<compile_context>
chip_gen: v6e
topology: v6e:2x2x1
jax: 0.10.0
libtpu: 0.0.40
codegen_flags: <defaults>
</compile_context>

<pallas_src>
import math

import jax
import jax.numpy as jnp
from jax import lax
from jax.experimental import pallas as pl
from jax.experimental.pallas import tpu as pltpu

HID = 256                       # hidden width fixed by the torch module
EPS = 1e-5                      # BatchNorm1d default eps
RESNET_TIME = 4                 # fixed by the torch module
VMEM_LIMIT = 32 * 1024 * 1024   # <= v7x's 64 MiB physical VMEM; plenty here


# ----------------------------------------------------------------------------
# In-kernel helpers
# ----------------------------------------------------------------------------
def _dotw(x, w_ref):
    # bf16 operands on the MXU, f32 accumulation.
    return jnp.dot(x.astype(jnp.bfloat16), w_ref[...],
                   preferred_element_type=jnp.float32)


def _lin(x, w_ref, b_ref):
    return _dotw(x, w_ref) + b_ref[...]


def _relu(x):
    return jnp.maximum(x, 0.0)


def _masked_moments(x, nvalid, row0):
    """Per-tile [sum; sum_sq; 0...] (8, D) with padded rows masked out."""
    tm, d = x.shape
    gid = row0 + lax.broadcasted_iota(jnp.int32, (tm, 1), 0)
    valid = (gid < nvalid).astype(jnp.float32)            # (tm, 1)
    xm = x * valid
    sums = jnp.sum(xm, axis=0, keepdims=True)              # (1, d)
    ssqs = jnp.sum(xm * x, axis=0, keepdims=True)          # (1, d)  (= sum of valid x^2)
    ridx = lax.broadcasted_iota(jnp.int32, (8, d), 0)
    return jnp.where(ridx == 0, sums, jnp.where(ridx == 1, ssqs, 0.0))


# ----------------------------------------------------------------------------
# Kernel 1: batch-tiled, BN-free portion of the forward pass (+ BN1 partial
# statistics).  All weights are whole-array blocks with constant index_map
# -> resident in VMEM across the whole grid.
# ----------------------------------------------------------------------------
def icm_main_kernel(
        nvalid_ref,
        state_ref, next_state_ref, action_ref,
        fW1, fb1, fW2, fb2, fW3, fb3,
        iW1a, iW1b, ib1,
        aW, ab,
        f1W1x, f1W2, f1b2, f1W3, f1b3, f1W4, f1b4, f1W5, f1b5,
        rW1x, rW2, rb2,
        f2W1x, f2W2, f2b2, f2W3, f2b3, f2W4, f2b4, f2W5, f2b5,
        ens_out, pnsf_out, h1pre_out, st1_out):

    tm = state_ref.shape[0]

    # --- feature net, fused over [state; next_state] (2*tm rows -> better MXU
    #     M-occupancy, half the matmul instructions for this stage)
    x2 = jnp.concatenate([state_ref[...], next_state_ref[...]], axis=0)
    h = _relu(_lin(x2, fW1, fb1))
    h = _relu(_lin(h, fW2, fb2))
    feat = _lin(h, fW3, fb3)
    es, ens = feat[:tm], feat[tm:]
    ens_out[...] = ens

    # --- inverse_net first Linear (pre-BatchNorm).  BN needs full-batch
    #     statistics, so emit masked per-tile sum / sum-of-squares; the tail
    #     kernels apply BN with XLA-reduced mean/rstd.
    h1pre = _dotw(es, iW1a) + _dotw(ens, iW1b) + ib1[...]
    h1pre_out[...] = h1pre
    st1_out[...] = _masked_moments(h1pre, nvalid_ref[0], pl.program_id(0) * tm)

    # --- single fused, loop-invariant action projection:
    #     columns are [forward_net_1 | residual | forward_net_2] first layers,
    #     with the corresponding first-layer biases folded in.
    aproj = _dotw(action_ref[...], aW) + ab[...]
    a_f1 = aproj[:, 0 * HID:1 * HID]
    a_res = aproj[:, 1 * HID:2 * HID]
    a_f2 = aproj[:, 2 * HID:3 * HID]

    # --- forward_net_1 on cat(encode_state, action)
    h = _relu(_dotw(es, f1W1x) + a_f1)
    h = _relu(_lin(h, f1W2, f1b2))
    h = _relu(_lin(h, f1W3, f1b3))
    h = _relu(_lin(h, f1W4, f1b4))
    pred = _lin(h, f1W5, f1b5)

    # --- residual stack: all 8 entries alias ONE torch module (shared
    #     weights); the skip adds the pre-pair value (matches the source).
    #     fori_loop bounds live ranges at large tiles (anti-spill).
    def res_block(x):
        return _lin(_relu(_dotw(x, rW1x) + a_res), rW2, rb2)

    def res_pair(_, p):
        return res_block(res_block(p)) + p

    pred = lax.fori_loop(0, RESNET_TIME, res_pair, pred)

    # --- forward_net_2 on cat(pred, action)
    h = _relu(_dotw(pred, f2W1x) + a_f2)
    h = _relu(_lin(h, f2W2, f2b2))
    h = _relu(_lin(h, f2W3, f2b3))
    h = _relu(_lin(h, f2W4, f2b4))
    pnsf_out[...] = _lin(h, f2W5, f2b5)


# ----------------------------------------------------------------------------
# Tail kernel A (tiled): apply BN1 (resident mean/rstd), ReLU, second inverse
# Linear, and emit masked per-tile statistics for BN2.
# ----------------------------------------------------------------------------
def icm_tail_a_kernel(nvalid_ref, h1_ref, mean1, rstd1, ig1, ibe1, iW2, ib2,
                      h2_out, st2_out):
    tm = h1_ref.shape[0]
    h = _relu((h1_ref[...] - mean1[...]) * rstd1[...] * ig1[...] + ibe1[...])
    h2 = _lin(h, iW2, ib2)
    h2_out[...] = h2
    st2_out[...] = _masked_moments(h2, nvalid_ref[0], pl.program_id(0) * tm)


# ----------------------------------------------------------------------------
# Tail kernel B (tiled): apply BN2 (resident mean/rstd), ReLU, and the final
# action head (zero-padded to a 128-lane slab; sliced back in the wrapper).
# ----------------------------------------------------------------------------
def icm_tail_b_kernel(nvalid_ref, h2_ref, mean2, rstd2, ig2, ibe2, iW3, ib3,
                      pact_out):
    del nvalid_ref  # only needed so all calls share the same index_map arity
    h = _relu((h2_ref[...] - mean2[...]) * rstd2[...] * ig2[...] + ibe2[...])
    pact_out[...] = _lin(h, iW3, ib3)


# ----------------------------------------------------------------------------
# Wrapper
# ----------------------------------------------------------------------------
def _round_up(x, m):
    return ((x + m - 1) // m) * m


def icm_forward(state, next_state, action, params, *, tm=256):
    main, tail = params
    (ig1, ibe1, iW2, ib2, ig2, ibe2, iW3p, ib3p) = tail
    b, in_dim = state.shape
    act_dim = action.shape[1]
    out_pad = ib3p.shape[1]          # padded width of the inverse-net head

    # Batch tile: as large as possible (MXU M-occupancy + grid-step
    # amortization) while keeping >= 2 grid steps whenever the batch allows
    # (v7x megacore sharding).  tm stays a multiple of 8.
    tm = max(8, min(tm, _round_up((b + 1) // 2, 8)))
    bp = _round_up(b, tm)
    if bp != b:
        pad = ((0, bp - b), (0, 0))
        state = jnp.pad(state, pad)
        next_state = jnp.pad(next_state, pad)
        action = jnp.pad(action, pad)
    num_tiles = bp // tm
    grid = (num_tiles,)
    nvalid = jnp.array([b], dtype=jnp.int32)   # scalar-prefetch: real row count

    def row_spec(d):
        return pl.BlockSpec((tm, d), lambda i, nv: (i, 0))

    def w_spec(p):
        # Whole-array block, constant index -> DMA'd once, resident across grid.
        return pl.BlockSpec(p.shape, lambda i, nv: (0, 0))

    stat_spec = pl.BlockSpec((8, HID), lambda i, nv: (i, 0))

    cparams = pltpu.CompilerParams(
        dimension_semantics=("parallel",),      # v7x: shard tiles across 2 TCs
        vmem_limit_bytes=VMEM_LIMIT)

    # ---------------- kernel 1: main (BN-free) pass ----------------
    kn = 32 * HID * HID + 2 * in_dim * HID + 3 * act_dim * HID
    flops1 = int(2 * bp * kn)
    bytes1 = int(sum(int(p.size) * p.dtype.itemsize for p in main)
                 + bp * (2 * in_dim + act_dim) * 4 + 3 * bp * HID * 4)

    ens_p, pnsf_p, h1pre_p, st1_p = pl.pallas_call(
        icm_main_kernel,
        out_shape=(
            jax.ShapeDtypeStruct((bp, HID), jnp.float32),        # encode_next_state
            jax.ShapeDtypeStruct((bp, HID), jnp.float32),        # pred_next_state_feature
            jax.ShapeDtypeStruct((bp, HID), jnp.float32),        # inverse_net pre-BN act
            jax.ShapeDtypeStruct((num_tiles * 8, HID), jnp.float32),  # BN1 partial stats
        ),
        grid_spec=pltpu.PrefetchScalarGridSpec(
            num_scalar_prefetch=1,
            grid=grid,
            in_specs=[row_spec(in_dim), row_spec(in_dim), row_spec(act_dim)]
                     + [w_spec(p) for p in main],
            out_specs=[row_spec(HID)] * 3 + [stat_spec],
        ),
        compiler_params=cparams,
        cost_estimate=pl.CostEstimate(flops=flops1, transcendentals=0,
                                      bytes_accessed=bytes1),
    )(nvalid, state, next_state, action, *main)

    # BN1 statistics over exactly the real batch (tiny XLA reduction).
    st1 = st1_p.reshape(num_tiles, 8, HID).sum(axis=0)
    s1 = st1[0].reshape(1, HID)
    q1 = st1[1].reshape(1, HID)
    mean1 = s1 / b
    rstd1 = lax.rsqrt(jnp.maximum(q1 / b - jnp.square(mean1), 0.0) + EPS)

    # ---------------- tail A: BN1 -> Linear, BN2 partial stats ----------------
    flops2 = int(2 * bp * HID * HID)
    bytes2 = int(2 * bp * HID * 4 + HID * HID * 2 + 6 * HID * 4)
    h2_p, st2_p = pl.pallas_call(
        icm_tail_a_kernel,
        out_shape=(jax.ShapeDtypeStruct((bp, HID), jnp.float32),
                   jax.ShapeDtypeStruct((num_tiles * 8, HID), jnp.float32)),
        grid_spec=pltpu.PrefetchScalarGridSpec(
            num_scalar_prefetch=1,
            grid=grid,
            in_specs=[row_spec(HID)] + [w_spec(p) for p in
                                        (mean1, rstd1, ig1, ibe1, iW2, ib2)],
            out_specs=[row_spec(HID), stat_spec],
        ),
        compiler_params=cparams,
        cost_estimate=pl.CostEstimate(flops=flops2, transcendentals=0,
                                      bytes_accessed=bytes2),
    )(nvalid, h1pre_p, mean1, rstd1, ig1, ibe1, iW2, ib2)

    st2 = st2_p.reshape(num_tiles, 8, HID).sum(axis=0)
    s2 = st2[0].reshape(1, HID)
    q2 = st2[1].reshape(1, HID)
    mean2 = s2 / b
    rstd2 = lax.rsqrt(jnp.maximum(q2 / b - jnp.square(mean2), 0.0) + EPS)

    # ---------------- tail B: BN2 -> action head ----------------
    flops3 = int(2 * bp * HID * out_pad)
    bytes3 = int(bp * (HID + out_pad) * 4 + HID * out_pad * 2 + 6 * HID * 4)
    pact_p = pl.pallas_call(
        icm_tail_b_kernel,
        out_shape=jax.ShapeDtypeStruct((bp, out_pad), jnp.float32),
        grid_spec=pltpu.PrefetchScalarGridSpec(
            num_scalar_prefetch=1,
            grid=grid,
            in_specs=[row_spec(HID)] + [w_spec(p) for p in
                                        (mean2, rstd2, ig2, ibe2, iW3p, ib3p)],
            out_specs=row_spec(out_pad),
        ),
        compiler_params=cparams,
        cost_estimate=pl.CostEstimate(flops=flops3, transcendentals=0,
                                      bytes_accessed=bytes3),
    )(nvalid, h2_p, mean2, rstd2, ig2, ibe2, iW3p, ib3p)

    return ens_p[:b], pnsf_p[:b], pact_p[:b, :act_dim]


# ----------------------------------------------------------------------------
# Pure-JAX reference (module semantics, bf16 matmul operands) for checking.
# ----------------------------------------------------------------------------
def _ref_forward(state, next_state, action, main, tail):
    (fW1, fb1, fW2, fb2, fW3, fb3,
     iW1a, iW1b, ib1,
     aW, ab,
     f1W1x, f1W2, f1b2, f1W3, f1b3, f1W4, f1b4, f1W5, f1b5,
     rW1x, rW2, rb2,
     f2W1x, f2W2, f2b2, f2W3, f2b3, f2W4, f2b4, f2W5, f2b5) = main
    (ig1, ibe1, iW2, ib2, ig2, ibe2, iW3p, ib3p) = tail

    def dotw(x, w):
        return jnp.dot(x.astype(jnp.bfloat16), w, preferred_element_type=jnp.float32)

    def lin(x, w, b):
        return dotw(x, w) + b

    def relu(x):
        return jnp.maximum(x, 0.0)

    def bn_train(x, g, b):
        # training-mode BatchNorm1d: batch mean, biased batch variance
        mean = jnp.mean(x, axis=0, keepdims=True)
        var = jnp.mean(jnp.square(x - mean), axis=0, keepdims=True)
        return (x - mean) * lax.rsqrt(var + EPS) * g + b

    def feature(x):
        h = relu(lin(x, fW1, fb1))
        h = relu(lin(h, fW2, fb2))
        return lin(h, fW3, fb3)

    es = feature(state)
    ens = feature(next_state)

    h = relu(bn_train(dotw(es, iW1a) + dotw(ens, iW1b) + ib1, ig1, ibe1))
    h = relu(bn_train(lin(h, iW2, ib2), ig2, ibe2))
    pact_full = lin(h, iW3p, ib3p)

    aproj = dotw(action, aW) + ab
    a_f1 = aproj[:, 0 * HID:1 * HID]
    a_res = aproj[:, 1 * HID:2 * HID]
    a_f2 = aproj[:, 2 * HID:3 * HID]

    h = relu(dotw(es, f1W1x) + a_f1)
    h = relu(lin(h, f1W2, f1b2))
    h = relu(lin(h, f1W3, f1b3))
    h = relu(lin(h, f1W4, f1b4))
    pred = lin(h, f1W5, f1b5)

    def res_block(x):
        return lin(relu(dotw(x, rW1x) + a_res), rW2, rb2)

    for _ in range(RESNET_TIME):
        pred = res_block(res_block(pred)) + pred

    h = relu(dotw(pred, f2W1x) + a_f2)
    h = relu(lin(h, f2W2, f2b2))
    h = relu(lin(h, f2W3, f2b3))
    h = relu(lin(h, f2W4, f2b4))
    pnsf = lin(h, f2W5, f2b5)

    return ens, pnsf, pact_full


# ----------------------------------------------------------------------------
# Deterministic parameter init (PyTorch nn.Linear-style uniform).  Matmul
# weights stored in bf16; biases / BN params stay f32.
# ----------------------------------------------------------------------------
def init_params(key, input_size, output_size):
    def linear(k, fan_in, fan_out):
        kw, kb = jax.random.split(k)
        bound = 1.0 / math.sqrt(fan_in)
        w = jax.random.uniform(kw, (fan_in, fan_out), jnp.float32, -bound, bound)
        b = jax.random.uniform(kb, (1, fan_out), jnp.float32, -bound, bound)
        return w, b

    def bf(w):
        return w.astype(jnp.bfloat16)

    keys = iter(jax.random.split(key, 20))

    # feature
    fW1, fb1 = linear(next(keys), input_size, HID)
    fW2, fb2 = linear(next(keys), HID, HID)
    fW3, fb3 = linear(next(keys), HID, HID)

    # inverse_net (first layer acts on cat(es, ens) -> split the weight)
    iW1, ib1 = linear(next(keys), 2 * HID, HID)
    iW1a, iW1b = iW1[:HID], iW1[HID:]
    ig1 = jnp.ones((1, HID), jnp.float32)
    ibe1 = jnp.zeros((1, HID), jnp.float32)
    iW2, ib2 = linear(next(keys), HID, HID)
    ig2 = jnp.ones((1, HID), jnp.float32)
    ibe2 = jnp.zeros((1, HID), jnp.float32)
    iW3, ib3 = linear(next(keys), HID, output_size)
    # pad the narrow action head to a lane-dense 128-multiple slab
    out_pad = max(128, ((output_size + 127) // 128) * 128)
    iW3p = jnp.zeros((HID, out_pad), jnp.float32).at[:, :output_size].set(iW3)
    ib3p = jnp.zeros((1, out_pad), jnp.float32).at[:, :output_size].set(ib3)

    # forward_net_1 (first layer acts on cat(es, action) -> split)
    f1W1, f1b1 = linear(next(keys), HID + output_size, HID)
    f1W1x, f1W1a = f1W1[:HID], f1W1[HID:]
    f1W2, f1b2 = linear(next(keys), HID, HID)
    f1W3, f1b3 = linear(next(keys), HID, HID)
    f1W4, f1b4 = linear(next(keys), HID, HID)
    f1W5, f1b5 = linear(next(keys), HID, HID)

    # residual block (shared by all 2*resnet_time entries, as in torch)
    rW1, rb1 = linear(next(keys), HID + output_size, HID)
    rW1x, rW1a = rW1[:HID], rW1[HID:]
    rW2, rb2 = linear(next(keys), HID, HID)

    # forward_net_2
    f2W1, f2b1 = linear(next(keys), HID + output_size, HID)
    f2W1x, f2W1a = f2W1[:HID], f2W1[HID:]
    f2W2, f2b2 = linear(next(keys), HID, HID)
    f2W3, f2b3 = linear(next(keys), HID, HID)
    f2W4, f2b4 = linear(next(keys), HID, HID)
    f2W5, f2b5 = linear(next(keys), HID, HID)

    # fused action projection: [forward_net_1 | residual | forward_net_2]
    # first-layer action columns, with the first-layer biases folded in.
    aW = jnp.concatenate([f1W1a, rW1a, f2W1a], axis=1)
    ab = jnp.concatenate([f1b1, rb1, f2b1], axis=1)

    main = (bf(fW1), fb1, bf(fW2), fb2, bf(fW3), fb3,
            bf(iW1a), bf(iW1b), ib1,
            bf(aW), ab,
            bf(f1W1x), bf(f1W2), f1b2, bf(f1W3), f1b3, bf(f1W4), f1b4,
            bf(f1W5), f1b5,
            bf(rW1x), bf(rW2), rb2,
            bf(f2W1x), bf(f2W2), f2b2, bf(f2W3), f2b3, bf(f2W4), f2b4,
            bf(f2W5), f2b5)
    tail = (ig1, ibe1, bf(iW2), ib2, ig2, ibe2, bf(iW3p), ib3p)
    return main, tail


if __name__ == "__main__":
    # B=200 exercises the batch-tile grid (2 tiles of 104 rows, 8 padded rows
    # masked out of the BN statistics) while staying tiny.
    B, INPUT_SIZE, OUTPUT_SIZE = 200, 16, 4

    key = jax.random.PRNGKey(0)
    kp, ks, kn_, ka = jax.random.split(key, 4)
    params = init_params(kp, INPUT_SIZE, OUTPUT_SIZE)

    state = jax.random.normal(ks, (B, INPUT_SIZE), jnp.float32)
    next_state = jax.random.normal(kn_, (B, INPUT_SIZE), jnp.float32)
    action = jax.random.normal(ka, (B, OUTPUT_SIZE), jnp.float32)

    fwd = jax.jit(lambda s, n, a: icm_forward(s, n, a, params))
    ens, pnsf, pact = jax.block_until_ready(fwd(state, next_state, action))

    # pure-JAX reference check (same math, outside Pallas)
    r_ens, r_pnsf, r_pact_full = jax.jit(_ref_forward)(
        state, next_state, action, *params)
    r_pact = r_pact_full[:, :OUTPUT_SIZE]

    assert ens.shape == (B, HID) and pnsf.shape == (B, HID)
    assert pact.shape == (B, OUTPUT_SIZE)
    assert jnp.allclose(ens, r_ens, atol=1e-2, rtol=1e-2)
    assert jnp.allclose(pnsf, r_pnsf, atol=1e-2, rtol=1e-2)
    assert jnp.allclose(pact, r_pact, atol=1e-2, rtol=1e-2)

    print("KERNEL_OK")
</pallas_src>

<mosaic_0001>
module attributes {stable_mosaic.version = 11 : i64} {
  func.func @icm_main_kernel(%arg0: i32, %arg1: memref<1xi32, #tpu.memory_space<smem>>, %arg2: memref<104x16xf32, #tpu.memory_space<vmem>>, %arg3: memref<104x16xf32, #tpu.memory_space<vmem>>, %arg4: memref<104x4xf32, #tpu.memory_space<vmem>>, %arg5: memref<16x256xbf16, #tpu.memory_space<vmem>>, %arg6: memref<1x256xf32, #tpu.memory_space<vmem>>, %arg7: memref<256x256xbf16, #tpu.memory_space<vmem>>, %arg8: memref<1x256xf32, #tpu.memory_space<vmem>>, %arg9: memref<256x256xbf16, #tpu.memory_space<vmem>>, %arg10: memref<1x256xf32, #tpu.memory_space<vmem>>, %arg11: memref<256x256xbf16, #tpu.memory_space<vmem>>, %arg12: memref<256x256xbf16, #tpu.memory_space<vmem>>, %arg13: memref<1x256xf32, #tpu.memory_space<vmem>>, %arg14: memref<4x768xbf16, #tpu.memory_space<vmem>>, %arg15: memref<1x768xf32, #tpu.memory_space<vmem>>, %arg16: memref<256x256xbf16, #tpu.memory_space<vmem>>, %arg17: memref<256x256xbf16, #tpu.memory_space<vmem>>, %arg18: memref<1x256xf32, #tpu.memory_space<vmem>>, %arg19: memref<256x256xbf16, #tpu.memory_space<vmem>>, %arg20: memref<1x256xf32, #tpu.memory_space<vmem>>, %arg21: memref<256x256xbf16, #tpu.memory_space<vmem>>, %arg22: memref<1x256xf32, #tpu.memory_space<vmem>>, %arg23: memref<256x256xbf16, #tpu.memory_space<vmem>>, %arg24: memref<1x256xf32, #tpu.memory_space<vmem>>, %arg25: memref<256x256xbf16, #tpu.memory_space<vmem>>, %arg26: memref<256x256xbf16, #tpu.memory_space<vmem>>, %arg27: memref<1x256xf32, #tpu.memory_space<vmem>>, %arg28: memref<256x256xbf16, #tpu.memory_space<vmem>>, %arg29: memref<256x256xbf16, #tpu.memory_space<vmem>>, %arg30: memref<1x256xf32, #tpu.memory_space<vmem>>, %arg31: memref<256x256xbf16, #tpu.memory_space<vmem>>, %arg32: memref<1x256xf32, #tpu.memory_space<vmem>>, %arg33: memref<256x256xbf16, #tpu.memory_space<vmem>>, %arg34: memref<1x256xf32, #tpu.memory_space<vmem>>, %arg35: memref<256x256xbf16, #tpu.memory_space<vmem>>, %arg36: memref<1x256xf32, #tpu.memory_space<vmem>>, %arg37: memref<104x256xf32, #tpu.memory_space<vmem>>, %arg38: memref<104x256xf32, #tpu.memory_space<vmem>>, %arg39: memref<104x256xf32, #tpu.memory_space<vmem>>, %arg40: memref<8x256xf32, #tpu.memory_space<vmem>>) attributes {dimension_semantics = [#tpu.dimension_semantics<parallel>], iteration_bounds = array<i64: 2>, scalar_prefetch = 1 : i64, scratch_operands = 0 : i64, tpu.core_type = #tpu.core_type<tc>, window_params = [{transform_indices = @transform_0, window_bounds = array<i64: 104, 16>}, {transform_indices = @transform_1, window_bounds = array<i64: 104, 16>}, {transform_indices = @transform_2, window_bounds = array<i64: 104, 4>}, {pipeline_mode = #tpu.pipeline_mode<synchronous>, transform_indices = @transform_3, window_bounds = array<i64: 16, 256>}, {pipeline_mode = #tpu.pipeline_mode<synchronous>, transform_indices = @transform_4, window_bounds = array<i64: 1, 256>}, {pipeline_mode = #tpu.pipeline_mode<synchronous>, transform_indices = @transform_5, window_bounds = array<i64: 256, 256>}, {pipeline_mode = #tpu.pipeline_mode<synchronous>, transform_indices = @transform_6, window_bounds = array<i64: 1, 256>}, {pipeline_mode = #tpu.pipeline_mode<synchronous>, transform_indices = @transform_7, window_bounds = array<i64: 256, 256>}, {pipeline_mode = #tpu.pipeline_mode<synchronous>, transform_indices = @transform_8, window_bounds = array<i64: 1, 256>}, {pipeline_mode = #tpu.pipeline_mode<synchronous>, transform_indices = @transform_9, window_bounds = array<i64: 256, 256>}, {pipeline_mode = #tpu.pipeline_mode<synchronous>, transform_indices = @transform_10, window_bounds = array<i64: 256, 256>}, {pipeline_mode = #tpu.pipeline_mode<synchronous>, transform_indices = @transform_11, window_bounds = array<i64: 1, 256>}, {pipeline_mode = #tpu.pipeline_mode<synchronous>, transform_indices = @transform_12, window_bounds = array<i64: 4, 768>}, {pipeline_mode = #tpu.pipeline_mode<synchronous>, transform_indices = @transform_13, window_bounds = array<i64: 1, 768>}, {pipeline_mode = #tpu.pipeline_mode<synchronous>, transform_indices = @transform_14, window_bounds = array<i64: 256, 256>}, {pipeline_mode = #tpu.pipeline_mode<synchronous>, transform_indices = @transform_15, window_bounds = array<i64: 256, 256>}, {pipeline_mode = #tpu.pipeline_mode<synchronous>, transform_indices = @transform_16, window_bounds = array<i64: 1, 256>}, {pipeline_mode = #tpu.pipeline_mode<synchronous>, transform_indices = @transform_17, window_bounds = array<i64: 256, 256>}, {pipeline_mode = #tpu.pipeline_mode<synchronous>, transform_indices = @transform_18, window_bounds = array<i64: 1, 256>}, {pipeline_mode = #tpu.pipeline_mode<synchronous>, transform_indices = @transform_19, window_bounds = array<i64: 256, 256>}, {pipeline_mode = #tpu.pipeline_mode<synchronous>, transform_indices = @transform_20, window_bounds = array<i64: 1, 256>}, {pipeline_mode = #tpu.pipeline_mode<synchronous>, transform_indices = @transform_21, window_bounds = array<i64: 256, 256>}, {pipeline_mode = #tpu.pipeline_mode<synchronous>, transform_indices = @transform_22, window_bounds = array<i64: 1, 256>}, {pipeline_mode = #tpu.pipeline_mode<synchronous>, transform_indices = @transform_23, window_bounds = array<i64: 256, 256>}, {pipeline_mode = #tpu.pipeline_mode<synchronous>, transform_indices = @transform_24, window_bounds = array<i64: 256, 256>}, {pipeline_mode = #tpu.pipeline_mode<synchronous>, transform_indices = @transform_25, window_bounds = array<i64: 1, 256>}, {pipeline_mode = #tpu.pipeline_mode<synchronous>, transform_indices = @transform_26, window_bounds = array<i64: 256, 256>}, {pipeline_mode = #tpu.pipeline_mode<synchronous>, transform_indices = @transform_27, window_bounds = array<i64: 256, 256>}, {pipeline_mode = #tpu.pipeline_mode<synchronous>, transform_indices = @transform_28, window_bounds = array<i64: 1, 256>}, {pipeline_mode = #tpu.pipeline_mode<synchronous>, transform_indices = @transform_29, window_bounds = array<i64: 256, 256>}, {pipeline_mode = #tpu.pipeline_mode<synchronous>, transform_indices = @transform_30, window_bounds = array<i64: 1, 256>}, {pipeline_mode = #tpu.pipeline_mode<synchronous>, transform_indices = @transform_31, window_bounds = array<i64: 256, 256>}, {pipeline_mode = #tpu.pipeline_mode<synchronous>, transform_indices = @transform_32, window_bounds = array<i64: 1, 256>}, {pipeline_mode = #tpu.pipeline_mode<synchronous>, transform_indices = @transform_33, window_bounds = array<i64: 256, 256>}, {pipeline_mode = #tpu.pipeline_mode<synchronous>, transform_indices = @transform_34, window_bounds = array<i64: 1, 256>}, {transform_indices = @transform_35, window_bounds = array<i64: 104, 256>}, {transform_indices = @transform_36, window_bounds = array<i64: 104, 256>}, {transform_indices = @transform_37, window_bounds = array<i64: 104, 256>}, {transform_indices = @transform_38, window_bounds = array<i64: 8, 256>}]} {
    %c0 = arith.constant 0 : index
    %c0_0 = arith.constant 0 : index
    %0 = vector.load %arg2[%c0, %c0_0] : memref<104x16xf32, #tpu.memory_space<vmem>>, vector<104x16xf32>
    %c0_1 = arith.constant 0 : index
    %c0_2 = arith.constant 0 : index
    %1 = vector.load %arg3[%c0_1, %c0_2] : memref<104x16xf32, #tpu.memory_space<vmem>>, vector<104x16xf32>
    %2 = tpu.concatenate %0, %1 in 0 : vector<104x16xf32>, vector<104x16xf32> -> vector<208x16xf32>
    %3 = arith.truncf %2 : vector<208x16xf32> to vector<208x16xbf16>
    %c0_3 = arith.constant 0 : index
    %c0_4 = arith.constant 0 : index
    %4 = vector.load %arg5[%c0_3, %c0_4] : memref<16x256xbf16, #tpu.memory_space<vmem>>, vector<16x256xbf16>
    %cst = arith.constant dense<0.000000e+00> : vector<208x256xf32>
    %5 = tpu.matmul %3, %4, %cst {dimension_numbers = #tpu.dot_dimension_numbers<[1], [0], [0], [1], [0, 0, 1, 1], [], []>} : vector<208x16xbf16>, vector<16x256xbf16>, vector<208x256xf32> -> vector<208x256xf32>
    %c0_5 = arith.constant 0 : index
    %c0_6 = arith.constant 0 : index
    %6 = vector.load %arg6[%c0_5, %c0_6] : memref<1x256xf32, #tpu.memory_space<vmem>>, vector<1x256xf32>
    %7 = vector.broadcast %6 : vector<1x256xf32> to vector<208x256xf32>
    %8 = arith.addf %5, %7 : vector<208x256xf32>
    %cst_7 = arith.constant 0.000000e+00 : f32
    %9 = vector.broadcast %cst_7 : f32 to vector<208x256xf32>
    %10 = arith.maximumf %8, %9 : vector<208x256xf32>
    %11 = arith.truncf %10 : vector<208x256xf32> to vector<208x256xbf16>
    %c0_8 = arith.constant 0 : index
    %c0_9 = arith.constant 0 : index
    %12 = vector.load %arg7[%c0_8, %c0_9] : memref<256x256xbf16, #tpu.memory_space<vmem>>, vector<256x256xbf16>
    %cst_10 = arith.constant dense<0.000000e+00> : vector<208x256xf32>
    %13 = tpu.matmul %11, %12, %cst_10 {dimension_numbers = #tpu.dot_dimension_numbers<[1], [0], [0], [1], [0, 0, 1, 1], [], []>} : vector<208x256xbf16>, vector<256x256xbf16>, vector<208x256xf32> -> vector<208x256xf32>
    %c0_11 = arith.constant 0 : index
    %c0_12 = arith.constant 0 : index
    %14 = vector.load %arg8[%c0_11, %c0_12] : memref<1x256xf32, #tpu.memory_space<vmem>>, vector<1x256xf32>
    %15 = vector.broadcast %14 : vector<1x256xf32> to vector<208x256xf32>
    %16 = arith.addf %13, %15 : vector<208x256xf32>
    %cst_13 = arith.constant 0.000000e+00 : f32
    %17 = vector.broadcast %cst_13 : f32 to vector<208x256xf32>
    %18 = arith.maximumf %16, %17 : vector<208x256xf32>
    %19 = arith.truncf %18 : vector<208x256xf32> to vector<208x256xbf16>
    %c0_14 = arith.constant 0 : index
    %c0_15 = arith.constant 0 : index
    %20 = vector.load %arg9[%c0_14, %c0_15] : memref<256x256xbf16, #tpu.memory_space<vmem>>, vector<256x256xbf16>
    %cst_16 = arith.constant dense<0.000000e+00> : vector<208x256xf32>
    %21 = tpu.matmul %19, %20, %cst_16 {dimension_numbers = #tpu.dot_dimension_numbers<[1], [0], [0], [1], [0, 0, 1, 1], [], []>} : vector<208x256xbf16>, vector<256x256xbf16>, vector<208x256xf32> -> vector<208x256xf32>
    %c0_17 = arith.constant 0 : index
    %c0_18 = arith.constant 0 : index
    %22 = vector.load %arg10[%c0_17, %c0_18] : memref<1x256xf32, #tpu.memory_space<vmem>>, vector<1x256xf32>
    %23 = vector.broadcast %22 : vector<1x256xf32> to vector<208x256xf32>
    %24 = arith.addf %21, %23 : vector<208x256xf32>
    %25 = vector.extract_strided_slice %24 {offsets = [0, 0], sizes = [104, 256], strides = [1, 1]} : vector<208x256xf32> to vector<104x256xf32>
    %26 = vector.extract_strided_slice %24 {offsets = [104, 0], sizes = [104, 256], strides = [1, 1]} : vector<208x256xf32> to vector<104x256xf32>
    %c0_19 = arith.constant 0 : index
    %c0_20 = arith.constant 0 : index
    %27 = vector.load %arg37[%c0_19, %c0_20] : memref<104x256xf32, #tpu.memory_space<vmem>>, vector<104x256xf32>
    tpu.vector_store %arg37[%c0_19, %c0_20], %26 {strides = array<i32>} : memref<104x256xf32, #tpu.memory_space<vmem>>, vector<104x256xf32>,
    %28 = arith.truncf %25 : vector<104x256xf32> to vector<104x256xbf16>
    %c0_21 = arith.constant 0 : index
    %c0_22 = arith.constant 0 : index
    %29 = vector.load %arg11[%c0_21, %c0_22] : memref<256x256xbf16, #tpu.memory_space<vmem>>, vector<256x256xbf16>
    %cst_23 = arith.constant dense<0.000000e+00> : vector<104x256xf32>
    %30 = tpu.matmul %28, %29, %cst_23 {dimension_numbers = #tpu.dot_dimension_numbers<[1], [0], [0], [1], [0, 0, 1, 1], [], []>} : vector<104x256xbf16>, vector<256x256xbf16>, vector<104x256xf32> -> vector<104x256xf32>
    %31 = arith.truncf %26 : vector<104x256xf32> to vector<104x256xbf16>
    %c0_24 = arith.constant 0 : index
    %c0_25 = arith.constant 0 : index
    %32 = vector.load %arg12[%c0_24, %c0_25] : memref<256x256xbf16, #tpu.memory_space<vmem>>, vector<256x256xbf16>
    %cst_26 = arith.constant dense<0.000000e+00> : vector<104x256xf32>
    %33 = tpu.matmul %31, %32, %cst_26 {dimension_numbers = #tpu.dot_dimension_numbers<[1], [0], [0], [1], [0, 0, 1, 1], [], []>} : vector<104x256xbf16>, vector<256x256xbf16>, vector<104x256xf32> -> vector<104x256xf32>
    %34 = arith.addf %30, %33 : vector<104x256xf32>
    %c0_27 = arith.constant 0 : index
    %c0_28 = arith.constant 0 : index
    %35 = vector.load %arg13[%c0_27, %c0_28] : memref<1x256xf32, #tpu.memory_space<vmem>>, vector<1x256xf32>
    %36 = vector.broadcast %35 : vector<1x256xf32> to vector<104x256xf32>
    %37 = arith.addf %34, %36 : vector<104x256xf32>
    %c0_29 = arith.constant 0 : index
    %c0_30 = arith.constant 0 : index
    %38 = vector.load %arg39[%c0_29, %c0_30] : memref<104x256xf32, #tpu.memory_space<vmem>>, vector<104x256xf32>
    tpu.vector_store %arg39[%c0_29, %c0_30], %37 {strides = array<i32>} : memref<104x256xf32, #tpu.memory_space<vmem>>, vector<104x256xf32>,
    %c0_31 = arith.constant 0 : index
    %39 = memref.load %arg1[%c0_31] : memref<1xi32, #tpu.memory_space<smem>>
    %c104_i32 = arith.constant 104 : i32
    %40 = arith.muli %arg0, %c104_i32 : i32
    %41 = tpu.iota {dimensions = array<i32: 0>} : vector<104x1xi32>
    %42 = vector.broadcast %40 : i32 to vector<104x1xi32>
    %43 = arith.addi %42, %41 : vector<104x1xi32>
    %44 = vector.broadcast %39 : i32 to vector<104x1xi32>
    %45 = arith.cmpi slt, %43, %44 : vector<104x1xi32>
    %46 = arith.extui %45 : vector<104x1xi1> to vector<104x1xi32>
    %47 = arith.sitofp %46 : vector<104x1xi32> to vector<104x1xf32>
    %48 = vector.broadcast %47 : vector<104x1xf32> to vector<104x256xf32>
    %49 = arith.mulf %37, %48 : vector<104x256xf32>
    %cst_32 = arith.constant dense<0.000000e+00> : vector<256xf32>
    %50 = vector.multi_reduction <add>, %49, %cst_32 [0] : vector<104x256xf32> to vector<256xf32>
    %51 = vector.shape_cast %50 : vector<256xf32> to vector<1x256xf32>
    %52 = arith.mulf %49, %37 : vector<104x256xf32>
    %cst_33 = arith.constant dense<0.000000e+00> : vector<256xf32>
    %53 = vector.multi_reduction <add>, %52, %cst_33 [0] : vector<104x256xf32> to vector<256xf32>
    %54 = vector.shape_cast %53 : vector<256xf32> to vector<1x256xf32>
    %55 = tpu.iota {dimensions = array<i32: 0>} : vector<8x256xi32>
    %c0_i32 = arith.constant 0 : i32
    %56 = vector.broadcast %c0_i32 : i32 to vector<8x256xi32>
    %57 = arith.cmpi eq, %55, %56 : vector<8x256xi32>
    %c1_i32 = arith.constant 1 : i32
    %58 = vector.broadcast %c1_i32 : i32 to vector<8x256xi32>
    %59 = arith.cmpi eq, %55, %58 : vector<8x256xi32>
    %cst_34 = arith.constant 0.000000e+00 : f32
    %60 = vector.shape_cast %54 : vector<1x256xf32> to vector<1x256xf32>
    %61 = vector.broadcast %60 : vector<1x256xf32> to vector<8x256xf32>
    %62 = vector.broadcast %cst_34 : f32 to vector<8x256xf32>
    %63 = arith.select %59, %61, %62 : vector<8x256xi1>, vector<8x256xf32>
    %64 = vector.shape_cast %51 : vector<1x256xf32> to vector<1x256xf32>
    %65 = vector.broadcast %64 : vector<1x256xf32> to vector<8x256xf32>
    %66 = arith.select %57, %65, %63 : vector<8x256xi1>, vector<8x256xf32>
    %c0_35 = arith.constant 0 : index
    %c0_36 = arith.constant 0 : index
    %67 = vector.load %arg40[%c0_35, %c0_36] : memref<8x256xf32, #tpu.memory_space<vmem>>, vector<8x256xf32>
    tpu.vector_store %arg40[%c0_35, %c0_36], %66 {strides = array<i32>} : memref<8x256xf32, #tpu.memory_space<vmem>>, vector<8x256xf32>,
    %c0_37 = arith.constant 0 : index
    %c0_38 = arith.constant 0 : index
    %68 = vector.load %arg4[%c0_37, %c0_38] : memref<104x4xf32, #tpu.memory_space<vmem>>, vector<104x4xf32>
    %69 = arith.truncf %68 : vector<104x4xf32> to vector<104x4xbf16>
    %c0_39 = arith.constant 0 : index
    %c0_40 = arith.constant 0 : index
    %70 = vector.load %arg14[%c0_39, %c0_40] : memref<4x768xbf16, #tpu.memory_space<vmem>>, vector<4x768xbf16>
    %cst_41 = arith.constant dense<0.000000e+00> : vector<104x768xf32>
    %71 = tpu.matmul %69, %70, %cst_41 {dimension_numbers = #tpu.dot_dimension_numbers<[1], [0], [0], [1], [0, 0, 1, 1], [], []>} : vector<104x4xbf16>, vector<4x768xbf16>, vector<104x768xf32> -> vector<104x768xf32>
    %c0_42 = arith.constant 0 : index
    %c0_43 = arith.constant 0 : index
    %72 = vector.load %arg15[%c0_42, %c0_43] : memref<1x768xf32, #tpu.memory_space<vmem>>, vector<1x768xf32>
    %73 = vector.broadcast %72 : vector<1x768xf32> to vector<104x768xf32>
    %74 = arith.addf %71, %73 : vector<104x768xf32>
    %75 = vector.extract_strided_slice %74 {offsets = [0, 0], sizes = [104, 256], strides = [1, 1]} : vector<104x768xf32> to vector<104x256xf32>
    %76 = vector.extract_strided_slice %74 {offsets = [0, 256], sizes = [104, 256], strides = [1, 1]} : vector<104x768xf32> to vector<104x256xf32>
    %77 = vector.extract_strided_slice %74 {offsets = [0, 512], sizes = [104, 256], strides = [1, 1]} : vector<104x768xf32> to vector<104x256xf32>
    %78 = arith.truncf %25 : vector<104x256xf32> to vector<104x256xbf16>
    %c0_44 = arith.constant 0 : index
    %c0_45 = arith.constant 0 : index
    %79 = vector.load %arg16[%c0_44, %c0_45] : memref<256x256xbf16, #tpu.memory_space<vmem>>, vector<256x256xbf16>
    %cst_46 = arith.constant dense<0.000000e+00> : vector<104x256xf32>
    %80 = tpu.matmul %78, %79, %cst_46 {dimension_numbers = #tpu.dot_dimension_numbers<[1], [0], [0], [1], [0, 0, 1, 1], [], []>} : vector<104x256xbf16>, vector<256x256xbf16>, vector<104x256xf32> -> vector<104x256xf32>
    %81 = arith.addf %80, %75 : vector<104x256xf32>
    %cst_47 = arith.constant 0.000000e+00 : f32
    %82 = vector.broadcast %cst_47 : f32 to vector<104x256xf32>
    %83 = arith.maximumf %81, %82 : vector<104x256xf32>
    %84 = arith.truncf %83 : vector<104x256xf32> to vector<104x256xbf16>
    %c0_48 = arith.constant 0 : index
    %c0_49 = arith.constant 0 : index
    %85 = vector.load %arg17[%c0_48, %c0_49] : memref<256x256xbf16, #tpu.memory_space<vmem>>, vector<256x256xbf16>
    %cst_50 = arith.constant dense<0.000000e+00> : vector<104x256xf32>
    %86 = tpu.matmul %84, %85, %cst_50 {dimension_numbers = #tpu.dot_dimension_numbers<[1], [0], [0], [1], [0, 0, 1, 1], [], []>} : vector<104x256xbf16>, vector<256x256xbf16>, vector<104x256xf32> -> vector<104x256xf32>
    %c0_51 = arith.constant 0 : index
    %c0_52 = arith.constant 0 : index
    %87 = vector.load %arg18[%c0_51, %c0_52] : memref<1x256xf32, #tpu.memory_space<vmem>>, vector<1x256xf32>
    %88 = vector.broadcast %87 : vector<1x256xf32> to vector<104x256xf32>
    %89 = arith.addf %86, %88 : vector<104x256xf32>
    %cst_53 = arith.constant 0.000000e+00 : f32
    %90 = vector.broadcast %cst_53 : f32 to vector<104x256xf32>
    %91 = arith.maximumf %89, %90 : vector<104x256xf32>
    %92 = arith.truncf %91 : vector<104x256xf32> to vector<104x256xbf16>
    %c0_54 = arith.constant 0 : index
    %c0_55 = arith.constant 0 : index
    %93 = vector.load %arg19[%c0_54, %c0_55] : memref<256x256xbf16, #tpu.memory_space<vmem>>, vector<256x256xbf16>
    %cst_56 = arith.constant dense<0.000000e+00> : vector<104x256xf32>
    %94 = tpu.matmul %92, %93, %cst_56 {dimension_numbers = #tpu.dot_dimension_numbers<[1], [0], [0], [1], [0, 0, 1, 1], [], []>} : vector<104x256xbf16>, vector<256x256xbf16>, vector<104x256xf32> -> vector<104x256xf32>
    %c0_57 = arith.constant 0 : index
    %c0_58 = arith.constant 0 : index
    %95 = vector.load %arg20[%c0_57, %c0_58] : memref<1x256xf32, #tpu.memory_space<vmem>>, vector<1x256xf32>
    %96 = vector.broadcast %95 : vector<1x256xf32> to vector<104x256xf32>
    %97 = arith.addf %94, %96 : vector<104x256xf32>
    %cst_59 = arith.constant 0.000000e+00 : f32
    %98 = vector.broadcast %cst_59 : f32 to vector<104x256xf32>
    %99 = arith.maximumf %97, %98 : vector<104x256xf32>
    %100 = arith.truncf %99 : vector<104x256xf32> to vector<104x256xbf16>
    %c0_60 = arith.constant 0 : index
    %c0_61 = arith.constant 0 : index
    %101 = vector.load %arg21[%c0_60, %c0_61] : memref<256x256xbf16, #tpu.memory_space<vmem>>, vector<256x256xbf16>
    %cst_62 = arith.constant dense<0.000000e+00> : vector<104x256xf32>
    %102 = tpu.matmul %100, %101, %cst_62 {dimension_numbers = #tpu.dot_dimension_numbers<[1], [0], [0], [1], [0, 0, 1, 1], [], []>} : vector<104x256xbf16>, vector<256x256xbf16>, vector<104x256xf32> -> vector<104x256xf32>
    %c0_63 = arith.constant 0 : index
    %c0_64 = arith.constant 0 : index
    %103 = vector.load %arg22[%c0_63, %c0_64] : memref<1x256xf32, #tpu.memory_space<vmem>>, vector<1x256xf32>
    %104 = vector.broadcast %103 : vector<1x256xf32> to vector<104x256xf32>
    %105 = arith.addf %102, %104 : vector<104x256xf32>
    %cst_65 = arith.constant 0.000000e+00 : f32
    %106 = vector.broadcast %cst_65 : f32 to vector<104x256xf32>
    %107 = arith.maximumf %105, %106 : vector<104x256xf32>
    %108 = arith.truncf %107 : vector<104x256xf32> to vector<104x256xbf16>
    %c0_66 = arith.constant 0 : index
    %c0_67 = arith.constant 0 : index
    %109 = vector.load %arg23[%c0_66, %c0_67] : memref<256x256xbf16, #tpu.memory_space<vmem>>, vector<256x256xbf16>
    %cst_68 = arith.constant dense<0.000000e+00> : vector<104x256xf32>
    %110 = tpu.matmul %108, %109, %cst_68 {dimension_numbers = #tpu.dot_dimension_numbers<[1], [0], [0], [1], [0, 0, 1, 1], [], []>} : vector<104x256xbf16>, vector<256x256xbf16>, vector<104x256xf32> -> vector<104x256xf32>
    %c0_69 = arith.constant 0 : index
    %c0_70 = arith.constant 0 : index
    %111 = vector.load %arg24[%c0_69, %c0_70] : memref<1x256xf32, #tpu.memory_space<vmem>>, vector<1x256xf32>
    %112 = vector.broadcast %111 : vector<1x256xf32> to vector<104x256xf32>
    %113 = arith.addf %110, %112 : vector<104x256xf32>
    %c0_i32_71 = arith.constant 0 : i32
    %c4_i32 = arith.constant 4 : i32
    %114 = arith.addi %c0_i32_71, %c4_i32 : i32
    %c1_i32_72 = arith.constant 1 : i32
    %115 = scf.for %arg41 = %c0_i32_71 to %114 step %c1_i32_72 iter_args(%arg42 = %113) -> (vector<104x256xf32>)  : i32 {
      %153 = arith.truncf %arg42 : vector<104x256xf32> to vector<104x256xbf16>
      %c0_102 = arith.constant 0 : index
      %c0_103 = arith.constant 0 : index
      %154 = vector.load %arg25[%c0_102, %c0_103] : memref<256x256xbf16, #tpu.memory_space<vmem>>, vector<256x256xbf16>
      %cst_104 = arith.constant dense<0.000000e+00> : vector<104x256xf32>
      %155 = tpu.matmul %153, %154, %cst_104 {dimension_numbers = #tpu.dot_dimension_numbers<[1], [0], [0], [1], [0, 0, 1, 1], [], []>} : vector<104x256xbf16>, vector<256x256xbf16>, vector<104x256xf32> -> vector<104x256xf32>
      %156 = arith.addf %155, %76 : vector<104x256xf32>
      %cst_105 = arith.constant 0.000000e+00 : f32
      %157 = vector.broadcast %cst_105 : f32 to vector<104x256xf32>
      %158 = arith.maximumf %156, %157 : vector<104x256xf32>
      %159 = arith.truncf %158 : vector<104x256xf32> to vector<104x256xbf16>
      %c0_106 = arith.constant 0 : index
      %c0_107 = arith.constant 0 : index
      %160 = vector.load %arg26[%c0_106, %c0_107] : memref<256x256xbf16, #tpu.memory_space<vmem>>, vector<256x256xbf16>
      %cst_108 = arith.constant dense<0.000000e+00> : vector<104x256xf32>
      %161 = tpu.matmul %159, %160, %cst_108 {dimension_numbers = #tpu.dot_dimension_numbers<[1], [0], [0], [1], [0, 0, 1, 1], [], []>} : vector<104x256xbf16>, vector<256x256xbf16>, vector<104x256xf32> -> vector<104x256xf32>
      %c0_109 = arith.constant 0 : index
      %c0_110 = arith.constant 0 : index
      %162 = vector.load %arg27[%c0_109, %c0_110] : memref<1x256xf32, #tpu.memory_space<vmem>>, vector<1x256xf32>
      %163 = vector.broadcast %162 : vector<1x256xf32> to vector<104x256xf32>
      %164 = arith.addf %161, %163 : vector<104x256xf32>
      %165 = arith.truncf %164 : vector<104x256xf32> to vector<104x256xbf16>
      %c0_111 = arith.constant 0 : index
      %c0_112 = arith.constant 0 : index
      %166 = vector.load %arg25[%c0_111, %c0_112] : memref<256x256xbf16, #tpu.memory_space<vmem>>, vector<256x256xbf16>
      %cst_113 = arith.constant dense<0.000000e+00> : vector<104x256xf32>
      %167 = tpu.matmul %165, %166, %cst_113 {dimension_numbers = #tpu.dot_dimension_numbers<[1], [0], [0], [1], [0, 0, 1, 1], [], []>} : vector<104x256xbf16>, vector<256x256xbf16>, vector<104x256xf32> -> vector<104x256xf32>
      %168 = arith.addf %167, %76 : vector<104x256xf32>
      %cst_114 = arith.constant 0.000000e+00 : f32
      %169 = vector.broadcast %cst_114 : f32 to vector<104x256xf32>
      %170 = arith.maximumf %168, %169 : vector<104x256xf32>
      %171 = arith.truncf %170 : vector<104x256xf32> to vector<104x256xbf16>
      %c0_115 = arith.constant 0 : index
      %c0_116 = arith.constant 0 : index
      %172 = vector.load %arg26[%c0_115, %c0_116] : memref<256x256xbf16, #tpu.memory_space<vmem>>, vector<256x256xbf16>
      %cst_117 = arith.constant dense<0.000000e+00> : vector<104x256xf32>
      %173 = tpu.matmul %171, %172, %cst_117 {dimension_numbers = #tpu.dot_dimension_numbers<[1], [0], [0], [1], [0, 0, 1, 1], [], []>} : vector<104x256xbf16>, vector<256x256xbf16>, vector<104x256xf32> -> vector<104x256xf32>
      %c0_118 = arith.constant 0 : index
      %c0_119 = arith.constant 0 : index
      %174 = vector.load %arg27[%c0_118, %c0_119] : memref<1x256xf32, #tpu.memory_space<vmem>>, vector<1x256xf32>
      %175 = vector.broadcast %174 : vector<1x256xf32> to vector<104x256xf32>
      %176 = arith.addf %173, %175 : vector<104x256xf32>
      %177 = arith.addf %176, %arg42 : vector<104x256xf32>
      scf.yield %177 : vector<104x256xf32>
    }
    %116 = arith.truncf %115 : vector<104x256xf32> to vector<104x256xbf16>
    %c0_73 = arith.constant 0 : index
    %c0_74 = arith.constant 0 : index
    %117 = vector.load %arg28[%c0_73, %c0_74] : memref<256x256xbf16, #tpu.memory_space<vmem>>, vector<256x256xbf16>
    %cst_75 = arith.constant dense<0.000000e+00> : vector<104x256xf32>
    %118 = tpu.matmul %116, %117, %cst_75 {dimension_numbers = #tpu.dot_dimension_numbers<[1], [0], [0], [1], [0, 0, 1, 1], [], []>} : vector<104x256xbf16>, vector<256x256xbf16>, vector<104x256xf32> -> vector<104x256xf32>
    %119 = arith.addf %118, %77 : vector<104x256xf32>
    %cst_76 = arith.constant 0.000000e+00 : f32
    %120 = vector.broadcast %cst_76 : f32 to vector<104x256xf32>
    %121 = arith.maximumf %119, %120 : vector<104x256xf32>
    %122 = arith.truncf %121 : vector<104x256xf32> to vector<104x256xbf16>
    %c0_77 = arith.constant 0 : index
    %c0_78 = arith.constant 0 : index
    %123 = vector.load %arg29[%c0_77, %c0_78] : memref<256x256xbf16, #tpu.memory_space<vmem>>, vector<256x256xbf16>
    %cst_79 = arith.constant dense<0.000000e+00> : vector<104x256xf32>
    %124 = tpu.matmul %122, %123, %cst_79 {dimension_numbers = #tpu.dot_dimension_numbers<[1], [0], [0], [1], [0, 0, 1, 1], [], []>} : vector<104x256xbf16>, vector<256x256xbf16>, vector<104x256xf32> -> vector<104x256xf32>
    %c0_80 = arith.constant 0 : index
    %c0_81 = arith.constant 0 : index
    %125 = vector.load %arg30[%c0_80, %c0_81] : memref<1x256xf32, #tpu.memory_space<vmem>>, vector<1x256xf32>
    %126 = vector.broadcast %125 : vector<1x256xf32> to vector<104x256xf32>
    %127 = arith.addf %124, %126 : vector<104x256xf32>
    %cst_82 = arith.constant 0.000000e+00 : f32
    %128 = vector.broadcast %cst_82 : f32 to vector<104x256xf32>
    %129 = arith.maximumf %127, %128 : vector<104x256xf32>
    %130 = arith.truncf %129 : vector<104x256xf32> to vector<104x256xbf16>
    %c0_83 = arith.constant 0 : index
    %c0_84 = arith.constant 0 : index
    %131 = vector.load %arg31[%c0_83, %c0_84] : memref<256x256xbf16, #tpu.memory_space<vmem>>, vector<256x256xbf16>
    %cst_85 = arith.constant dense<0.000000e+00> : vector<104x256xf32>
    %132 = tpu.matmul %130, %131, %cst_85 {dimension_numbers = #tpu.dot_dimension_numbers<[1], [0], [0], [1], [0, 0, 1, 1], [], []>} : vector<104x256xbf16>, vector<256x256xbf16>, vector<104x256xf32> -> vector<104x256xf32>
    %c0_86 = arith.constant 0 : index
    %c0_87 = arith.constant 0 : index
    %133 = vector.load %arg32[%c0_86, %c0_87] : memref<1x256xf32, #tpu.memory_space<vmem>>, vector<1x256xf32>
    %134 = vector.broadcast %133 : vector<1x256xf32> to vector<104x256xf32>
    %135 = arith.addf %132, %134 : vector<104x256xf32>
    %cst_88 = arith.constant 0.000000e+00 : f32
    %136 = vector.broadcast %cst_88 : f32 to vector<104x256xf32>
    %137 = arith.maximumf %135, %136 : vector<104x256xf32>
    %138 = arith.truncf %137 : vector<104x256xf32> to vector<104x256xbf16>
    %c0_89 = arith.constant 0 : index
    %c0_90 = arith.constant 0 : index
    %139 = vector.load %arg33[%c0_89, %c0_90] : memref<256x256xbf16, #tpu.memory_space<vmem>>, vector<256x256xbf16>
    %cst_91 = arith.constant dense<0.000000e+00> : vector<104x256xf32>
    %140 = tpu.matmul %138, %139, %cst_91 {dimension_numbers = #tpu.dot_dimension_numbers<[1], [0], [0], [1], [0, 0, 1, 1], [], []>} : vector<104x256xbf16>, vector<256x256xbf16>, vector<104x256xf32> -> vector<104x256xf32>
    %c0_92 = arith.constant 0 : index
    %c0_93 = arith.constant 0 : index
    %141 = vector.load %arg34[%c0_92, %c0_93] : memref<1x256xf32, #tpu.memory_space<vmem>>, vector<1x256xf32>
    %142 = vector.broadcast %141 : vector<1x256xf32> to vector<104x256xf32>
    %143 = arith.addf %140, %142 : vector<104x256xf32>
    %cst_94 = arith.constant 0.000000e+00 : f32
    %144 = vector.broadcast %cst_94 : f32 to vector<104x256xf32>
    %145 = arith.maximumf %143, %144 : vector<104x256xf32>
    %146 = arith.truncf %145 : vector<104x256xf32> to vector<104x256xbf16>
    %c0_95 = arith.constant 0 : index
    %c0_96 = arith.constant 0 : index
    %147 = vector.load %arg35[%c0_95, %c0_96] : memref<256x256xbf16, #tpu.memory_space<vmem>>, vector<256x256xbf16>
    %cst_97 = arith.constant dense<0.000000e+00> : vector<104x256xf32>
    %148 = tpu.matmul %146, %147, %cst_97 {dimension_numbers = #tpu.dot_dimension_numbers<[1], [0], [0], [1], [0, 0, 1, 1], [], []>} : vector<104x256xbf16>, vector<256x256xbf16>, vector<104x256xf32> -> vector<104x256xf32>
    %c0_98 = arith.constant 0 : index
    %c0_99 = arith.constant 0 : index
    %149 = vector.load %arg36[%c0_98, %c0_99] : memref<1x256xf32, #tpu.memory_space<vmem>>, vector<1x256xf32>
    %150 = vector.broadcast %149 : vector<1x256xf32> to vector<104x256xf32>
    %151 = arith.addf %148, %150 : vector<104x256xf32>
    %c0_100 = arith.constant 0 : index
    %c0_101 = arith.constant 0 : index
    %152 = vector.load %arg38[%c0_100, %c0_101] : memref<104x256xf32, #tpu.memory_space<vmem>>, vector<104x256xf32>
    tpu.vector_store %arg38[%c0_100, %c0_101], %151 {strides = array<i32>} : memref<104x256xf32, #tpu.memory_space<vmem>>, vector<104x256xf32>,
    return
  }
  func.func @transform_0(%arg0: i32, %arg1: memref<1xi32, #tpu.memory_space<smem>>) -> (i32, i32) {
    %c0_i32 = arith.constant 0 : i32
    %c0_i32_0 = arith.constant 0 : i32
    return %arg0, %c0_i32 : i32, i32
  }
  func.func @transform_1(%arg0: i32, %arg1: memref<1xi32, #tpu.memory_space<smem>>) -> (i32, i32) {
    %c0_i32 = arith.constant 0 : i32
    %c0_i32_0 = arith.constant 0 : i32
    return %arg0, %c0_i32 : i32, i32
  }
  func.func @transform_2(%arg0: i32, %arg1: memref<1xi32, #tpu.memory_space<smem>>) -> (i32, i32) {
    %c0_i32 = arith.constant 0 : i32
    %c0_i32_0 = arith.constant 0 : i32
    return %arg0, %c0_i32 : i32, i32
  }
  func.func @transform_3(%arg0: i32, %arg1: memref<1xi32, #tpu.memory_space<smem>>) -> (i32, i32) {
    %c0_i32 = arith.constant 0 : i32
    %c0_i32_0 = arith.constant 0 : i32
    %c0_i32_1 = arith.constant 0 : i32
    return %c0_i32, %c0_i32_0 : i32, i32
  }
  func.func @transform_4(%arg0: i32, %arg1: memref<1xi32, #tpu.memory_space<smem>>) -> (i32, i32) {
    %c0_i32 = arith.constant 0 : i32
    %c0_i32_0 = arith.constant 0 : i32
    %c0_i32_1 = arith.constant 0 : i32
    return %c0_i32, %c0_i32_0 : i32, i32
  }
  func.func @transform_5(%arg0: i32, %arg1: memref<1xi32, #tpu.memory_space<smem>>) -> (i32, i32) {
    %c0_i32 = arith.constant 0 : i32
    %c0_i32_0 = arith.constant 0 : i32
    %c0_i32_1 = arith.constant 0 : i32
    return %c0_i32, %c0_i32_0 : i32, i32
  }
  func.func @transform_6(%arg0: i32, %arg1: memref<1xi32, #tpu.memory_space<smem>>) -> (i32, i32) {
    %c0_i32 = arith.constant 0 : i32
    %c0_i32_0 = arith.constant 0 : i32
    %c0_i32_1 = arith.constant 0 : i32
    return %c0_i32, %c0_i32_0 : i32, i32
  }
  func.func @transform_7(%arg0: i32, %arg1: memref<1xi32, #tpu.memory_space<smem>>) -> (i32, i32) {
    %c0_i32 = arith.constant 0 : i32
    %c0_i32_0 = arith.constant 0 : i32
    %c0_i32_1 = arith.constant 0 : i32
    return %c0_i32, %c0_i32_0 : i32, i32
  }
  func.func @transform_8(%arg0: i32, %arg1: memref<1xi32, #tpu.memory_space<smem>>) -> (i32, i32) {
    %c0_i32 = arith.constant 0 : i32
    %c0_i32_0 = arith.constant 0 : i32
    %c0_i32_1 = arith.constant 0 : i32
    return %c0_i32, %c0_i32_0 : i32, i32
  }
  func.func @transform_9(%arg0: i32, %arg1: memref<1xi32, #tpu.memory_space<smem>>) -> (i32, i32) {
    %c0_i32 = arith.constant 0 : i32
    %c0_i32_0 = arith.constant 0 : i32
    %c0_i32_1 = arith.constant 0 : i32
    return %c0_i32, %c0_i32_0 : i32, i32
  }
  func.func @transform_10(%arg0: i32, %arg1: memref<1xi32, #tpu.memory_space<smem>>) -> (i32, i32) {
    %c0_i32 = arith.constant 0 : i32
    %c0_i32_0 = arith.constant 0 : i32
    %c0_i32_1 = arith.constant 0 : i32
    return %c0_i32, %c0_i32_0 : i32, i32
  }
  func.func @transform_11(%arg0: i32, %arg1: memref<1xi32, #tpu.memory_space<smem>>) -> (i32, i32) {
    %c0_i32 = arith.constant 0 : i32
    %c0_i32_0 = arith.constant 0 : i32
    %c0_i32_1 = arith.constant 0 : i32
    return %c0_i32, %c0_i32_0 : i32, i32
  }
  func.func @transform_12(%arg0: i32, %arg1: memref<1xi32, #tpu.memory_space<smem>>) -> (i32, i32) {
    %c0_i32 = arith.constant 0 : i32
    %c0_i32_0 = arith.constant 0 : i32
    %c0_i32_1 = arith.constant 0 : i32
    return %c0_i32, %c0_i32_0 : i32, i32
  }
  func.func @transform_13(%arg0: i32, %arg1: memref<1xi32, #tpu.memory_space<smem>>) -> (i32, i32) {
    %c0_i32 = arith.constant 0 : i32
    %c0_i32_0 = arith.constant 0 : i32
    %c0_i32_1 = arith.constant 0 : i32
    return %c0_i32, %c0_i32_0 : i32, i32
  }
  func.func @transform_14(%arg0: i32, %arg1: memref<1xi32, #tpu.memory_space<smem>>) -> (i32, i32) {
    %c0_i32 = arith.constant 0 : i32
    %c0_i32_0 = arith.constant 0 : i32
    %c0_i32_1 = arith.constant 0 : i32
    return %c0_i32, %c0_i32_0 : i32, i32
  }
  func.func @transform_15(%arg0: i32, %arg1: memref<1xi32, #tpu.memory_space<smem>>) -> (i32, i32) {
    %c0_i32 = arith.constant 0 : i32
    %c0_i32_0 = arith.constant 0 : i32
    %c0_i32_1 = arith.constant 0 : i32
    return %c0_i32, %c0_i32_0 : i32, i32
  }
  func.func @transform_16(%arg0: i32, %arg1: memref<1xi32, #tpu.memory_space<smem>>) -> (i32, i32) {
    %c0_i32 = arith.constant 0 : i32
    %c0_i32_0 = arith.constant 0 : i32
    %c0_i32_1 = arith.constant 0 : i32
    return %c0_i32, %c0_i32_0 : i32, i32
  }
  func.func @transform_17(%arg0: i32, %arg1: memref<1xi32, #tpu.memory_space<smem>>) -> (i32, i32) {
    %c0_i32 = arith.constant 0 : i32
    %c0_i32_0 = arith.constant 0 : i32
    %c0_i32_1 = arith.constant 0 : i32
    return %c0_i32, %c0_i32_0 : i32, i32
  }
  func.func @transform_18(%arg0: i32, %arg1: memref<1xi32, #tpu.memory_space<smem>>) -> (i32, i32) {
    %c0_i32 = arith.constant 0 : i32
    %c0_i32_0 = arith.constant 0 : i32
    %c0_i32_1 = arith.constant 0 : i32
    return %c0_i32, %c0_i32_0 : i32, i32
  }
  func.func @transform_19(%arg0: i32, %arg1: memref<1xi32, #tpu.memory_space<smem>>) -> (i32, i32) {
    %c0_i32 = arith.constant 0 : i32
    %c0_i32_0 = arith.constant 0 : i32
    %c0_i32_1 = arith.constant 0 : i32
    return %c0_i32, %c0_i32_0 : i32, i32
  }
  func.func @transform_20(%arg0: i32, %arg1: memref<1xi32, #tpu.memory_space<smem>>) -> (i32, i32) {
    %c0_i32 = arith.constant 0 : i32
    %c0_i32_0 = arith.constant 0 : i32
    %c0_i32_1 = arith.constant 0 : i32
    return %c0_i32, %c0_i32_0 : i32, i32
  }
  func.func @transform_21(%arg0: i32, %arg1: memref<1xi32, #tpu.memory_space<smem>>) -> (i32, i32) {
    %c0_i32 = arith.constant 0 : i32
    %c0_i32_0 = arith.constant 0 : i32
    %c0_i32_1 = arith.constant 0 : i32
    return %c0_i32, %c0_i32_0 : i32, i32
  }
  func.func @transform_22(%arg0: i32, %arg1: memref<1xi32, #tpu.memory_space<smem>>) -> (i32, i32) {
    %c0_i32 = arith.constant 0 : i32
    %c0_i32_0 = arith.constant 0 : i32
    %c0_i32_1 = arith.constant 0 : i32
    return %c0_i32, %c0_i32_0 : i32, i32
  }
  func.func @transform_23(%arg0: i32, %arg1: memref<1xi32, #tpu.memory_space<smem>>) -> (i32, i32) {
    %c0_i32 = arith.constant 0 : i32
    %c0_i32_0 = arith.constant 0 : i32
    %c0_i32_1 = arith.constant 0 : i32
    return %c0_i32, %c0_i32_0 : i32, i32
  }
  func.func @transform_24(%arg0: i32, %arg1: memref<1xi32, #tpu.memory_space<smem>>) -> (i32, i32) {
    %c0_i32 = arith.constant 0 : i32
    %c0_i32_0 = arith.constant 0 : i32
    %c0_i32_1 = arith.constant 0 : i32
    return %c0_i32, %c0_i32_0 : i32, i32
  }
  func.func @transform_25(%arg0: i32, %arg1: memref<1xi32, #tpu.memory_space<smem>>) -> (i32, i32) {
    %c0_i32 = arith.constant 0 : i32
    %c0_i32_0 = arith.constant 0 : i32
    %c0_i32_1 = arith.constant 0 : i32
    return %c0_i32, %c0_i32_0 : i32, i32
  }
  func.func @transform_26(%arg0: i32, %arg1: memref<1xi32, #tpu.memory_space<smem>>) -> (i32, i32) {
    %c0_i32 = arith.constant 0 : i32
    %c0_i32_0 = arith.constant 0 : i32
    %c0_i32_1 = arith.constant 0 : i32
    return %c0_i32, %c0_i32_0 : i32, i32
  }
  func.func @transform_27(%arg0: i32, %arg1: memref<1xi32, #tpu.memory_space<smem>>) -> (i32, i32) {
    %c0_i32 = arith.constant 0 : i32
    %c0_i32_0 = arith.constant 0 : i32
    %c0_i32_1 = arith.constant 0 : i32
    return %c0_i32, %c0_i32_0 : i32, i32
  }
  func.func @transform_28(%arg0: i32, %arg1: memref<1xi32, #tpu.memory_space<smem>>) -> (i32, i32) {
    %c0_i32 = arith.constant 0 : i32
    %c0_i32_0 = arith.constant 0 : i32
    %c0_i32_1 = arith.constant 0 : i32
    return %c0_i32, %c0_i32_0 : i32, i32
  }
  func.func @transform_29(%arg0: i32, %arg1: memref<1xi32, #tpu.memory_space<smem>>) -> (i32, i32) {
    %c0_i32 = arith.constant 0 : i32
    %c0_i32_0 = arith.constant 0 : i32
    %c0_i32_1 = arith.constant 0 : i32
    return %c0_i32, %c0_i32_0 : i32, i32
  }
  func.func @transform_30(%arg0: i32, %arg1: memref<1xi32, #tpu.memory_space<smem>>) -> (i32, i32) {
    %c0_i32 = arith.constant 0 : i32
    %c0_i32_0 = arith.constant 0 : i32
    %c0_i32_1 = arith.constant 0 : i32
    return %c0_i32, %c0_i32_0 : i32, i32
  }
  func.func @transform_31(%arg0: i32, %arg1: memref<1xi32, #tpu.memory_space<smem>>) -> (i32, i32) {
    %c0_i32 = arith.constant 0 : i32
    %c0_i32_0 = arith.constant 0 : i32
    %c0_i32_1 = arith.constant 0 : i32
    return %c0_i32, %c0_i32_0 : i32, i32
  }
  func.func @transform_32(%arg0: i32, %arg1: memref<1xi32, #tpu.memory_space<smem>>) -> (i32, i32) {
    %c0_i32 = arith.constant 0 : i32
    %c0_i32_0 = arith.constant 0 : i32
    %c0_i32_1 = arith.constant 0 : i32
    return %c0_i32, %c0_i32_0 : i32, i32
  }
  func.func @transform_33(%arg0: i32, %arg1: memref<1xi32, #tpu.memory_space<smem>>) -> (i32, i32) {
    %c0_i32 = arith.constant 0 : i32
    %c0_i32_0 = arith.constant 0 : i32
    %c0_i32_1 = arith.constant 0 : i32
    return %c0_i32, %c0_i32_0 : i32, i32
  }
  func.func @transform_34(%arg0: i32, %arg1: memref<1xi32, #tpu.memory_space<smem>>) -> (i32, i32) {
    %c0_i32 = arith.constant 0 : i32
    %c0_i32_0 = arith.constant 0 : i32
    %c0_i32_1 = arith.constant 0 : i32
    return %c0_i32, %c0_i32_0 : i32, i32
  }
  func.func @transform_35(%arg0: i32, %arg1: memref<1xi32, #tpu.memory_space<smem>>) -> (i32, i32) {
    %c0_i32 = arith.constant 0 : i32
    %c0_i32_0 = arith.constant 0 : i32
    return %arg0, %c0_i32 : i32, i32
  }
  func.func @transform_36(%arg0: i32, %arg1: memref<1xi32, #tpu.memory_space<smem>>) -> (i32, i32) {
    %c0_i32 = arith.constant 0 : i32
    %c0_i32_0 = arith.constant 0 : i32
    return %arg0, %c0_i32 : i32, i32
  }
  func.func @transform_37(%arg0: i32, %arg1: memref<1xi32, #tpu.memory_space<smem>>) -> (i32, i32) {
    %c0_i32 = arith.constant 0 : i32
    %c0_i32_0 = arith.constant 0 : i32
    return %arg0, %c0_i32 : i32, i32
  }
  func.func @transform_38(%arg0: i32, %arg1: memref<1xi32, #tpu.memory_space<smem>>) -> (i32, i32) {
    %c0_i32 = arith.constant 0 : i32
    %c0_i32_0 = arith.constant 0 : i32
    return %arg0, %c0_i32 : i32, i32
  }
}

module attributes {stable_mosaic.version = 11 : i64} {
  func.func @icm_tail_b_kernel(%arg0: i32, %arg1: memref<1xi32, #tpu.memory_space<smem>>, %arg2: memref<104x256xf32, #tpu.memory_space<vmem>>, %arg3: memref<1x256xf32, #tpu.memory_space<vmem>>, %arg4: memref<1x256xf32, #tpu.memory_space<vmem>>, %arg5: memref<1x256xf32, #tpu.memory_space<vmem>>, %arg6: memref<1x256xf32, #tpu.memory_space<vmem>>, %arg7: memref<256x128xbf16, #tpu.memory_space<vmem>>, %arg8: memref<1x128xf32, #tpu.memory_space<vmem>>, %arg9: memref<104x128xf32, #tpu.memory_space<vmem>>) attributes {dimension_semantics = [#tpu.dimension_semantics<parallel>], iteration_bounds = array<i64: 2>, scalar_prefetch = 1 : i64, scratch_operands = 0 : i64, tpu.core_type = #tpu.core_type<tc>, window_params = [{transform_indices = @transform_0, window_bounds = array<i64: 104, 256>}, {pipeline_mode = #tpu.pipeline_mode<synchronous>, transform_indices = @transform_1, window_bounds = array<i64: 1, 256>}, {pipeline_mode = #tpu.pipeline_mode<synchronous>, transform_indices = @transform_2, window_bounds = array<i64: 1, 256>}, {pipeline_mode = #tpu.pipeline_mode<synchronous>, transform_indices = @transform_3, window_bounds = array<i64: 1, 256>}, {pipeline_mode = #tpu.pipeline_mode<synchronous>, transform_indices = @transform_4, window_bounds = array<i64: 1, 256>}, {pipeline_mode = #tpu.pipeline_mode<synchronous>, transform_indices = @transform_5, window_bounds = array<i64: 256, 128>}, {pipeline_mode = #tpu.pipeline_mode<synchronous>, transform_indices = @transform_6, window_bounds = array<i64: 1, 128>}, {transform_indices = @transform_7, window_bounds = array<i64: 104, 128>}]} {
    %c0 = arith.constant 0 : index
    %c0_0 = arith.constant 0 : index
    %0 = vector.load %arg2[%c0, %c0_0] : memref<104x256xf32, #tpu.memory_space<vmem>>, vector<104x256xf32>
    %c0_1 = arith.constant 0 : index
    %c0_2 = arith.constant 0 : index
    %1 = vector.load %arg3[%c0_1, %c0_2] : memref<1x256xf32, #tpu.memory_space<vmem>>, vector<1x256xf32>
    %2 = vector.broadcast %1 : vector<1x256xf32> to vector<104x256xf32>
    %3 = arith.subf %0, %2 : vector<104x256xf32>
    %c0_3 = arith.constant 0 : index
    %c0_4 = arith.constant 0 : index
    %4 = vector.load %arg4[%c0_3, %c0_4] : memref<1x256xf32, #tpu.memory_space<vmem>>, vector<1x256xf32>
    %5 = vector.broadcast %4 : vector<1x256xf32> to vector<104x256xf32>
    %6 = arith.mulf %3, %5 : vector<104x256xf32>
    %c0_5 = arith.constant 0 : index
    %c0_6 = arith.constant 0 : index
    %7 = vector.load %arg5[%c0_5, %c0_6] : memref<1x256xf32, #tpu.memory_space<vmem>>, vector<1x256xf32>
    %8 = vector.broadcast %7 : vector<1x256xf32> to vector<104x256xf32>
    %9 = arith.mulf %6, %8 : vector<104x256xf32>
    %c0_7 = arith.constant 0 : index
    %c0_8 = arith.constant 0 : index
    %10 = vector.load %arg6[%c0_7, %c0_8] : memref<1x256xf32, #tpu.memory_space<vmem>>, vector<1x256xf32>
    %11 = vector.broadcast %10 : vector<1x256xf32> to vector<104x256xf32>
    %12 = arith.addf %9, %11 : vector<104x256xf32>
    %cst = arith.constant 0.000000e+00 : f32
    %13 = vector.broadcast %cst : f32 to vector<104x256xf32>
    %14 = arith.maximumf %12, %13 : vector<104x256xf32>
    %15 = arith.truncf %14 : vector<104x256xf32> to vector<104x256xbf16>
    %c0_9 = arith.constant 0 : index
    %c0_10 = arith.constant 0 : index
    %16 = vector.load %arg7[%c0_9, %c0_10] : memref<256x128xbf16, #tpu.memory_space<vmem>>, vector<256x128xbf16>
    %cst_11 = arith.constant dense<0.000000e+00> : vector<104x128xf32>
    %17 = tpu.matmul %15, %16, %cst_11 {dimension_numbers = #tpu.dot_dimension_numbers<[1], [0], [0], [1], [0, 0, 1, 1], [], []>} : vector<104x256xbf16>, vector<256x128xbf16>, vector<104x128xf32> -> vector<104x128xf32>
    %c0_12 = arith.constant 0 : index
    %c0_13 = arith.constant 0 : index
    %18 = vector.load %arg8[%c0_12, %c0_13] : memref<1x128xf32, #tpu.memory_space<vmem>>, vector<1x128xf32>
    %19 = vector.broadcast %18 : vector<1x128xf32> to vector<104x128xf32>
    %20 = arith.addf %17, %19 : vector<104x128xf32>
    %c0_14 = arith.constant 0 : index
    %c0_15 = arith.constant 0 : index
    %21 = vector.load %arg9[%c0_14, %c0_15] : memref<104x128xf32, #tpu.memory_space<vmem>>, vector<104x128xf32>
    tpu.vector_store %arg9[%c0_14, %c0_15], %20 {strides = array<i32>} : memref<104x128xf32, #tpu.memory_space<vmem>>, vector<104x128xf32>,
    return
  }
  func.func @transform_0(%arg0: i32, %arg1: memref<1xi32, #tpu.memory_space<smem>>) -> (i32, i32) {
    %c0_i32 = arith.constant 0 : i32
    %c0_i32_0 = arith.constant 0 : i32
    return %arg0, %c0_i32 : i32, i32
  }
  func.func @transform_1(%arg0: i32, %arg1: memref<1xi32, #tpu.memory_space<smem>>) -> (i32, i32) {
    %c0_i32 = arith.constant 0 : i32
    %c0_i32_0 = arith.constant 0 : i32
    %c0_i32_1 = arith.constant 0 : i32
    return %c0_i32, %c0_i32_0 : i32, i32
  }
  func.func @transform_2(%arg0: i32, %arg1: memref<1xi32, #tpu.memory_space<smem>>) -> (i32, i32) {
    %c0_i32 = arith.constant 0 : i32
    %c0_i32_0 = arith.constant 0 : i32
    %c0_i32_1 = arith.constant 0 : i32
    return %c0_i32, %c0_i32_0 : i32, i32
  }
  func.func @transform_3(%arg0: i32, %arg1: memref<1xi32, #tpu.memory_space<smem>>) -> (i32, i32) {
    %c0_i32 = arith.constant 0 : i32
    %c0_i32_0 = arith.constant 0 : i32
    %c0_i32_1 = arith.constant 0 : i32
    return %c0_i32, %c0_i32_0 : i32, i32
  }
  func.func @transform_4(%arg0: i32, %arg1: memref<1xi32, #tpu.memory_space<smem>>) -> (i32, i32) {
    %c0_i32 = arith.constant 0 : i32
    %c0_i32_0 = arith.constant 0 : i32
    %c0_i32_1 = arith.constant 0 : i32
    return %c0_i32, %c0_i32_0 : i32, i32
  }
  func.func @transform_5(%arg0: i32, %arg1: memref<1xi32, #tpu.memory_space<smem>>) -> (i32, i32) {
    %c0_i32 = arith.constant 0 : i32
    %c0_i32_0 = arith.constant 0 : i32
    %c0_i32_1 = arith.constant 0 : i32
    return %c0_i32, %c0_i32_0 : i32, i32
  }
  func.func @transform_6(%arg0: i32, %arg1: memref<1xi32, #tpu.memory_space<smem>>) -> (i32, i32) {
    %c0_i32 = arith.constant 0 : i32
    %c0_i32_0 = arith.constant 0 : i32
    %c0_i32_1 = arith.constant 0 : i32
    return %c0_i32, %c0_i32_0 : i32, i32
  }
  func.func @transform_7(%arg0: i32, %arg1: memref<1xi32, #tpu.memory_space<smem>>) -> (i32, i32) {
    %c0_i32 = arith.constant 0 : i32
    %c0_i32_0 = arith.constant 0 : i32
    return %arg0, %c0_i32 : i32, i32
  }
}

module attributes {stable_mosaic.version = 11 : i64} {
  func.func @icm_tail_a_kernel(%arg0: i32, %arg1: memref<1xi32, #tpu.memory_space<smem>>, %arg2: memref<104x256xf32, #tpu.memory_space<vmem>>, %arg3: memref<1x256xf32, #tpu.memory_space<vmem>>, %arg4: memref<1x256xf32, #tpu.memory_space<vmem>>, %arg5: memref<1x256xf32, #tpu.memory_space<vmem>>, %arg6: memref<1x256xf32, #tpu.memory_space<vmem>>, %arg7: memref<256x256xbf16, #tpu.memory_space<vmem>>, %arg8: memref<1x256xf32, #tpu.memory_space<vmem>>, %arg9: memref<104x256xf32, #tpu.memory_space<vmem>>, %arg10: memref<8x256xf32, #tpu.memory_space<vmem>>) attributes {dimension_semantics = [#tpu.dimension_semantics<parallel>], iteration_bounds = array<i64: 2>, scalar_prefetch = 1 : i64, scratch_operands = 0 : i64, tpu.core_type = #tpu.core_type<tc>, window_params = [{transform_indices = @transform_0, window_bounds = array<i64: 104, 256>}, {pipeline_mode = #tpu.pipeline_mode<synchronous>, transform_indices = @transform_1, window_bounds = array<i64: 1, 256>}, {pipeline_mode = #tpu.pipeline_mode<synchronous>, transform_indices = @transform_2, window_bounds = array<i64: 1, 256>}, {pipeline_mode = #tpu.pipeline_mode<synchronous>, transform_indices = @transform_3, window_bounds = array<i64: 1, 256>}, {pipeline_mode = #tpu.pipeline_mode<synchronous>, transform_indices = @transform_4, window_bounds = array<i64: 1, 256>}, {pipeline_mode = #tpu.pipeline_mode<synchronous>, transform_indices = @transform_5, window_bounds = array<i64: 256, 256>}, {pipeline_mode = #tpu.pipeline_mode<synchronous>, transform_indices = @transform_6, window_bounds = array<i64: 1, 256>}, {transform_indices = @transform_7, window_bounds = array<i64: 104, 256>}, {transform_indices = @transform_8, window_bounds = array<i64: 8, 256>}]} {
    %c0 = arith.constant 0 : index
    %c0_0 = arith.constant 0 : index
    %0 = vector.load %arg2[%c0, %c0_0] : memref<104x256xf32, #tpu.memory_space<vmem>>, vector<104x256xf32>
    %c0_1 = arith.constant 0 : index
    %c0_2 = arith.constant 0 : index
    %1 = vector.load %arg3[%c0_1, %c0_2] : memref<1x256xf32, #tpu.memory_space<vmem>>, vector<1x256xf32>
    %2 = vector.broadcast %1 : vector<1x256xf32> to vector<104x256xf32>
    %3 = arith.subf %0, %2 : vector<104x256xf32>
    %c0_3 = arith.constant 0 : index
    %c0_4 = arith.constant 0 : index
    %4 = vector.load %arg4[%c0_3, %c0_4] : memref<1x256xf32, #tpu.memory_space<vmem>>, vector<1x256xf32>
    %5 = vector.broadcast %4 : vector<1x256xf32> to vector<104x256xf32>
    %6 = arith.mulf %3, %5 : vector<104x256xf32>
    %c0_5 = arith.constant 0 : index
    %c0_6 = arith.constant 0 : index
    %7 = vector.load %arg5[%c0_5, %c0_6] : memref<1x256xf32, #tpu.memory_space<vmem>>, vector<1x256xf32>
    %8 = vector.broadcast %7 : vector<1x256xf32> to vector<104x256xf32>
    %9 = arith.mulf %6, %8 : vector<104x256xf32>
    %c0_7 = arith.constant 0 : index
    %c0_8 = arith.constant 0 : index
    %10 = vector.load %arg6[%c0_7, %c0_8] : memref<1x256xf32, #tpu.memory_space<vmem>>, vector<1x256xf32>
    %11 = vector.broadcast %10 : vector<1x256xf32> to vector<104x256xf32>
    %12 = arith.addf %9, %11 : vector<104x256xf32>
    %cst = arith.constant 0.000000e+00 : f32
    %13 = vector.broadcast %cst : f32 to vector<104x256xf32>
    %14 = arith.maximumf %12, %13 : vector<104x256xf32>
    %15 = arith.truncf %14 : vector<104x256xf32> to vector<104x256xbf16>
    %c0_9 = arith.constant 0 : index
    %c0_10 = arith.constant 0 : index
    %16 = vector.load %arg7[%c0_9, %c0_10] : memref<256x256xbf16, #tpu.memory_space<vmem>>, vector<256x256xbf16>
    %cst_11 = arith.constant dense<0.000000e+00> : vector<104x256xf32>
    %17 = tpu.matmul %15, %16, %cst_11 {dimension_numbers = #tpu.dot_dimension_numbers<[1], [0], [0], [1], [0, 0, 1, 1], [], []>} : vector<104x256xbf16>, vector<256x256xbf16>, vector<104x256xf32> -> vector<104x256xf32>
    %c0_12 = arith.constant 0 : index
    %c0_13 = arith.constant 0 : index
    %18 = vector.load %arg8[%c0_12, %c0_13] : memref<1x256xf32, #tpu.memory_space<vmem>>, vector<1x256xf32>
    %19 = vector.broadcast %18 : vector<1x256xf32> to vector<104x256xf32>
    %20 = arith.addf %17, %19 : vector<104x256xf32>
    %c0_14 = arith.constant 0 : index
    %c0_15 = arith.constant 0 : index
    %21 = vector.load %arg9[%c0_14, %c0_15] : memref<104x256xf32, #tpu.memory_space<vmem>>, vector<104x256xf32>
    tpu.vector_store %arg9[%c0_14, %c0_15], %20 {strides = array<i32>} : memref<104x256xf32, #tpu.memory_space<vmem>>, vector<104x256xf32>,
    %c0_16 = arith.constant 0 : index
    %22 = memref.load %arg1[%c0_16] : memref<1xi32, #tpu.memory_space<smem>>
    %c104_i32 = arith.constant 104 : i32
    %23 = arith.muli %arg0, %c104_i32 : i32
    %24 = tpu.iota {dimensions = array<i32: 0>} : vector<104x1xi32>
    %25 = vector.broadcast %23 : i32 to vector<104x1xi32>
    %26 = arith.addi %25, %24 : vector<104x1xi32>
    %27 = vector.broadcast %22 : i32 to vector<104x1xi32>
    %28 = arith.cmpi slt, %26, %27 : vector<104x1xi32>
    %29 = arith.extui %28 : vector<104x1xi1> to vector<104x1xi32>
    %30 = arith.sitofp %29 : vector<104x1xi32> to vector<104x1xf32>
    %31 = vector.broadcast %30 : vector<104x1xf32> to vector<104x256xf32>
    %32 = arith.mulf %20, %31 : vector<104x256xf32>
    %cst_17 = arith.constant dense<0.000000e+00> : vector<256xf32>
    %33 = vector.multi_reduction <add>, %32, %cst_17 [0] : vector<104x256xf32> to vector<256xf32>
    %34 = vector.shape_cast %33 : vector<256xf32> to vector<1x256xf32>
    %35 = arith.mulf %32, %20 : vector<104x256xf32>
    %cst_18 = arith.constant dense<0.000000e+00> : vector<256xf32>
    %36 = vector.multi_reduction <add>, %35, %cst_18 [0] : vector<104x256xf32> to vector<256xf32>
    %37 = vector.shape_cast %36 : vector<256xf32> to vector<1x256xf32>
    %38 = tpu.iota {dimensions = array<i32: 0>} : vector<8x256xi32>
    %c0_i32 = arith.constant 0 : i32
    %39 = vector.broadcast %c0_i32 : i32 to vector<8x256xi32>
    %40 = arith.cmpi eq, %38, %39 : vector<8x256xi32>
    %c1_i32 = arith.constant 1 : i32
    %41 = vector.broadcast %c1_i32 : i32 to vector<8x256xi32>
    %42 = arith.cmpi eq, %38, %41 : vector<8x256xi32>
    %cst_19 = arith.constant 0.000000e+00 : f32
    %43 = vector.shape_cast %37 : vector<1x256xf32> to vector<1x256xf32>
    %44 = vector.broadcast %43 : vector<1x256xf32> to vector<8x256xf32>
    %45 = vector.broadcast %cst_19 : f32 to vector<8x256xf32>
    %46 = arith.select %42, %44, %45 : vector<8x256xi1>, vector<8x256xf32>
    %47 = vector.shape_cast %34 : vector<1x256xf32> to vector<1x256xf32>
    %48 = vector.broadcast %47 : vector<1x256xf32> to vector<8x256xf32>
    %49 = arith.select %40, %48, %46 : vector<8x256xi1>, vector<8x256xf32>
    %c0_20 = arith.constant 0 : index
    %c0_21 = arith.constant 0 : index
    %50 = vector.load %arg10[%c0_20, %c0_21] : memref<8x256xf32, #tpu.memory_space<vmem>>, vector<8x256xf32>
    tpu.vector_store %arg10[%c0_20, %c0_21], %49 {strides = array<i32>} : memref<8x256xf32, #tpu.memory_space<vmem>>, vector<8x256xf32>,
    return
  }
  func.func @transform_0(%arg0: i32, %arg1: memref<1xi32, #tpu.memory_space<smem>>) -> (i32, i32) {
    %c0_i32 = arith.constant 0 : i32
    %c0_i32_0 = arith.constant 0 : i32
    return %arg0, %c0_i32 : i32, i32
  }
  func.func @transform_1(%arg0: i32, %arg1: memref<1xi32, #tpu.memory_space<smem>>) -> (i32, i32) {
    %c0_i32 = arith.constant 0 : i32
    %c0_i32_0 = arith.constant 0 : i32
    %c0_i32_1 = arith.constant 0 : i32
    return %c0_i32, %c0_i32_0 : i32, i32
  }
  func.func @transform_2(%arg0: i32, %arg1: memref<1xi32, #tpu.memory_space<smem>>) -> (i32, i32) {
    %c0_i32 = arith.constant 0 : i32
    %c0_i32_0 = arith.constant 0 : i32
    %c0_i32_1 = arith.constant 0 : i32
    return %c0_i32, %c0_i32_0 : i32, i32
  }
  func.func @transform_3(%arg0: i32, %arg1: memref<1xi32, #tpu.memory_space<smem>>) -> (i32, i32) {
    %c0_i32 = arith.constant 0 : i32
    %c0_i32_0 = arith.constant 0 : i32
    %c0_i32_1 = arith.constant 0 : i32
    return %c0_i32, %c0_i32_0 : i32, i32
  }
  func.func @transform_4(%arg0: i32, %arg1: memref<1xi32, #tpu.memory_space<smem>>) -> (i32, i32) {
    %c0_i32 = arith.constant 0 : i32
    %c0_i32_0 = arith.constant 0 : i32
    %c0_i32_1 = arith.constant 0 : i32
    return %c0_i32, %c0_i32_0 : i32, i32
  }
  func.func @transform_5(%arg0: i32, %arg1: memref<1xi32, #tpu.memory_space<smem>>) -> (i32, i32) {
    %c0_i32 = arith.constant 0 : i32
    %c0_i32_0 = arith.constant 0 : i32
    %c0_i32_1 = arith.constant 0 : i32
    return %c0_i32, %c0_i32_0 : i32, i32
  }
  func.func @transform_6(%arg0: i32, %arg1: memref<1xi32, #tpu.memory_space<smem>>) -> (i32, i32) {
    %c0_i32 = arith.constant 0 : i32
    %c0_i32_0 = arith.constant 0 : i32
    %c0_i32_1 = arith.constant 0 : i32
    return %c0_i32, %c0_i32_0 : i32, i32
  }
  func.func @transform_7(%arg0: i32, %arg1: memref<1xi32, #tpu.memory_space<smem>>) -> (i32, i32) {
    %c0_i32 = arith.constant 0 : i32
    %c0_i32_0 = arith.constant 0 : i32
    return %arg0, %c0_i32 : i32, i32
  }
  func.func @transform_8(%arg0: i32, %arg1: memref<1xi32, #tpu.memory_space<smem>>) -> (i32, i32) {
    %c0_i32 = arith.constant 0 : i32
    %c0_i32_0 = arith.constant 0 : i32
    return %arg0, %c0_i32 : i32, i32
  }
}

</mosaic_0001>

<llo_original>
// kernel: _lambda_.5
$region0: #{_lambda_.5}
  #allocation0 [shape = 'u32[]', space=smem, size = 0x4, offset = 0x4, fixed_abs, tag = 'smem constant byte address 0x4 - core index']
  #allocation1 [shape = 'u32[144,128]{1,0:T(1,128)}', space=vmem, size = 0x12000, scoped, tag = 'internal scratch']
  #allocation2 [shape = 's32[1]{0}', space=sflag, size = 0x4, scoped, tag = 'scoped memory for _lambda_.5']
  #allocation3 [shape = 's32[1]{0:T(128)S(6)}', space=smem, size = 0x200, scoped, tag = 'prefetched SMEM operand 0']
  %s0 = inlined_call_operand.<no memory space> [shape: s32[1], index: 0, kind: input, shape index: {}]
  %s1 = inlined_call_operand.vmem [shape: f32[208,256], index: 1, kind: input, shape index: {}]
  %s2 = inlined_call_operand.vmem [shape: f32[1,256], index: 2, kind: input, shape index: {}]
  %s3 = inlined_call_operand.vmem [shape: f32[1,256], index: 3, kind: input, shape index: {}]
  %s4 = inlined_call_operand.vmem [shape: f32[1,256], index: 4, kind: input, shape index: {}]
  %s5 = inlined_call_operand.vmem [shape: f32[1,256], index: 5, kind: input, shape index: {}]
  %s6 = inlined_call_operand.vmem [shape: bf16[256,128], index: 6, kind: input, shape index: {}]
  %s7 = inlined_call_operand.vmem [shape: f32[1,128], index: 7, kind: input, shape index: {}]
  %s8 = inlined_call_operand.vmem [shape: f32[208,128], index: 8, kind: output, shape index: {}]
  %s9 = sld [smem:[#allocation0]]
  $region61: #{_lambda_.5} parent=0
    _
  %s11 = ssub.s32 1, %s9
  %s12 = scalar_select 0, %s11, %s9
  %13 = sst [smem:[#allocation3]] %s0
  loop: start=0, step=1, limit=4
  $region2: #{_lambda_.5} parent=0 // loop_pre_header
    _
  $region3: #{_lambda_.5} parent=0 // loop_header
    %s15 = sphi 0, %s19
    %p16 = scmp.ge.s32.totalorder %s15, 4
    %s25 = sphi 0, %s27
    %s28 = sphi 0, %s25
    %s29 = sphi 0, %s28
    %s45 = sphi 0, %s29
    %s49 = sphi 0, %s49
    %s51 = sphi 0, %s49
    %s52 = sphi 0, %s51
    %s66 = sphi 0, %s52
    %s70 = sphi 0, %s70
    %s72 = sphi 0, %s70
    %s73 = sphi 0, %s72
    %s87 = sphi 0, %s73
    %s91 = sphi 0, %s91
    %s93 = sphi 0, %s91
    %s94 = sphi 0, %s93
    %s108 = sphi 0, %s94
    %s112 = sphi 0, %s112
    %s114 = sphi 0, %s112
    %s115 = sphi 0, %s114
    %s129 = sphi 0, %s115
    %s133 = sphi 0, %s133
    %s135 = sphi 0, %s133
    %s136 = sphi 0, %s135
    %s150 = sphi 0, %s136
    %s154 = sphi 0, %s154
    %s156 = sphi 0, %s154
    %s157 = sphi 0, %s156
    %s171 = sphi 0, %s157
    %s177 = sphi 0, %s179
    %s180 = sphi 0, %s177
    %s181 = sphi 0, %s180
    %s197 = sphi 0, %s181
  $region4: #{_lambda_.5} parent=0 // loop_header_branch
    %18 = sbr.rel (%p16) target = $region8
  $region5: #{_lambda_.5} parent=0 // loop_body
    %s20 = ssub.s32 %s15, 1
    %s21 = ssub.s32 %s15, 2
    %s22 = sadd.s32 %s15, 1
    %s23 = ssub.s32 %s15, %s22
    %p24 = scmp.eq.s32.totalorder %s23, 0
    %s26 = sadd.s32 %s25, 1
    %s27 = scalar_select %p24, %s25, %s26
    %p30 = pneg %p24
    %p31 = scmp.eq.s32.totalorder %s15, 1
    %p32 = por %p30, %p31
    %p33 = scmp.ne.s32.totalorder %s25, %s28
    %p34 = scmp.eq.s32.totalorder %s15, 0
    %p35 = por %p33, %p34
    %p36 = scmp.ne.s32.totalorder %s25, %s28
    %p37 = scmp.eq.s32.totalorder %s20, 1
    %p38 = por %p36, %p37
    %p39 = scmp.ne.s32.totalorder %s28, %s29
    %p40 = scmp.eq.s32.totalorder %s20, 0
    %p41 = por %p39, %p40
    %p42 = scmp.ne.s32.totalorder %s28, %s29
    %p43 = scmp.eq.s32.totalorder %s21, 1
    %p44 = por %p42, %p43
    %p46 = scmp.ne.s32.totalorder %s29, %s45
    %p47 = scmp.eq.s32.totalorder %s21, 0
    %p48 = por %p46, %p47
    %s50 = sadd.s32 %s49, 1
    %p53 = scmp.eq.s32.totalorder %s15, 1
    %p54 = scmp.ne.s32.totalorder %s49, %s51
    %p55 = scmp.eq.s32.totalorder %s15, 0
    %p56 = por %p54, %p55
    %p57 = scmp.ne.s32.totalorder %s49, %s51
    %p58 = scmp.eq.s32.totalorder %s20, 1
    %p59 = por %p57, %p58
    %p60 = scmp.ne.s32.totalorder %s51, %s52
    %p61 = scmp.eq.s32.totalorder %s20, 0
    %p62 = por %p60, %p61
    %p63 = scmp.ne.s32.totalorder %s51, %s52
    %p64 = scmp.eq.s32.totalorder %s21, 1
    %p65 = por %p63, %p64
    %p67 = scmp.ne.s32.totalorder %s52, %s66
    %p68 = scmp.eq.s32.totalorder %s21, 0
    %p69 = por %p67, %p68
    %s71 = sadd.s32 %s70, 1
    %p74 = scmp.eq.s32.totalorder %s15, 1
    %p75 = scmp.ne.s32.totalorder %s70, %s72
    %p76 = scmp.eq.s32.totalorder %s15, 0
    %p77 = por %p75, %p76
    %p78 = scmp.ne.s32.totalorder %s70, %s72
    %p79 = scmp.eq.s32.totalorder %s20, 1
    %p80 = por %p78, %p79
    %p81 = scmp.ne.s32.totalorder %s72, %s73
    %p82 = scmp.eq.s32.totalorder %s20, 0
    %p83 = por %p81, %p82
    %p84 = scmp.ne.s32.totalorder %s72, %s73
    %p85 = scmp.eq.s32.totalorder %s21, 1
    %p86 = por %p84, %p85
    %p88 = scmp.ne.s32.totalorder %s73, %s87
    %p89 = scmp.eq.s32.totalorder %s21, 0
    %p90 = por %p88, %p89
    %s92 = sadd.s32 %s91, 1
    %p95 = scmp.eq.s32.totalorder %s15, 1
    %p96 = scmp.ne.s32.totalorder %s91, %s93
    %p97 = scmp.eq.s32.totalorder %s15, 0
    %p98 = por %p96, %p97
    %p99 = scmp.ne.s32.totalorder %s91, %s93
    %p100 = scmp.eq.s32.totalorder %s20, 1
    %p101 = por %p99, %p100
    %p102 = scmp.ne.s32.totalorder %s93, %s94
    %p103 = scmp.eq.s32.totalorder %s20, 0
    %p104 = por %p102, %p103
    %p105 = scmp.ne.s32.totalorder %s93, %s94
    %p106 = scmp.eq.s32.totalorder %s21, 1
    %p107 = por %p105, %p106
    %p109 = scmp.ne.s32.totalorder %s94, %s108
    %p110 = scmp.eq.s32.totalorder %s21, 0
    %p111 = por %p109, %p110
    %s113 = sadd.s32 %s112, 1
    %p116 = scmp.eq.s32.totalorder %s15, 1
    %p117 = scmp.ne.s32.totalorder %s112, %s114
    %p118 = scmp.eq.s32.totalorder %s15, 0
    %p119 = por %p117, %p118
    %p120 = scmp.ne.s32.totalorder %s112, %s114
    %p121 = scmp.eq.s32.totalorder %s20, 1
    %p122 = por %p120, %p121
    %p123 = scmp.ne.s32.totalorder %s114, %s115
    %p124 = scmp.eq.s32.totalorder %s20, 0
    %p125 = por %p123, %p124
    %p126 = scmp.ne.s32.totalorder %s114, %s115
    %p127 = scmp.eq.s32.totalorder %s21, 1
    %p128 = por %p126, %p127
    %p130 = scmp.ne.s32.totalorder %s115, %s129
    %p131 = scmp.eq.s32.totalorder %s21, 0
    %p132 = por %p130, %p131
    %s134 = sadd.s32 %s133, 1
    %p137 = scmp.eq.s32.totalorder %s15, 1
    %p138 = scmp.ne.s32.totalorder %s133, %s135
    %p139 = scmp.eq.s32.totalorder %s15, 0
    %p140 = por %p138, %p139
    %p141 = scmp.ne.s32.totalorder %s133, %s135
    %p142 = scmp.eq.s32.totalorder %s20, 1
    %p143 = por %p141, %p142
    %p144 = scmp.ne.s32.totalorder %s135, %s136
    %p145 = scmp.eq.s32.totalorder %s20, 0
    %p146 = por %p144, %p145
    %p147 = scmp.ne.s32.totalorder %s135, %s136
    %p148 = scmp.eq.s32.totalorder %s21, 1
    %p149 = por %p147, %p148
    %p151 = scmp.ne.s32.totalorder %s136, %s150
    %p152 = scmp.eq.s32.totalorder %s21, 0
    %p153 = por %p151, %p152
    %s155 = sadd.s32 %s154, 1
    %p158 = scmp.eq.s32.totalorder %s15, 1
    %p159 = scmp.ne.s32.totalorder %s154, %s156
    %p160 = scmp.eq.s32.totalorder %s15, 0
    %p161 = por %p159, %p160
    %p162 = scmp.ne.s32.totalorder %s154, %s156
    %p163 = scmp.eq.s32.totalorder %s20, 1
    %p164 = por %p162, %p163
    %p165 = scmp.ne.s32.totalorder %s156, %s157
    %p166 = scmp.eq.s32.totalorder %s20, 0
    %p167 = por %p165, %p166
    %p168 = scmp.ne.s32.totalorder %s156, %s157
    %p169 = scmp.eq.s32.totalorder %s21, 1
    %p170 = por %p168, %p169
    %p172 = scmp.ne.s32.totalorder %s157, %s171
    %p173 = scmp.eq.s32.totalorder %s21, 0
    %p174 = por %p172, %p173
    %s175 = ssub.s32 %s15, %s22
    %p176 = scmp.eq.s32.totalorder %s175, 0
    %s178 = sadd.s32 %s177, 1
    %s179 = scalar_select %p176, %s177, %s178
    %p182 = pneg %p176
    %p183 = scmp.eq.s32.totalorder %s15, 1
    %p184 = por %p182, %p183
    %p185 = scmp.ne.s32.totalorder %s177, %s180
    %p186 = scmp.eq.s32.totalorder %s15, 0
    %p187 = por %p185, %p186
    %p188 = scmp.ne.s32.totalorder %s177, %s180
    %p189 = scmp.eq.s32.totalorder %s20, 1
    %p190 = por %p188, %p189
    %p191 = scmp.ne.s32.totalorder %s180, %s181
    %p192 = scmp.eq.s32.totalorder %s20, 0
    %p193 = por %p191, %p192
    %p194 = scmp.ne.s32.totalorder %s180, %s181
    %p195 = scmp.eq.s32.totalorder %s21, 1
    %p196 = por %p194, %p195
    %p198 = scmp.ne.s32.totalorder %s181, %s197
    %p199 = scmp.eq.s32.totalorder %s21, 0
    %p200 = por %p198, %p199
    %p201 = scmp.le.s32.totalorder 1, %s15
    %p202 = scmp.lt.s32.totalorder %s15, 3
    %p203 = pnand %p201, %p202
    %p204 = pneg %p203
    // Predicated region
    $region9: #{_lambda_.5} parent=5 // pred_check
      _
    $region10: #{_lambda_.5} parent=5 // pred_check_branch
      %206 = sbr.rel (%p203) target = $region12
    $region11: #{_lambda_.5} parent=5 // pred_region
      %s207 = ssub.s32 %s15, 1
      // Predicated region
      $region13: #{_lambda_.5} parent=11 // pred_check
        %p208 = pneg %p62
      $region14: #{_lambda_.5} parent=11 // pred_check_branch
        %210 = sbr.rel (%p208) target = $region16
      $region15: #{_lambda_.5} parent=11 // pred_region
        _
      $region16: #{_lambda_.5} parent=11 // pred_fallthru
        _
      // Predicated region
      $region17: #{_lambda_.5} parent=11 // pred_check
        %p211 = pneg %p83
      $region18: #{_lambda_.5} parent=11 // pred_check_branch
        %213 = sbr.rel (%p211) target = $region20
      $region19: #{_lambda_.5} parent=11 // pred_region
        _
      $region20: #{_lambda_.5} parent=11 // pred_fallthru
        _
      // Predicated region
      $region21: #{_lambda_.5} parent=11 // pred_check
        %p214 = pneg %p104
      $region22: #{_lambda_.5} parent=11 // pred_check_branch
        %216 = sbr.rel (%p214) target = $region24
      $region23: #{_lambda_.5} parent=11 // pred_region
        _
      $region24: #{_lambda_.5} parent=11 // pred_fallthru
        _
      // Predicated region
      $region25: #{_lambda_.5} parent=11 // pred_check
        %p217 = pneg %p125
      $region26: #{_lambda_.5} parent=11 // pred_check_branch
        %219 = sbr.rel (%p217) target = $region28
      $region27: #{_lambda_.5} parent=11 // pred_region
        _
      $region28: #{_lambda_.5} parent=11 // pred_fallthru
        _
      // Predicated region
      $region29: #{_lambda_.5} parent=11 // pred_check
        %p220 = pneg %p146
      $region30: #{_lambda_.5} parent=11 // pred_check_branch
        %222 = sbr.rel (%p220) target = $region32
      $region31: #{_lambda_.5} parent=11 // pred_region
        _
      $region32: #{_lambda_.5} parent=11 // pred_fallthru
        _
      // Predicated region
      $region33: #{_lambda_.5} parent=11 // pred_check
        %p223 = pneg %p167
      $region34: #{_lambda_.5} parent=11 // pred_check_branch
        %225 = sbr.rel (%p223) target = $region36
      $region35: #{_lambda_.5} parent=11 // pred_region
        _
      $region36: #{_lambda_.5} parent=11 // pred_fallthru
        _
    $region12: #{_lambda_.5} parent=5 // pred_fallthru
      _
    %p226 = scmp.lt.s32.totalorder %s15, 2
    // Predicated region
    $region37: #{_lambda_.5} parent=5 // pred_check
      %p227 = pneg %p226
    $region38: #{_lambda_.5} parent=5 // pred_check_branch
      %229 = sbr.rel (%p227) target = $region40
    $region39: #{_lambda_.5} parent=5 // pred_region
      // Predicated region
      $region41: #{_lambda_.5} parent=39 // pred_check
        %p230 = pneg %p35
      $region42: #{_lambda_.5} parent=39 // pred_check_branch
        %232 = sbr.rel (%p230) target = $region44
      $region43: #{_lambda_.5} parent=39 // pred_region
        %s233 = smul.u32 13, %s15
        %p234 = scmp.lt.s32.totalorder %s233, 25
        %s235 = scalar_select %p234, %s233, 25
        %s236 = smul.addr %s235, 2
        %s237 = smul.addr %s236, 8
        %s238 = scalar_lea.vmem %s1, %s237
        %s239 = smul.u32 13, %s15
      $region44: #{_lambda_.5} parent=39 // pred_fallthru
        _
    $region40: #{_lambda_.5} parent=5 // pred_fallthru
      _
    %p240 = scmp.le.s32.totalorder 1, %s15
    %p241 = scmp.lt.s32.totalorder %s15, 3
    %p242 = pnand %p240, %p241
    %p243 = pneg %p242
    // Predicated region
    $region45: #{_lambda_.5} parent=5 // pred_check
      _
    $region46: #{_lambda_.5} parent=5 // pred_check_branch
      %245 = sbr.rel (%p242) target = $region48
    $region47: #{_lambda_.5} parent=5 // pred_region
      %s246 = ssub.s32 %s15, 1
      %s247 = smul.u32 13, %s20
      %p248 = scmp.lt.s32.totalorder %s247, 25
      %s249 = scalar_select %p248, %s247, 25
      %s250 = smul.addr %s249, 2
      %s251 = smul.addr %s250, 8
      %s252 = scalar_lea.vmem %s1, %s251
      %p253 = pneg %p41
      %p254 = pneg %p38
      %p255 = pneg %p62
      %p256 = pneg %p59
      %p257 = pneg %p83
      %p258 = pneg %p80
      %p259 = pneg %p104
      %p260 = pneg %p101
      %p261 = pneg %p125
      %p262 = pneg %p122
      %p263 = pneg %p146
      %p264 = pneg %p143
      %p265 = pneg %p167
      %p266 = pneg %p164
      %p267 = pneg %p193
      %p268 = pneg %p190
      %s269 = smul.u32 13, %s20
      %p270 = scmp.lt.s32.totalorder %s269, 25
      %s271 = scalar_select %p270, %s269, 25
      %s272 = smul.addr %s271, 8
      %s273 = scalar_lea.vmem %s8, %s272
      %s274 = smul.u32 13, %s20
      %p275 = scmp.lt.s32.totalorder %s274, 25
      %s276 = scalar_select %p275, %s274, 25
      %s277 = smul.addr %s276, 2
      %s278 = smul.addr %s277, 8
      %s279 = scalar_lea.vmem %s1, %s278
      %s280 = smul.u32 13, %s20
      %s281 = smul.u32 13, %s20
      %p282 = scmp.lt.s32.totalorder %s281, 25
      %s283 = scalar_select %p282, %s281, 25
      %s284 = smul.addr %s283, 8
      %s285 = scalar_lea.vmem %s8, %s284
      %s286 = smul.u32 13, %s20
      %v288 = vld [vmem:[%s279] sm:$0xff]
      %v289 = vld [vmem:[%s279 + $0x8] sm:$0xff]
      %v290 = vld [vmem:[%s279 + $0x10] sm:$0xff]
      %v291 = vld [vmem:[%s279 + $0x18] sm:$0xff]
      %v292 = vld [vmem:[%s279 + $0x20] sm:$0xff]
      %v293 = vld [vmem:[%s279 + $0x28] sm:$0xff]
      %v294 = vld [vmem:[%s279 + $0x30] sm:$0xff]
      %v295 = vld [vmem:[%s279 + $0x38] sm:$0xff]
      %v296 = vld [vmem:[%s279 + $0x40] sm:$0xff]
      %v297 = vld [vmem:[%s279 + $0x48] sm:$0xff]
      %v298 = vld [vmem:[%s279 + $0x50] sm:$0xff]
      %v299 = vld [vmem:[%s279 + $0x58] sm:$0xff]
      %v300 = vld [vmem:[%s279 + $0x60] sm:$0xff]
      %v301 = vld [vmem:[%s279 + $0x68] sm:$0xff]
      %v302 = vld [vmem:[%s279 + $0x70] sm:$0xff]
      %v303 = vld [vmem:[%s279 + $0x78] sm:$0xff]
      %v304 = vld [vmem:[%s279 + $0x80] sm:$0xff]
      %v305 = vld [vmem:[%s279 + $0x88] sm:$0xff]
      %v306 = vld [vmem:[%s279 + $0x90] sm:$0xff]
      %v307 = vld [vmem:[%s279 + $0x98] sm:$0xff]
      %v308 = vld [vmem:[%s279 + $0xa0] sm:$0xff]
      %v309 = vld [vmem:[%s279 + $0xa8] sm:$0xff]
      %v310 = vld [vmem:[%s279 + $0xb0] sm:$0xff]
      %v311 = vld [vmem:[%s279 + $0xb8] sm:$0xff]
      %v312 = vld [vmem:[%s279 + $0xc0] sm:$0xff]
      %v313 = vld [vmem:[%s279 + $0xc8] sm:$0xff]
      %v314 = vld [vmem:[%s2] sm:$0x3]
      %v316 = vlaneseq
      %v317 = vshrl.u32 %v316, 7
      %v318 = vsub.s32 0, %v317
      %v319 = vrot.slane %v314, %v318
      %v320 = vlaneseq
      %v321 = vshrl.u32 %v320, 7
      %v322 = vsub.s32 1, %v321
      %v323 = vrot.slane %v314, %v322
      %v326 = vsub.f32 %v288, %v319
      %v327 = vsub.f32 %v289, %v323
      %v328 = vsub.f32 %v290, %v319
      %v329 = vsub.f32 %v291, %v323
      %v330 = vsub.f32 %v292, %v319
      %v331 = vsub.f32 %v293, %v323
      %v332 = vsub.f32 %v294, %v319
      %v333 = vsub.f32 %v295, %v323
      %v334 = vsub.f32 %v296, %v319
      %v335 = vsub.f32 %v297, %v323
      %v336 = vsub.f32 %v298, %v319
      %v337 = vsub.f32 %v299, %v323
      %v338 = vsub.f32 %v300, %v319
      %v339 = vsub.f32 %v301, %v323
      %v340 = vsub.f32 %v302, %v319
      %v341 = vsub.f32 %v303, %v323
      %v342 = vsub.f32 %v304, %v319
      %v343 = vsub.f32 %v305, %v323
      %v344 = vsub.f32 %v306, %v319
      %v345 = vsub.f32 %v307, %v323
      %v346 = vsub.f32 %v308, %v319
      %v347 = vsub.f32 %v309, %v323
      %v348 = vsub.f32 %v310, %v319
      %v349 = vsub.f32 %v311, %v323
      %v350 = vsub.f32 %v312, %v319
      %v351 = vsub.f32 %v313, %v323
      %v352 = vld [vmem:[%s3] sm:$0x3]
      %v354 = vlaneseq
      %v355 = vshrl.u32 %v354, 7
      %v356 = vsub.s32 0, %v355
      %v357 = vrot.slane %v352, %v356
      %v358 = vlaneseq
      %v359 = vshrl.u32 %v358, 7
      %v360 = vsub.s32 1, %v359
      %v361 = vrot.slane %v352, %v360
      %v364 = vmul.f32 %v326, %v357
      %v365 = vmul.f32 %v327, %v361
      %v366 = vmul.f32 %v328, %v357
      %v367 = vmul.f32 %v329, %v361
      %v368 = vmul.f32 %v330, %v357
      %v369 = vmul.f32 %v331, %v361
      %v370 = vmul.f32 %v332, %v357
      %v371 = vmul.f32 %v333, %v361
      %v372 = vmul.f32 %v334, %v357
      %v373 = vmul.f32 %v335, %v361
      %v374 = vmul.f32 %v336, %v357
      %v375 = vmul.f32 %v337, %v361
      %v376 = vmul.f32 %v338, %v357
      %v377 = vmul.f32 %v339, %v361
      %v378 = vmul.f32 %v340, %v357
      %v379 = vmul.f32 %v341, %v361
      %v380 = vmul.f32 %v342, %v357
      %v381 = vmul.f32 %v343, %v361
      %v382 = vmul.f32 %v344, %v357
      %v383 = vmul.f32 %v345, %v361
      %v384 = vmul.f32 %v346, %v357
      %v385 = vmul.f32 %v347, %v361
      %v386 = vmul.f32 %v348, %v357
      %v387 = vmul.f32 %v349, %v361
      %v388 = vmul.f32 %v350, %v357
      %v389 = vmul.f32 %v351, %v361
      %v390 = vld [vmem:[%s4] sm:$0x3]
      %v392 = vlaneseq
      %v393 = vshrl.u32 %v392, 7
      %v394 = vsub.s32 0, %v393
      %v395 = vrot.slane %v390, %v394
      %v396 = vlaneseq
      %v397 = vshrl.u32 %v396, 7
      %v398 = vsub.s32 1, %v397
      %v399 = vrot.slane %v390, %v398
      %v402 = vmul.f32 %v364, %v395
      %v403 = vmul.f32 %v365, %v399
      %v404 = vmul.f32 %v366, %v395
      %v405 = vmul.f32 %v367, %v399
      %v406 = vmul.f32 %v368, %v395
      %v407 = vmul.f32 %v369, %v399
      %v408 = vmul.f32 %v370, %v395
      %v409 = vmul.f32 %v371, %v399
      %v410 = vmul.f32 %v372, %v395
      %v411 = vmul.f32 %v373, %v399
      %v412 = vmul.f32 %v374, %v395
      %v413 = vmul.f32 %v375, %v399
      %v414 = vmul.f32 %v376, %v395
      %v415 = vmul.f32 %v377, %v399
      %v416 = vmul.f32 %v378, %v395
      %v417 = vmul.f32 %v379, %v399
      %v418 = vmul.f32 %v380, %v395
      %v419 = vmul.f32 %v381, %v399
      %v420 = vmul.f32 %v382, %v395
      %v421 = vmul.f32 %v383, %v399
      %v422 = vmul.f32 %v384, %v395
      %v423 = vmul.f32 %v385, %v399
      %v424 = vmul.f32 %v386, %v395
      %v425 = vmul.f32 %v387, %v399
      %v426 = vmul.f32 %v388, %v395
      %v427 = vmul.f32 %v389, %v399
      %v428 = vld [vmem:[%s5] sm:$0x3]
      %v430 = vlaneseq
      %v431 = vshrl.u32 %v430, 7
      %v432 = vsub.s32 0, %v431
      %v433 = vrot.slane %v428, %v432
      %v434 = vlaneseq
      %v435 = vshrl.u32 %v434, 7
      %v436 = vsub.s32 1, %v435
      %v437 = vrot.slane %v428, %v436
      %v440 = vadd.f32 %v402, %v433
      %v441 = vadd.f32 %v403, %v437
      %v442 = vadd.f32 %v404, %v433
      %v443 = vadd.f32 %v405, %v437
      %v444 = vadd.f32 %v406, %v433
      %v445 = vadd.f32 %v407, %v437
      %v446 = vadd.f32 %v408, %v433
      %v447 = vadd.f32 %v409, %v437
      %v448 = vadd.f32 %v410, %v433
      %v449 = vadd.f32 %v411, %v437
      %v450 = vadd.f32 %v412, %v433
      %v451 = vadd.f32 %v413, %v437
      %v452 = vadd.f32 %v414, %v433
      %v453 = vadd.f32 %v415, %v437
      %v454 = vadd.f32 %v416, %v433
      %v455 = vadd.f32 %v417, %v437
      %v456 = vadd.f32 %v418, %v433
      %v457 = vadd.f32 %v419, %v437
      %v458 = vadd.f32 %v420, %v433
      %v459 = vadd.f32 %v421, %v437
      %v460 = vadd.f32 %v422, %v433
      %v461 = vadd.f32 %v423, %v437
      %v462 = vadd.f32 %v424, %v433
      %v463 = vadd.f32 %v425, %v437
      %v464 = vadd.f32 %v426, %v433
      %v465 = vadd.f32 %v427, %v437
      %v466 = vmax.f32 %v440, 0.0
      %v467 = vmax.f32 %v441, 0.0
      %v468 = vmax.f32 %v442, 0.0
      %v469 = vmax.f32 %v443, 0.0
      %v470 = vmax.f32 %v444, 0.0
      %v471 = vmax.f32 %v445, 0.0
      %v472 = vmax.f32 %v446, 0.0
      %v473 = vmax.f32 %v447, 0.0
      %v474 = vmax.f32 %v448, 0.0
      %v475 = vmax.f32 %v449, 0.0
      %v476 = vmax.f32 %v450, 0.0
      %v477 = vmax.f32 %v451, 0.0
      %v478 = vmax.f32 %v452, 0.0
      %v479 = vmax.f32 %v453, 0.0
      %v480 = vmax.f32 %v454, 0.0
      %v481 = vmax.f32 %v455, 0.0
      %v482 = vmax.f32 %v456, 0.0
      %v483 = vmax.f32 %v457, 0.0
      %v484 = vmax.f32 %v458, 0.0
      %v485 = vmax.f32 %v459, 0.0
      %v486 = vmax.f32 %v460, 0.0
      %v487 = vmax.f32 %v461, 0.0
      %v488 = vmax.f32 %v462, 0.0
      %v489 = vmax.f32 %v463, 0.0
      %v490 = vmax.f32 %v464, 0.0
      %v491 = vmax.f32 %v465, 0.0
      %v492 = vpack.c.bf16 %v468, %v466
      %v493 = vpack.c.bf16 %v469, %v467
      %v494 = vpack.c.bf16 %v472, %v470
      %v495 = vpack.c.bf16 %v473, %v471
      %v496 = vpack.c.bf16 %v476, %v474
      %v497 = vpack.c.bf16 %v477, %v475
      %v498 = vpack.c.bf16 %v480, %v478
      %v499 = vpack.c.bf16 %v481, %v479
      %v500 = vpack.c.bf16 %v484, %v482
      %v501 = vpack.c.bf16 %v485, %v483
      %v502 = vpack.c.bf16 %v488, %v486
      %v503 = vpack.c.bf16 %v489, %v487
      %v504 = vpack.c.bf16 %v490, %v490
      %v505 = vpack.c.bf16 %v491, %v491
      %v506 = vld [vmem:[%s6] sm:$0xf]
      %v507 = vld [vmem:[%s6 + $0x4] sm:$0xf]
      %v508 = vld [vmem:[%s6 + $0x8] sm:$0xf]
      %v509 = vld [vmem:[%s6 + $0xc] sm:$0xf]
      %v510 = vld [vmem:[%s6 + $0x10] sm:$0xf]
      %v511 = vld [vmem:[%s6 + $0x14] sm:$0xf]
      %v512 = vld [vmem:[%s6 + $0x18] sm:$0xf]
      %v513 = vld [vmem:[%s6 + $0x1c] sm:$0xf]
      %v514 = vld [vmem:[%s6 + $0x20] sm:$0xf]
      %v515 = vld [vmem:[%s6 + $0x24] sm:$0xf]
      %v516 = vld [vmem:[%s6 + $0x28] sm:$0xf]
      %v517 = vld [vmem:[%s6 + $0x2c] sm:$0xf]
      %v518 = vld [vmem:[%s6 + $0x30] sm:$0xf]
      %v519 = vld [vmem:[%s6 + $0x34] sm:$0xf]
      %v520 = vld [vmem:[%s6 + $0x38] sm:$0xf]
      %v521 = vld [vmem:[%s6 + $0x3c] sm:$0xf]
      %v522 = vld [vmem:[%s6 + $0x40] sm:$0xf]
      %v523 = vld [vmem:[%s6 + $0x44] sm:$0xf]
      %v524 = vld [vmem:[%s6 + $0x48] sm:$0xf]
      %v525 = vld [vmem:[%s6 + $0x4c] sm:$0xf]
      %v526 = vld [vmem:[%s6 + $0x50] sm:$0xf]
      %v527 = vld [vmem:[%s6 + $0x54] sm:$0xf]
      %v528 = vld [vmem:[%s6 + $0x58] sm:$0xf]
      %v529 = vld [vmem:[%s6 + $0x5c] sm:$0xf]
      %v530 = vld [vmem:[%s6 + $0x60] sm:$0xf]
      %v531 = vld [vmem:[%s6 + $0x64] sm:$0xf]
      %v532 = vld [vmem:[%s6 + $0x68] sm:$0xf]
      %v533 = vld [vmem:[%s6 + $0x6c] sm:$0xf]
      %v534 = vld [vmem:[%s6 + $0x70] sm:$0xf]
      %v535 = vld [vmem:[%s6 + $0x74] sm:$0xf]
      %v536 = vld [vmem:[%s6 + $0x78] sm:$0xf]
      %v537 = vld [vmem:[%s6 + $0x7c] sm:$0xf]
      %v538 = vld [vmem:[%s7] sm:$0x1]
      %v540 = vlaneseq
      %v541 = vshrl.u32 %v540, 7
      %v542 = vsub.s32 0, %v541
      %v543 = vrot.slane %v538, %v542
      %v577 = vunpack.c.l.b16 %v506
      %v578 = vunpack.c.l.b16 %v507
      %v579 = vunpack.c.l.b16 %v508
      %v580 = vunpack.c.l.b16 %v509
      %v581 = vunpack.c.l.b16 %v510
      %v582 = vunpack.c.l.b16 %v511
      %v583 = vunpack.c.l.b16 %v512
      %v584 = vunpack.c.l.b16 %v513
      %v585 = vunpack.c.l.b16 %v514
      %v586 = vunpack.c.l.b16 %v515
      %v587 = vunpack.c.l.b16 %v516
      %v588 = vunpack.c.l.b16 %v517
      %v589 = vunpack.c.l.b16 %v518
      %v590 = vunpack.c.l.b16 %v519
      %v591 = vunpack.c.l.b16 %v520
      %v592 = vunpack.c.l.b16 %v521
      %v593 = vunpack.c.l.b16 %v522
      %v594 = vunpack.c.l.b16 %v523
      %v595 = vunpack.c.l.b16 %v524
      %v596 = vunpack.c.l.b16 %v525
      %v597 = vunpack.c.l.b16 %v526
      %v598 = vunpack.c.l.b16 %v527
      %v599 = vunpack.c.l.b16 %v528
      %v600 = vunpack.c.l.b16 %v529
      %v601 = vunpack.c.l.b16 %v530
      %v602 = vunpack.c.l.b16 %v531
      %v603 = vunpack.c.l.b16 %v532
      %v604 = vunpack.c.l.b16 %v533
      %v605 = vunpack.c.l.b16 %v534
      %v606 = vunpack.c.l.b16 %v535
      %v607 = vunpack.c.l.b16 %v536
      %v608 = vunpack.c.l.b16 %v537
      %v609 = vpack.c.b16 %v578, %v577
      %v610 = vpack.c.b16 %v580, %v579
      %v611 = vpack.c.b16 %v582, %v581
      %v612 = vpack.c.b16 %v584, %v583
      %v613 = vpack.c.b16 %v586, %v585
      %v614 = vpack.c.b16 %v588, %v587
      %v615 = vpack.c.b16 %v590, %v589
      %v616 = vpack.c.b16 %v592, %v591
      %v617 = vpack.c.b16 %v594, %v593
      %v618 = vpack.c.b16 %v596, %v595
      %v619 = vpack.c.b16 %v598, %v597
      %v620 = vpack.c.b16 %v600, %v599
      %v621 = vpack.c.b16 %v602, %v601
      %v622 = vpack.c.b16 %v604, %v603
      %v623 = vpack.c.b16 %v606, %v605
      %v624 = vpack.c.b16 %v608, %v607
      %641 = vmatprep.subr.bf16.mxu0 0
      %642 = vmatpush1.bf16.msra.mxu0 %v616
      %643 = vmatprep.subr.bf16.mxu0 0
      %644 = vmatpush1.bf16.msra.mxu0 %v615
      %645 = vmatprep.subr.bf16.mxu0 0
      %646 = vmatpush1.bf16.msra.mxu0 %v614
      %647 = vmatprep.subr.bf16.mxu0 0
      %648 = vmatpush1.bf16.msra.mxu0 %v613
      %649 = vmatprep.subr.bf16.mxu0 0
      %650 = vmatpush1.bf16.msra.mxu0 %v612
      %651 = vmatprep.subr.bf16.mxu0 0
      %652 = vmatpush1.bf16.msra.mxu0 %v611
      %653 = vmatprep.subr.bf16.mxu0 0
      %654 = vmatpush1.bf16.msra.mxu0 %v610
      %655 = vmatprep.subr.bf16.mxu0 0
      %656 = vmatpush1.bf16.msra.mxu0 %v609
      %657 = vmatprep.subr.bf16.mxu0 0
      %658 = vmatpush2.bf16.msra.mxu0 %v624
      %659 = vmatprep.subr.bf16.mxu0 0
      %660 = vmatpush2.bf16.msra.mxu0 %v623
      %661 = vmatprep.subr.bf16.mxu0 0
      %662 = vmatpush2.bf16.msra.mxu0 %v622
      %663 = vmatprep.subr.bf16.mxu0 0
      %664 = vmatpush2.bf16.msra.mxu0 %v621
      %665 = vmatprep.subr.bf16.mxu0 0
      %666 = vmatpush2.bf16.msra.mxu0 %v620
      %667 = vmatprep.subr.bf16.mxu0 0
      %668 = vmatpush2.bf16.msra.mxu0 %v619
      %669 = vmatprep.subr.bf16.mxu0 0
      %670 = vmatpush2.bf16.msra.mxu0 %v618
      %671 = vmatprep.subr.bf16.mxu0 0
      %672 = vmatpush2.bf16.msra.mxu0 %v617
      %673 = vmatprep.mubr.bf16.mxu0 %v493
      %674 = vmatmul.mubr.bf16.gmra.mxu0 %v492
      %v675 = vpop.f32.mrf.mxu0
      %v676 = vadd.f32 %v543, %v675
      %v677 = vpop.f32.mrf.mxu0
      %v678 = vpop.f32.mrf.mxu0
      %v679 = vadd.f32 %v543, %v678
      %v680 = vpop.f32.mrf.mxu0
      %681 = vmatprep.mubr.bf16.mxu0 %v495
      %682 = vmatmul.mubr.bf16.gmra.mxu0 %v494
      %v683 = vpop.f32.mrf.mxu0
      %v684 = vadd.f32 %v543, %v683
      %v685 = vpop.f32.mrf.mxu0
      %v686 = vpop.f32.mrf.mxu0
      %v687 = vadd.f32 %v543, %v686
      %v688 = vpop.f32.mrf.mxu0
      %689 = vmatprep.mubr.bf16.mxu0 %v497
      %690 = vmatmul.mubr.bf16.gmra.mxu0 %v496
      %v691 = vpop.f32.mrf.mxu0
      %v692 = vadd.f32 %v543, %v691
      %v693 = vpop.f32.mrf.mxu0
      %v694 = vpop.f32.mrf.mxu0
      %v695 = vadd.f32 %v543, %v694
      %v696 = vpop.f32.mrf.mxu0
      %697 = vmatprep.mubr.bf16.mxu0 %v499
      %698 = vmatmul.mubr.bf16.gmra.mxu0 %v498
      %v699 = vpop.f32.mrf.mxu0
      %v700 = vadd.f32 %v543, %v699
      %v701 = vpop.f32.mrf.mxu0
      %v702 = vpop.f32.mrf.mxu0
      %v703 = vadd.f32 %v543, %v702
      %v704 = vpop.f32.mrf.mxu0
      %705 = vmatprep.mubr.bf16.mxu0 %v501
      %706 = vmatmul.mubr.bf16.gmra.mxu0 %v500
      %v707 = vpop.f32.mrf.mxu0
      %v708 = vadd.f32 %v543, %v707
      %v709 = vpop.f32.mrf.mxu0
      %v710 = vpop.f32.mrf.mxu0
      %v711 = vadd.f32 %v543, %v710
      %v712 = vpop.f32.mrf.mxu0
      %713 = vmatprep.mubr.bf16.mxu0 %v503
      %714 = vmatmul.mubr.bf16.gmra.mxu0 %v502
      %v715 = vpop.f32.mrf.mxu0
      %v716 = vadd.f32 %v543, %v715
      %v717 = vpop.f32.mrf.mxu0
      %v718 = vpop.f32.mrf.mxu0
      %v719 = vadd.f32 %v543, %v718
      %v720 = vpop.f32.mrf.mxu0
      %721 = vmatprep.mubr.bf16.mxu0 %v505
      %722 = vmatmul.mubr.bf16.gmra.mxu0 %v504
      %v723 = vpop.f32.mrf.mxu0
      %v724 = vadd.f32 %v543, %v723
      %v725 = vpop.f32.mrf.mxu0
      %v726 = vpop.f32.mrf.mxu0
      %v727 = vpop.f32.mrf.mxu0
      %728 = vdwg.mxu0
      %729 = vst [vmem:[%s285] sm:$0xff] %v676
      %730 = vst [vmem:[%s285 + $0x8] sm:$0xff] %v679
      %731 = vst [vmem:[%s285 + $0x10] sm:$0xff] %v684
      %732 = vst [vmem:[%s285 + $0x18] sm:$0xff] %v687
      %733 = vst [vmem:[%s285 + $0x20] sm:$0xff] %v692
      %734 = vst [vmem:[%s285 + $0x28] sm:$0xff] %v695
      %735 = vst [vmem:[%s285 + $0x30] sm:$0xff] %v700
      %736 = vst [vmem:[%s285 + $0x38] sm:$0xff] %v703
      %737 = vst [vmem:[%s285 + $0x40] sm:$0xff] %v708
      %738 = vst [vmem:[%s285 + $0x48] sm:$0xff] %v711
      %739 = vst [vmem:[%s285 + $0x50] sm:$0xff] %v716
      %740 = vst [vmem:[%s285 + $0x58] sm:$0xff] %v719
      %741 = vst [vmem:[%s285 + $0x60] sm:$0xff] %v724
      %s742 = smul.u32 13, %s20
      %p743 = scmp.lt.s32.totalorder %s742, 25
      %s744 = scalar_select %p743, %s742, 25
      %s745 = smul.addr %s744, 8
      %s746 = scalar_lea.vmem %s8, %s745
      // Predicated region
      $region49: #{_lambda_.5} parent=47 // pred_check
        %p747 = pneg %p190
      $region50: #{_lambda_.5} parent=47 // pred_check_branch
        %749 = sbr.rel (%p747) target = $region52
      $region51: #{_lambda_.5} parent=47 // pred_region
        %s750 = smul.u32 13, %s20
      $region52: #{_lambda_.5} parent=47 // pred_fallthru
        _
    $region48: #{_lambda_.5} parent=5 // pred_fallthru
      _
    %p751 = scmp.le.s32.totalorder 2, %s15
    // Predicated region
    $region53: #{_lambda_.5} parent=5 // pred_check
      %p752 = pneg %p751
    $region54: #{_lambda_.5} parent=5 // pred_check_branch
      %754 = sbr.rel (%p752) target = $region56
    $region55: #{_lambda_.5} parent=5 // pred_region
      %s755 = ssub.s32 %s15, 2
      // Predicated region
      $region57: #{_lambda_.5} parent=55 // pred_check
        %p756 = pneg %p196
      $region58: #{_lambda_.5} parent=55 // pred_check_branch
        %758 = sbr.rel (%p756) target = $region60
      $region59: #{_lambda_.5} parent=55 // pred_region
        %s759 = smul.u32 13, %s21
        %p760 = scmp.lt.s32.totalorder %s759, 25
        %s761 = scalar_select %p760, %s759, 25
        %s762 = smul.addr %s761, 8
        %s763 = scalar_lea.vmem %s8, %s762
      $region60: #{_lambda_.5} parent=55 // pred_fallthru
        _
    $region56: #{_lambda_.5} parent=5 // pred_fallthru
      _
  $region6: #{_lambda_.5} parent=0 // loop_footer
    %s19 = sadd.s32 1, %s15
  $region7: #{_lambda_.5} parent=0 // loop_footer_branch
    %14 = sbr.rel target = $region3
  $region8: #{_lambda_.5} parent=0 // loop_exit
    _

// kernel: _lambda_.4
$region0: #{_lambda_.4}
  #allocation0 [shape = 'u32[]', space=smem, size = 0x4, offset = 0x4, fixed_abs, tag = 'smem constant byte address 0x4 - core index']
  #allocation1 [shape = 'u32[144,128]{1,0:T(1,128)}', space=vmem, size = 0x12000, scoped, tag = 'internal scratch']
  #allocation2 [shape = 's32[1]{0}', space=sflag, size = 0x4, scoped, tag = 'scoped memory for _lambda_.4']
  #allocation3 [shape = 's32[1]{0:T(128)S(6)}', space=smem, size = 0x200, scoped, tag = 'prefetched SMEM operand 0']
  %s0 = inlined_call_operand.<no memory space> [shape: s32[1], index: 0, kind: input, shape index: {}]
  %s1 = inlined_call_operand.vmem [shape: f32[208,256], index: 1, kind: input, shape index: {}]
  %s2 = inlined_call_operand.vmem [shape: f32[1,256], index: 2, kind: input, shape index: {}]
  %s3 = inlined_call_operand.vmem [shape: f32[1,256], index: 3, kind: input, shape index: {}]
  %s4 = inlined_call_operand.vmem [shape: f32[1,256], index: 4, kind: input, shape index: {}]
  %s5 = inlined_call_operand.vmem [shape: f32[1,256], index: 5, kind: input, shape index: {}]
  %s6 = inlined_call_operand.vmem [shape: bf16[256,256], index: 6, kind: input, shape index: {}]
  %s7 = inlined_call_operand.vmem [shape: f32[1,256], index: 7, kind: input, shape index: {}]
  %s8 = inlined_call_operand.vmem [shape: f32[208,256], index: 8, kind: output, shape index: {0}]
  %s9 = inlined_call_operand.vmem [shape: f32[16,256], index: 9, kind: output, shape index: {1}]
  %10 = xla_tuple %s8, %s9
  %s11 = sld [smem:[#allocation0]]
  $region69: #{_lambda_.4} parent=0
    _
  %s13 = ssub.s32 1, %s11
  %s14 = scalar_select 0, %s13, %s11
  %15 = sst [smem:[#allocation3]] %s0
  loop: start=0, step=1, limit=4
  $region2: #{_lambda_.4} parent=0 // loop_pre_header
    _
  $region3: #{_lambda_.4} parent=0 // loop_header
    %s17 = sphi 0, %s21
    %p18 = scmp.ge.s32.totalorder %s17, 4
    %s27 = sphi 0, %s29
    %s30 = sphi 0, %s27
    %s31 = sphi 0, %s30
    %s47 = sphi 0, %s31
    %s51 = sphi 0, %s51
    %s53 = sphi 0, %s51
    %s54 = sphi 0, %s53
    %s68 = sphi 0, %s54
    %s72 = sphi 0, %s72
    %s74 = sphi 0, %s72
    %s75 = sphi 0, %s74
    %s89 = sphi 0, %s75
    %s93 = sphi 0, %s93
    %s95 = sphi 0, %s93
    %s96 = sphi 0, %s95
    %s110 = sphi 0, %s96
    %s114 = sphi 0, %s114
    %s116 = sphi 0, %s114
    %s117 = sphi 0, %s116
    %s131 = sphi 0, %s117
    %s135 = sphi 0, %s135
    %s137 = sphi 0, %s135
    %s138 = sphi 0, %s137
    %s152 = sphi 0, %s138
    %s156 = sphi 0, %s156
    %s158 = sphi 0, %s156
    %s159 = sphi 0, %s158
    %s173 = sphi 0, %s159
    %s179 = sphi 0, %s181
    %s182 = sphi 0, %s179
    %s183 = sphi 0, %s182
    %s199 = sphi 0, %s183
    %s205 = sphi 0, %s207
    %s208 = sphi 0, %s205
    %s209 = sphi 0, %s208
    %s225 = sphi 0, %s209
  $region4: #{_lambda_.4} parent=0 // loop_header_branch
    %20 = sbr.rel (%p18) target = $region8
  $region5: #{_lambda_.4} parent=0 // loop_body
    %s22 = ssub.s32 %s17, 1
    %s23 = ssub.s32 %s17, 2
    %s24 = sadd.s32 %s17, 1
    %s25 = ssub.s32 %s17, %s24
    %p26 = scmp.eq.s32.totalorder %s25, 0
    %s28 = sadd.s32 %s27, 1
    %s29 = scalar_select %p26, %s27, %s28
    %p32 = pneg %p26
    %p33 = scmp.eq.s32.totalorder %s17, 1
    %p34 = por %p32, %p33
    %p35 = scmp.ne.s32.totalorder %s27, %s30
    %p36 = scmp.eq.s32.totalorder %s17, 0
    %p37 = por %p35, %p36
    %p38 = scmp.ne.s32.totalorder %s27, %s30
    %p39 = scmp.eq.s32.totalorder %s22, 1
    %p40 = por %p38, %p39
    %p41 = scmp.ne.s32.totalorder %s30, %s31
    %p42 = scmp.eq.s32.totalorder %s22, 0
    %p43 = por %p41, %p42
    %p44 = scmp.ne.s32.totalorder %s30, %s31
    %p45 = scmp.eq.s32.totalorder %s23, 1
    %p46 = por %p44, %p45
    %p48 = scmp.ne.s32.totalorder %s31, %s47
    %p49 = scmp.eq.s32.totalorder %s23, 0
    %p50 = por %p48, %p49
    %s52 = sadd.s32 %s51, 1
    %p55 = scmp.eq.s32.totalorder %s17, 1
    %p56 = scmp.ne.s32.totalorder %s51, %s53
    %p57 = scmp.eq.s32.totalorder %s17, 0
    %p58 = por %p56, %p57
    %p59 = scmp.ne.s32.totalorder %s51, %s53
    %p60 = scmp.eq.s32.totalorder %s22, 1
    %p61 = por %p59, %p60
    %p62 = scmp.ne.s32.totalorder %s53, %s54
    %p63 = scmp.eq.s32.totalorder %s22, 0
    %p64 = por %p62, %p63
    %p65 = scmp.ne.s32.totalorder %s53, %s54
    %p66 = scmp.eq.s32.totalorder %s23, 1
    %p67 = por %p65, %p66
    %p69 = scmp.ne.s32.totalorder %s54, %s68
    %p70 = scmp.eq.s32.totalorder %s23, 0
    %p71 = por %p69, %p70
    %s73 = sadd.s32 %s72, 1
    %p76 = scmp.eq.s32.totalorder %s17, 1
    %p77 = scmp.ne.s32.totalorder %s72, %s74
    %p78 = scmp.eq.s32.totalorder %s17, 0
    %p79 = por %p77, %p78
    %p80 = scmp.ne.s32.totalorder %s72, %s74
    %p81 = scmp.eq.s32.totalorder %s22, 1
    %p82 = por %p80, %p81
    %p83 = scmp.ne.s32.totalorder %s74, %s75
    %p84 = scmp.eq.s32.totalorder %s22, 0
    %p85 = por %p83, %p84
    %p86 = scmp.ne.s32.totalorder %s74, %s75
    %p87 = scmp.eq.s32.totalorder %s23, 1
    %p88 = por %p86, %p87
    %p90 = scmp.ne.s32.totalorder %s75, %s89
    %p91 = scmp.eq.s32.totalorder %s23, 0
    %p92 = por %p90, %p91
    %s94 = sadd.s32 %s93, 1
    %p97 = scmp.eq.s32.totalorder %s17, 1
    %p98 = scmp.ne.s32.totalorder %s93, %s95
    %p99 = scmp.eq.s32.totalorder %s17, 0
    %p100 = por %p98, %p99
    %p101 = scmp.ne.s32.totalorder %s93, %s95
    %p102 = scmp.eq.s32.totalorder %s22, 1
    %p103 = por %p101, %p102
    %p104 = scmp.ne.s32.totalorder %s95, %s96
    %p105 = scmp.eq.s32.totalorder %s22, 0
    %p106 = por %p104, %p105
    %p107 = scmp.ne.s32.totalorder %s95, %s96
    %p108 = scmp.eq.s32.totalorder %s23, 1
    %p109 = por %p107, %p108
    %p111 = scmp.ne.s32.totalorder %s96, %s110
    %p112 = scmp.eq.s32.totalorder %s23, 0
    %p113 = por %p111, %p112
    %s115 = sadd.s32 %s114, 1
    %p118 = scmp.eq.s32.totalorder %s17, 1
    %p119 = scmp.ne.s32.totalorder %s114, %s116
    %p120 = scmp.eq.s32.totalorder %s17, 0
    %p121 = por %p119, %p120
    %p122 = scmp.ne.s32.totalorder %s114, %s116
    %p123 = scmp.eq.s32.totalorder %s22, 1
    %p124 = por %p122, %p123
    %p125 = scmp.ne.s32.totalorder %s116, %s117
    %p126 = scmp.eq.s32.totalorder %s22, 0
    %p127 = por %p125, %p126
    %p128 = scmp.ne.s32.totalorder %s116, %s117
    %p129 = scmp.eq.s32.totalorder %s23, 1
    %p130 = por %p128, %p129
    %p132 = scmp.ne.s32.totalorder %s117, %s131
    %p133 = scmp.eq.s32.totalorder %s23, 0
    %p134 = por %p132, %p133
    %s136 = sadd.s32 %s135, 1
    %p139 = scmp.eq.s32.totalorder %s17, 1
    %p140 = scmp.ne.s32.totalorder %s135, %s137
    %p141 = scmp.eq.s32.totalorder %s17, 0
    %p142 = por %p140, %p141
    %p143 = scmp.ne.s32.totalorder %s135, %s137
    %p144 = scmp.eq.s32.totalorder %s22, 1
    %p145 = por %p143, %p144
    %p146 = scmp.ne.s32.totalorder %s137, %s138
    %p147 = scmp.eq.s32.totalorder %s22, 0
    %p148 = por %p146, %p147
    %p149 = scmp.ne.s32.totalorder %s137, %s138
    %p150 = scmp.eq.s32.totalorder %s23, 1
    %p151 = por %p149, %p150
    %p153 = scmp.ne.s32.totalorder %s138, %s152
    %p154 = scmp.eq.s32.totalorder %s23, 0
    %p155 = por %p153, %p154
    %s157 = sadd.s32 %s156, 1
    %p160 = scmp.eq.s32.totalorder %s17, 1
    %p161 = scmp.ne.s32.totalorder %s156, %s158
    %p162 = scmp.eq.s32.totalorder %s17, 0
    %p163 = por %p161, %p162
    %p164 = scmp.ne.s32.totalorder %s156, %s158
    %p165 = scmp.eq.s32.totalorder %s22, 1
    %p166 = por %p164, %p165
    %p167 = scmp.ne.s32.totalorder %s158, %s159
    %p168 = scmp.eq.s32.totalorder %s22, 0
    %p169 = por %p167, %p168
    %p170 = scmp.ne.s32.totalorder %s158, %s159
    %p171 = scmp.eq.s32.totalorder %s23, 1
    %p172 = por %p170, %p171
    %p174 = scmp.ne.s32.totalorder %s159, %s173
    %p175 = scmp.eq.s32.totalorder %s23, 0
    %p176 = por %p174, %p175
    %s177 = ssub.s32 %s17, %s24
    %p178 = scmp.eq.s32.totalorder %s177, 0
    %s180 = sadd.s32 %s179, 1
    %s181 = scalar_select %p178, %s179, %s180
    %p184 = pneg %p178
    %p185 = scmp.eq.s32.totalorder %s17, 1
    %p186 = por %p184, %p185
    %p187 = scmp.ne.s32.totalorder %s179, %s182
    %p188 = scmp.eq.s32.totalorder %s17, 0
    %p189 = por %p187, %p188
    %p190 = scmp.ne.s32.totalorder %s179, %s182
    %p191 = scmp.eq.s32.totalorder %s22, 1
    %p192 = por %p190, %p191
    %p193 = scmp.ne.s32.totalorder %s182, %s183
    %p194 = scmp.eq.s32.totalorder %s22, 0
    %p195 = por %p193, %p194
    %p196 = scmp.ne.s32.totalorder %s182, %s183
    %p197 = scmp.eq.s32.totalorder %s23, 1
    %p198 = por %p196, %p197
    %p200 = scmp.ne.s32.totalorder %s183, %s199
    %p201 = scmp.eq.s32.totalorder %s23, 0
    %p202 = por %p200, %p201
    %s203 = ssub.s32 %s17, %s24
    %p204 = scmp.eq.s32.totalorder %s203, 0
    %s206 = sadd.s32 %s205, 1
    %s207 = scalar_select %p204, %s205, %s206
    %p210 = pneg %p204
    %p211 = scmp.eq.s32.totalorder %s17, 1
    %p212 = por %p210, %p211
    %p213 = scmp.ne.s32.totalorder %s205, %s208
    %p214 = scmp.eq.s32.totalorder %s17, 0
    %p215 = por %p213, %p214
    %p216 = scmp.ne.s32.totalorder %s205, %s208
    %p217 = scmp.eq.s32.totalorder %s22, 1
    %p218 = por %p216, %p217
    %p219 = scmp.ne.s32.totalorder %s208, %s209
    %p220 = scmp.eq.s32.totalorder %s22, 0
    %p221 = por %p219, %p220
    %p222 = scmp.ne.s32.totalorder %s208, %s209
    %p223 = scmp.eq.s32.totalorder %s23, 1
    %p224 = por %p222, %p223
    %p226 = scmp.ne.s32.totalorder %s209, %s225
    %p227 = scmp.eq.s32.totalorder %s23, 0
    %p228 = por %p226, %p227
    %p229 = scmp.le.s32.totalorder 1, %s17
    %p230 = scmp.lt.s32.totalorder %s17, 3
    %p231 = pnand %p229, %p230
    %p232 = pneg %p231
    // Predicated region
    $region9: #{_lambda_.4} parent=5 // pred_check
      _
    $region10: #{_lambda_.4} parent=5 // pred_check_branch
      %234 = sbr.rel (%p231) target = $region12
    $region11: #{_lambda_.4} parent=5 // pred_region
      %s235 = ssub.s32 %s17, 1
      // Predicated region
      $region13: #{_lambda_.4} parent=11 // pred_check
        %p236 = pneg %p64
      $region14: #{_lambda_.4} parent=11 // pred_check_branch
        %238 = sbr.rel (%p236) target = $region16
      $region15: #{_lambda_.4} parent=11 // pred_region
        _
      $region16: #{_lambda_.4} parent=11 // pred_fallthru
        _
      // Predicated region
      $region17: #{_lambda_.4} parent=11 // pred_check
        %p239 = pneg %p85
      $region18: #{_lambda_.4} parent=11 // pred_check_branch
        %241 = sbr.rel (%p239) target = $region20
      $region19: #{_lambda_.4} parent=11 // pred_region
        _
      $region20: #{_lambda_.4} parent=11 // pred_fallthru
        _
      // Predicated region
      $region21: #{_lambda_.4} parent=11 // pred_check
        %p242 = pneg %p106
      $region22: #{_lambda_.4} parent=11 // pred_check_branch
        %244 = sbr.rel (%p242) target = $region24
      $region23: #{_lambda_.4} parent=11 // pred_region
        _
      $region24: #{_lambda_.4} parent=11 // pred_fallthru
        _
      // Predicated region
      $region25: #{_lambda_.4} parent=11 // pred_check
        %p245 = pneg %p127
      $region26: #{_lambda_.4} parent=11 // pred_check_branch
        %247 = sbr.rel (%p245) target = $region28
      $region27: #{_lambda_.4} parent=11 // pred_region
        _
      $region28: #{_lambda_.4} parent=11 // pred_fallthru
        _
      // Predicated region
      $region29: #{_lambda_.4} parent=11 // pred_check
        %p248 = pneg %p148
      $region30: #{_lambda_.4} parent=11 // pred_check_branch
        %250 = sbr.rel (%p248) target = $region32
      $region31: #{_lambda_.4} parent=11 // pred_region
        _
      $region32: #{_lambda_.4} parent=11 // pred_fallthru
        _
      // Predicated region
      $region33: #{_lambda_.4} parent=11 // pred_check
        %p251 = pneg %p169
      $region34: #{_lambda_.4} parent=11 // pred_check_branch
        %253 = sbr.rel (%p251) target = $region36
      $region35: #{_lambda_.4} parent=11 // pred_region
        _
      $region36: #{_lambda_.4} parent=11 // pred_fallthru
        _
    $region12: #{_lambda_.4} parent=5 // pred_fallthru
      _
    %p254 = scmp.lt.s32.totalorder %s17, 2
    // Predicated region
    $region37: #{_lambda_.4} parent=5 // pred_check
      %p255 = pneg %p254
    $region38: #{_lambda_.4} parent=5 // pred_check_branch
      %257 = sbr.rel (%p255) target = $region40
    $region39: #{_lambda_.4} parent=5 // pred_region
      // Predicated region
      $region41: #{_lambda_.4} parent=39 // pred_check
        %p258 = pneg %p37
      $region42: #{_lambda_.4} parent=39 // pred_check_branch
        %260 = sbr.rel (%p258) target = $region44
      $region43: #{_lambda_.4} parent=39 // pred_region
        %s261 = smul.u32 13, %s17
        %p262 = scmp.lt.s32.totalorder %s261, 25
        %s263 = scalar_select %p262, %s261, 25
        %s264 = smul.addr %s263, 2
        %s265 = smul.addr %s264, 8
        %s266 = scalar_lea.vmem %s1, %s265
        %s267 = smul.u32 13, %s17
      $region44: #{_lambda_.4} parent=39 // pred_fallthru
        _
    $region40: #{_lambda_.4} parent=5 // pred_fallthru
      _
    %p268 = scmp.le.s32.totalorder 1, %s17
    %p269 = scmp.lt.s32.totalorder %s17, 3
    %p270 = pnand %p268, %p269
    %p271 = pneg %p270
    // Predicated region
    $region45: #{_lambda_.4} parent=5 // pred_check
      _
    $region46: #{_lambda_.4} parent=5 // pred_check_branch
      %273 = sbr.rel (%p270) target = $region48
    $region47: #{_lambda_.4} parent=5 // pred_region
      %s274 = ssub.s32 %s17, 1
      %s275 = smul.u32 13, %s22
      %p276 = scmp.lt.s32.totalorder %s275, 25
      %s277 = scalar_select %p276, %s275, 25
      %s278 = smul.addr %s277, 2
      %s279 = smul.addr %s278, 8
      %s280 = scalar_lea.vmem %s1, %s279
      %p281 = pneg %p43
      %p282 = pneg %p40
      %p283 = pneg %p64
      %p284 = pneg %p61
      %p285 = pneg %p85
      %p286 = pneg %p82
      %p287 = pneg %p106
      %p288 = pneg %p103
      %p289 = pneg %p127
      %p290 = pneg %p124
      %p291 = pneg %p148
      %p292 = pneg %p145
      %p293 = pneg %p169
      %p294 = pneg %p166
      %p295 = pneg %p195
      %p296 = pneg %p192
      %s297 = smul.u32 13, %s22
      %p298 = scmp.lt.s32.totalorder %s297, 25
      %s299 = scalar_select %p298, %s297, 25
      %s300 = smul.addr %s299, 2
      %s301 = smul.addr %s300, 8
      %s302 = scalar_lea.vmem %s8, %s301
      %p303 = pneg %p221
      %p304 = pneg %p218
      %p305 = scmp.lt.s32.totalorder %s22, 1
      %s306 = scalar_select %p305, %s22, 1
      %s307 = smul.addr %s306, 2
      %s308 = smul.addr %s307, 8
      %s309 = scalar_lea.vmem %s9, %s308
      %s310 = smul.u32 13, %s22
      %p311 = scmp.lt.s32.totalorder %s310, 25
      %s312 = scalar_select %p311, %s310, 25
      %s313 = smul.addr %s312, 2
      %s314 = smul.addr %s313, 8
      %s315 = scalar_lea.vmem %s1, %s314
      %s316 = smul.u32 13, %s22
      %s317 = smul.u32 13, %s22
      %p318 = scmp.lt.s32.totalorder %s317, 25
      %s319 = scalar_select %p318, %s317, 25
      %s320 = smul.addr %s319, 2
      %s321 = smul.addr %s320, 8
      %s322 = scalar_lea.vmem %s8, %s321
      %s323 = smul.u32 13, %s22
      %p324 = scmp.lt.s32.totalorder %s22, 1
      %s325 = scalar_select %p324, %s22, 1
      %s326 = smul.addr %s325, 2
      %s327 = smul.addr %s326, 8
      %s328 = scalar_lea.vmem %s9, %s327
      %v329 = vld [vmem:[%s315] sm:$0xff]
      %v330 = vld [vmem:[%s315 + $0x8] sm:$0xff]
      %v331 = vld [vmem:[%s315 + $0x10] sm:$0xff]
      %v332 = vld [vmem:[%s315 + $0x18] sm:$0xff]
      %v333 = vld [vmem:[%s315 + $0x20] sm:$0xff]
      %v334 = vld [vmem:[%s315 + $0x28] sm:$0xff]
      %v335 = vld [vmem:[%s315 + $0x30] sm:$0xff]
      %v336 = vld [vmem:[%s315 + $0x38] sm:$0xff]
      %v337 = vld [vmem:[%s315 + $0x40] sm:$0xff]
      %v338 = vld [vmem:[%s315 + $0x48] sm:$0xff]
      %v339 = vld [vmem:[%s315 + $0x50] sm:$0xff]
      %v340 = vld [vmem:[%s315 + $0x58] sm:$0xff]
      %v341 = vld [vmem:[%s315 + $0x60] sm:$0xff]
      %v342 = vld [vmem:[%s315 + $0x68] sm:$0xff]
      %v343 = vld [vmem:[%s315 + $0x70] sm:$0xff]
      %v344 = vld [vmem:[%s315 + $0x78] sm:$0xff]
      %v345 = vld [vmem:[%s315 + $0x80] sm:$0xff]
      %v346 = vld [vmem:[%s315 + $0x88] sm:$0xff]
      %v347 = vld [vmem:[%s315 + $0x90] sm:$0xff]
      %v348 = vld [vmem:[%s315 + $0x98] sm:$0xff]
      %v349 = vld [vmem:[%s315 + $0xa0] sm:$0xff]
      %v350 = vld [vmem:[%s315 + $0xa8] sm:$0xff]
      %v351 = vld [vmem:[%s315 + $0xb0] sm:$0xff]
      %v352 = vld [vmem:[%s315 + $0xb8] sm:$0xff]
      %v353 = vld [vmem:[%s315 + $0xc0] sm:$0xff]
      %v354 = vld [vmem:[%s315 + $0xc8] sm:$0xff]
      %v355 = vld [vmem:[%s2] sm:$0x3]
      %v357 = vlaneseq
      %v358 = vshrl.u32 %v357, 7
      %v359 = vsub.s32 0, %v358
      %v360 = vrot.slane %v355, %v359
      %v361 = vlaneseq
      %v362 = vshrl.u32 %v361, 7
      %v363 = vsub.s32 1, %v362
      %v364 = vrot.slane %v355, %v363
      %v367 = vsub.f32 %v329, %v360
      %v368 = vsub.f32 %v330, %v364
      %v369 = vsub.f32 %v331, %v360
      %v370 = vsub.f32 %v332, %v364
      %v371 = vsub.f32 %v333, %v360
      %v372 = vsub.f32 %v334, %v364
      %v373 = vsub.f32 %v335, %v360
      %v374 = vsub.f32 %v336, %v364
      %v375 = vsub.f32 %v337, %v360
      %v376 = vsub.f32 %v338, %v364
      %v377 = vsub.f32 %v339, %v360
      %v378 = vsub.f32 %v340, %v364
      %v379 = vsub.f32 %v341, %v360
      %v380 = vsub.f32 %v342, %v364
      %v381 = vsub.f32 %v343, %v360
      %v382 = vsub.f32 %v344, %v364
      %v383 = vsub.f32 %v345, %v360
      %v384 = vsub.f32 %v346, %v364
      %v385 = vsub.f32 %v347, %v360
      %v386 = vsub.f32 %v348, %v364
      %v387 = vsub.f32 %v349, %v360
      %v388 = vsub.f32 %v350, %v364
      %v389 = vsub.f32 %v351, %v360
      %v390 = vsub.f32 %v352, %v364
      %v391 = vsub.f32 %v353, %v360
      %v392 = vsub.f32 %v354, %v364
      %v393 = vld [vmem:[%s3] sm:$0x3]
      %v395 = vlaneseq
      %v396 = vshrl.u32 %v395, 7
      %v397 = vsub.s32 0, %v396
      %v398 = vrot.slane %v393, %v397
      %v399 = vlaneseq
      %v400 = vshrl.u32 %v399, 7
      %v401 = vsub.s32 1, %v400
      %v402 = vrot.slane %v393, %v401
      %v405 = vmul.f32 %v367, %v398
      %v406 = vmul.f32 %v368, %v402
      %v407 = vmul.f32 %v369, %v398
      %v408 = vmul.f32 %v370, %v402
      %v409 = vmul.f32 %v371, %v398
      %v410 = vmul.f32 %v372, %v402
      %v411 = vmul.f32 %v373, %v398
      %v412 = vmul.f32 %v374, %v402
      %v413 = vmul.f32 %v375, %v398
      %v414 = vmul.f32 %v376, %v402
      %v415 = vmul.f32 %v377, %v398
      %v416 = vmul.f32 %v378, %v402
      %v417 = vmul.f32 %v379, %v398
      %v418 = vmul.f32 %v380, %v402
      %v419 = vmul.f32 %v381, %v398
      %v420 = vmul.f32 %v382, %v402
      %v421 = vmul.f32 %v383, %v398
      %v422 = vmul.f32 %v384, %v402
      %v423 = vmul.f32 %v385, %v398
      %v424 = vmul.f32 %v386, %v402
      %v425 = vmul.f32 %v387, %v398
      %v426 = vmul.f32 %v388, %v402
      %v427 = vmul.f32 %v389, %v398
      %v428 = vmul.f32 %v390, %v402
      %v429 = vmul.f32 %v391, %v398
      %v430 = vmul.f32 %v392, %v402
      %v431 = vld [vmem:[%s4] sm:$0x3]
      %v433 = vlaneseq
      %v434 = vshrl.u32 %v433, 7
      %v435 = vsub.s32 0, %v434
      %v436 = vrot.slane %v431, %v435
      %v437 = vlaneseq
      %v438 = vshrl.u32 %v437, 7
      %v439 = vsub.s32 1, %v438
      %v440 = vrot.slane %v431, %v439
      %v443 = vmul.f32 %v405, %v436
      %v444 = vmul.f32 %v406, %v440
      %v445 = vmul.f32 %v407, %v436
      %v446 = vmul.f32 %v408, %v440
      %v447 = vmul.f32 %v409, %v436
      %v448 = vmul.f32 %v410, %v440
      %v449 = vmul.f32 %v411, %v436
      %v450 = vmul.f32 %v412, %v440
      %v451 = vmul.f32 %v413, %v436
      %v452 = vmul.f32 %v414, %v440
      %v453 = vmul.f32 %v415, %v436
      %v454 = vmul.f32 %v416, %v440
      %v455 = vmul.f32 %v417, %v436
      %v456 = vmul.f32 %v418, %v440
      %v457 = vmul.f32 %v419, %v436
      %v458 = vmul.f32 %v420, %v440
      %v459 = vmul.f32 %v421, %v436
      %v460 = vmul.f32 %v422, %v440
      %v461 = vmul.f32 %v423, %v436
      %v462 = vmul.f32 %v424, %v440
      %v463 = vmul.f32 %v425, %v436
      %v464 = vmul.f32 %v426, %v440
      %v465 = vmul.f32 %v427, %v436
      %v466 = vmul.f32 %v428, %v440
      %v467 = vmul.f32 %v429, %v436
      %v468 = vmul.f32 %v430, %v440
      %v469 = vld [vmem:[%s5] sm:$0x3]
      %v471 = vlaneseq
      %v472 = vshrl.u32 %v471, 7
      %v473 = vsub.s32 0, %v472
      %v474 = vrot.slane %v469, %v473
      %v475 = vlaneseq
      %v476 = vshrl.u32 %v475, 7
      %v477 = vsub.s32 1, %v476
      %v478 = vrot.slane %v469, %v477
      %v481 = vadd.f32 %v443, %v474
      %v482 = vadd.f32 %v444, %v478
      %v483 = vadd.f32 %v445, %v474
      %v484 = vadd.f32 %v446, %v478
      %v485 = vadd.f32 %v447, %v474
      %v486 = vadd.f32 %v448, %v478
      %v487 = vadd.f32 %v449, %v474
      %v488 = vadd.f32 %v450, %v478
      %v489 = vadd.f32 %v451, %v474
      %v490 = vadd.f32 %v452, %v478
      %v491 = vadd.f32 %v453, %v474
      %v492 = vadd.f32 %v454, %v478
      %v493 = vadd.f32 %v455, %v474
      %v494 = vadd.f32 %v456, %v478
      %v495 = vadd.f32 %v457, %v474
      %v496 = vadd.f32 %v458, %v478
      %v497 = vadd.f32 %v459, %v474
      %v498 = vadd.f32 %v460, %v478
      %v499 = vadd.f32 %v461, %v474
      %v500 = vadd.f32 %v462, %v478
      %v501 = vadd.f32 %v463, %v474
      %v502 = vadd.f32 %v464, %v478
      %v503 = vadd.f32 %v465, %v474
      %v504 = vadd.f32 %v466, %v478
      %v505 = vadd.f32 %v467, %v474
      %v506 = vadd.f32 %v468, %v478
      %v507 = vmax.f32 %v481, 0.0
      %v508 = vmax.f32 %v482, 0.0
      %v509 = vmax.f32 %v483, 0.0
      %v510 = vmax.f32 %v484, 0.0
      %v511 = vmax.f32 %v485, 0.0
      %v512 = vmax.f32 %v486, 0.0
      %v513 = vmax.f32 %v487, 0.0
      %v514 = vmax.f32 %v488, 0.0
      %v515 = vmax.f32 %v489, 0.0
      %v516 = vmax.f32 %v490, 0.0
      %v517 = vmax.f32 %v491, 0.0
      %v518 = vmax.f32 %v492, 0.0
      %v519 = vmax.f32 %v493, 0.0
      %v520 = vmax.f32 %v494, 0.0
      %v521 = vmax.f32 %v495, 0.0
      %v522 = vmax.f32 %v496, 0.0
      %v523 = vmax.f32 %v497, 0.0
      %v524 = vmax.f32 %v498, 0.0
      %v525 = vmax.f32 %v499, 0.0
      %v526 = vmax.f32 %v500, 0.0
      %v527 = vmax.f32 %v501, 0.0
      %v528 = vmax.f32 %v502, 0.0
      %v529 = vmax.f32 %v503, 0.0
      %v530 = vmax.f32 %v504, 0.0
      %v531 = vmax.f32 %v505, 0.0
      %v532 = vmax.f32 %v506, 0.0
      %v533 = vpack.c.bf16 %v509, %v507
      %v534 = vpack.c.bf16 %v510, %v508
      %v535 = vpack.c.bf16 %v513, %v511
      %v536 = vpack.c.bf16 %v514, %v512
      %v537 = vpack.c.bf16 %v517, %v515
      %v538 = vpack.c.bf16 %v518, %v516
      %v539 = vpack.c.bf16 %v521, %v519
      %v540 = vpack.c.bf16 %v522, %v520
      %v541 = vpack.c.bf16 %v525, %v523
      %v542 = vpack.c.bf16 %v526, %v524
      %v543 = vpack.c.bf16 %v529, %v527
      %v544 = vpack.c.bf16 %v530, %v528
      %v545 = vpack.c.bf16 %v531, %v531
      %v546 = vpack.c.bf16 %v532, %v532
      %v547 = vld [vmem:[%s6] sm:$0xff]
      %v548 = vld [vmem:[%s6 + $0x8] sm:$0xff]
      %v549 = vld [vmem:[%s6 + $0x10] sm:$0xff]
      %v550 = vld [vmem:[%s6 + $0x18] sm:$0xff]
      %v551 = vld [vmem:[%s6 + $0x20] sm:$0xff]
      %v552 = vld [vmem:[%s6 + $0x28] sm:$0xff]
      %v553 = vld [vmem:[%s6 + $0x30] sm:$0xff]
      %v554 = vld [vmem:[%s6 + $0x38] sm:$0xff]
      %v555 = vld [vmem:[%s6 + $0x40] sm:$0xff]
      %v556 = vld [vmem:[%s6 + $0x48] sm:$0xff]
      %v557 = vld [vmem:[%s6 + $0x50] sm:$0xff]
      %v558 = vld [vmem:[%s6 + $0x58] sm:$0xff]
      %v559 = vld [vmem:[%s6 + $0x60] sm:$0xff]
      %v560 = vld [vmem:[%s6 + $0x68] sm:$0xff]
      %v561 = vld [vmem:[%s6 + $0x70] sm:$0xff]
      %v562 = vld [vmem:[%s6 + $0x78] sm:$0xff]
      %v563 = vld [vmem:[%s6 + $0x80] sm:$0xff]
      %v564 = vld [vmem:[%s6 + $0x88] sm:$0xff]
      %v565 = vld [vmem:[%s6 + $0x90] sm:$0xff]
      %v566 = vld [vmem:[%s6 + $0x98] sm:$0xff]
      %v567 = vld [vmem:[%s6 + $0xa0] sm:$0xff]
      %v568 = vld [vmem:[%s6 + $0xa8] sm:$0xff]
      %v569 = vld [vmem:[%s6 + $0xb0] sm:$0xff]
      %v570 = vld [vmem:[%s6 + $0xb8] sm:$0xff]
      %v571 = vld [vmem:[%s6 + $0xc0] sm:$0xff]
      %v572 = vld [vmem:[%s6 + $0xc8] sm:$0xff]
      %v573 = vld [vmem:[%s6 + $0xd0] sm:$0xff]
      %v574 = vld [vmem:[%s6 + $0xd8] sm:$0xff]
      %v575 = vld [vmem:[%s6 + $0xe0] sm:$0xff]
      %v576 = vld [vmem:[%s6 + $0xe8] sm:$0xff]
      %v577 = vld [vmem:[%s6 + $0xf0] sm:$0xff]
      %v578 = vld [vmem:[%s6 + $0xf8] sm:$0xff]
      %v579 = vld [vmem:[%s7] sm:$0x3]
      %v581 = vlaneseq
      %v582 = vshrl.u32 %v581, 7
      %v583 = vsub.s32 0, %v582
      %v584 = vrot.slane %v579, %v583
      %v585 = vlaneseq
      %v586 = vshrl.u32 %v585, 7
      %v587 = vsub.s32 1, %v586
      %v588 = vrot.slane %v579, %v587
      %v623 = vunpack.c.l.b16 %v547
      %v624 = vunpack.c.h.b16 %v547
      %v625 = vunpack.c.l.b16 %v548
      %v626 = vunpack.c.h.b16 %v548
      %v627 = vunpack.c.l.b16 %v549
      %v628 = vunpack.c.h.b16 %v549
      %v629 = vunpack.c.l.b16 %v550
      %v630 = vunpack.c.h.b16 %v550
      %v631 = vunpack.c.l.b16 %v551
      %v632 = vunpack.c.h.b16 %v551
      %v633 = vunpack.c.l.b16 %v552
      %v634 = vunpack.c.h.b16 %v552
      %v635 = vunpack.c.l.b16 %v553
      %v636 = vunpack.c.h.b16 %v553
      %v637 = vunpack.c.l.b16 %v554
      %v638 = vunpack.c.h.b16 %v554
      %v639 = vunpack.c.l.b16 %v555
      %v640 = vunpack.c.h.b16 %v555
      %v641 = vunpack.c.l.b16 %v556
      %v642 = vunpack.c.h.b16 %v556
      %v643 = vunpack.c.l.b16 %v557
      %v644 = vunpack.c.h.b16 %v557
      %v645 = vunpack.c.l.b16 %v558
      %v646 = vunpack.c.h.b16 %v558
      %v647 = vunpack.c.l.b16 %v559
      %v648 = vunpack.c.h.b16 %v559
      %v649 = vunpack.c.l.b16 %v560
      %v650 = vunpack.c.h.b16 %v560
      %v651 = vunpack.c.l.b16 %v561
      %v652 = vunpack.c.h.b16 %v561
      %v653 = vunpack.c.l.b16 %v562
      %v654 = vunpack.c.h.b16 %v562
      %v655 = vunpack.c.l.b16 %v563
      %v656 = vunpack.c.h.b16 %v563
      %v657 = vunpack.c.l.b16 %v564
      %v658 = vunpack.c.h.b16 %v564
      %v659 = vunpack.c.l.b16 %v565
      %v660 = vunpack.c.h.b16 %v565
      %v661 = vunpack.c.l.b16 %v566
      %v662 = vunpack.c.h.b16 %v566
      %v663 = vunpack.c.l.b16 %v567
      %v664 = vunpack.c.h.b16 %v567
      %v665 = vunpack.c.l.b16 %v568
      %v666 = vunpack.c.h.b16 %v568
      %v667 = vunpack.c.l.b16 %v569
      %v668 = vunpack.c.h.b16 %v569
      %v669 = vunpack.c.l.b16 %v570
      %v670 = vunpack.c.h.b16 %v570
      %v671 = vunpack.c.l.b16 %v571
      %v672 = vunpack.c.h.b16 %v571
      %v673 = vunpack.c.l.b16 %v572
      %v674 = vunpack.c.h.b16 %v572
      %v675 = vunpack.c.l.b16 %v573
      %v676 = vunpack.c.h.b16 %v573
      %v677 = vunpack.c.l.b16 %v574
      %v678 = vunpack.c.h.b16 %v574
      %v679 = vunpack.c.l.b16 %v575
      %v680 = vunpack.c.h.b16 %v575
      %v681 = vunpack.c.l.b16 %v576
      %v682 = vunpack.c.h.b16 %v576
      %v683 = vunpack.c.l.b16 %v577
      %v684 = vunpack.c.h.b16 %v577
      %v685 = vunpack.c.l.b16 %v578
      %v686 = vunpack.c.h.b16 %v578
      %v687 = vpack.c.b16 %v625, %v623
      %v688 = vpack.c.b16 %v626, %v624
      %v689 = vpack.c.b16 %v629, %v627
      %v690 = vpack.c.b16 %v630, %v628
      %v691 = vpack.c.b16 %v633, %v631
      %v692 = vpack.c.b16 %v634, %v632
      %v693 = vpack.c.b16 %v637, %v635
      %v694 = vpack.c.b16 %v638, %v636
      %v695 = vpack.c.b16 %v641, %v639
      %v696 = vpack.c.b16 %v642, %v640
      %v697 = vpack.c.b16 %v645, %v643
      %v698 = vpack.c.b16 %v646, %v644
      %v699 = vpack.c.b16 %v649, %v647
      %v700 = vpack.c.b16 %v650, %v648
      %v701 = vpack.c.b16 %v653, %v651
      %v702 = vpack.c.b16 %v654, %v652
      %v703 = vpack.c.b16 %v657, %v655
      %v704 = vpack.c.b16 %v658, %v656
      %v705 = vpack.c.b16 %v661, %v659
      %v706 = vpack.c.b16 %v662, %v660
      %v707 = vpack.c.b16 %v665, %v663
      %v708 = vpack.c.b16 %v666, %v664
      %v709 = vpack.c.b16 %v669, %v667
      %v710 = vpack.c.b16 %v670, %v668
      %v711 = vpack.c.b16 %v673, %v671
      %v712 = vpack.c.b16 %v674, %v672
      %v713 = vpack.c.b16 %v677, %v675
      %v714 = vpack.c.b16 %v678, %v676
      %v715 = vpack.c.b16 %v681, %v679
      %v716 = vpack.c.b16 %v682, %v680
      %v717 = vpack.c.b16 %v685, %v683
      %v718 = vpack.c.b16 %v686, %v684
      %751 = vmatprep.subr.bf16.mxu0 %v702
      %752 = vmatpush1.bf16.msra.mxu0 %v701
      %753 = vmatprep.subr.bf16.mxu0 %v700
      %754 = vmatpush1.bf16.msra.mxu0 %v699
      %755 = vmatprep.subr.bf16.mxu0 %v698
      %756 = vmatpush1.bf16.msra.mxu0 %v697
      %757 = vmatprep.subr.bf16.mxu0 %v696
      %758 = vmatpush1.bf16.msra.mxu0 %v695
      %759 = vmatprep.subr.bf16.mxu0 %v694
      %760 = vmatpush1.bf16.msra.mxu0 %v693
      %761 = vmatprep.subr.bf16.mxu0 %v692
      %762 = vmatpush1.bf16.msra.mxu0 %v691
      %763 = vmatprep.subr.bf16.mxu0 %v690
      %764 = vmatpush1.bf16.msra.mxu0 %v689
      %765 = vmatprep.subr.bf16.mxu0 %v688
      %766 = vmatpush1.bf16.msra.mxu0 %v687
      %767 = vmatprep.subr.bf16.mxu0 %v718
      %768 = vmatpush2.bf16.msra.mxu0 %v717
      %769 = vmatprep.subr.bf16.mxu0 %v716
      %770 = vmatpush2.bf16.msra.mxu0 %v715
      %771 = vmatprep.subr.bf16.mxu0 %v714
      %772 = vmatpush2.bf16.msra.mxu0 %v713
      %773 = vmatprep.subr.bf16.mxu0 %v712
      %774 = vmatpush2.bf16.msra.mxu0 %v711
      %775 = vmatprep.subr.bf16.mxu0 %v710
      %776 = vmatpush2.bf16.msra.mxu0 %v709
      %777 = vmatprep.subr.bf16.mxu0 %v708
      %778 = vmatpush2.bf16.msra.mxu0 %v707
      %779 = vmatprep.subr.bf16.mxu0 %v706
      %780 = vmatpush2.bf16.msra.mxu0 %v705
      %781 = vmatprep.subr.bf16.mxu0 %v704
      %782 = vmatpush2.bf16.msra.mxu0 %v703
      %783 = vmatprep.mubr.bf16.mxu0 %v534
      %784 = vmatmul.mubr.bf16.gmra.mxu0 %v533
      %v785 = vpop.f32.mrf.mxu0
      %v786 = vadd.f32 %v584, %v785
      %v787 = vpop.f32.mrf.mxu0
      %v788 = vadd.f32 %v588, %v787
      %v789 = vpop.f32.mrf.mxu0
      %v790 = vadd.f32 %v584, %v789
      %v791 = vpop.f32.mrf.mxu0
      %v792 = vadd.f32 %v588, %v791
      %793 = vmatprep.mubr.bf16.mxu0 %v536
      %794 = vmatmul.mubr.bf16.gmra.mxu0 %v535
      %v795 = vpop.f32.mrf.mxu0
      %v796 = vadd.f32 %v584, %v795
      %v797 = vpop.f32.mrf.mxu0
      %v798 = vadd.f32 %v588, %v797
      %v799 = vpop.f32.mrf.mxu0
      %v800 = vadd.f32 %v584, %v799
      %v801 = vpop.f32.mrf.mxu0
      %v802 = vadd.f32 %v588, %v801
      %803 = vmatprep.mubr.bf16.mxu0 %v538
      %804 = vmatmul.mubr.bf16.gmra.mxu0 %v537
      %v805 = vpop.f32.mrf.mxu0
      %v806 = vadd.f32 %v584, %v805
      %v807 = vpop.f32.mrf.mxu0
      %v808 = vadd.f32 %v588, %v807
      %v809 = vpop.f32.mrf.mxu0
      %v810 = vadd.f32 %v584, %v809
      %v811 = vpop.f32.mrf.mxu0
      %v812 = vadd.f32 %v588, %v811
      %813 = vmatprep.mubr.bf16.mxu0 %v540
      %814 = vmatmul.mubr.bf16.gmra.mxu0 %v539
      %v815 = vpop.f32.mrf.mxu0
      %v816 = vadd.f32 %v584, %v815
      %v817 = vpop.f32.mrf.mxu0
      %v818 = vadd.f32 %v588, %v817
      %v819 = vpop.f32.mrf.mxu0
      %v820 = vadd.f32 %v584, %v819
      %v821 = vpop.f32.mrf.mxu0
      %v822 = vadd.f32 %v588, %v821
      %823 = vmatprep.mubr.bf16.mxu0 %v542
      %824 = vmatmul.mubr.bf16.gmra.mxu0 %v541
      %v825 = vpop.f32.mrf.mxu0
      %v826 = vadd.f32 %v584, %v825
      %v827 = vpop.f32.mrf.mxu0
      %v828 = vadd.f32 %v588, %v827
      %v829 = vpop.f32.mrf.mxu0
      %v830 = vadd.f32 %v584, %v829
      %v831 = vpop.f32.mrf.mxu0
      %v832 = vadd.f32 %v588, %v831
      %833 = vmatprep.mubr.bf16.mxu0 %v544
      %834 = vmatmul.mubr.bf16.gmra.mxu0 %v543
      %v835 = vpop.f32.mrf.mxu0
      %v836 = vadd.f32 %v584, %v835
      %v837 = vpop.f32.mrf.mxu0
      %v838 = vadd.f32 %v588, %v837
      %v839 = vpop.f32.mrf.mxu0
      %v840 = vadd.f32 %v584, %v839
      %v841 = vpop.f32.mrf.mxu0
      %v842 = vadd.f32 %v588, %v841
      %843 = vmatprep.mubr.bf16.mxu0 %v546
      %844 = vmatmul.mubr.bf16.gmra.mxu0 %v545
      %v845 = vpop.f32.mrf.mxu0
      %v846 = vadd.f32 %v584, %v845
      %v847 = vpop.f32.mrf.mxu0
      %v848 = vadd.f32 %v588, %v847
      %v849 = vpop.f32.mrf.mxu0
      %v850 = vpop.f32.mrf.mxu0
      %851 = vdwg.mxu0
      %852 = vst [vmem:[%s322] sm:$0xff] %v786
      %853 = vst [vmem:[%s322 + $0x8] sm:$0xff] %v788
      %854 = vst [vmem:[%s322 + $0x10] sm:$0xff] %v790
      %855 = vst [vmem:[%s322 + $0x18] sm:$0xff] %v792
      %856 = vst [vmem:[%s322 + $0x20] sm:$0xff] %v796
      %857 = vst [vmem:[%s322 + $0x28] sm:$0xff] %v798
      %858 = vst [vmem:[%s322 + $0x30] sm:$0xff] %v800
      %859 = vst [vmem:[%s322 + $0x38] sm:$0xff] %v802
      %860 = vst [vmem:[%s322 + $0x40] sm:$0xff] %v806
      %861 = vst [vmem:[%s322 + $0x48] sm:$0xff] %v808
      %862 = vst [vmem:[%s322 + $0x50] sm:$0xff] %v810
      %863 = vst [vmem:[%s322 + $0x58] sm:$0xff] %v812
      %864 = vst [vmem:[%s322 + $0x60] sm:$0xff] %v816
      %865 = vst [vmem:[%s322 + $0x68] sm:$0xff] %v818
      %866 = vst [vmem:[%s322 + $0x70] sm:$0xff] %v820
      %867 = vst [vmem:[%s322 + $0x78] sm:$0xff] %v822
      %868 = vst [vmem:[%s322 + $0x80] sm:$0xff] %v826
      %869 = vst [vmem:[%s322 + $0x88] sm:$0xff] %v828
      %870 = vst [vmem:[%s322 + $0x90] sm:$0xff] %v830
      %871 = vst [vmem:[%s322 + $0x98] sm:$0xff] %v832
      %872 = vst [vmem:[%s322 + $0xa0] sm:$0xff] %v836
      %873 = vst [vmem:[%s322 + $0xa8] sm:$0xff] %v838
      %874 = vst [vmem:[%s322 + $0xb0] sm:$0xff] %v840
      %875 = vst [vmem:[%s322 + $0xb8] sm:$0xff] %v842
      %876 = vst [vmem:[%s322 + $0xc0] sm:$0xff] %v846
      %877 = vst [vmem:[%s322 + $0xc8] sm:$0xff] %v848
      %s878 = sld [smem:[#allocation3]]
      %s879 = smul.u32 %s22, 104
      %v880 = vlaneseq
      %v881 = vshrl.u32 %v880, 7
      %v882 = vadd.s32 %v881, 8
      %v883 = vadd.s32 %v881, 16
      %v884 = vadd.s32 %v881, 24
      %v885 = vadd.s32 %v881, 32
      %v886 = vadd.s32 %v881, 40
      %v887 = vadd.s32 %v881, 48
      %v888 = vadd.s32 %v881, 56
      %v889 = vadd.s32 %v881, 64
      %v890 = vadd.s32 %v881, 72
      %v891 = vadd.s32 %v881, 80
      %v892 = vadd.s32 %v881, 88
      %v893 = vadd.s32 %v881, 96
      %v894 = vstv %s879
      %v895 = vadd.s32 %v894, %v881
      %v896 = vadd.s32 %v894, %v882
      %v897 = vadd.s32 %v894, %v883
      %v898 = vadd.s32 %v894, %v884
      %v899 = vadd.s32 %v894, %v885
      %v900 = vadd.s32 %v894, %v886
      %v901 = vadd.s32 %v894, %v887
      %v902 = vadd.s32 %v894, %v888
      %v903 = vadd.s32 %v894, %v889
      %v904 = vadd.s32 %v894, %v890
      %v905 = vadd.s32 %v894, %v891
      %v906 = vadd.s32 %v894, %v892
      %v907 = vadd.s32 %v894, %v893
      %v908 = vstv %s878
      %vm909 = vcmp.lt.s32.totalorder %v895, %v908
      %vm910 = vcmp.lt.s32.totalorder %v896, %v908
      %vm911 = vcmp.lt.s32.totalorder %v897, %v908
      %vm912 = vcmp.lt.s32.totalorder %v898, %v908
      %vm913 = vcmp.lt.s32.totalorder %v899, %v908
      %vm914 = vcmp.lt.s32.totalorder %v900, %v908
      %vm915 = vcmp.lt.s32.totalorder %v901, %v908
      %vm916 = vcmp.lt.s32.totalorder %v902, %v908
      %vm917 = vcmp.lt.s32.totalorder %v903, %v908
      %vm918 = vcmp.lt.s32.totalorder %v904, %v908
      %vm919 = vcmp.lt.s32.totalorder %v905, %v908
      %vm920 = vcmp.lt.s32.totalorder %v906, %v908
      %vm921 = vcmp.lt.s32.totalorder %v907, %v908
      %v922 = vsel %vm909, 1, 0
      %v923 = vsel %vm910, 1, 0
      %v924 = vsel %vm911, 1, 0
      %v925 = vsel %vm912, 1, 0
      %v926 = vsel %vm913, 1, 0
      %v927 = vsel %vm914, 1, 0
      %v928 = vsel %vm915, 1, 0
      %v929 = vsel %vm916, 1, 0
      %v930 = vsel %vm917, 1, 0
      %v931 = vsel %vm918, 1, 0
      %v932 = vsel %vm919, 1, 0
      %v933 = vsel %vm920, 1, 0
      %v934 = vsel %vm921, 1, 0
      %v935 = vcvt.s32.f32 %v922
      %v936 = vcvt.s32.f32 %v923
      %v937 = vcvt.s32.f32 %v924
      %v938 = vcvt.s32.f32 %v925
      %v939 = vcvt.s32.f32 %v926
      %v940 = vcvt.s32.f32 %v927
      %v941 = vcvt.s32.f32 %v928
      %v942 = vcvt.s32.f32 %v929
      %v943 = vcvt.s32.f32 %v930
      %v944 = vcvt.s32.f32 %v931
      %v945 = vcvt.s32.f32 %v932
      %v946 = vcvt.s32.f32 %v933
      %v947 = vcvt.s32.f32 %v934
      %v948 = vmul.f32 %v786, %v935
      %v949 = vmul.f32 %v788, %v935
      %v950 = vmul.f32 %v790, %v936
      %v951 = vmul.f32 %v792, %v936
      %v952 = vmul.f32 %v796, %v937
      %v953 = vmul.f32 %v798, %v937
      %v954 = vmul.f32 %v800, %v938
      %v955 = vmul.f32 %v802, %v938
      %v956 = vmul.f32 %v806, %v939
      %v957 = vmul.f32 %v808, %v939
      %v958 = vmul.f32 %v810, %v940
      %v959 = vmul.f32 %v812, %v940
      %v960 = vmul.f32 %v816, %v941
      %v961 = vmul.f32 %v818, %v941
      %v962 = vmul.f32 %v820, %v942
      %v963 = vmul.f32 %v822, %v942
      %v964 = vmul.f32 %v826, %v943
      %v965 = vmul.f32 %v828, %v943
      %v966 = vmul.f32 %v830, %v944
      %v967 = vmul.f32 %v832, %v944
      %v968 = vmul.f32 %v836, %v945
      %v969 = vmul.f32 %v838, %v945
      %v970 = vmul.f32 %v840, %v946
      %v971 = vmul.f32 %v842, %v946
      %v972 = vmul.f32 %v846, %v947
      %v973 = vmul.f32 %v848, %v947
      %v974 = vadd.f32 %v948, %v950
      %v975 = vadd.f32 %v974, %v952
      %v976 = vadd.f32 %v975, %v954
      %v977 = vadd.f32 %v976, %v956
      %v978 = vadd.f32 %v977, %v958
      %v979 = vadd.f32 %v978, %v960
      %v980 = vadd.f32 %v979, %v962
      %v981 = vadd.f32 %v980, %v964
      %v982 = vadd.f32 %v981, %v966
      %v983 = vadd.f32 %v982, %v968
      %v984 = vadd.f32 %v983, %v970
      %v985 = vadd.f32 %v984, %v972
      %v986 = vrot.slane %v985, 4
      %v987 = vadd.f32 %v985, %v986
      %v988 = vrot.slane %v987, 2
      %v989 = vadd.f32 %v987, %v988
      %v990 = vrot.slane %v989, 1
      %v991 = vadd.f32 %v989, %v990
      %v992 = vadd.f32 %v949, %v951
      %v993 = vadd.f32 %v992, %v953
      %v994 = vadd.f32 %v993, %v955
      %v995 = vadd.f32 %v994, %v957
      %v996 = vadd.f32 %v995, %v959
      %v997 = vadd.f32 %v996, %v961
      %v998 = vadd.f32 %v997, %v963
      %v999 = vadd.f32 %v998, %v965
      %v1000 = vadd.f32 %v999, %v967
      %v1001 = vadd.f32 %v1000, %v969
      %v1002 = vadd.f32 %v1001, %v971
      %v1003 = vadd.f32 %v1002, %v973
      %v1004 = vrot.slane %v1003, 4
      %v1005 = vadd.f32 %v1003, %v1004
      %v1006 = vrot.slane %v1005, 2
      %v1007 = vadd.f32 %v1005, %v1006
      %v1008 = vrot.slane %v1007, 1
      %v1009 = vadd.f32 %v1007, %v1008
      %v1010 = vmul.f32 %v948, %v786
      %v1011 = vmul.f32 %v949, %v788
      %v1012 = vmul.f32 %v950, %v790
      %v1013 = vmul.f32 %v951, %v792
      %v1014 = vmul.f32 %v952, %v796
      %v1015 = vmul.f32 %v953, %v798
      %v1016 = vmul.f32 %v954, %v800
      %v1017 = vmul.f32 %v955, %v802
      %v1018 = vmul.f32 %v956, %v806
      %v1019 = vmul.f32 %v957, %v808
      %v1020 = vmul.f32 %v958, %v810
      %v1021 = vmul.f32 %v959, %v812
      %v1022 = vmul.f32 %v960, %v816
      %v1023 = vmul.f32 %v961, %v818
      %v1024 = vmul.f32 %v962, %v820
      %v1025 = vmul.f32 %v963, %v822
      %v1026 = vmul.f32 %v964, %v826
      %v1027 = vmul.f32 %v965, %v828
      %v1028 = vmul.f32 %v966, %v830
      %v1029 = vmul.f32 %v967, %v832
      %v1030 = vmul.f32 %v968, %v836
      %v1031 = vmul.f32 %v969, %v838
      %v1032 = vmul.f32 %v970, %v840
      %v1033 = vmul.f32 %v971, %v842
      %v1034 = vmul.f32 %v972, %v846
      %v1035 = vmul.f32 %v973, %v848
      %v1036 = vadd.f32 %v1010, %v1012
      %v1037 = vadd.f32 %v1036, %v1014
      %v1038 = vadd.f32 %v1037, %v1016
      %v1039 = vadd.f32 %v1038, %v1018
      %v1040 = vadd.f32 %v1039, %v1020
      %v1041 = vadd.f32 %v1040, %v1022
      %v1042 = vadd.f32 %v1041, %v1024
      %v1043 = vadd.f32 %v1042, %v1026
      %v1044 = vadd.f32 %v1043, %v1028
      %v1045 = vadd.f32 %v1044, %v1030
      %v1046 = vadd.f32 %v1045, %v1032
      %v1047 = vadd.f32 %v1046, %v1034
      %v1048 = vrot.slane %v1047, 4
      %v1049 = vadd.f32 %v1047, %v1048
      %v1050 = vrot.slane %v1049, 2
      %v1051 = vadd.f32 %v1049, %v1050
      %v1052 = vrot.slane %v1051, 1
      %v1053 = vadd.f32 %v1051, %v1052
      %v1054 = vadd.f32 %v1011, %v1013
      %v1055 = vadd.f32 %v1054, %v1015
      %v1056 = vadd.f32 %v1055, %v1017
      %v1057 = vadd.f32 %v1056, %v1019
      %v1058 = vadd.f32 %v1057, %v1021
      %v1059 = vadd.f32 %v1058, %v1023
      %v1060 = vadd.f32 %v1059, %v1025
      %v1061 = vadd.f32 %v1060, %v1027
      %v1062 = vadd.f32 %v1061, %v1029
      %v1063 = vadd.f32 %v1062, %v1031
      %v1064 = vadd.f32 %v1063, %v1033
      %v1065 = vadd.f32 %v1064, %v1035
      %v1066 = vrot.slane %v1065, 4
      %v1067 = vadd.f32 %v1065, %v1066
      %v1068 = vrot.slane %v1067, 2
      %v1069 = vadd.f32 %v1067, %v1068
      %v1070 = vrot.slane %v1069, 1
      %v1071 = vadd.f32 %v1069, %v1070
      %vm1072 = vcmp.eq.s32.totalorder %v881, 0
      %vm1073 = vcmp.eq.s32.totalorder %v881, 1
      %v1074 = vsel %vm1073, %v1053, 0.0
      %v1075 = vsel %vm1073, %v1071, 0.0
      %v1076 = vsel %vm1072, %v991, %v1074
      %v1077 = vsel %vm1072, %v1009, %v1075
      %1078 = vst [vmem:[%s328] sm:$0xff] %v1076
      %1079 = vst [vmem:[%s328 + $0x8] sm:$0xff] %v1077
      %s1080 = smul.u32 13, %s22
      %p1081 = scmp.lt.s32.totalorder %s1080, 25
      %s1082 = scalar_select %p1081, %s1080, 25
      %s1083 = smul.addr %s1082, 2
      %s1084 = smul.addr %s1083, 8
      %s1085 = scalar_lea.vmem %s8, %s1084
      %p1086 = scmp.lt.s32.totalorder %s22, 1
      %s1087 = scalar_select %p1086, %s22, 1
      %s1088 = smul.addr %s1087, 2
      %s1089 = smul.addr %s1088, 8
      %s1090 = scalar_lea.vmem %s9, %s1089
      // Predicated region
      $region49: #{_lambda_.4} parent=47 // pred_check
        %p1091 = pneg %p192
      $region50: #{_lambda_.4} parent=47 // pred_check_branch
        %1093 = sbr.rel (%p1091) target = $region52
      $region51: #{_lambda_.4} parent=47 // pred_region
        %s1094 = smul.u32 13, %s22
      $region52: #{_lambda_.4} parent=47 // pred_fallthru
        _
      // Predicated region
      $region53: #{_lambda_.4} parent=47 // pred_check
        %p1095 = pneg %p218
      $region54: #{_lambda_.4} parent=47 // pred_check_branch
        %1097 = sbr.rel (%p1095) target = $region56
      $region55: #{_lambda_.4} parent=47 // pred_region
        _
      $region56: #{_lambda_.4} parent=47 // pred_fallthru
        _
    $region48: #{_lambda_.4} parent=5 // pred_fallthru
      _
    %p1098 = scmp.le.s32.totalorder 2, %s17
    // Predicated region
    $region57: #{_lambda_.4} parent=5 // pred_check
      %p1099 = pneg %p1098
    $region58: #{_lambda_.4} parent=5 // pred_check_branch
      %1101 = sbr.rel (%p1099) target = $region60
    $region59: #{_lambda_.4} parent=5 // pred_region
      %s1102 = ssub.s32 %s17, 2
      // Predicated region
      $region61: #{_lambda_.4} parent=59 // pred_check
        %p1103 = pneg %p198
      $region62: #{_lambda_.4} parent=59 // pred_check_branch
        %1105 = sbr.rel (%p1103) target = $region64
      $region63: #{_lambda_.4} parent=59 // pred_region
        %s1106 = smul.u32 13, %s23
        %p1107 = scmp.lt.s32.totalorder %s1106, 25
        %s1108 = scalar_select %p1107, %s1106, 25
        %s1109 = smul.addr %s1108, 2
        %s1110 = smul.addr %s1109, 8
        %s1111 = scalar_lea.vmem %s8, %s1110
      $region64: #{_lambda_.4} parent=59 // pred_fallthru
        _
      // Predicated region
      $region65: #{_lambda_.4} parent=59 // pred_check
        %p1112 = pneg %p224
      $region66: #{_lambda_.4} parent=59 // pred_check_branch
        %1114 = sbr.rel (%p1112) target = $region68
      $region67: #{_lambda_.4} parent=59 // pred_region
        %p1115 = scmp.lt.s32.totalorder %s23, 1
        %s1116 = scalar_select %p1115, %s23, 1
        %s1117 = smul.addr %s1116, 2
        %s1118 = smul.addr %s1117, 8
        %s1119 = scalar_lea.vmem %s9, %s1118
      $region68: #{_lambda_.4} parent=59 // pred_fallthru
        _
    $region60: #{_lambda_.4} parent=5 // pred_fallthru
      _
  $region6: #{_lambda_.4} parent=0 // loop_footer
    %s21 = sadd.s32 1, %s17
  $region7: #{_lambda_.4} parent=0 // loop_footer_branch
    %16 = sbr.rel target = $region3
  $region8: #{_lambda_.4} parent=0 // loop_exit
    _

// kernel: _lambda_.3
$region0: #{_lambda_.3}
  #allocation0 [shape = 'u32[]', space=smem, size = 0x4, offset = 0x4, fixed_abs, tag = 'smem constant byte address 0x4 - core index']
  #allocation1 [shape = 'u32[144,128]{1,0:T(1,128)}', space=vmem, size = 0x12000, scoped, tag = 'internal scratch']
  #allocation2 [shape = 's32[1]{0}', space=sflag, size = 0x4, scoped, tag = 'scoped memory for _lambda_.3']
  #allocation3 [shape = 's32[1]{0:T(128)S(6)}', space=smem, size = 0x200, scoped, tag = 'prefetched SMEM operand 0']
  %s0 = inlined_call_operand.smem [shape: u32[40], index: -1, kind: input, shape index: {}]
  %s1 = sld [smem:[%s0]]
  %s2 = scalar_lea.smem %s0, 1
  %s3 = sld [smem:[%s2]]
  %s4 = scalar_lea.smem %s0, 2
  %s5 = sld [smem:[%s4]]
  %s6 = scalar_lea.smem %s0, 3
  %s7 = sld [smem:[%s6]]
  %s8 = scalar_lea.smem %s0, 4
  %s9 = sld [smem:[%s8]]
  %s10 = scalar_lea.smem %s0, 5
  %s11 = sld [smem:[%s10]]
  %s12 = scalar_lea.smem %s0, 6
  %s13 = sld [smem:[%s12]]
  %s14 = scalar_lea.smem %s0, 7
  %s15 = sld [smem:[%s14]]
  %s16 = scalar_lea.smem %s0, 8
  %s17 = sld [smem:[%s16]]
  %s18 = scalar_lea.smem %s0, 9
  %s19 = sld [smem:[%s18]]
  %s20 = scalar_lea.smem %s0, 10
  %s21 = sld [smem:[%s20]]
  %s22 = scalar_lea.smem %s0, 11
  %s23 = sld [smem:[%s22]]
  %s24 = scalar_lea.smem %s0, 12
  %s25 = sld [smem:[%s24]]
  %s26 = scalar_lea.smem %s0, 13
  %s27 = sld [smem:[%s26]]
  %s28 = scalar_lea.smem %s0, 14
  %s29 = sld [smem:[%s28]]
  %s30 = scalar_lea.smem %s0, 15
  %s31 = sld [smem:[%s30]]
  %s32 = scalar_lea.smem %s0, 16
  %s33 = sld [smem:[%s32]]
  %s34 = scalar_lea.smem %s0, 17
  %s35 = sld [smem:[%s34]]
  %s36 = scalar_lea.smem %s0, 18
  %s37 = sld [smem:[%s36]]
  %s38 = scalar_lea.smem %s0, 19
  %s39 = sld [smem:[%s38]]
  %s40 = scalar_lea.smem %s0, 20
  %s41 = sld [smem:[%s40]]
  %s42 = scalar_lea.smem %s0, 21
  %s43 = sld [smem:[%s42]]
  %s44 = scalar_lea.smem %s0, 22
  %s45 = sld [smem:[%s44]]
  %s46 = scalar_lea.smem %s0, 23
  %s47 = sld [smem:[%s46]]
  %s48 = scalar_lea.smem %s0, 24
  %s49 = sld [smem:[%s48]]
  %s50 = scalar_lea.smem %s0, 25
  %s51 = sld [smem:[%s50]]
  %s52 = scalar_lea.smem %s0, 26
  %s53 = sld [smem:[%s52]]
  %s54 = scalar_lea.smem %s0, 27
  %s55 = sld [smem:[%s54]]
  %s56 = scalar_lea.smem %s0, 28
  %s57 = sld [smem:[%s56]]
  %s58 = scalar_lea.smem %s0, 29
  %s59 = sld [smem:[%s58]]
  %s60 = scalar_lea.smem %s0, 30
  %s61 = sld [smem:[%s60]]
  %s62 = scalar_lea.smem %s0, 31
  %s63 = sld [smem:[%s62]]
  %s64 = scalar_lea.smem %s0, 32
  %s65 = sld [smem:[%s64]]
  %s66 = scalar_lea.smem %s0, 33
  %s67 = sld [smem:[%s66]]
  %s68 = scalar_lea.smem %s0, 34
  %s69 = sld [smem:[%s68]]
  %s70 = scalar_lea.smem %s0, 35
  %s71 = sld [smem:[%s70]]
  %s72 = scalar_lea.smem %s0, 36
  %s73 = sld [smem:[%s72]]
  %s74 = scalar_lea.smem %s0, 37
  %s75 = sld [smem:[%s74]]
  %s76 = scalar_lea.smem %s0, 38
  %s77 = sld [smem:[%s76]]
  %s78 = scalar_lea.smem %s0, 39
  %s79 = sld [smem:[%s78]]
  %80 = xla_tuple %s73, %s75, %s77, %s79
  %s81 = sld [smem:[#allocation0]]
  $region240: #{_lambda_.3} parent=0
    _
  %s83 = ssub.s32 1, %s81
  %s84 = scalar_select 0, %s83, %s81
  %85 = sst [smem:[#allocation3]] %s1
  $region1: #{_lambda_.3} parent=0
    #allocation4 [shape = 'u8[131072]{0}', space=vmem, size = 0x20000, scoped, tag = 'input window, operand 20, single buffered']
    #allocation5 [shape = 's32[2]{0}', space=sflag, size = 0x8, scoped, tag = 'scoped memory for _lambda_.3']
    #allocation6 [shape = 'u8[131072]{0}', space=vmem, size = 0x20000, scoped, tag = 'input window, operand 22, single buffered']
    #allocation7 [shape = 's32[1]{0}', space=sflag, size = 0x4, scoped, tag = 'scoped memory for _lambda_.3']
    #allocation8 [shape = 'u8[131072]{0}', space=vmem, size = 0x20000, scoped, tag = 'input window, operand 24, single buffered']
    #allocation9 [shape = 'u8[131072]{0}', space=vmem, size = 0x20000, scoped, tag = 'input window, operand 25, single buffered']
    #allocation10 [shape = 's32[1]{0}', space=sflag, size = 0x4, scoped, tag = 'scoped memory for _lambda_.3']
    #allocation11 [shape = 'u8[131072]{0}', space=vmem, size = 0x20000, scoped, tag = 'input window, operand 27, single buffered']
    #allocation12 [shape = 'u8[131072]{0}', space=vmem, size = 0x20000, scoped, tag = 'input window, operand 28, single buffered']
    #allocation13 [shape = 's32[1]{0}', space=sflag, size = 0x4, scoped, tag = 'scoped memory for _lambda_.3']
    #allocation14 [shape = 'u8[131072]{0}', space=vmem, size = 0x20000, scoped, tag = 'input window, operand 30, single buffered']
    #allocation15 [shape = 'u8[131072]{0}', space=vmem, size = 0x20000, scoped, tag = 'input window, operand 32, single buffered']
    #allocation16 [shape = 's32[1]{0}', space=sflag, size = 0x4, scoped, tag = 'scoped memory for _lambda_.3']
    #allocation17 [shape = 'u8[131072]{0}', space=vmem, size = 0x20000, scoped, tag = 'input window, operand 34, single buffered']
    %86 = vsyncpa [#allocation5], 0
    %87 = vsyncpa [#allocation7], 0
    %88 = vsyncpa [#allocation10], 0
    %89 = vsyncpa [#allocation13], 0
    %90 = vsyncpa [#allocation16], 0
    loop: start=0, step=1, limit=4
    $region2: #{_lambda_.3} parent=1 // loop_pre_header
      _
    $region3: #{_lambda_.3} parent=1 // loop_header
      %s92 = sphi 0, %s96
      %p93 = scmp.ge.s32.totalorder %s92, 4
      %s102 = sphi 0, %s104
      %s105 = sphi 0, %s102
      %s106 = sphi 0, %s105
      %s122 = sphi 0, %s106
      %s128 = sphi 0, %s130
      %s131 = sphi 0, %s128
      %s132 = sphi 0, %s131
      %s148 = sphi 0, %s132
      %s154 = sphi 0, %s156
      %s157 = sphi 0, %s154
      %s158 = sphi 0, %s157
      %s174 = sphi 0, %s158
      %s178 = sphi 0, %s178
      %s180 = sphi 0, %s178
      %s181 = sphi 0, %s180
      %s195 = sphi 0, %s181
      %s199 = sphi 0, %s199
      %s201 = sphi 0, %s199
      %s202 = sphi 0, %s201
      %s216 = sphi 0, %s202
      %s220 = sphi 0, %s220
      %s222 = sphi 0, %s220
      %s223 = sphi 0, %s222
      %s237 = sphi 0, %s223
      %s241 = sphi 0, %s241
      %s243 = sphi 0, %s241
      %s244 = sphi 0, %s243
      %s258 = sphi 0, %s244
      %s262 = sphi 0, %s262
      %s264 = sphi 0, %s262
      %s265 = sphi 0, %s264
      %s279 = sphi 0, %s265
      %s283 = sphi 0, %s283
      %s285 = sphi 0, %s283
      %s286 = sphi 0, %s285
      %s300 = sphi 0, %s286
      %s304 = sphi 0, %s304
      %s306 = sphi 0, %s304
      %s307 = sphi 0, %s306
      %s321 = sphi 0, %s307
      %s325 = sphi 0, %s325
      %s327 = sphi 0, %s325
      %s328 = sphi 0, %s327
      %s342 = sphi 0, %s328
      %s346 = sphi 0, %s346
      %s348 = sphi 0, %s346
      %s349 = sphi 0, %s348
      %s363 = sphi 0, %s349
      %s367 = sphi 0, %s367
      %s369 = sphi 0, %s367
      %s370 = sphi 0, %s369
      %s384 = sphi 0, %s370
      %s388 = sphi 0, %s388
      %s390 = sphi 0, %s388
      %s391 = sphi 0, %s390
      %s405 = sphi 0, %s391
      %s409 = sphi 0, %s409
      %s411 = sphi 0, %s409
      %s412 = sphi 0, %s411
      %s426 = sphi 0, %s412
      %s430 = sphi 0, %s430
      %s432 = sphi 0, %s430
      %s433 = sphi 0, %s432
      %s447 = sphi 0, %s433
      %s451 = sphi 0, %s451
      %s453 = sphi 0, %s451
      %s454 = sphi 0, %s453
      %s468 = sphi 0, %s454
      %s472 = sphi 0, %s472
      %s474 = sphi 0, %s472
      %s475 = sphi 0, %s474
      %s489 = sphi 0, %s475
      %s493 = sphi 0, %s493
      %s495 = sphi 0, %s493
      %s496 = sphi 0, %s495
      %s510 = sphi 0, %s496
      %s514 = sphi 0, %s514
      %s516 = sphi 0, %s514
      %s517 = sphi 0, %s516
      %s531 = sphi 0, %s517
      %s535 = sphi 0, %s535
      %s537 = sphi 0, %s535
      %s538 = sphi 0, %s537
      %s552 = sphi 0, %s538
      %s556 = sphi 0, %s556
      %s558 = sphi 0, %s556
      %s559 = sphi 0, %s558
      %s573 = sphi 0, %s559
      %s577 = sphi 0, %s577
      %s579 = sphi 0, %s577
      %s580 = sphi 0, %s579
      %s594 = sphi 0, %s580
      %s598 = sphi 0, %s598
      %s600 = sphi 0, %s598
      %s601 = sphi 0, %s600
      %s615 = sphi 0, %s601
      %s619 = sphi 0, %s619
      %s621 = sphi 0, %s619
      %s622 = sphi 0, %s621
      %s636 = sphi 0, %s622
      %s640 = sphi 0, %s640
      %s642 = sphi 0, %s640
      %s643 = sphi 0, %s642
      %s657 = sphi 0, %s643
      %s661 = sphi 0, %s661
      %s663 = sphi 0, %s661
      %s664 = sphi 0, %s663
      %s678 = sphi 0, %s664
      %s682 = sphi 0, %s682
      %s684 = sphi 0, %s682
      %s685 = sphi 0, %s684
      %s699 = sphi 0, %s685
      %s703 = sphi 0, %s703
      %s705 = sphi 0, %s703
      %s706 = sphi 0, %s705
      %s720 = sphi 0, %s706
      %s724 = sphi 0, %s724
      %s726 = sphi 0, %s724
      %s727 = sphi 0, %s726
      %s741 = sphi 0, %s727
      %s745 = sphi 0, %s745
      %s747 = sphi 0, %s745
      %s748 = sphi 0, %s747
      %s762 = sphi 0, %s748
      %s766 = sphi 0, %s766
      %s768 = sphi 0, %s766
      %s769 = sphi 0, %s768
      %s783 = sphi 0, %s769
      %s787 = sphi 0, %s787
      %s789 = sphi 0, %s787
      %s790 = sphi 0, %s789
      %s804 = sphi 0, %s790
      %s808 = sphi 0, %s808
      %s810 = sphi 0, %s808
      %s811 = sphi 0, %s810
      %s825 = sphi 0, %s811
      %s829 = sphi 0, %s829
      %s831 = sphi 0, %s829
      %s832 = sphi 0, %s831
      %s846 = sphi 0, %s832
      %s852 = sphi 0, %s854
      %s855 = sphi 0, %s852
      %s856 = sphi 0, %s855
      %s872 = sphi 0, %s856
      %s878 = sphi 0, %s880
      %s881 = sphi 0, %s878
      %s882 = sphi 0, %s881
      %s898 = sphi 0, %s882
      %s904 = sphi 0, %s906
      %s907 = sphi 0, %s904
      %s908 = sphi 0, %s907
      %s924 = sphi 0, %s908
      %s930 = sphi 0, %s932
      %s933 = sphi 0, %s930
      %s934 = sphi 0, %s933
      %s950 = sphi 0, %s934
    $region4: #{_lambda_.3} parent=1 // loop_header_branch
      %95 = sbr.rel (%p93) target = $region8
    $region5: #{_lambda_.3} parent=1 // loop_body
      %s97 = ssub.s32 %s92, 1
      %s98 = ssub.s32 %s92, 2
      %s99 = sadd.s32 %s92, 1
      %s100 = ssub.s32 %s92, %s99
      %p101 = scmp.eq.s32.totalorder %s100, 0
      %s103 = sadd.s32 %s102, 1
      %s104 = scalar_select %p101, %s102, %s103
      %p107 = pneg %p101
      %p108 = scmp.eq.s32.totalorder %s92, 1
      %p109 = por %p107, %p108
      %p110 = scmp.ne.s32.totalorder %s102, %s105
      %p111 = scmp.eq.s32.totalorder %s92, 0
      %p112 = por %p110, %p111
      %p113 = scmp.ne.s32.totalorder %s102, %s105
      %p114 = scmp.eq.s32.totalorder %s97, 1
      %p115 = por %p113, %p114
      %p116 = scmp.ne.s32.totalorder %s105, %s106
      %p117 = scmp.eq.s32.totalorder %s97, 0
      %p118 = por %p116, %p117
      %p119 = scmp.ne.s32.totalorder %s105, %s106
      %p120 = scmp.eq.s32.totalorder %s98, 1
      %p121 = por %p119, %p120
      %p123 = scmp.ne.s32.totalorder %s106, %s122
      %p124 = scmp.eq.s32.totalorder %s98, 0
      %p125 = por %p123, %p124
      %s126 = ssub.s32 %s92, %s99
      %p127 = scmp.eq.s32.totalorder %s126, 0
      %s129 = sadd.s32 %s128, 1
      %s130 = scalar_select %p127, %s128, %s129
      %p133 = pneg %p127
      %p134 = scmp.eq.s32.totalorder %s92, 1
      %p135 = por %p133, %p134
      %p136 = scmp.ne.s32.totalorder %s128, %s131
      %p137 = scmp.eq.s32.totalorder %s92, 0
      %p138 = por %p136, %p137
      %p139 = scmp.ne.s32.totalorder %s128, %s131
      %p140 = scmp.eq.s32.totalorder %s97, 1
      %p141 = por %p139, %p140
      %p142 = scmp.ne.s32.totalorder %s131, %s132
      %p143 = scmp.eq.s32.totalorder %s97, 0
      %p144 = por %p142, %p143
      %p145 = scmp.ne.s32.totalorder %s131, %s132
      %p146 = scmp.eq.s32.totalorder %s98, 1
      %p147 = por %p145, %p146
      %p149 = scmp.ne.s32.totalorder %s132, %s148
      %p150 = scmp.eq.s32.totalorder %s98, 0
      %p151 = por %p149, %p150
      %s152 = ssub.s32 %s92, %s99
      %p153 = scmp.eq.s32.totalorder %s152, 0
      %s155 = sadd.s32 %s154, 1
      %s156 = scalar_select %p153, %s154, %s155
      %p159 = pneg %p153
      %p160 = scmp.eq.s32.totalorder %s92, 1
      %p161 = por %p159, %p160
      %p162 = scmp.ne.s32.totalorder %s154, %s157
      %p163 = scmp.eq.s32.totalorder %s92, 0
      %p164 = por %p162, %p163
      %p165 = scmp.ne.s32.totalorder %s154, %s157
      %p166 = scmp.eq.s32.totalorder %s97, 1
      %p167 = por %p165, %p166
      %p168 = scmp.ne.s32.totalorder %s157, %s158
      %p169 = scmp.eq.s32.totalorder %s97, 0
      %p170 = por %p168, %p169
      %p171 = scmp.ne.s32.totalorder %s157, %s158
      %p172 = scmp.eq.s32.totalorder %s98, 1
      %p173 = por %p171, %p172
      %p175 = scmp.ne.s32.totalorder %s158, %s174
      %p176 = scmp.eq.s32.totalorder %s98, 0
      %p177 = por %p175, %p176
      %s179 = sadd.s32 %s178, 1
      %p182 = scmp.eq.s32.totalorder %s92, 1
      %p183 = scmp.ne.s32.totalorder %s178, %s180
      %p184 = scmp.eq.s32.totalorder %s92, 0
      %p185 = por %p183, %p184
      %p186 = scmp.ne.s32.totalorder %s178, %s180
      %p187 = scmp.eq.s32.totalorder %s97, 1
      %p188 = por %p186, %p187
      %p189 = scmp.ne.s32.totalorder %s180, %s181
      %p190 = scmp.eq.s32.totalorder %s97, 0
      %p191 = por %p189, %p190
      %p192 = scmp.ne.s32.totalorder %s180, %s181
      %p193 = scmp.eq.s32.totalorder %s98, 1
      %p194 = por %p192, %p193
      %p196 = scmp.ne.s32.totalorder %s181, %s195
      %p197 = scmp.eq.s32.totalorder %s98, 0
      %p198 = por %p196, %p197
      %s200 = sadd.s32 %s199, 1
      %p203 = scmp.eq.s32.totalorder %s92, 1
      %p204 = scmp.ne.s32.totalorder %s199, %s201
      %p205 = scmp.eq.s32.totalorder %s92, 0
      %p206 = por %p204, %p205
      %p207 = scmp.ne.s32.totalorder %s199, %s201
      %p208 = scmp.eq.s32.totalorder %s97, 1
      %p209 = por %p207, %p208
      %p210 = scmp.ne.s32.totalorder %s201, %s202
      %p211 = scmp.eq.s32.totalorder %s97, 0
      %p212 = por %p210, %p211
      %p213 = scmp.ne.s32.totalorder %s201, %s202
      %p214 = scmp.eq.s32.totalorder %s98, 1
      %p215 = por %p213, %p214
      %p217 = scmp.ne.s32.totalorder %s202, %s216
      %p218 = scmp.eq.s32.totalorder %s98, 0
      %p219 = por %p217, %p218
      %s221 = sadd.s32 %s220, 1
      %p224 = scmp.eq.s32.totalorder %s92, 1
      %p225 = scmp.ne.s32.totalorder %s220, %s222
      %p226 = scmp.eq.s32.totalorder %s92, 0
      %p227 = por %p225, %p226
      %p228 = scmp.ne.s32.totalorder %s220, %s222
      %p229 = scmp.eq.s32.totalorder %s97, 1
      %p230 = por %p228, %p229
      %p231 = scmp.ne.s32.totalorder %s222, %s223
      %p232 = scmp.eq.s32.totalorder %s97, 0
      %p233 = por %p231, %p232
      %p234 = scmp.ne.s32.totalorder %s222, %s223
      %p235 = scmp.eq.s32.totalorder %s98, 1
      %p236 = por %p234, %p235
      %p238 = scmp.ne.s32.totalorder %s223, %s237
      %p239 = scmp.eq.s32.totalorder %s98, 0
      %p240 = por %p238, %p239
      %s242 = sadd.s32 %s241, 1
      %p245 = scmp.eq.s32.totalorder %s92, 1
      %p246 = scmp.ne.s32.totalorder %s241, %s243
      %p247 = scmp.eq.s32.totalorder %s92, 0
      %p248 = por %p246, %p247
      %p249 = scmp.ne.s32.totalorder %s241, %s243
      %p250 = scmp.eq.s32.totalorder %s97, 1
      %p251 = por %p249, %p250
      %p252 = scmp.ne.s32.totalorder %s243, %s244
      %p253 = scmp.eq.s32.totalorder %s97, 0
      %p254 = por %p252, %p253
      %p255 = scmp.ne.s32.totalorder %s243, %s244
      %p256 = scmp.eq.s32.totalorder %s98, 1
      %p257 = por %p255, %p256
      %p259 = scmp.ne.s32.totalorder %s244, %s258
      %p260 = scmp.eq.s32.totalorder %s98, 0
      %p261 = por %p259, %p260
      %s263 = sadd.s32 %s262, 1
      %p266 = scmp.eq.s32.totalorder %s92, 1
      %p267 = scmp.ne.s32.totalorder %s262, %s264
      %p268 = scmp.eq.s32.totalorder %s92, 0
      %p269 = por %p267, %p268
      %p270 = scmp.ne.s32.totalorder %s262, %s264
      %p271 = scmp.eq.s32.totalorder %s97, 1
      %p272 = por %p270, %p271
      %p273 = scmp.ne.s32.totalorder %s264, %s265
      %p274 = scmp.eq.s32.totalorder %s97, 0
      %p275 = por %p273, %p274
      %p276 = scmp.ne.s32.totalorder %s264, %s265
      %p277 = scmp.eq.s32.totalorder %s98, 1
      %p278 = por %p276, %p277
      %p280 = scmp.ne.s32.totalorder %s265, %s279
      %p281 = scmp.eq.s32.totalorder %s98, 0
      %p282 = por %p280, %p281
      %s284 = sadd.s32 %s283, 1
      %p287 = scmp.eq.s32.totalorder %s92, 1
      %p288 = scmp.ne.s32.totalorder %s283, %s285
      %p289 = scmp.eq.s32.totalorder %s92, 0
      %p290 = por %p288, %p289
      %p291 = scmp.ne.s32.totalorder %s283, %s285
      %p292 = scmp.eq.s32.totalorder %s97, 1
      %p293 = por %p291, %p292
      %p294 = scmp.ne.s32.totalorder %s285, %s286
      %p295 = scmp.eq.s32.totalorder %s97, 0
      %p296 = por %p294, %p295
      %p297 = scmp.ne.s32.totalorder %s285, %s286
      %p298 = scmp.eq.s32.totalorder %s98, 1
      %p299 = por %p297, %p298
      %p301 = scmp.ne.s32.totalorder %s286, %s300
      %p302 = scmp.eq.s32.totalorder %s98, 0
      %p303 = por %p301, %p302
      %s305 = sadd.s32 %s304, 1
      %p308 = scmp.eq.s32.totalorder %s92, 1
      %p309 = scmp.ne.s32.totalorder %s304, %s306
      %p310 = scmp.eq.s32.totalorder %s92, 0
      %p311 = por %p309, %p310
      %p312 = scmp.ne.s32.totalorder %s304, %s306
      %p313 = scmp.eq.s32.totalorder %s97, 1
      %p314 = por %p312, %p313
      %p315 = scmp.ne.s32.totalorder %s306, %s307
      %p316 = scmp.eq.s32.totalorder %s97, 0
      %p317 = por %p315, %p316
      %p318 = scmp.ne.s32.totalorder %s306, %s307
      %p319 = scmp.eq.s32.totalorder %s98, 1
      %p320 = por %p318, %p319
      %p322 = scmp.ne.s32.totalorder %s307, %s321
      %p323 = scmp.eq.s32.totalorder %s98, 0
      %p324 = por %p322, %p323
      %s326 = sadd.s32 %s325, 1
      %p329 = scmp.eq.s32.totalorder %s92, 1
      %p330 = scmp.ne.s32.totalorder %s325, %s327
      %p331 = scmp.eq.s32.totalorder %s92, 0
      %p332 = por %p330, %p331
      %p333 = scmp.ne.s32.totalorder %s325, %s327
      %p334 = scmp.eq.s32.totalorder %s97, 1
      %p335 = por %p333, %p334
      %p336 = scmp.ne.s32.totalorder %s327, %s328
      %p337 = scmp.eq.s32.totalorder %s97, 0
      %p338 = por %p336, %p337
      %p339 = scmp.ne.s32.totalorder %s327, %s328
      %p340 = scmp.eq.s32.totalorder %s98, 1
      %p341 = por %p339, %p340
      %p343 = scmp.ne.s32.totalorder %s328, %s342
      %p344 = scmp.eq.s32.totalorder %s98, 0
      %p345 = por %p343, %p344
      %s347 = sadd.s32 %s346, 1
      %p350 = scmp.eq.s32.totalorder %s92, 1
      %p351 = scmp.ne.s32.totalorder %s346, %s348
      %p352 = scmp.eq.s32.totalorder %s92, 0
      %p353 = por %p351, %p352
      %p354 = scmp.ne.s32.totalorder %s346, %s348
      %p355 = scmp.eq.s32.totalorder %s97, 1
      %p356 = por %p354, %p355
      %p357 = scmp.ne.s32.totalorder %s348, %s349
      %p358 = scmp.eq.s32.totalorder %s97, 0
      %p359 = por %p357, %p358
      %p360 = scmp.ne.s32.totalorder %s348, %s349
      %p361 = scmp.eq.s32.totalorder %s98, 1
      %p362 = por %p360, %p361
      %p364 = scmp.ne.s32.totalorder %s349, %s363
      %p365 = scmp.eq.s32.totalorder %s98, 0
      %p366 = por %p364, %p365
      %s368 = sadd.s32 %s367, 1
      %p371 = scmp.eq.s32.totalorder %s92, 1
      %p372 = scmp.ne.s32.totalorder %s367, %s369
      %p373 = scmp.eq.s32.totalorder %s92, 0
      %p374 = por %p372, %p373
      %p375 = scmp.ne.s32.totalorder %s367, %s369
      %p376 = scmp.eq.s32.totalorder %s97, 1
      %p377 = por %p375, %p376
      %p378 = scmp.ne.s32.totalorder %s369, %s370
      %p379 = scmp.eq.s32.totalorder %s97, 0
      %p380 = por %p378, %p379
      %p381 = scmp.ne.s32.totalorder %s369, %s370
      %p382 = scmp.eq.s32.totalorder %s98, 1
      %p383 = por %p381, %p382
      %p385 = scmp.ne.s32.totalorder %s370, %s384
      %p386 = scmp.eq.s32.totalorder %s98, 0
      %p387 = por %p385, %p386
      %s389 = sadd.s32 %s388, 1
      %p392 = scmp.eq.s32.totalorder %s92, 1
      %p393 = scmp.ne.s32.totalorder %s388, %s390
      %p394 = scmp.eq.s32.totalorder %s92, 0
      %p395 = por %p393, %p394
      %p396 = scmp.ne.s32.totalorder %s388, %s390
      %p397 = scmp.eq.s32.totalorder %s97, 1
      %p398 = por %p396, %p397
      %p399 = scmp.ne.s32.totalorder %s390, %s391
      %p400 = scmp.eq.s32.totalorder %s97, 0
      %p401 = por %p399, %p400
      %p402 = scmp.ne.s32.totalorder %s390, %s391
      %p403 = scmp.eq.s32.totalorder %s98, 1
      %p404 = por %p402, %p403
      %p406 = scmp.ne.s32.totalorder %s391, %s405
      %p407 = scmp.eq.s32.totalorder %s98, 0
      %p408 = por %p406, %p407
      %s410 = sadd.s32 %s409, 1
      %p413 = scmp.eq.s32.totalorder %s92, 1
      %p414 = scmp.ne.s32.totalorder %s409, %s411
      %p415 = scmp.eq.s32.totalorder %s92, 0
      %p416 = por %p414, %p415
      %p417 = scmp.ne.s32.totalorder %s409, %s411
      %p418 = scmp.eq.s32.totalorder %s97, 1
      %p419 = por %p417, %p418
      %p420 = scmp.ne.s32.totalorder %s411, %s412
      %p421 = scmp.eq.s32.totalorder %s97, 0
      %p422 = por %p420, %p421
      %p423 = scmp.ne.s32.totalorder %s411, %s412
      %p424 = scmp.eq.s32.totalorder %s98, 1
      %p425 = por %p423, %p424
      %p427 = scmp.ne.s32.totalorder %s412, %s426
      %p428 = scmp.eq.s32.totalorder %s98, 0
      %p429 = por %p427, %p428
      %s431 = sadd.s32 %s430, 1
      %p434 = scmp.eq.s32.totalorder %s92, 1
      %p435 = scmp.ne.s32.totalorder %s430, %s432
      %p436 = scmp.eq.s32.totalorder %s92, 0
      %p437 = por %p435, %p436
      %p438 = scmp.ne.s32.totalorder %s430, %s432
      %p439 = scmp.eq.s32.totalorder %s97, 1
      %p440 = por %p438, %p439
      %p441 = scmp.ne.s32.totalorder %s432, %s433
      %p442 = scmp.eq.s32.totalorder %s97, 0
      %p443 = por %p441, %p442
      %p444 = scmp.ne.s32.totalorder %s432, %s433
      %p445 = scmp.eq.s32.totalorder %s98, 1
      %p446 = por %p444, %p445
      %p448 = scmp.ne.s32.totalorder %s433, %s447
      %p449 = scmp.eq.s32.totalorder %s98, 0
      %p450 = por %p448, %p449
      %s452 = sadd.s32 %s451, 1
      %p455 = scmp.eq.s32.totalorder %s92, 1
      %p456 = scmp.ne.s32.totalorder %s451, %s453
      %p457 = scmp.eq.s32.totalorder %s92, 0
      %p458 = por %p456, %p457
      %p459 = scmp.ne.s32.totalorder %s451, %s453
      %p460 = scmp.eq.s32.totalorder %s97, 1
      %p461 = por %p459, %p460
      %p462 = scmp.ne.s32.totalorder %s453, %s454
      %p463 = scmp.eq.s32.totalorder %s97, 0
      %p464 = por %p462, %p463
      %p465 = scmp.ne.s32.totalorder %s453, %s454
      %p466 = scmp.eq.s32.totalorder %s98, 1
      %p467 = por %p465, %p466
      %p469 = scmp.ne.s32.totalorder %s454, %s468
      %p470 = scmp.eq.s32.totalorder %s98, 0
      %p471 = por %p469, %p470
      %s473 = sadd.s32 %s472, 1
      %p476 = scmp.eq.s32.totalorder %s92, 1
      %p477 = scmp.ne.s32.totalorder %s472, %s474
      %p478 = scmp.eq.s32.totalorder %s92, 0
      %p479 = por %p477, %p478
      %p480 = scmp.ne.s32.totalorder %s472, %s474
      %p481 = scmp.eq.s32.totalorder %s97, 1
      %p482 = por %p480, %p481
      %p483 = scmp.ne.s32.totalorder %s474, %s475
      %p484 = scmp.eq.s32.totalorder %s97, 0
      %p485 = por %p483, %p484
      %p486 = scmp.ne.s32.totalorder %s474, %s475
      %p487 = scmp.eq.s32.totalorder %s98, 1
      %p488 = por %p486, %p487
      %p490 = scmp.ne.s32.totalorder %s475, %s489
      %p491 = scmp.eq.s32.totalorder %s98, 0
      %p492 = por %p490, %p491
      %s494 = sadd.s32 %s493, 1
      %p497 = scmp.eq.s32.totalorder %s92, 1
      %p498 = scmp.ne.s32.totalorder %s493, %s495
      %p499 = scmp.eq.s32.totalorder %s92, 0
      %p500 = por %p498, %p499
      %p501 = scmp.ne.s32.totalorder %s493, %s495
      %p502 = scmp.eq.s32.totalorder %s97, 1
      %p503 = por %p501, %p502
      %p504 = scmp.ne.s32.totalorder %s495, %s496
      %p505 = scmp.eq.s32.totalorder %s97, 0
      %p506 = por %p504, %p505
      %p507 = scmp.ne.s32.totalorder %s495, %s496
      %p508 = scmp.eq.s32.totalorder %s98, 1
      %p509 = por %p507, %p508
      %p511 = scmp.ne.s32.totalorder %s496, %s510
      %p512 = scmp.eq.s32.totalorder %s98, 0
      %p513 = por %p511, %p512
      %s515 = sadd.s32 %s514, 1
      %p518 = scmp.eq.s32.totalorder %s92, 1
      %p519 = scmp.ne.s32.totalorder %s514, %s516
      %p520 = scmp.eq.s32.totalorder %s92, 0
      %p521 = por %p519, %p520
      %p522 = scmp.ne.s32.totalorder %s514, %s516
      %p523 = scmp.eq.s32.totalorder %s97, 1
      %p524 = por %p522, %p523
      %p525 = scmp.ne.s32.totalorder %s516, %s517
      %p526 = scmp.eq.s32.totalorder %s97, 0
      %p527 = por %p525, %p526
      %p528 = scmp.ne.s32.totalorder %s516, %s517
      %p529 = scmp.eq.s32.totalorder %s98, 1
      %p530 = por %p528, %p529
      %p532 = scmp.ne.s32.totalorder %s517, %s531
      %p533 = scmp.eq.s32.totalorder %s98, 0
      %p534 = por %p532, %p533
      %s536 = sadd.s32 %s535, 1
      %p539 = scmp.eq.s32.totalorder %s92, 1
      %p540 = scmp.ne.s32.totalorder %s535, %s537
      %p541 = scmp.eq.s32.totalorder %s92, 0
      %p542 = por %p540, %p541
      %p543 = scmp.ne.s32.totalorder %s535, %s537
      %p544 = scmp.eq.s32.totalorder %s97, 1
      %p545 = por %p543, %p544
      %p546 = scmp.ne.s32.totalorder %s537, %s538
      %p547 = scmp.eq.s32.totalorder %s97, 0
      %p548 = por %p546, %p547
      %p549 = scmp.ne.s32.totalorder %s537, %s538
      %p550 = scmp.eq.s32.totalorder %s98, 1
      %p551 = por %p549, %p550
      %p553 = scmp.ne.s32.totalorder %s538, %s552
      %p554 = scmp.eq.s32.totalorder %s98, 0
      %p555 = por %p553, %p554
      %s557 = sadd.s32 %s556, 1
      %p560 = scmp.eq.s32.totalorder %s92, 1
      %p561 = scmp.ne.s32.totalorder %s556, %s558
      %p562 = scmp.eq.s32.totalorder %s92, 0
      %p563 = por %p561, %p562
      %p564 = scmp.ne.s32.totalorder %s556, %s558
      %p565 = scmp.eq.s32.totalorder %s97, 1
      %p566 = por %p564, %p565
      %p567 = scmp.ne.s32.totalorder %s558, %s559
      %p568 = scmp.eq.s32.totalorder %s97, 0
      %p569 = por %p567, %p568
      %p570 = scmp.ne.s32.totalorder %s558, %s559
      %p571 = scmp.eq.s32.totalorder %s98, 1
      %p572 = por %p570, %p571
      %p574 = scmp.ne.s32.totalorder %s559, %s573
      %p575 = scmp.eq.s32.totalorder %s98, 0
      %p576 = por %p574, %p575
      %s578 = sadd.s32 %s577, 1
      %p581 = scmp.eq.s32.totalorder %s92, 1
      %p582 = scmp.ne.s32.totalorder %s577, %s579
      %p583 = scmp.eq.s32.totalorder %s92, 0
      %p584 = por %p582, %p583
      %p585 = scmp.ne.s32.totalorder %s577, %s579
      %p586 = scmp.eq.s32.totalorder %s97, 1
      %p587 = por %p585, %p586
      %p588 = scmp.ne.s32.totalorder %s579, %s580
      %p589 = scmp.eq.s32.totalorder %s97, 0
      %p590 = por %p588, %p589
      %p591 = scmp.ne.s32.totalorder %s579, %s580
      %p592 = scmp.eq.s32.totalorder %s98, 1
      %p593 = por %p591, %p592
      %p595 = scmp.ne.s32.totalorder %s580, %s594
      %p596 = scmp.eq.s32.totalorder %s98, 0
      %p597 = por %p595, %p596
      %s599 = sadd.s32 %s598, 1
      %p602 = scmp.eq.s32.totalorder %s92, 1
      %p603 = scmp.ne.s32.totalorder %s598, %s600
      %p604 = scmp.eq.s32.totalorder %s92, 0
      %p605 = por %p603, %p604
      %p606 = scmp.ne.s32.totalorder %s598, %s600
      %p607 = scmp.eq.s32.totalorder %s97, 1
      %p608 = por %p606, %p607
      %p609 = scmp.ne.s32.totalorder %s600, %s601
      %p610 = scmp.eq.s32.totalorder %s97, 0
      %p611 = por %p609, %p610
      %p612 = scmp.ne.s32.totalorder %s600, %s601
      %p613 = scmp.eq.s32.totalorder %s98, 1
      %p614 = por %p612, %p613
      %p616 = scmp.ne.s32.totalorder %s601, %s615
      %p617 = scmp.eq.s32.totalorder %s98, 0
      %p618 = por %p616, %p617
      %s620 = sadd.s32 %s619, 1
      %p623 = scmp.eq.s32.totalorder %s92, 1
      %p624 = scmp.ne.s32.totalorder %s619, %s621
      %p625 = scmp.eq.s32.totalorder %s92, 0
      %p626 = por %p624, %p625
      %p627 = scmp.ne.s32.totalorder %s619, %s621
      %p628 = scmp.eq.s32.totalorder %s97, 1
      %p629 = por %p627, %p628
      %p630 = scmp.ne.s32.totalorder %s621, %s622
      %p631 = scmp.eq.s32.totalorder %s97, 0
      %p632 = por %p630, %p631
      %p633 = scmp.ne.s32.totalorder %s621, %s622
      %p634 = scmp.eq.s32.totalorder %s98, 1
      %p635 = por %p633, %p634
      %p637 = scmp.ne.s32.totalorder %s622, %s636
      %p638 = scmp.eq.s32.totalorder %s98, 0
      %p639 = por %p637, %p638
      %s641 = sadd.s32 %s640, 1
      %p644 = scmp.eq.s32.totalorder %s92, 1
      %p645 = scmp.ne.s32.totalorder %s640, %s642
      %p646 = scmp.eq.s32.totalorder %s92, 0
      %p647 = por %p645, %p646
      %p648 = scmp.ne.s32.totalorder %s640, %s642
      %p649 = scmp.eq.s32.totalorder %s97, 1
      %p650 = por %p648, %p649
      %p651 = scmp.ne.s32.totalorder %s642, %s643
      %p652 = scmp.eq.s32.totalorder %s97, 0
      %p653 = por %p651, %p652
      %p654 = scmp.ne.s32.totalorder %s642, %s643
      %p655 = scmp.eq.s32.totalorder %s98, 1
      %p656 = por %p654, %p655
      %p658 = scmp.ne.s32.totalorder %s643, %s657
      %p659 = scmp.eq.s32.totalorder %s98, 0
      %p660 = por %p658, %p659
      %s662 = sadd.s32 %s661, 1
      %p665 = scmp.eq.s32.totalorder %s92, 1
      %p666 = scmp.ne.s32.totalorder %s661, %s663
      %p667 = scmp.eq.s32.totalorder %s92, 0
      %p668 = por %p666, %p667
      %p669 = scmp.ne.s32.totalorder %s661, %s663
      %p670 = scmp.eq.s32.totalorder %s97, 1
      %p671 = por %p669, %p670
      %p672 = scmp.ne.s32.totalorder %s663, %s664
      %p673 = scmp.eq.s32.totalorder %s97, 0
      %p674 = por %p672, %p673
      %p675 = scmp.ne.s32.totalorder %s663, %s664
      %p676 = scmp.eq.s32.totalorder %s98, 1
      %p677 = por %p675, %p676
      %p679 = scmp.ne.s32.totalorder %s664, %s678
      %p680 = scmp.eq.s32.totalorder %s98, 0
      %p681 = por %p679, %p680
      %s683 = sadd.s32 %s682, 1
      %p686 = scmp.eq.s32.totalorder %s92, 1
      %p687 = scmp.ne.s32.totalorder %s682, %s684
      %p688 = scmp.eq.s32.totalorder %s92, 0
      %p689 = por %p687, %p688
      %p690 = scmp.ne.s32.totalorder %s682, %s684
      %p691 = scmp.eq.s32.totalorder %s97, 1
      %p692 = por %p690, %p691
      %p693 = scmp.ne.s32.totalorder %s684, %s685
      %p694 = scmp.eq.s32.totalorder %s97, 0
      %p695 = por %p693, %p694
      %p696 = scmp.ne.s32.totalorder %s684, %s685
      %p697 = scmp.eq.s32.totalorder %s98, 1
      %p698 = por %p696, %p697
      %p700 = scmp.ne.s32.totalorder %s685, %s699
      %p701 = scmp.eq.s32.totalorder %s98, 0
      %p702 = por %p700, %p701
      %s704 = sadd.s32 %s703, 1
      %p707 = scmp.eq.s32.totalorder %s92, 1
      %p708 = scmp.ne.s32.totalorder %s703, %s705
      %p709 = scmp.eq.s32.totalorder %s92, 0
      %p710 = por %p708, %p709
      %p711 = scmp.ne.s32.totalorder %s703, %s705
      %p712 = scmp.eq.s32.totalorder %s97, 1
      %p713 = por %p711, %p712
      %p714 = scmp.ne.s32.totalorder %s705, %s706
      %p715 = scmp.eq.s32.totalorder %s97, 0
      %p716 = por %p714, %p715
      %p717 = scmp.ne.s32.totalorder %s705, %s706
      %p718 = scmp.eq.s32.totalorder %s98, 1
      %p719 = por %p717, %p718
      %p721 = scmp.ne.s32.totalorder %s706, %s720
      %p722 = scmp.eq.s32.totalorder %s98, 0
      %p723 = por %p721, %p722
      %s725 = sadd.s32 %s724, 1
      %p728 = scmp.eq.s32.totalorder %s92, 1
      %p729 = scmp.ne.s32.totalorder %s724, %s726
      %p730 = scmp.eq.s32.totalorder %s92, 0
      %p731 = por %p729, %p730
      %p732 = scmp.ne.s32.totalorder %s724, %s726
      %p733 = scmp.eq.s32.totalorder %s97, 1
      %p734 = por %p732, %p733
      %p735 = scmp.ne.s32.totalorder %s726, %s727
      %p736 = scmp.eq.s32.totalorder %s97, 0
      %p737 = por %p735, %p736
      %p738 = scmp.ne.s32.totalorder %s726, %s727
      %p739 = scmp.eq.s32.totalorder %s98, 1
      %p740 = por %p738, %p739
      %p742 = scmp.ne.s32.totalorder %s727, %s741
      %p743 = scmp.eq.s32.totalorder %s98, 0
      %p744 = por %p742, %p743
      %s746 = sadd.s32 %s745, 1
      %p749 = scmp.eq.s32.totalorder %s92, 1
      %p750 = scmp.ne.s32.totalorder %s745, %s747
      %p751 = scmp.eq.s32.totalorder %s92, 0
      %p752 = por %p750, %p751
      %p753 = scmp.ne.s32.totalorder %s745, %s747
      %p754 = scmp.eq.s32.totalorder %s97, 1
      %p755 = por %p753, %p754
      %p756 = scmp.ne.s32.totalorder %s747, %s748
      %p757 = scmp.eq.s32.totalorder %s97, 0
      %p758 = por %p756, %p757
      %p759 = scmp.ne.s32.totalorder %s747, %s748
      %p760 = scmp.eq.s32.totalorder %s98, 1
      %p761 = por %p759, %p760
      %p763 = scmp.ne.s32.totalorder %s748, %s762
      %p764 = scmp.eq.s32.totalorder %s98, 0
      %p765 = por %p763, %p764
      %s767 = sadd.s32 %s766, 1
      %p770 = scmp.eq.s32.totalorder %s92, 1
      %p771 = scmp.ne.s32.totalorder %s766, %s768
      %p772 = scmp.eq.s32.totalorder %s92, 0
      %p773 = por %p771, %p772
      %p774 = scmp.ne.s32.totalorder %s766, %s768
      %p775 = scmp.eq.s32.totalorder %s97, 1
      %p776 = por %p774, %p775
      %p777 = scmp.ne.s32.totalorder %s768, %s769
      %p778 = scmp.eq.s32.totalorder %s97, 0
      %p779 = por %p777, %p778
      %p780 = scmp.ne.s32.totalorder %s768, %s769
      %p781 = scmp.eq.s32.totalorder %s98, 1
      %p782 = por %p780, %p781
      %p784 = scmp.ne.s32.totalorder %s769, %s783
      %p785 = scmp.eq.s32.totalorder %s98, 0
      %p786 = por %p784, %p785
      %s788 = sadd.s32 %s787, 1
      %p791 = scmp.eq.s32.totalorder %s92, 1
      %p792 = scmp.ne.s32.totalorder %s787, %s789
      %p793 = scmp.eq.s32.totalorder %s92, 0
      %p794 = por %p792, %p793
      %p795 = scmp.ne.s32.totalorder %s787, %s789
      %p796 = scmp.eq.s32.totalorder %s97, 1
      %p797 = por %p795, %p796
      %p798 = scmp.ne.s32.totalorder %s789, %s790
      %p799 = scmp.eq.s32.totalorder %s97, 0
      %p800 = por %p798, %p799
      %p801 = scmp.ne.s32.totalorder %s789, %s790
      %p802 = scmp.eq.s32.totalorder %s98, 1
      %p803 = por %p801, %p802
      %p805 = scmp.ne.s32.totalorder %s790, %s804
      %p806 = scmp.eq.s32.totalorder %s98, 0
      %p807 = por %p805, %p806
      %s809 = sadd.s32 %s808, 1
      %p812 = scmp.eq.s32.totalorder %s92, 1
      %p813 = scmp.ne.s32.totalorder %s808, %s810
      %p814 = scmp.eq.s32.totalorder %s92, 0
      %p815 = por %p813, %p814
      %p816 = scmp.ne.s32.totalorder %s808, %s810
      %p817 = scmp.eq.s32.totalorder %s97, 1
      %p818 = por %p816, %p817
      %p819 = scmp.ne.s32.totalorder %s810, %s811
      %p820 = scmp.eq.s32.totalorder %s97, 0
      %p821 = por %p819, %p820
      %p822 = scmp.ne.s32.totalorder %s810, %s811
      %p823 = scmp.eq.s32.totalorder %s98, 1
      %p824 = por %p822, %p823
      %p826 = scmp.ne.s32.totalorder %s811, %s825
      %p827 = scmp.eq.s32.totalorder %s98, 0
      %p828 = por %p826, %p827
      %s830 = sadd.s32 %s829, 1
      %p833 = scmp.eq.s32.totalorder %s92, 1
      %p834 = scmp.ne.s32.totalorder %s829, %s831
      %p835 = scmp.eq.s32.totalorder %s92, 0
      %p836 = por %p834, %p835
      %p837 = scmp.ne.s32.totalorder %s829, %s831
      %p838 = scmp.eq.s32.totalorder %s97, 1
      %p839 = por %p837, %p838
      %p840 = scmp.ne.s32.totalorder %s831, %s832
      %p841 = scmp.eq.s32.totalorder %s97, 0
      %p842 = por %p840, %p841
      %p843 = scmp.ne.s32.totalorder %s831, %s832
      %p844 = scmp.eq.s32.totalorder %s98, 1
      %p845 = por %p843, %p844
      %p847 = scmp.ne.s32.totalorder %s832, %s846
      %p848 = scmp.eq.s32.totalorder %s98, 0
      %p849 = por %p847, %p848
      %s850 = ssub.s32 %s92, %s99
      %p851 = scmp.eq.s32.totalorder %s850, 0
      %s853 = sadd.s32 %s852, 1
      %s854 = scalar_select %p851, %s852, %s853
      %p857 = pneg %p851
      %p858 = scmp.eq.s32.totalorder %s92, 1
      %p859 = por %p857, %p858
      %p860 = scmp.ne.s32.totalorder %s852, %s855
      %p861 = scmp.eq.s32.totalorder %s92, 0
      %p862 = por %p860, %p861
      %p863 = scmp.ne.s32.totalorder %s852, %s855
      %p864 = scmp.eq.s32.totalorder %s97, 1
      %p865 = por %p863, %p864
      %p866 = scmp.ne.s32.totalorder %s855, %s856
      %p867 = scmp.eq.s32.totalorder %s97, 0
      %p868 = por %p866, %p867
      %p869 = scmp.ne.s32.totalorder %s855, %s856
      %p870 = scmp.eq.s32.totalorder %s98, 1
      %p871 = por %p869, %p870
      %p873 = scmp.ne.s32.totalorder %s856, %s872
      %p874 = scmp.eq.s32.totalorder %s98, 0
      %p875 = por %p873, %p874
      %s876 = ssub.s32 %s92, %s99
      %p877 = scmp.eq.s32.totalorder %s876, 0
      %s879 = sadd.s32 %s878, 1
      %s880 = scalar_select %p877, %s878, %s879
      %p883 = pneg %p877
      %p884 = scmp.eq.s32.totalorder %s92, 1
      %p885 = por %p883, %p884
      %p886 = scmp.ne.s32.totalorder %s878, %s881
      %p887 = scmp.eq.s32.totalorder %s92, 0
      %p888 = por %p886, %p887
      %p889 = scmp.ne.s32.totalorder %s878, %s881
      %p890 = scmp.eq.s32.totalorder %s97, 1
      %p891 = por %p889, %p890
      %p892 = scmp.ne.s32.totalorder %s881, %s882
      %p893 = scmp.eq.s32.totalorder %s97, 0
      %p894 = por %p892, %p893
      %p895 = scmp.ne.s32.totalorder %s881, %s882
      %p896 = scmp.eq.s32.totalorder %s98, 1
      %p897 = por %p895, %p896
      %p899 = scmp.ne.s32.totalorder %s882, %s898
      %p900 = scmp.eq.s32.totalorder %s98, 0
      %p901 = por %p899, %p900
      %s902 = ssub.s32 %s92, %s99
      %p903 = scmp.eq.s32.totalorder %s902, 0
      %s905 = sadd.s32 %s904, 1
      %s906 = scalar_select %p903, %s904, %s905
      %p909 = pneg %p903
      %p910 = scmp.eq.s32.totalorder %s92, 1
      %p911 = por %p909, %p910
      %p912 = scmp.ne.s32.totalorder %s904, %s907
      %p913 = scmp.eq.s32.totalorder %s92, 0
      %p914 = por %p912, %p913
      %p915 = scmp.ne.s32.totalorder %s904, %s907
      %p916 = scmp.eq.s32.totalorder %s97, 1
      %p917 = por %p915, %p916
      %p918 = scmp.ne.s32.totalorder %s907, %s908
      %p919 = scmp.eq.s32.totalorder %s97, 0
      %p920 = por %p918, %p919
      %p921 = scmp.ne.s32.totalorder %s907, %s908
      %p922 = scmp.eq.s32.totalorder %s98, 1
      %p923 = por %p921, %p922
      %p925 = scmp.ne.s32.totalorder %s908, %s924
      %p926 = scmp.eq.s32.totalorder %s98, 0
      %p927 = por %p925, %p926
      %s928 = ssub.s32 %s92, %s99
      %p929 = scmp.eq.s32.totalorder %s928, 0
      %s931 = sadd.s32 %s930, 1
      %s932 = scalar_select %p929, %s930, %s931
      %p935 = pneg %p929
      %p936 = scmp.eq.s32.totalorder %s92, 1
      %p937 = por %p935, %p936
      %p938 = scmp.ne.s32.totalorder %s930, %s933
      %p939 = scmp.eq.s32.totalorder %s92, 0
      %p940 = por %p938, %p939
      %p941 = scmp.ne.s32.totalorder %s930, %s933
      %p942 = scmp.eq.s32.totalorder %s97, 1
      %p943 = por %p941, %p942
      %p944 = scmp.ne.s32.totalorder %s933, %s934
      %p945 = scmp.eq.s32.totalorder %s97, 0
      %p946 = por %p944, %p945
      %p947 = scmp.ne.s32.totalorder %s933, %s934
      %p948 = scmp.eq.s32.totalorder %s98, 1
      %p949 = por %p947, %p948
      %p951 = scmp.ne.s32.totalorder %s934, %s950
      %p952 = scmp.eq.s32.totalorder %s98, 0
      %p953 = por %p951, %p952
      %p954 = scmp.le.s32.totalorder 1, %s92
      %p955 = scmp.lt.s32.totalorder %s92, 3
      %p956 = pnand %p954, %p955
      %p957 = pneg %p956
      // Predicated region
      $region9: #{_lambda_.3} parent=5 // pred_check
        _
      $region10: #{_lambda_.3} parent=5 // pred_check_branch
        %959 = sbr.rel (%p956) target = $region12
      $region11: #{_lambda_.3} parent=5 // pred_region
        %s960 = ssub.s32 %s92, 1
        // Predicated region
        $region13: #{_lambda_.3} parent=11 // pred_check
          %p961 = pneg %p191
        $region14: #{_lambda_.3} parent=11 // pred_check_branch
          %963 = sbr.rel (%p961) target = $region16
        $region15: #{_lambda_.3} parent=11 // pred_region
          _
        $region16: #{_lambda_.3} parent=11 // pred_fallthru
          _
        // Predicated region
        $region17: #{_lambda_.3} parent=11 // pred_check
          %p964 = pneg %p212
        $region18: #{_lambda_.3} parent=11 // pred_check_branch
          %966 = sbr.rel (%p964) target = $region20
        $region19: #{_lambda_.3} parent=11 // pred_region
          _
        $region20: #{_lambda_.3} parent=11 // pred_fallthru
          _
        // Predicated region
        $region21: #{_lambda_.3} parent=11 // pred_check
          %p967 = pneg %p233
        $region22: #{_lambda_.3} parent=11 // pred_check_branch
          %969 = sbr.rel (%p967) target = $region24
        $region23: #{_lambda_.3} parent=11 // pred_region
          _
        $region24: #{_lambda_.3} parent=11 // pred_fallthru
          _
        // Predicated region
        $region25: #{_lambda_.3} parent=11 // pred_check
          %p970 = pneg %p254
        $region26: #{_lambda_.3} parent=11 // pred_check_branch
          %972 = sbr.rel (%p970) target = $region28
        $region27: #{_lambda_.3} parent=11 // pred_region
          _
        $region28: #{_lambda_.3} parent=11 // pred_fallthru
          _
        // Predicated region
        $region29: #{_lambda_.3} parent=11 // pred_check
          %p973 = pneg %p275
        $region30: #{_lambda_.3} parent=11 // pred_check_branch
          %975 = sbr.rel (%p973) target = $region32
        $region31: #{_lambda_.3} parent=11 // pred_region
          _
        $region32: #{_lambda_.3} parent=11 // pred_fallthru
          _
        // Predicated region
        $region33: #{_lambda_.3} parent=11 // pred_check
          %p976 = pneg %p296
        $region34: #{_lambda_.3} parent=11 // pred_check_branch
          %978 = sbr.rel (%p976) target = $region36
        $region35: #{_lambda_.3} parent=11 // pred_region
          _
        $region36: #{_lambda_.3} parent=11 // pred_fallthru
          _
        // Predicated region
        $region37: #{_lambda_.3} parent=11 // pred_check
          %p979 = pneg %p317
        $region38: #{_lambda_.3} parent=11 // pred_check_branch
          %981 = sbr.rel (%p979) target = $region40
        $region39: #{_lambda_.3} parent=11 // pred_region
          _
        $region40: #{_lambda_.3} parent=11 // pred_fallthru
          _
        // Predicated region
        $region41: #{_lambda_.3} parent=11 // pred_check
          %p982 = pneg %p338
        $region42: #{_lambda_.3} parent=11 // pred_check_branch
          %984 = sbr.rel (%p982) target = $region44
        $region43: #{_lambda_.3} parent=11 // pred_region
          _
        $region44: #{_lambda_.3} parent=11 // pred_fallthru
          _
        // Predicated region
        $region45: #{_lambda_.3} parent=11 // pred_check
          %p985 = pneg %p359
        $region46: #{_lambda_.3} parent=11 // pred_check_branch
          %987 = sbr.rel (%p985) target = $region48
        $region47: #{_lambda_.3} parent=11 // pred_region
          _
        $region48: #{_lambda_.3} parent=11 // pred_fallthru
          _
        // Predicated region
        $region49: #{_lambda_.3} parent=11 // pred_check
          %p988 = pneg %p380
        $region50: #{_lambda_.3} parent=11 // pred_check_branch
          %990 = sbr.rel (%p988) target = $region52
        $region51: #{_lambda_.3} parent=11 // pred_region
          _
        $region52: #{_lambda_.3} parent=11 // pred_fallthru
          _
        // Predicated region
        $region53: #{_lambda_.3} parent=11 // pred_check
          %p991 = pneg %p401
        $region54: #{_lambda_.3} parent=11 // pred_check_branch
          %993 = sbr.rel (%p991) target = $region56
        $region55: #{_lambda_.3} parent=11 // pred_region
          _
        $region56: #{_lambda_.3} parent=11 // pred_fallthru
          _
        // Predicated region
        $region57: #{_lambda_.3} parent=11 // pred_check
          %p994 = pneg %p422
        $region58: #{_lambda_.3} parent=11 // pred_check_branch
          %996 = sbr.rel (%p994) target = $region60
        $region59: #{_lambda_.3} parent=11 // pred_region
          _
        $region60: #{_lambda_.3} parent=11 // pred_fallthru
          _
        // Predicated region
        $region61: #{_lambda_.3} parent=11 // pred_check
          %p997 = pneg %p443
        $region62: #{_lambda_.3} parent=11 // pred_check_branch
          %999 = sbr.rel (%p997) target = $region64
        $region63: #{_lambda_.3} parent=11 // pred_region
          _
        $region64: #{_lambda_.3} parent=11 // pred_fallthru
          _
        // Predicated region
        $region65: #{_lambda_.3} parent=11 // pred_check
          %p1000 = pneg %p464
        $region66: #{_lambda_.3} parent=11 // pred_check_branch
          %1002 = sbr.rel (%p1000) target = $region68
        $region67: #{_lambda_.3} parent=11 // pred_region
          _
        $region68: #{_lambda_.3} parent=11 // pred_fallthru
          _
        // Predicated region
        $region69: #{_lambda_.3} parent=11 // pred_check
          %p1003 = pneg %p485
        $region70: #{_lambda_.3} parent=11 // pred_check_branch
          %1005 = sbr.rel (%p1003) target = $region72
        $region71: #{_lambda_.3} parent=11 // pred_region
          _
        $region72: #{_lambda_.3} parent=11 // pred_fallthru
          _
        // Predicated region
        $region73: #{_lambda_.3} parent=11 // pred_check
          %p1006 = pneg %p506
        $region74: #{_lambda_.3} parent=11 // pred_check_branch
          %1008 = sbr.rel (%p1006) target = $region76
        $region75: #{_lambda_.3} parent=11 // pred_region
          _
        $region76: #{_lambda_.3} parent=11 // pred_fallthru
          _
        // Predicated region
        $region77: #{_lambda_.3} parent=11 // pred_check
          %p1009 = pneg %p527
        $region78: #{_lambda_.3} parent=11 // pred_check_branch
          %1011 = sbr.rel (%p1009) target = $region80
        $region79: #{_lambda_.3} parent=11 // pred_region
          %s1013 = ssub.s32 4096, 4096
          %1014 = vsyncadd [#allocation5], %s1013
          %s1015 = sshll.u32 [#allocation4], 4
          %s1016 = int_to_ptr.vmem [resolvable:$true] %s1015
          %1021 = dma.hbm_to_vmem [thread:$0]  %s41, 4096, %s1016, [#allocation5], 128, 128, 8
        $region80: #{_lambda_.3} parent=11 // pred_fallthru
          _
        // Predicated region
        $region81: #{_lambda_.3} parent=11 // pred_check
          %p1022 = pneg %p548
        $region82: #{_lambda_.3} parent=11 // pred_check_branch
          %1024 = sbr.rel (%p1022) target = $region84
        $region83: #{_lambda_.3} parent=11 // pred_region
          _
        $region84: #{_lambda_.3} parent=11 // pred_fallthru
          _
        // Predicated region
        $region85: #{_lambda_.3} parent=11 // pred_check
          %p1025 = pneg %p569
        $region86: #{_lambda_.3} parent=11 // pred_check_branch
          %1027 = sbr.rel (%p1025) target = $region88
        $region87: #{_lambda_.3} parent=11 // pred_region
          %s1029 = ssub.s32 4096, 4096
          %1030 = vsyncadd [#allocation7], %s1029
          %s1031 = sshll.u32 [#allocation6], 4
          %s1032 = int_to_ptr.vmem [resolvable:$true] %s1031
          %1037 = dma.hbm_to_vmem [thread:$0]  %s45, 4096, %s1032, [#allocation7], 128, 128, 8
        $region88: #{_lambda_.3} parent=11 // pred_fallthru
          _
        // Predicated region
        $region89: #{_lambda_.3} parent=11 // pred_check
          %p1038 = pneg %p590
        $region90: #{_lambda_.3} parent=11 // pred_check_branch
          %1040 = sbr.rel (%p1038) target = $region92
        $region91: #{_lambda_.3} parent=11 // pred_region
          _
        $region92: #{_lambda_.3} parent=11 // pred_fallthru
          _
        // Predicated region
        $region93: #{_lambda_.3} parent=11 // pred_check
          %p1041 = pneg %p611
        $region94: #{_lambda_.3} parent=11 // pred_check_branch
          %1043 = sbr.rel (%p1041) target = $region96
        $region95: #{_lambda_.3} parent=11 // pred_region
          %s1045 = ssub.s32 4096, 4096
          %1046 = vsyncadd [#allocation7], %s1045
          %s1047 = sshll.u32 [#allocation8], 4
          %s1048 = int_to_ptr.vmem [resolvable:$true] %s1047
          %1053 = dma.hbm_to_vmem [thread:$0]  %s49, 4096, %s1048, [#allocation7], 128, 128, 8
        $region96: #{_lambda_.3} parent=11 // pred_fallthru
          _
        // Predicated region
        $region97: #{_lambda_.3} parent=11 // pred_check
          %p1054 = pneg %p632
        $region98: #{_lambda_.3} parent=11 // pred_check_branch
          %1056 = sbr.rel (%p1054) target = $region100
        $region99: #{_lambda_.3} parent=11 // pred_region
          %s1058 = ssub.s32 4096, 4096
          %1059 = vsyncadd [#allocation10], %s1058
          %s1060 = sshll.u32 [#allocation9], 4
          %s1061 = int_to_ptr.vmem [resolvable:$true] %s1060
          %1066 = dma.hbm_to_vmem [thread:$0]  %s51, 4096, %s1061, [#allocation10], 128, 128, 8
        $region100: #{_lambda_.3} parent=11 // pred_fallthru
          _
        // Predicated region
        $region101: #{_lambda_.3} parent=11 // pred_check
          %p1067 = pneg %p653
        $region102: #{_lambda_.3} parent=11 // pred_check_branch
          %1069 = sbr.rel (%p1067) target = $region104
        $region103: #{_lambda_.3} parent=11 // pred_region
          _
        $region104: #{_lambda_.3} parent=11 // pred_fallthru
          _
        // Predicated region
        $region105: #{_lambda_.3} parent=11 // pred_check
          %p1070 = pneg %p674
        $region106: #{_lambda_.3} parent=11 // pred_check_branch
          %1072 = sbr.rel (%p1070) target = $region108
        $region107: #{_lambda_.3} parent=11 // pred_region
          %s1074 = ssub.s32 4096, 4096
          %1075 = vsyncadd [#allocation10], %s1074
          %s1076 = sshll.u32 [#allocation11], 4
          %s1077 = int_to_ptr.vmem [resolvable:$true] %s1076
          %1082 = dma.hbm_to_vmem [thread:$0]  %s55, 4096, %s1077, [#allocation10], 128, 128, 8
        $region108: #{_lambda_.3} parent=11 // pred_fallthru
          _
        // Predicated region
        $region109: #{_lambda_.3} parent=11 // pred_check
          %p1083 = pneg %p695
        $region110: #{_lambda_.3} parent=11 // pred_check_branch
          %1085 = sbr.rel (%p1083) target = $region112
        $region111: #{_lambda_.3} parent=11 // pred_region
          %s1087 = ssub.s32 4096, 4096
          %1088 = vsyncadd [#allocation13], %s1087
          %s1089 = sshll.u32 [#allocation12], 4
          %s1090 = int_to_ptr.vmem [resolvable:$true] %s1089
          %1095 = dma.hbm_to_vmem [thread:$0]  %s57, 4096, %s1090, [#allocation13], 128, 128, 8
        $region112: #{_lambda_.3} parent=11 // pred_fallthru
          _
        // Predicated region
        $region113: #{_lambda_.3} parent=11 // pred_check
          %p1096 = pneg %p716
        $region114: #{_lambda_.3} parent=11 // pred_check_branch
          %1098 = sbr.rel (%p1096) target = $region116
        $region115: #{_lambda_.3} parent=11 // pred_region
          _
        $region116: #{_lambda_.3} parent=11 // pred_fallthru
          _
        // Predicated region
        $region117: #{_lambda_.3} parent=11 // pred_check
          %p1099 = pneg %p737
        $region118: #{_lambda_.3} parent=11 // pred_check_branch
          %1101 = sbr.rel (%p1099) target = $region120
        $region119: #{_lambda_.3} parent=11 // pred_region
          %s1103 = ssub.s32 4096, 4096
          %1104 = vsyncadd [#allocation13], %s1103
          %s1105 = sshll.u32 [#allocation14], 4
          %s1106 = int_to_ptr.vmem [resolvable:$true] %s1105
          %1111 = dma.hbm_to_vmem [thread:$0]  %s61, 4096, %s1106, [#allocation13], 128, 128, 8
        $region120: #{_lambda_.3} parent=11 // pred_fallthru
          _
        // Predicated region
        $region121: #{_lambda_.3} parent=11 // pred_check
          %p1112 = pneg %p758
        $region122: #{_lambda_.3} parent=11 // pred_check_branch
          %1114 = sbr.rel (%p1112) target = $region124
        $region123: #{_lambda_.3} parent=11 // pred_region
          _
        $region124: #{_lambda_.3} parent=11 // pred_fallthru
          _
        // Predicated region
        $region125: #{_lambda_.3} parent=11 // pred_check
          %p1115 = pneg %p779
        $region126: #{_lambda_.3} parent=11 // pred_check_branch
          %1117 = sbr.rel (%p1115) target = $region128
        $region127: #{_lambda_.3} parent=11 // pred_region
          %s1119 = ssub.s32 4096, 4096
          %1120 = vsyncadd [#allocation16], %s1119
          %s1121 = sshll.u32 [#allocation15], 4
          %s1122 = int_to_ptr.vmem [resolvable:$true] %s1121
          %1127 = dma.hbm_to_vmem [thread:$0]  %s65, 4096, %s1122, [#allocation16], 128, 128, 8
        $region128: #{_lambda_.3} parent=11 // pred_fallthru
          _
        // Predicated region
        $region129: #{_lambda_.3} parent=11 // pred_check
          %p1128 = pneg %p800
        $region130: #{_lambda_.3} parent=11 // pred_check_branch
          %1130 = sbr.rel (%p1128) target = $region132
        $region131: #{_lambda_.3} parent=11 // pred_region
          _
        $region132: #{_lambda_.3} parent=11 // pred_fallthru
          _
        // Predicated region
        $region133: #{_lambda_.3} parent=11 // pred_check
          %p1131 = pneg %p821
        $region134: #{_lambda_.3} parent=11 // pred_check_branch
          %1133 = sbr.rel (%p1131) target = $region136
        $region135: #{_lambda_.3} parent=11 // pred_region
          %s1135 = ssub.s32 4096, 4096
          %1136 = vsyncadd [#allocation16], %s1135
          %s1137 = sshll.u32 [#allocation17], 4
          %s1138 = int_to_ptr.vmem [resolvable:$true] %s1137
          %1143 = dma.hbm_to_vmem [thread:$0]  %s69, 4096, %s1138, [#allocation16], 128, 128, 8
        $region136: #{_lambda_.3} parent=11 // pred_fallthru
          _
        // Predicated region
        $region137: #{_lambda_.3} parent=11 // pred_check
          %p1144 = pneg %p842
        $region138: #{_lambda_.3} parent=11 // pred_check_branch
          %1146 = sbr.rel (%p1144) target = $region140
        $region139: #{_lambda_.3} parent=11 // pred_region
          _
        $region140: #{_lambda_.3} parent=11 // pred_fallthru
          _
      $region12: #{_lambda_.3} parent=5 // pred_fallthru
        _
      %p1147 = scmp.lt.s32.totalorder %s92, 2
      // Predicated region
      $region141: #{_lambda_.3} parent=5 // pred_check
        %p1148 = pneg %p1147
      $region142: #{_lambda_.3} parent=5 // pred_check_branch
        %1150 = sbr.rel (%p1148) target = $region144
      $region143: #{_lambda_.3} parent=5 // pred_region
        // Predicated region
        $region145: #{_lambda_.3} parent=143 // pred_check
          %p1151 = pneg %p112
        $region146: #{_lambda_.3} parent=143 // pred_check_branch
          %1153 = sbr.rel (%p1151) target = $region148
        $region147: #{_lambda_.3} parent=143 // pred_region
          %s1154 = smul.u32 13, %s92
          %p1155 = scmp.lt.s32.totalorder %s1154, 25
          %s1156 = scalar_select %p1155, %s1154, 25
          %s1157 = smul.addr %s1156, 8
          %s1158 = scalar_lea.vmem %s3, %s1157
          %s1159 = smul.u32 13, %s92
        $region148: #{_lambda_.3} parent=143 // pred_fallthru
          _
        // Predicated region
        $region149: #{_lambda_.3} parent=143 // pred_check
          %p1160 = pneg %p138
        $region150: #{_lambda_.3} parent=143 // pred_check_branch
          %1162 = sbr.rel (%p1160) target = $region152
        $region151: #{_lambda_.3} parent=143 // pred_region
          %s1163 = smul.u32 13, %s92
          %p1164 = scmp.lt.s32.totalorder %s1163, 25
          %s1165 = scalar_select %p1164, %s1163, 25
          %s1166 = smul.addr %s1165, 8
          %s1167 = scalar_lea.vmem %s5, %s1166
          %s1168 = smul.u32 13, %s92
        $region152: #{_lambda_.3} parent=143 // pred_fallthru
          _
        // Predicated region
        $region153: #{_lambda_.3} parent=143 // pred_check
          %p1169 = pneg %p164
        $region154: #{_lambda_.3} parent=143 // pred_check_branch
          %1171 = sbr.rel (%p1169) target = $region156
        $region155: #{_lambda_.3} parent=143 // pred_region
          %s1172 = smul.u32 13, %s92
          %p1173 = scmp.lt.s32.totalorder %s1172, 25
          %s1174 = scalar_select %p1173, %s1172, 25
          %s1175 = smul.addr %s1174, 8
          %s1176 = scalar_lea.vmem %s7, %s1175
          %s1177 = smul.u32 13, %s92
        $region156: #{_lambda_.3} parent=143 // pred_fallthru
          _
      $region144: #{_lambda_.3} parent=5 // pred_fallthru
        _
      %p1178 = scmp.le.s32.totalorder 1, %s92
      %p1179 = scmp.lt.s32.totalorder %s92, 3
      %p1180 = pnand %p1178, %p1179
      %p1181 = pneg %p1180
      // Predicated region
      $region157: #{_lambda_.3} parent=5 // pred_check
        _
      $region158: #{_lambda_.3} parent=5 // pred_check_branch
        %1183 = sbr.rel (%p1180) target = $region160
      $region159: #{_lambda_.3} parent=5 // pred_region
        %s1184 = ssub.s32 %s92, 1
        // Predicated region
        $region161: #{_lambda_.3} parent=159 // pred_check
          %p1185 = pneg %p527
        $region162: #{_lambda_.3} parent=159 // pred_check_branch
          %1187 = sbr.rel (%p1185) target = $region164
        $region163: #{_lambda_.3} parent=159 // pred_region
          %1188 = dma.done [#allocation5], 4096
        $region164: #{_lambda_.3} parent=159 // pred_fallthru
          _
        // Predicated region
        $region165: #{_lambda_.3} parent=159 // pred_check
          %p1189 = pneg %p569
        $region166: #{_lambda_.3} parent=159 // pred_check_branch
          %1191 = sbr.rel (%p1189) target = $region168
        $region167: #{_lambda_.3} parent=159 // pred_region
          %1192 = dma.done [#allocation7], 4096
        $region168: #{_lambda_.3} parent=159 // pred_fallthru
          _
        // Predicated region
        $region169: #{_lambda_.3} parent=159 // pred_check
          %p1193 = pneg %p611
        $region170: #{_lambda_.3} parent=159 // pred_check_branch
          %1195 = sbr.rel (%p1193) target = $region172
        $region171: #{_lambda_.3} parent=159 // pred_region
          %1196 = dma.done [#allocation7], 4096
        $region172: #{_lambda_.3} parent=159 // pred_fallthru
          _
        // Predicated region
        $region173: #{_lambda_.3} parent=159 // pred_check
          %p1197 = pneg %p632
        $region174: #{_lambda_.3} parent=159 // pred_check_branch
          %1199 = sbr.rel (%p1197) target = $region176
        $region175: #{_lambda_.3} parent=159 // pred_region
          %1200 = dma.done [#allocation10], 4096
        $region176: #{_lambda_.3} parent=159 // pred_fallthru
          _
        // Predicated region
        $region177: #{_lambda_.3} parent=159 // pred_check
          %p1201 = pneg %p674
        $region178: #{_lambda_.3} parent=159 // pred_check_branch
          %1203 = sbr.rel (%p1201) target = $region180
        $region179: #{_lambda_.3} parent=159 // pred_region
          %1204 = dma.done [#allocation10], 4096
        $region180: #{_lambda_.3} parent=159 // pred_fallthru
          _
        // Predicated region
        $region181: #{_lambda_.3} parent=159 // pred_check
          %p1205 = pneg %p695
        $region182: #{_lambda_.3} parent=159 // pred_check_branch
          %1207 = sbr.rel (%p1205) target = $region184
        $region183: #{_lambda_.3} parent=159 // pred_region
          %1208 = dma.done [#allocation13], 4096
        $region184: #{_lambda_.3} parent=159 // pred_fallthru
          _
        // Predicated region
        $region185: #{_lambda_.3} parent=159 // pred_check
          %p1209 = pneg %p737
        $region186: #{_lambda_.3} parent=159 // pred_check_branch
          %1211 = sbr.rel (%p1209) target = $region188
        $region187: #{_lambda_.3} parent=159 // pred_region
          %1212 = dma.done [#allocation13], 4096
        $region188: #{_lambda_.3} parent=159 // pred_fallthru
          _
        // Predicated region
        $region189: #{_lambda_.3} parent=159 // pred_check
          %p1213 = pneg %p779
        $region190: #{_lambda_.3} parent=159 // pred_check_branch
          %1215 = sbr.rel (%p1213) target = $region192
        $region191: #{_lambda_.3} parent=159 // pred_region
          %1216 = dma.done [#allocation16], 4096
        $region192: #{_lambda_.3} parent=159 // pred_fallthru
          _
        // Predicated region
        $region193: #{_lambda_.3} parent=159 // pred_check
          %p1217 = pneg %p821
        $region194: #{_lambda_.3} parent=159 // pred_check_branch
          %1219 = sbr.rel (%p1217) target = $region196
        $region195: #{_lambda_.3} parent=159 // pred_region
          %1220 = dma.done [#allocation16], 4096
        $region196: #{_lambda_.3} parent=159 // pred_fallthru
          _
        %s1221 = smul.u32 13, %s97
        %p1222 = scmp.lt.s32.totalorder %s1221, 25
        %s1223 = scalar_select %p1222, %s1221, 25
        %s1224 = smul.addr %s1223, 8
        %s1225 = scalar_lea.vmem %s3, %s1224
        %p1226 = pneg %p118
        %p1227 = pneg %p115
        %s1228 = smul.u32 13, %s97
        %p1229 = scmp.lt.s32.totalorder %s1228, 25
        %s1230 = scalar_select %p1229, %s1228, 25
        %s1231 = smul.addr %s1230, 8
        %s1232 = scalar_lea.vmem %s5, %s1231
        %p1233 = pneg %p144
        %p1234 = pneg %p141
        %s1235 = smul.u32 13, %s97
        %p1236 = scmp.lt.s32.totalorder %s1235, 25
        %s1237 = scalar_select %p1236, %s1235, 25
        %s1238 = smul.addr %s1237, 8
        %s1239 = scalar_lea.vmem %s7, %s1238
        %p1240 = pneg %p170
        %p1241 = pneg %p167
        %p1242 = pneg %p191
        %p1243 = pneg %p188
        %p1244 = pneg %p212
        %p1245 = pneg %p209
        %p1246 = pneg %p233
        %p1247 = pneg %p230
        %p1248 = pneg %p254
        %p1249 = pneg %p251
        %p1250 = pneg %p275
        %p1251 = pneg %p272
        %p1252 = pneg %p296
        %p1253 = pneg %p293
        %p1254 = pneg %p317
        %p1255 = pneg %p314
        %p1256 = pneg %p338
        %p1257 = pneg %p335
        %p1258 = pneg %p359
        %p1259 = pneg %p356
        %p1260 = pneg %p380
        %p1261 = pneg %p377
        %p1262 = pneg %p401
        %p1263 = pneg %p398
        %p1264 = pneg %p422
        %p1265 = pneg %p419
        %p1266 = pneg %p443
        %p1267 = pneg %p440
        %p1268 = pneg %p464
        %p1269 = pneg %p461
        %p1270 = pneg %p485
        %p1271 = pneg %p482
        %p1272 = pneg %p506
        %p1273 = pneg %p503
        %p1274 = pneg %p527
        %p1275 = pneg %p524
        %p1276 = pneg %p548
        %p1277 = pneg %p545
        %p1278 = pneg %p569
        %p1279 = pneg %p566
        %p1280 = pneg %p590
        %p1281 = pneg %p587
        %p1282 = pneg %p611
        %p1283 = pneg %p608
        %p1284 = pneg %p632
        %p1285 = pneg %p629
        %p1286 = pneg %p653
        %p1287 = pneg %p650
        %p1288 = pneg %p674
        %p1289 = pneg %p671
        %p1290 = pneg %p695
        %p1291 = pneg %p692
        %p1292 = pneg %p716
        %p1293 = pneg %p713
        %p1294 = pneg %p737
        %p1295 = pneg %p734
        %p1296 = pneg %p758
        %p1297 = pneg %p755
        %p1298 = pneg %p779
        %p1299 = pneg %p776
        %p1300 = pneg %p800
        %p1301 = pneg %p797
        %p1302 = pneg %p821
        %p1303 = pneg %p818
        %p1304 = pneg %p842
        %p1305 = pneg %p839
        %p1306 = pneg %p868
        %p1307 = pneg %p865
        %s1308 = smul.u32 13, %s97
        %p1309 = scmp.lt.s32.totalorder %s1308, 25
        %s1310 = scalar_select %p1309, %s1308, 25
        %s1311 = smul.addr %s1310, 2
        %s1312 = smul.addr %s1311, 8
        %s1313 = scalar_lea.vmem %s73, %s1312
        %p1314 = pneg %p894
        %p1315 = pneg %p891
        %s1316 = smul.u32 13, %s97
        %p1317 = scmp.lt.s32.totalorder %s1316, 25
        %s1318 = scalar_select %p1317, %s1316, 25
        %s1319 = smul.addr %s1318, 2
        %s1320 = smul.addr %s1319, 8
        %s1321 = scalar_lea.vmem %s75, %s1320
        %p1322 = pneg %p920
        %p1323 = pneg %p917
        %s1324 = smul.u32 13, %s97
        %p1325 = scmp.lt.s32.totalorder %s1324, 25
        %s1326 = scalar_select %p1325, %s1324, 25
        %s1327 = smul.addr %s1326, 2
        %s1328 = smul.addr %s1327, 8
        %s1329 = scalar_lea.vmem %s77, %s1328
        %p1330 = pneg %p946
        %p1331 = pneg %p943
        %p1332 = scmp.lt.s32.totalorder %s97, 1
        %s1333 = scalar_select %p1332, %s97, 1
        %s1334 = smul.addr %s1333, 2
        %s1335 = smul.addr %s1334, 8
        %s1336 = scalar_lea.vmem %s79, %s1335
        %s1337 = smul.u32 13, %s97
        %p1338 = scmp.lt.s32.totalorder %s1337, 25
        %s1339 = scalar_select %p1338, %s1337, 25
        %s1340 = smul.addr %s1339, 8
        %s1341 = scalar_lea.vmem %s3, %s1340
        %s1342 = smul.u32 13, %s97
        %s1343 = smul.u32 13, %s97
        %p1344 = scmp.lt.s32.totalorder %s1343, 25
        %s1345 = scalar_select %p1344, %s1343, 25
        %s1346 = smul.addr %s1345, 8
        %s1347 = scalar_lea.vmem %s5, %s1346
        %s1348 = smul.u32 13, %s97
        %s1349 = smul.u32 13, %s97
        %p1350 = scmp.lt.s32.totalorder %s1349, 25
        %s1351 = scalar_select %p1350, %s1349, 25
        %s1352 = smul.addr %s1351, 8
        %s1353 = scalar_lea.vmem %s7, %s1352
        %s1354 = smul.u32 13, %s97
        %s1355 = smul.u32 13, %s97
        %p1356 = scmp.lt.s32.totalorder %s1355, 25
        %s1357 = scalar_select %p1356, %s1355, 25
        %s1358 = smul.addr %s1357, 2
        %s1359 = smul.addr %s1358, 8
        %s1360 = scalar_lea.vmem %s73, %s1359
        %s1361 = smul.u32 13, %s97
        %s1362 = smul.u32 13, %s97
        %p1363 = scmp.lt.s32.totalorder %s1362, 25
        %s1364 = scalar_select %p1363, %s1362, 25
        %s1365 = smul.addr %s1364, 2
        %s1366 = smul.addr %s1365, 8
        %s1367 = scalar_lea.vmem %s75, %s1366
        %s1368 = smul.u32 13, %s97
        %s1369 = smul.u32 13, %s97
        %p1370 = scmp.lt.s32.totalorder %s1369, 25
        %s1371 = scalar_select %p1370, %s1369, 25
        %s1372 = smul.addr %s1371, 2
        %s1373 = smul.addr %s1372, 8
        %s1374 = scalar_lea.vmem %s77, %s1373
        %s1375 = smul.u32 13, %s97
        %p1376 = scmp.lt.s32.totalorder %s97, 1
        %s1377 = scalar_select %p1376, %s97, 1
        %s1378 = smul.addr %s1377, 2
        %s1379 = smul.addr %s1378, 8
        %s1380 = scalar_lea.vmem %s79, %s1379
        %v1382 = vld [vmem:[%s1341] sm:$0xff]
        %v1383 = vld [vmem:[%s1341 + $0x8] sm:$0xff]
        %v1384 = vld [vmem:[%s1341 + $0x10] sm:$0xff]
        %v1385 = vld [vmem:[%s1341 + $0x18] sm:$0xff]
        %v1386 = vld [vmem:[%s1341 + $0x20] sm:$0xff]
        %v1387 = vld [vmem:[%s1341 + $0x28] sm:$0xff]
        %v1388 = vld [vmem:[%s1341 + $0x30] sm:$0xff]
        %v1389 = vld [vmem:[%s1341 + $0x38] sm:$0xff]
        %v1390 = vld [vmem:[%s1341 + $0x40] sm:$0xff]
        %v1391 = vld [vmem:[%s1341 + $0x48] sm:$0xff]
        %v1392 = vld [vmem:[%s1341 + $0x50] sm:$0xff]
        %v1393 = vld [vmem:[%s1341 + $0x58] sm:$0xff]
        %v1394 = vld [vmem:[%s1341 + $0x60] sm:$0xff]
        %v1395 = vld [vmem:[%s1347] sm:$0xff]
        %v1396 = vld [vmem:[%s1347 + $0x8] sm:$0xff]
        %v1397 = vld [vmem:[%s1347 + $0x10] sm:$0xff]
        %v1398 = vld [vmem:[%s1347 + $0x18] sm:$0xff]
        %v1399 = vld [vmem:[%s1347 + $0x20] sm:$0xff]
        %v1400 = vld [vmem:[%s1347 + $0x28] sm:$0xff]
        %v1401 = vld [vmem:[%s1347 + $0x30] sm:$0xff]
        %v1402 = vld [vmem:[%s1347 + $0x38] sm:$0xff]
        %v1403 = vld [vmem:[%s1347 + $0x40] sm:$0xff]
        %v1404 = vld [vmem:[%s1347 + $0x48] sm:$0xff]
        %v1405 = vld [vmem:[%s1347 + $0x50] sm:$0xff]
        %v1406 = vld [vmem:[%s1347 + $0x58] sm:$0xff]
        %v1407 = vld [vmem:[%s1347 + $0x60] sm:$0xff]
        %v1408 = vpack.c.bf16 %v1383, %v1382
        %v1409 = vpack.c.bf16 %v1385, %v1384
        %v1410 = vpack.c.bf16 %v1387, %v1386
        %v1411 = vpack.c.bf16 %v1389, %v1388
        %v1412 = vpack.c.bf16 %v1391, %v1390
        %v1413 = vpack.c.bf16 %v1393, %v1392
        %v1414 = vpack.c.bf16 %v1395, %v1394
        %v1415 = vpack.c.bf16 %v1397, %v1396
        %v1416 = vpack.c.bf16 %v1399, %v1398
        %v1417 = vpack.c.bf16 %v1401, %v1400
        %v1418 = vpack.c.bf16 %v1403, %v1402
        %v1419 = vpack.c.bf16 %v1405, %v1404
        %v1420 = vpack.c.bf16 %v1407, %v1406
        %v1421 = vld [vmem:[%s9] sm:$0xff]
        %v1422 = vld [vmem:[%s9 + $0x8] sm:$0xff]
        %v1423 = vld [vmem:[%s11] sm:$0x3]
        %v1425 = vlaneseq
        %v1426 = vshrl.u32 %v1425, 7
        %v1427 = vsub.s32 0, %v1426
        %v1428 = vrot.slane %v1423, %v1427
        %v1429 = vlaneseq
        %v1430 = vshrl.u32 %v1429, 7
        %v1431 = vsub.s32 1, %v1430
        %v1432 = vrot.slane %v1423, %v1431
        %v1437 = vunpack.c.l.b16 %v1421
        %v1438 = vunpack.c.h.b16 %v1421
        %v1439 = vunpack.c.l.b16 %v1422
        %v1440 = vunpack.c.h.b16 %v1422
        %v1441 = vpack.c.b16 %v1439, %v1437
        %v1442 = vpack.c.b16 %v1440, %v1438
        %vm1445 = vcmask 130048
        %v1447 = vsel %vm1445, %v1408, 0
        %v1450 = vsel %vm1445, %v1409, 0
        %v1453 = vsel %vm1445, %v1410, 0
        %v1456 = vsel %vm1445, %v1411, 0
        %v1459 = vsel %vm1445, %v1412, 0
        %v1462 = vsel %vm1445, %v1413, 0
        %v1465 = vsel %vm1445, %v1414, 0
        %v1468 = vsel %vm1445, %v1415, 0
        %v1471 = vsel %vm1445, %v1416, 0
        %v1474 = vsel %vm1445, %v1417, 0
        %v1477 = vsel %vm1445, %v1418, 0
        %v1480 = vsel %vm1445, %v1419, 0
        %v1483 = vsel %vm1445, %v1420, 0
        %1485 = vmatprep.subr.bf16.mxu0 0
        %1486 = vmatpush1.bf16.msra.mxu0 0
        %1487 = vmatprep.subr.bf16.mxu0 0
        %1488 = vmatpush1.bf16.msra.mxu0 0
        %1489 = vmatprep.subr.bf16.mxu0 0
        %1490 = vmatpush1.bf16.msra.mxu0 0
        %1491 = vmatprep.subr.bf16.mxu0 0
        %1492 = vmatpush1.bf16.msra.mxu0 0
        %1493 = vmatprep.subr.bf16.mxu0 0
        %1494 = vmatpush1.bf16.msra.mxu0 0
        %1495 = vmatprep.subr.bf16.mxu0 0
        %1496 = vmatpush1.bf16.msra.mxu0 0
        %1497 = vmatprep.subr.bf16.mxu0 0
        %1498 = vmatpush1.bf16.msra.mxu0 0
        %1499 = vmatprep.subr.bf16.mxu0 %v1442
        %1500 = vmatpush1.bf16.msra.mxu0 %v1441
        %1501 = vmatprep.subr.bf16.mxu0 0
        %1502 = vmatpush2.bf16.msra.mxu0 0
        %1503 = vmatprep.subr.bf16.mxu0 0
        %1504 = vmatpush2.bf16.msra.mxu0 0
        %1505 = vmatprep.subr.bf16.mxu0 0
        %1506 = vmatpush2.bf16.msra.mxu0 0
        %1507 = vmatprep.subr.bf16.mxu0 0
        %1508 = vmatpush2.bf16.msra.mxu0 0
        %1509 = vmatprep.subr.bf16.mxu0 0
        %1510 = vmatpush2.bf16.msra.mxu0 0
        %1511 = vmatprep.subr.bf16.mxu0 0
        %1512 = vmatpush2.bf16.msra.mxu0 0
        %1513 = vmatprep.subr.bf16.mxu0 0
        %1514 = vmatpush2.bf16.msra.mxu0 0
        %1515 = vmatprep.subr.bf16.mxu0 0
        %1516 = vmatpush2.bf16.msra.mxu0 0
        %1517 = vmatprep.mubr.bf16.mxu0 0
        %1518 = vmatmul.mubr.bf16.gmra.mxu0 %v1447
        %v1519 = vpop.f32.mrf.mxu0
        %v1520 = vadd.f32 %v1428, %v1519
        %v1521 = vpop.f32.mrf.mxu0
        %v1522 = vadd.f32 %v1432, %v1521
        %v1523 = vpop.f32.mrf.mxu0
        %v1524 = vadd.f32 %v1428, %v1523
        %v1525 = vpop.f32.mrf.mxu0
        %v1526 = vadd.f32 %v1432, %v1525
        %1527 = vmatprep.mubr.bf16.mxu0 0
        %1528 = vmatmul.mubr.bf16.gmra.mxu0 %v1450
        %v1529 = vpop.f32.mrf.mxu0
        %v1530 = vadd.f32 %v1428, %v1529
        %v1531 = vpop.f32.mrf.mxu0
        %v1532 = vadd.f32 %v1432, %v1531
        %v1533 = vpop.f32.mrf.mxu0
        %v1534 = vadd.f32 %v1428, %v1533
        %v1535 = vpop.f32.mrf.mxu0
        %v1536 = vadd.f32 %v1432, %v1535
        %1537 = vmatprep.mubr.bf16.mxu0 0
        %1538 = vmatmul.mubr.bf16.gmra.mxu0 %v1453
        %v1539 = vpop.f32.mrf.mxu0
        %v1540 = vadd.f32 %v1428, %v1539
        %v1541 = vpop.f32.mrf.mxu0
        %v1542 = vadd.f32 %v1432, %v1541
        %v1543 = vpop.f32.mrf.mxu0
        %v1544 = vadd.f32 %v1428, %v1543
        %v1545 = vpop.f32.mrf.mxu0
        %v1546 = vadd.f32 %v1432, %v1545
        %1547 = vmatprep.mubr.bf16.mxu0 0
        %1548 = vmatmul.mubr.bf16.gmra.mxu0 %v1456
        %v1549 = vpop.f32.mrf.mxu0
        %v1550 = vadd.f32 %v1428, %v1549
        %v1551 = vpop.f32.mrf.mxu0
        %v1552 = vadd.f32 %v1432, %v1551
        %v1553 = vpop.f32.mrf.mxu0
        %v1554 = vadd.f32 %v1428, %v1553
        %v1555 = vpop.f32.mrf.mxu0
        %v1556 = vadd.f32 %v1432, %v1555
        %1557 = vmatprep.mubr.bf16.mxu0 0
        %1558 = vmatmul.mubr.bf16.gmra.mxu0 %v1459
        %v1559 = vpop.f32.mrf.mxu0
        %v1560 = vadd.f32 %v1428, %v1559
        %v1561 = vpop.f32.mrf.mxu0
        %v1562 = vadd.f32 %v1432, %v1561
        %v1563 = vpop.f32.mrf.mxu0
        %v1564 = vadd.f32 %v1428, %v1563
        %v1565 = vpop.f32.mrf.mxu0
        %v1566 = vadd.f32 %v1432, %v1565
        %1567 = vmatprep.mubr.bf16.mxu0 0
        %1568 = vmatmul.mubr.bf16.gmra.mxu0 %v1462
        %v1569 = vpop.f32.mrf.mxu0
        %v1570 = vadd.f32 %v1428, %v1569
        %v1571 = vpop.f32.mrf.mxu0
        %v1572 = vadd.f32 %v1432, %v1571
        %v1573 = vpop.f32.mrf.mxu0
        %v1574 = vadd.f32 %v1428, %v1573
        %v1575 = vpop.f32.mrf.mxu0
        %v1576 = vadd.f32 %v1432, %v1575
        %1577 = vmatprep.mubr.bf16.mxu0 0
        %1578 = vmatmul.mubr.bf16.gmra.mxu0 %v1465
        %v1579 = vpop.f32.mrf.mxu0
        %v1580 = vadd.f32 %v1428, %v1579
        %v1581 = vpop.f32.mrf.mxu0
        %v1582 = vadd.f32 %v1432, %v1581
        %v1583 = vpop.f32.mrf.mxu0
        %v1584 = vadd.f32 %v1428, %v1583
        %v1585 = vpop.f32.mrf.mxu0
        %v1586 = vadd.f32 %v1432, %v1585
        %1587 = vmatprep.mubr.bf16.mxu0 0
        %1588 = vmatmul.mubr.bf16.gmra.mxu0 %v1468
        %v1589 = vpop.f32.mrf.mxu0
        %v1590 = vadd.f32 %v1428, %v1589
        %v1591 = vpop.f32.mrf.mxu0
        %v1592 = vadd.f32 %v1432, %v1591
        %v1593 = vpop.f32.mrf.mxu0
        %v1594 = vadd.f32 %v1428, %v1593
        %v1595 = vpop.f32.mrf.mxu0
        %v1596 = vadd.f32 %v1432, %v1595
        %1597 = vmatprep.mubr.bf16.mxu0 0
        %1598 = vmatmul.mubr.bf16.gmra.mxu0 %v1471
        %v1599 = vpop.f32.mrf.mxu0
        %v1600 = vadd.f32 %v1428, %v1599
        %v1601 = vpop.f32.mrf.mxu0
        %v1602 = vadd.f32 %v1432, %v1601
        %v1603 = vpop.f32.mrf.mxu0
        %v1604 = vadd.f32 %v1428, %v1603
        %v1605 = vpop.f32.mrf.mxu0
        %v1606 = vadd.f32 %v1432, %v1605
        %1607 = vmatprep.mubr.bf16.mxu0 0
        %1608 = vmatmul.mubr.bf16.gmra.mxu0 %v1474
        %v1609 = vpop.f32.mrf.mxu0
        %v1610 = vadd.f32 %v1428, %v1609
        %v1611 = vpop.f32.mrf.mxu0
        %v1612 = vadd.f32 %v1432, %v1611
        %v1613 = vpop.f32.mrf.mxu0
        %v1614 = vadd.f32 %v1428, %v1613
        %v1615 = vpop.f32.mrf.mxu0
        %v1616 = vadd.f32 %v1432, %v1615
        %1617 = vmatprep.mubr.bf16.mxu0 0
        %1618 = vmatmul.mubr.bf16.gmra.mxu0 %v1477
        %v1619 = vpop.f32.mrf.mxu0
        %v1620 = vadd.f32 %v1428, %v1619
        %v1621 = vpop.f32.mrf.mxu0
        %v1622 = vadd.f32 %v1432, %v1621
        %v1623 = vpop.f32.mrf.mxu0
        %v1624 = vadd.f32 %v1428, %v1623
        %v1625 = vpop.f32.mrf.mxu0
        %v1626 = vadd.f32 %v1432, %v1625
        %1627 = vmatprep.mubr.bf16.mxu0 0
        %1628 = vmatmul.mubr.bf16.gmra.mxu0 %v1480
        %v1629 = vpop.f32.mrf.mxu0
        %v1630 = vadd.f32 %v1428, %v1629
        %v1631 = vpop.f32.mrf.mxu0
        %v1632 = vadd.f32 %v1432, %v1631
        %v1633 = vpop.f32.mrf.mxu0
        %v1634 = vadd.f32 %v1428, %v1633
        %v1635 = vpop.f32.mrf.mxu0
        %v1636 = vadd.f32 %v1432, %v1635
        %1637 = vmatprep.mubr.bf16.mxu0 0
        %1638 = vmatmul.mubr.bf16.gmra.mxu0 %v1483
        %v1639 = vpop.f32.mrf.mxu0
        %v1640 = vadd.f32 %v1428, %v1639
        %v1641 = vpop.f32.mrf.mxu0
        %v1642 = vadd.f32 %v1432, %v1641
        %v1643 = vpop.f32.mrf.mxu0
        %v1644 = vadd.f32 %v1428, %v1643
        %v1645 = vpop.f32.mrf.mxu0
        %v1646 = vadd.f32 %v1432, %v1645
        %1647 = vdwg.mxu0
        %v1648 = vmax.f32 %v1520, 0.0
        %v1649 = vmax.f32 %v1522, 0.0
        %v1650 = vmax.f32 %v1524, 0.0
        %v1651 = vmax.f32 %v1526, 0.0
        %v1652 = vmax.f32 %v1530, 0.0
        %v1653 = vmax.f32 %v1532, 0.0
        %v1654 = vmax.f32 %v1534, 0.0
        %v1655 = vmax.f32 %v1536, 0.0
        %v1656 = vmax.f32 %v1540, 0.0
        %v1657 = vmax.f32 %v1542, 0.0
        %v1658 = vmax.f32 %v1544, 0.0
        %v1659 = vmax.f32 %v1546, 0.0
        %v1660 = vmax.f32 %v1550, 0.0
        %v1661 = vmax.f32 %v1552, 0.0
        %v1662 = vmax.f32 %v1554, 0.0
        %v1663 = vmax.f32 %v1556, 0.0
        %v1664 = vmax.f32 %v1560, 0.0
        %v1665 = vmax.f32 %v1562, 0.0
        %v1666 = vmax.f32 %v1564, 0.0
        %v1667 = vmax.f32 %v1566, 0.0
        %v1668 = vmax.f32 %v1570, 0.0
        %v1669 = vmax.f32 %v1572, 0.0
        %v1670 = vmax.f32 %v1574, 0.0
        %v1671 = vmax.f32 %v1576, 0.0
        %v1672 = vmax.f32 %v1580, 0.0
        %v1673 = vmax.f32 %v1582, 0.0
        %v1674 = vmax.f32 %v1584, 0.0
        %v1675 = vmax.f32 %v1586, 0.0
        %v1676 = vmax.f32 %v1590, 0.0
        %v1677 = vmax.f32 %v1592, 0.0
        %v1678 = vmax.f32 %v1594, 0.0
        %v1679 = vmax.f32 %v1596, 0.0
        %v1680 = vmax.f32 %v1600, 0.0
        %v1681 = vmax.f32 %v1602, 0.0
        %v1682 = vmax.f32 %v1604, 0.0
        %v1683 = vmax.f32 %v1606, 0.0
        %v1684 = vmax.f32 %v1610, 0.0
        %v1685 = vmax.f32 %v1612, 0.0
        %v1686 = vmax.f32 %v1614, 0.0
        %v1687 = vmax.f32 %v1616, 0.0
        %v1688 = vmax.f32 %v1620, 0.0
        %v1689 = vmax.f32 %v1622, 0.0
        %v1690 = vmax.f32 %v1624, 0.0
        %v1691 = vmax.f32 %v1626, 0.0
        %v1692 = vmax.f32 %v1630, 0.0
        %v1693 = vmax.f32 %v1632, 0.0
        %v1694 = vmax.f32 %v1634, 0.0
        %v1695 = vmax.f32 %v1636, 0.0
        %v1696 = vmax.f32 %v1640, 0.0
        %v1697 = vmax.f32 %v1642, 0.0
        %v1698 = vmax.f32 %v1644, 0.0
        %v1699 = vmax.f32 %v1646, 0.0
        %v1700 = vpack.c.bf16 %v1650, %v1648
        %v1701 = vpack.c.bf16 %v1651, %v1649
        %v1702 = vpack.c.bf16 %v1654, %v1652
        %v1703 = vpack.c.bf16 %v1655, %v1653
        %v1704 = vpack.c.bf16 %v1658, %v1656
        %v1705 = vpack.c.bf16 %v1659, %v1657
        %v1706 = vpack.c.bf16 %v1662, %v1660
        %v1707 = vpack.c.bf16 %v1663, %v1661
        %v1708 = vpack.c.bf16 %v1666, %v1664
        %v1709 = vpack.c.bf16 %v1667, %v1665
        %v1710 = vpack.c.bf16 %v1670, %v1668
        %v1711 = vpack.c.bf16 %v1671, %v1669
        %v1712 = vpack.c.bf16 %v1674, %v1672
        %v1713 = vpack.c.bf16 %v1675, %v1673
        %v1714 = vpack.c.bf16 %v1678, %v1676
        %v1715 = vpack.c.bf16 %v1679, %v1677
        %v1716 = vpack.c.bf16 %v1682, %v1680
        %v1717 = vpack.c.bf16 %v1683, %v1681
        %v1718 = vpack.c.bf16 %v1686, %v1684
        %v1719 = vpack.c.bf16 %v1687, %v1685
        %v1720 = vpack.c.bf16 %v1690, %v1688
        %v1721 = vpack.c.bf16 %v1691, %v1689
        %v1722 = vpack.c.bf16 %v1694, %v1692
        %v1723 = vpack.c.bf16 %v1695, %v1693
        %v1724 = vpack.c.bf16 %v1698, %v1696
        %v1725 = vpack.c.bf16 %v1699, %v1697
        %v1726 = vld [vmem:[%s13] sm:$0xff]
        %v1727 = vld [vmem:[%s13 + $0x8] sm:$0xff]
        %v1728 = vld [vmem:[%s13 + $0x10] sm:$0xff]
        %v1729 = vld [vmem:[%s13 + $0x18] sm:$0xff]
        %v1730 = vld [vmem:[%s13 + $0x20] sm:$0xff]
        %v1731 = vld [vmem:[%s13 + $0x28] sm:$0xff]
        %v1732 = vld [vmem:[%s13 + $0x30] sm:$0xff]
        %v1733 = vld [vmem:[%s13 + $0x38] sm:$0xff]
        %v1734 = vld [vmem:[%s13 + $0x40] sm:$0xff]
        %v1735 = vld [vmem:[%s13 + $0x48] sm:$0xff]
        %v1736 = vld [vmem:[%s13 + $0x50] sm:$0xff]
        %v1737 = vld [vmem:[%s13 + $0x58] sm:$0xff]
        %v1738 = vld [vmem:[%s13 + $0x60] sm:$0xff]
        %v1739 = vld [vmem:[%s13 + $0x68] sm:$0xff]
        %v1740 = vld [vmem:[%s13 + $0x70] sm:$0xff]
        %v1741 = vld [vmem:[%s13 + $0x78] sm:$0xff]
        %v1742 = vld [vmem:[%s13 + $0x80] sm:$0xff]
        %v1743 = vld [vmem:[%s13 + $0x88] sm:$0xff]
        %v1744 = vld [vmem:[%s13 + $0x90] sm:$0xff]
        %v1745 = vld [vmem:[%s13 + $0x98] sm:$0xff]
        %v1746 = vld [vmem:[%s13 + $0xa0] sm:$0xff]
        %v1747 = vld [vmem:[%s13 + $0xa8] sm:$0xff]
        %v1748 = vld [vmem:[%s13 + $0xb0] sm:$0xff]
        %v1749 = vld [vmem:[%s13 + $0xb8] sm:$0xff]
        %v1750 = vld [vmem:[%s13 + $0xc0] sm:$0xff]
        %v1751 = vld [vmem:[%s13 + $0xc8] sm:$0xff]
        %v1752 = vld [vmem:[%s13 + $0xd0] sm:$0xff]
        %v1753 = vld [vmem:[%s13 + $0xd8] sm:$0xff]
        %v1754 = vld [vmem:[%s13 + $0xe0] sm:$0xff]
        %v1755 = vld [vmem:[%s13 + $0xe8] sm:$0xff]
        %v1756 = vld [vmem:[%s13 + $0xf0] sm:$0xff]
        %v1757 = vld [vmem:[%s13 + $0xf8] sm:$0xff]
        %v1758 = vld [vmem:[%s15] sm:$0x3]
        %v1760 = vlaneseq
        %v1761 = vshrl.u32 %v1760, 7
        %v1762 = vsub.s32 0, %v1761
        %v1763 = vrot.slane %v1758, %v1762
        %v1764 = vlaneseq
        %v1765 = vshrl.u32 %v1764, 7
        %v1766 = vsub.s32 1, %v1765
        %v1767 = vrot.slane %v1758, %v1766
        %v1802 = vunpack.c.l.b16 %v1726
        %v1803 = vunpack.c.h.b16 %v1726
        %v1804 = vunpack.c.l.b16 %v1727
        %v1805 = vunpack.c.h.b16 %v1727
        %v1806 = vunpack.c.l.b16 %v1728
        %v1807 = vunpack.c.h.b16 %v1728
        %v1808 = vunpack.c.l.b16 %v1729
        %v1809 = vunpack.c.h.b16 %v1729
        %v1810 = vunpack.c.l.b16 %v1730
        %v1811 = vunpack.c.h.b16 %v1730
        %v1812 = vunpack.c.l.b16 %v1731
        %v1813 = vunpack.c.h.b16 %v1731
        %v1814 = vunpack.c.l.b16 %v1732
        %v1815 = vunpack.c.h.b16 %v1732
        %v1816 = vunpack.c.l.b16 %v1733
        %v1817 = vunpack.c.h.b16 %v1733
        %v1818 = vunpack.c.l.b16 %v1734
        %v1819 = vunpack.c.h.b16 %v1734
        %v1820 = vunpack.c.l.b16 %v1735
        %v1821 = vunpack.c.h.b16 %v1735
        %v1822 = vunpack.c.l.b16 %v1736
        %v1823 = vunpack.c.h.b16 %v1736
        %v1824 = vunpack.c.l.b16 %v1737
        %v1825 = vunpack.c.h.b16 %v1737
        %v1826 = vunpack.c.l.b16 %v1738
        %v1827 = vunpack.c.h.b16 %v1738
        %v1828 = vunpack.c.l.b16 %v1739
        %v1829 = vunpack.c.h.b16 %v1739
        %v1830 = vunpack.c.l.b16 %v1740
        %v1831 = vunpack.c.h.b16 %v1740
        %v1832 = vunpack.c.l.b16 %v1741
        %v1833 = vunpack.c.h.b16 %v1741
        %v1834 = vunpack.c.l.b16 %v1742
        %v1835 = vunpack.c.h.b16 %v1742
        %v1836 = vunpack.c.l.b16 %v1743
        %v1837 = vunpack.c.h.b16 %v1743
        %v1838 = vunpack.c.l.b16 %v1744
        %v1839 = vunpack.c.h.b16 %v1744
        %v1840 = vunpack.c.l.b16 %v1745
        %v1841 = vunpack.c.h.b16 %v1745
        %v1842 = vunpack.c.l.b16 %v1746
        %v1843 = vunpack.c.h.b16 %v1746
        %v1844 = vunpack.c.l.b16 %v1747
        %v1845 = vunpack.c.h.b16 %v1747
        %v1846 = vunpack.c.l.b16 %v1748
        %v1847 = vunpack.c.h.b16 %v1748
        %v1848 = vunpack.c.l.b16 %v1749
        %v1849 = vunpack.c.h.b16 %v1749
        %v1850 = vunpack.c.l.b16 %v1750
        %v1851 = vunpack.c.h.b16 %v1750
        %v1852 = vunpack.c.l.b16 %v1751
        %v1853 = vunpack.c.h.b16 %v1751
        %v1854 = vunpack.c.l.b16 %v1752
        %v1855 = vunpack.c.h.b16 %v1752
        %v1856 = vunpack.c.l.b16 %v1753
        %v1857 = vunpack.c.h.b16 %v1753
        %v1858 = vunpack.c.l.b16 %v1754
        %v1859 = vunpack.c.h.b16 %v1754
        %v1860 = vunpack.c.l.b16 %v1755
        %v1861 = vunpack.c.h.b16 %v1755
        %v1862 = vunpack.c.l.b16 %v1756
        %v1863 = vunpack.c.h.b16 %v1756
        %v1864 = vunpack.c.l.b16 %v1757
        %v1865 = vunpack.c.h.b16 %v1757
        %v1866 = vpack.c.b16 %v1804, %v1802
        %v1867 = vpack.c.b16 %v1805, %v1803
        %v1868 = vpack.c.b16 %v1808, %v1806
        %v1869 = vpack.c.b16 %v1809, %v1807
        %v1870 = vpack.c.b16 %v1812, %v1810
        %v1871 = vpack.c.b16 %v1813, %v1811
        %v1872 = vpack.c.b16 %v1816, %v1814
        %v1873 = vpack.c.b16 %v1817, %v1815
        %v1874 = vpack.c.b16 %v1820, %v1818
        %v1875 = vpack.c.b16 %v1821, %v1819
        %v1876 = vpack.c.b16 %v1824, %v1822
        %v1877 = vpack.c.b16 %v1825, %v1823
        %v1878 = vpack.c.b16 %v1828, %v1826
        %v1879 = vpack.c.b16 %v1829, %v1827
        %v1880 = vpack.c.b16 %v1832, %v1830
        %v1881 = vpack.c.b16 %v1833, %v1831
        %v1882 = vpack.c.b16 %v1836, %v1834
        %v1883 = vpack.c.b16 %v1837, %v1835
        %v1884 = vpack.c.b16 %v1840, %v1838
        %v1885 = vpack.c.b16 %v1841, %v1839
        %v1886 = vpack.c.b16 %v1844, %v1842
        %v1887 = vpack.c.b16 %v1845, %v1843
        %v1888 = vpack.c.b16 %v1848, %v1846
        %v1889 = vpack.c.b16 %v1849, %v1847
        %v1890 = vpack.c.b16 %v1852, %v1850
        %v1891 = vpack.c.b16 %v1853, %v1851
        %v1892 = vpack.c.b16 %v1856, %v1854
        %v1893 = vpack.c.b16 %v1857, %v1855
        %v1894 = vpack.c.b16 %v1860, %v1858
        %v1895 = vpack.c.b16 %v1861, %v1859
        %v1896 = vpack.c.b16 %v1864, %v1862
        %v1897 = vpack.c.b16 %v1865, %v1863
        %1930 = vmatprep.subr.bf16.mxu0 %v1881
        %1931 = vmatpush1.bf16.msra.mxu0 %v1880
        %1932 = vmatprep.subr.bf16.mxu0 %v1879
        %1933 = vmatpush1.bf16.msra.mxu0 %v1878
        %1934 = vmatprep.subr.bf16.mxu0 %v1877
        %1935 = vmatpush1.bf16.msra.mxu0 %v1876
        %1936 = vmatprep.subr.bf16.mxu0 %v1875
        %1937 = vmatpush1.bf16.msra.mxu0 %v1874
        %1938 = vmatprep.subr.bf16.mxu0 %v1873
        %1939 = vmatpush1.bf16.msra.mxu0 %v1872
        %1940 = vmatprep.subr.bf16.mxu0 %v1871
        %1941 = vmatpush1.bf16.msra.mxu0 %v1870
        %1942 = vmatprep.subr.bf16.mxu0 %v1869
        %1943 = vmatpush1.bf16.msra.mxu0 %v1868
        %1944 = vmatprep.subr.bf16.mxu0 %v1867
        %1945 = vmatpush1.bf16.msra.mxu0 %v1866
        %1946 = vmatprep.subr.bf16.mxu0 %v1897
        %1947 = vmatpush2.bf16.msra.mxu0 %v1896
        %1948 = vmatprep.subr.bf16.mxu0 %v1895
        %1949 = vmatpush2.bf16.msra.mxu0 %v1894
        %1950 = vmatprep.subr.bf16.mxu0 %v1893
        %1951 = vmatpush2.bf16.msra.mxu0 %v1892
        %1952 = vmatprep.subr.bf16.mxu0 %v1891
        %1953 = vmatpush2.bf16.msra.mxu0 %v1890
        %1954 = vmatprep.subr.bf16.mxu0 %v1889
        %1955 = vmatpush2.bf16.msra.mxu0 %v1888
        %1956 = vmatprep.subr.bf16.mxu0 %v1887
        %1957 = vmatpush2.bf16.msra.mxu0 %v1886
        %1958 = vmatprep.subr.bf16.mxu0 %v1885
        %1959 = vmatpush2.bf16.msra.mxu0 %v1884
        %1960 = vmatprep.subr.bf16.mxu0 %v1883
        %1961 = vmatpush2.bf16.msra.mxu0 %v1882
        %1962 = vmatprep.mubr.bf16.mxu0 %v1701
        %1963 = vmatmul.mubr.bf16.gmra.mxu0 %v1700
        %v1964 = vpop.f32.mrf.mxu0
        %v1965 = vadd.f32 %v1763, %v1964
        %v1966 = vpop.f32.mrf.mxu0
        %v1967 = vadd.f32 %v1767, %v1966
        %v1968 = vpop.f32.mrf.mxu0
        %v1969 = vadd.f32 %v1763, %v1968
        %v1970 = vpop.f32.mrf.mxu0
        %v1971 = vadd.f32 %v1767, %v1970
        %1972 = vmatprep.mubr.bf16.mxu0 %v1703
        %1973 = vmatmul.mubr.bf16.gmra.mxu0 %v1702
        %v1974 = vpop.f32.mrf.mxu0
        %v1975 = vadd.f32 %v1763, %v1974
        %v1976 = vpop.f32.mrf.mxu0
        %v1977 = vadd.f32 %v1767, %v1976
        %v1978 = vpop.f32.mrf.mxu0
        %v1979 = vadd.f32 %v1763, %v1978
        %v1980 = vpop.f32.mrf.mxu0
        %v1981 = vadd.f32 %v1767, %v1980
        %1982 = vmatprep.mubr.bf16.mxu0 %v1705
        %1983 = vmatmul.mubr.bf16.gmra.mxu0 %v1704
        %v1984 = vpop.f32.mrf.mxu0
        %v1985 = vadd.f32 %v1763, %v1984
        %v1986 = vpop.f32.mrf.mxu0
        %v1987 = vadd.f32 %v1767, %v1986
        %v1988 = vpop.f32.mrf.mxu0
        %v1989 = vadd.f32 %v1763, %v1988
        %v1990 = vpop.f32.mrf.mxu0
        %v1991 = vadd.f32 %v1767, %v1990
        %1992 = vmatprep.mubr.bf16.mxu0 %v1707
        %1993 = vmatmul.mubr.bf16.gmra.mxu0 %v1706
        %v1994 = vpop.f32.mrf.mxu0
        %v1995 = vadd.f32 %v1763, %v1994
        %v1996 = vpop.f32.mrf.mxu0
        %v1997 = vadd.f32 %v1767, %v1996
        %v1998 = vpop.f32.mrf.mxu0
        %v1999 = vadd.f32 %v1763, %v1998
        %v2000 = vpop.f32.mrf.mxu0
        %v2001 = vadd.f32 %v1767, %v2000
        %2002 = vmatprep.mubr.bf16.mxu0 %v1709
        %2003 = vmatmul.mubr.bf16.gmra.mxu0 %v1708
        %v2004 = vpop.f32.mrf.mxu0
        %v2005 = vadd.f32 %v1763, %v2004
        %v2006 = vpop.f32.mrf.mxu0
        %v2007 = vadd.f32 %v1767, %v2006
        %v2008 = vpop.f32.mrf.mxu0
        %v2009 = vadd.f32 %v1763, %v2008
        %v2010 = vpop.f32.mrf.mxu0
        %v2011 = vadd.f32 %v1767, %v2010
        %2012 = vmatprep.mubr.bf16.mxu0 %v1711
        %2013 = vmatmul.mubr.bf16.gmra.mxu0 %v1710
        %v2014 = vpop.f32.mrf.mxu0
        %v2015 = vadd.f32 %v1763, %v2014
        %v2016 = vpop.f32.mrf.mxu0
        %v2017 = vadd.f32 %v1767, %v2016
        %v2018 = vpop.f32.mrf.mxu0
        %v2019 = vadd.f32 %v1763, %v2018
        %v2020 = vpop.f32.mrf.mxu0
        %v2021 = vadd.f32 %v1767, %v2020
        %2022 = vmatprep.mubr.bf16.mxu0 %v1713
        %2023 = vmatmul.mubr.bf16.gmra.mxu0 %v1712
        %v2024 = vpop.f32.mrf.mxu0
        %v2025 = vadd.f32 %v1763, %v2024
        %v2026 = vpop.f32.mrf.mxu0
        %v2027 = vadd.f32 %v1767, %v2026
        %v2028 = vpop.f32.mrf.mxu0
        %v2029 = vadd.f32 %v1763, %v2028
        %v2030 = vpop.f32.mrf.mxu0
        %v2031 = vadd.f32 %v1767, %v2030
        %2032 = vmatprep.mubr.bf16.mxu0 %v1715
        %2033 = vmatmul.mubr.bf16.gmra.mxu0 %v1714
        %v2034 = vpop.f32.mrf.mxu0
        %v2035 = vadd.f32 %v1763, %v2034
        %v2036 = vpop.f32.mrf.mxu0
        %v2037 = vadd.f32 %v1767, %v2036
        %v2038 = vpop.f32.mrf.mxu0
        %v2039 = vadd.f32 %v1763, %v2038
        %v2040 = vpop.f32.mrf.mxu0
        %v2041 = vadd.f32 %v1767, %v2040
        %2042 = vmatprep.mubr.bf16.mxu0 %v1717
        %2043 = vmatmul.mubr.bf16.gmra.mxu0 %v1716
        %v2044 = vpop.f32.mrf.mxu0
        %v2045 = vadd.f32 %v1763, %v2044
        %v2046 = vpop.f32.mrf.mxu0
        %v2047 = vadd.f32 %v1767, %v2046
        %v2048 = vpop.f32.mrf.mxu0
        %v2049 = vadd.f32 %v1763, %v2048
        %v2050 = vpop.f32.mrf.mxu0
        %v2051 = vadd.f32 %v1767, %v2050
        %2052 = vmatprep.mubr.bf16.mxu0 %v1719
        %2053 = vmatmul.mubr.bf16.gmra.mxu0 %v1718
        %v2054 = vpop.f32.mrf.mxu0
        %v2055 = vadd.f32 %v1763, %v2054
        %v2056 = vpop.f32.mrf.mxu0
        %v2057 = vadd.f32 %v1767, %v2056
        %v2058 = vpop.f32.mrf.mxu0
        %v2059 = vadd.f32 %v1763, %v2058
        %v2060 = vpop.f32.mrf.mxu0
        %v2061 = vadd.f32 %v1767, %v2060
        %2062 = vmatprep.mubr.bf16.mxu0 %v1721
        %2063 = vmatmul.mubr.bf16.gmra.mxu0 %v1720
        %v2064 = vpop.f32.mrf.mxu0
        %v2065 = vadd.f32 %v1763, %v2064
        %v2066 = vpop.f32.mrf.mxu0
        %v2067 = vadd.f32 %v1767, %v2066
        %v2068 = vpop.f32.mrf.mxu0
        %v2069 = vadd.f32 %v1763, %v2068
        %v2070 = vpop.f32.mrf.mxu0
        %v2071 = vadd.f32 %v1767, %v2070
        %2072 = vmatprep.mubr.bf16.mxu0 %v1723
        %2073 = vmatmul.mubr.bf16.gmra.mxu0 %v1722
        %v2074 = vpop.f32.mrf.mxu0
        %v2075 = vadd.f32 %v1763, %v2074
        %v2076 = vpop.f32.mrf.mxu0
        %v2077 = vadd.f32 %v1767, %v2076
        %v2078 = vpop.f32.mrf.mxu0
        %v2079 = vadd.f32 %v1763, %v2078
        %v2080 = vpop.f32.mrf.mxu0
        %v2081 = vadd.f32 %v1767, %v2080
        %2082 = vmatprep.mubr.bf16.mxu0 %v1725
        %2083 = vmatmul.mubr.bf16.gmra.mxu0 %v1724
        %v2084 = vpop.f32.mrf.mxu0
        %v2085 = vadd.f32 %v1763, %v2084
        %v2086 = vpop.f32.mrf.mxu0
        %v2087 = vadd.f32 %v1767, %v2086
        %v2088 = vpop.f32.mrf.mxu0
        %v2089 = vadd.f32 %v1763, %v2088
        %v2090 = vpop.f32.mrf.mxu0
        %v2091 = vadd.f32 %v1767, %v2090
        %2092 = vdwg.mxu0
        %v2093 = vmax.f32 %v1965, 0.0
        %v2094 = vmax.f32 %v1967, 0.0
        %v2095 = vmax.f32 %v1969, 0.0
        %v2096 = vmax.f32 %v1971, 0.0
        %v2097 = vmax.f32 %v1975, 0.0
        %v2098 = vmax.f32 %v1977, 0.0
        %v2099 = vmax.f32 %v1979, 0.0
        %v2100 = vmax.f32 %v1981, 0.0
        %v2101 = vmax.f32 %v1985, 0.0
        %v2102 = vmax.f32 %v1987, 0.0
        %v2103 = vmax.f32 %v1989, 0.0
        %v2104 = vmax.f32 %v1991, 0.0
        %v2105 = vmax.f32 %v1995, 0.0
        %v2106 = vmax.f32 %v1997, 0.0
        %v2107 = vmax.f32 %v1999, 0.0
        %v2108 = vmax.f32 %v2001, 0.0
        %v2109 = vmax.f32 %v2005, 0.0
        %v2110 = vmax.f32 %v2007, 0.0
        %v2111 = vmax.f32 %v2009, 0.0
        %v2112 = vmax.f32 %v2011, 0.0
        %v2113 = vmax.f32 %v2015, 0.0
        %v2114 = vmax.f32 %v2017, 0.0
        %v2115 = vmax.f32 %v2019, 0.0
        %v2116 = vmax.f32 %v2021, 0.0
        %v2117 = vmax.f32 %v2025, 0.0
        %v2118 = vmax.f32 %v2027, 0.0
        %v2119 = vmax.f32 %v2029, 0.0
        %v2120 = vmax.f32 %v2031, 0.0
        %v2121 = vmax.f32 %v2035, 0.0
        %v2122 = vmax.f32 %v2037, 0.0
        %v2123 = vmax.f32 %v2039, 0.0
        %v2124 = vmax.f32 %v2041, 0.0
        %v2125 = vmax.f32 %v2045, 0.0
        %v2126 = vmax.f32 %v2047, 0.0
        %v2127 = vmax.f32 %v2049, 0.0
        %v2128 = vmax.f32 %v2051, 0.0
        %v2129 = vmax.f32 %v2055, 0.0
        %v2130 = vmax.f32 %v2057, 0.0
        %v2131 = vmax.f32 %v2059, 0.0
        %v2132 = vmax.f32 %v2061, 0.0
        %v2133 = vmax.f32 %v2065, 0.0
        %v2134 = vmax.f32 %v2067, 0.0
        %v2135 = vmax.f32 %v2069, 0.0
        %v2136 = vmax.f32 %v2071, 0.0
        %v2137 = vmax.f32 %v2075, 0.0
        %v2138 = vmax.f32 %v2077, 0.0
        %v2139 = vmax.f32 %v2079, 0.0
        %v2140 = vmax.f32 %v2081, 0.0
        %v2141 = vmax.f32 %v2085, 0.0
        %v2142 = vmax.f32 %v2087, 0.0
        %v2143 = vmax.f32 %v2089, 0.0
        %v2144 = vmax.f32 %v2091, 0.0
        %v2145 = vpack.c.bf16 %v2095, %v2093
        %v2146 = vpack.c.bf16 %v2096, %v2094
        %v2147 = vpack.c.bf16 %v2099, %v2097
        %v2148 = vpack.c.bf16 %v2100, %v2098
        %v2149 = vpack.c.bf16 %v2103, %v2101
        %v2150 = vpack.c.bf16 %v2104, %v2102
        %v2151 = vpack.c.bf16 %v2107, %v2105
        %v2152 = vpack.c.bf16 %v2108, %v2106
        %v2153 = vpack.c.bf16 %v2111, %v2109
        %v2154 = vpack.c.bf16 %v2112, %v2110
        %v2155 = vpack.c.bf16 %v2115, %v2113
        %v2156 = vpack.c.bf16 %v2116, %v2114
        %v2157 = vpack.c.bf16 %v2119, %v2117
        %v2158 = vpack.c.bf16 %v2120, %v2118
        %v2159 = vpack.c.bf16 %v2123, %v2121
        %v2160 = vpack.c.bf16 %v2124, %v2122
        %v2161 = vpack.c.bf16 %v2127, %v2125
        %v2162 = vpack.c.bf16 %v2128, %v2126
        %v2163 = vpack.c.bf16 %v2131, %v2129
        %v2164 = vpack.c.bf16 %v2132, %v2130
        %v2165 = vpack.c.bf16 %v2135, %v2133
        %v2166 = vpack.c.bf16 %v2136, %v2134
        %v2167 = vpack.c.bf16 %v2139, %v2137
        %v2168 = vpack.c.bf16 %v2140, %v2138
        %v2169 = vpack.c.bf16 %v2143, %v2141
        %v2170 = vpack.c.bf16 %v2144, %v2142
        %v2171 = vld [vmem:[%s17] sm:$0xff]
        %v2172 = vld [vmem:[%s17 + $0x8] sm:$0xff]
        %v2173 = vld [vmem:[%s17 + $0x10] sm:$0xff]
        %v2174 = vld [vmem:[%s17 + $0x18] sm:$0xff]
        %v2175 = vld [vmem:[%s17 + $0x20] sm:$0xff]
        %v2176 = vld [vmem:[%s17 + $0x28] sm:$0xff]
        %v2177 = vld [vmem:[%s17 + $0x30] sm:$0xff]
        %v2178 = vld [vmem:[%s17 + $0x38] sm:$0xff]
        %v2179 = vld [vmem:[%s17 + $0x40] sm:$0xff]
        %v2180 = vld [vmem:[%s17 + $0x48] sm:$0xff]
        %v2181 = vld [vmem:[%s17 + $0x50] sm:$0xff]
        %v2182 = vld [vmem:[%s17 + $0x58] sm:$0xff]
        %v2183 = vld [vmem:[%s17 + $0x60] sm:$0xff]
        %v2184 = vld [vmem:[%s17 + $0x68] sm:$0xff]
        %v2185 = vld [vmem:[%s17 + $0x70] sm:$0xff]
        %v2186 = vld [vmem:[%s17 + $0x78] sm:$0xff]
        %v2187 = vld [vmem:[%s17 + $0x80] sm:$0xff]
        %v2188 = vld [vmem:[%s17 + $0x88] sm:$0xff]
        %v2189 = vld [vmem:[%s17 + $0x90] sm:$0xff]
        %v2190 = vld [vmem:[%s17 + $0x98] sm:$0xff]
        %v2191 = vld [vmem:[%s17 + $0xa0] sm:$0xff]
        %v2192 = vld [vmem:[%s17 + $0xa8] sm:$0xff]
        %v2193 = vld [vmem:[%s17 + $0xb0] sm:$0xff]
        %v2194 = vld [vmem:[%s17 + $0xb8] sm:$0xff]
        %v2195 = vld [vmem:[%s17 + $0xc0] sm:$0xff]
        %v2196 = vld [vmem:[%s17 + $0xc8] sm:$0xff]
        %v2197 = vld [vmem:[%s17 + $0xd0] sm:$0xff]
        %v2198 = vld [vmem:[%s17 + $0xd8] sm:$0xff]
        %v2199 = vld [vmem:[%s17 + $0xe0] sm:$0xff]
        %v2200 = vld [vmem:[%s17 + $0xe8] sm:$0xff]
        %v2201 = vld [vmem:[%s17 + $0xf0] sm:$0xff]
        %v2202 = vld [vmem:[%s17 + $0xf8] sm:$0xff]
        %v2203 = vld [vmem:[%s19] sm:$0x3]
        %v2205 = vlaneseq
        %v2206 = vshrl.u32 %v2205, 7
        %v2207 = vsub.s32 0, %v2206
        %v2208 = vrot.slane %v2203, %v2207
        %v2209 = vlaneseq
        %v2210 = vshrl.u32 %v2209, 7
        %v2211 = vsub.s32 1, %v2210
        %v2212 = vrot.slane %v2203, %v2211
        %v2247 = vunpack.c.l.b16 %v2171
        %v2248 = vunpack.c.h.b16 %v2171
        %v2249 = vunpack.c.l.b16 %v2172
        %v2250 = vunpack.c.h.b16 %v2172
        %v2251 = vunpack.c.l.b16 %v2173
        %v2252 = vunpack.c.h.b16 %v2173
        %v2253 = vunpack.c.l.b16 %v2174
        %v2254 = vunpack.c.h.b16 %v2174
        %v2255 = vunpack.c.l.b16 %v2175
        %v2256 = vunpack.c.h.b16 %v2175
        %v2257 = vunpack.c.l.b16 %v2176
        %v2258 = vunpack.c.h.b16 %v2176
        %v2259 = vunpack.c.l.b16 %v2177
        %v2260 = vunpack.c.h.b16 %v2177
        %v2261 = vunpack.c.l.b16 %v2178
        %v2262 = vunpack.c.h.b16 %v2178
        %v2263 = vunpack.c.l.b16 %v2179
        %v2264 = vunpack.c.h.b16 %v2179
        %v2265 = vunpack.c.l.b16 %v2180
        %v2266 = vunpack.c.h.b16 %v2180
        %v2267 = vunpack.c.l.b16 %v2181
        %v2268 = vunpack.c.h.b16 %v2181
        %v2269 = vunpack.c.l.b16 %v2182
        %v2270 = vunpack.c.h.b16 %v2182
        %v2271 = vunpack.c.l.b16 %v2183
        %v2272 = vunpack.c.h.b16 %v2183
        %v2273 = vunpack.c.l.b16 %v2184
        %v2274 = vunpack.c.h.b16 %v2184
        %v2275 = vunpack.c.l.b16 %v2185
        %v2276 = vunpack.c.h.b16 %v2185
        %v2277 = vunpack.c.l.b16 %v2186
        %v2278 = vunpack.c.h.b16 %v2186
        %v2279 = vunpack.c.l.b16 %v2187
        %v2280 = vunpack.c.h.b16 %v2187
        %v2281 = vunpack.c.l.b16 %v2188
        %v2282 = vunpack.c.h.b16 %v2188
        %v2283 = vunpack.c.l.b16 %v2189
        %v2284 = vunpack.c.h.b16 %v2189
        %v2285 = vunpack.c.l.b16 %v2190
        %v2286 = vunpack.c.h.b16 %v2190
        %v2287 = vunpack.c.l.b16 %v2191
        %v2288 = vunpack.c.h.b16 %v2191
        %v2289 = vunpack.c.l.b16 %v2192
        %v2290 = vunpack.c.h.b16 %v2192
        %v2291 = vunpack.c.l.b16 %v2193
        %v2292 = vunpack.c.h.b16 %v2193
        %v2293 = vunpack.c.l.b16 %v2194
        %v2294 = vunpack.c.h.b16 %v2194
        %v2295 = vunpack.c.l.b16 %v2195
        %v2296 = vunpack.c.h.b16 %v2195
        %v2297 = vunpack.c.l.b16 %v2196
        %v2298 = vunpack.c.h.b16 %v2196
        %v2299 = vunpack.c.l.b16 %v2197
        %v2300 = vunpack.c.h.b16 %v2197
        %v2301 = vunpack.c.l.b16 %v2198
        %v2302 = vunpack.c.h.b16 %v2198
        %v2303 = vunpack.c.l.b16 %v2199
        %v2304 = vunpack.c.h.b16 %v2199
        %v2305 = vunpack.c.l.b16 %v2200
        %v2306 = vunpack.c.h.b16 %v2200
        %v2307 = vunpack.c.l.b16 %v2201
        %v2308 = vunpack.c.h.b16 %v2201
        %v2309 = vunpack.c.l.b16 %v2202
        %v2310 = vunpack.c.h.b16 %v2202
        %v2311 = vpack.c.b16 %v2249, %v2247
        %v2312 = vpack.c.b16 %v2250, %v2248
        %v2313 = vpack.c.b16 %v2253, %v2251
        %v2314 = vpack.c.b16 %v2254, %v2252
        %v2315 = vpack.c.b16 %v2257, %v2255
        %v2316 = vpack.c.b16 %v2258, %v2256
        %v2317 = vpack.c.b16 %v2261, %v2259
        %v2318 = vpack.c.b16 %v2262, %v2260
        %v2319 = vpack.c.b16 %v2265, %v2263
        %v2320 = vpack.c.b16 %v2266, %v2264
        %v2321 = vpack.c.b16 %v2269, %v2267
        %v2322 = vpack.c.b16 %v2270, %v2268
        %v2323 = vpack.c.b16 %v2273, %v2271
        %v2324 = vpack.c.b16 %v2274, %v2272
        %v2325 = vpack.c.b16 %v2277, %v2275
        %v2326 = vpack.c.b16 %v2278, %v2276
        %v2327 = vpack.c.b16 %v2281, %v2279
        %v2328 = vpack.c.b16 %v2282, %v2280
        %v2329 = vpack.c.b16 %v2285, %v2283
        %v2330 = vpack.c.b16 %v2286, %v2284
        %v2331 = vpack.c.b16 %v2289, %v2287
        %v2332 = vpack.c.b16 %v2290, %v2288
        %v2333 = vpack.c.b16 %v2293, %v2291
        %v2334 = vpack.c.b16 %v2294, %v2292
        %v2335 = vpack.c.b16 %v2297, %v2295
        %v2336 = vpack.c.b16 %v2298, %v2296
        %v2337 = vpack.c.b16 %v2301, %v2299
        %v2338 = vpack.c.b16 %v2302, %v2300
        %v2339 = vpack.c.b16 %v2305, %v2303
        %v2340 = vpack.c.b16 %v2306, %v2304
        %v2341 = vpack.c.b16 %v2309, %v2307
        %v2342 = vpack.c.b16 %v2310, %v2308
        %2375 = vmatprep.subr.bf16.mxu0 %v2326
        %2376 = vmatpush1.bf16.msra.mxu0 %v2325
        %2377 = vmatprep.subr.bf16.mxu0 %v2324
        %2378 = vmatpush1.bf16.msra.mxu0 %v2323
        %2379 = vmatprep.subr.bf16.mxu0 %v2322
        %2380 = vmatpush1.bf16.msra.mxu0 %v2321
        %2381 = vmatprep.subr.bf16.mxu0 %v2320
        %2382 = vmatpush1.bf16.msra.mxu0 %v2319
        %2383 = vmatprep.subr.bf16.mxu0 %v2318
        %2384 = vmatpush1.bf16.msra.mxu0 %v2317
        %2385 = vmatprep.subr.bf16.mxu0 %v2316
        %2386 = vmatpush1.bf16.msra.mxu0 %v2315
        %2387 = vmatprep.subr.bf16.mxu0 %v2314
        %2388 = vmatpush1.bf16.msra.mxu0 %v2313
        %2389 = vmatprep.subr.bf16.mxu0 %v2312
        %2390 = vmatpush1.bf16.msra.mxu0 %v2311
        %2391 = vmatprep.subr.bf16.mxu0 %v2342
        %2392 = vmatpush2.bf16.msra.mxu0 %v2341
        %2393 = vmatprep.subr.bf16.mxu0 %v2340
        %2394 = vmatpush2.bf16.msra.mxu0 %v2339
        %2395 = vmatprep.subr.bf16.mxu0 %v2338
        %2396 = vmatpush2.bf16.msra.mxu0 %v2337
        %2397 = vmatprep.subr.bf16.mxu0 %v2336
        %2398 = vmatpush2.bf16.msra.mxu0 %v2335
        %2399 = vmatprep.subr.bf16.mxu0 %v2334
        %2400 = vmatpush2.bf16.msra.mxu0 %v2333
        %2401 = vmatprep.subr.bf16.mxu0 %v2332
        %2402 = vmatpush2.bf16.msra.mxu0 %v2331
        %2403 = vmatprep.subr.bf16.mxu0 %v2330
        %2404 = vmatpush2.bf16.msra.mxu0 %v2329
        %2405 = vmatprep.subr.bf16.mxu0 %v2328
        %2406 = vmatpush2.bf16.msra.mxu0 %v2327
        %2407 = vmatprep.mubr.bf16.mxu0 %v2146
        %2408 = vmatmul.mubr.bf16.gmra.mxu0 %v2145
        %v2409 = vpop.f32.mrf.mxu0
        %v2410 = vadd.f32 %v2208, %v2409
        %v2411 = vpop.f32.mrf.mxu0
        %v2412 = vadd.f32 %v2212, %v2411
        %v2413 = vpop.f32.mrf.mxu0
        %v2414 = vadd.f32 %v2208, %v2413
        %v2415 = vpop.f32.mrf.mxu0
        %v2416 = vadd.f32 %v2212, %v2415
        %2417 = vmatprep.mubr.bf16.mxu0 %v2148
        %2418 = vmatmul.mubr.bf16.gmra.mxu0 %v2147
        %v2419 = vpop.f32.mrf.mxu0
        %v2420 = vadd.f32 %v2208, %v2419
        %v2421 = vpop.f32.mrf.mxu0
        %v2422 = vadd.f32 %v2212, %v2421
        %v2423 = vpop.f32.mrf.mxu0
        %v2424 = vadd.f32 %v2208, %v2423
        %v2425 = vpop.f32.mrf.mxu0
        %v2426 = vadd.f32 %v2212, %v2425
        %2427 = vmatprep.mubr.bf16.mxu0 %v2150
        %2428 = vmatmul.mubr.bf16.gmra.mxu0 %v2149
        %v2429 = vpop.f32.mrf.mxu0
        %v2430 = vadd.f32 %v2208, %v2429
        %v2431 = vpop.f32.mrf.mxu0
        %v2432 = vadd.f32 %v2212, %v2431
        %v2433 = vpop.f32.mrf.mxu0
        %v2434 = vadd.f32 %v2208, %v2433
        %v2435 = vpop.f32.mrf.mxu0
        %v2436 = vadd.f32 %v2212, %v2435
        %2437 = vmatprep.mubr.bf16.mxu0 %v2152
        %2438 = vmatmul.mubr.bf16.gmra.mxu0 %v2151
        %v2439 = vpop.f32.mrf.mxu0
        %v2440 = vadd.f32 %v2208, %v2439
        %v2441 = vpop.f32.mrf.mxu0
        %v2442 = vadd.f32 %v2212, %v2441
        %v2443 = vpop.f32.mrf.mxu0
        %v2444 = vadd.f32 %v2208, %v2443
        %v2445 = vpop.f32.mrf.mxu0
        %v2446 = vadd.f32 %v2212, %v2445
        %2447 = vmatprep.mubr.bf16.mxu0 %v2154
        %2448 = vmatmul.mubr.bf16.gmra.mxu0 %v2153
        %v2449 = vpop.f32.mrf.mxu0
        %v2450 = vadd.f32 %v2208, %v2449
        %v2451 = vpop.f32.mrf.mxu0
        %v2452 = vadd.f32 %v2212, %v2451
        %v2453 = vpop.f32.mrf.mxu0
        %v2454 = vadd.f32 %v2208, %v2453
        %v2455 = vpop.f32.mrf.mxu0
        %v2456 = vadd.f32 %v2212, %v2455
        %2457 = vmatprep.mubr.bf16.mxu0 %v2156
        %2458 = vmatmul.mubr.bf16.gmra.mxu0 %v2155
        %v2459 = vpop.f32.mrf.mxu0
        %v2460 = vadd.f32 %v2208, %v2459
        %v2461 = vpop.f32.mrf.mxu0
        %v2462 = vadd.f32 %v2212, %v2461
        %v2463 = vpop.f32.mrf.mxu0
        %v2464 = vadd.f32 %v2208, %v2463
        %v2465 = vpop.f32.mrf.mxu0
        %v2466 = vadd.f32 %v2212, %v2465
        %2467 = vmatprep.mubr.bf16.mxu0 %v2158
        %2468 = vmatmul.mubr.bf16.gmra.mxu0 %v2157
        %v2469 = vpop.f32.mrf.mxu0
        %v2470 = vadd.f32 %v2208, %v2469
        %v2471 = vpop.f32.mrf.mxu0
        %v2472 = vadd.f32 %v2212, %v2471
        %v2473 = vpop.f32.mrf.mxu0
        %v2474 = vadd.f32 %v2208, %v2473
        %v2475 = vpop.f32.mrf.mxu0
        %v2476 = vadd.f32 %v2212, %v2475
        %2477 = vmatprep.mubr.bf16.mxu0 %v2160
        %2478 = vmatmul.mubr.bf16.gmra.mxu0 %v2159
        %v2479 = vpop.f32.mrf.mxu0
        %v2480 = vadd.f32 %v2208, %v2479
        %v2481 = vpop.f32.mrf.mxu0
        %v2482 = vadd.f32 %v2212, %v2481
        %v2483 = vpop.f32.mrf.mxu0
        %v2484 = vadd.f32 %v2208, %v2483
        %v2485 = vpop.f32.mrf.mxu0
        %v2486 = vadd.f32 %v2212, %v2485
        %2487 = vmatprep.mubr.bf16.mxu0 %v2162
        %2488 = vmatmul.mubr.bf16.gmra.mxu0 %v2161
        %v2489 = vpop.f32.mrf.mxu0
        %v2490 = vadd.f32 %v2208, %v2489
        %v2491 = vpop.f32.mrf.mxu0
        %v2492 = vadd.f32 %v2212, %v2491
        %v2493 = vpop.f32.mrf.mxu0
        %v2494 = vadd.f32 %v2208, %v2493
        %v2495 = vpop.f32.mrf.mxu0
        %v2496 = vadd.f32 %v2212, %v2495
        %2497 = vmatprep.mubr.bf16.mxu0 %v2164
        %2498 = vmatmul.mubr.bf16.gmra.mxu0 %v2163
        %v2499 = vpop.f32.mrf.mxu0
        %v2500 = vadd.f32 %v2208, %v2499
        %v2501 = vpop.f32.mrf.mxu0
        %v2502 = vadd.f32 %v2212, %v2501
        %v2503 = vpop.f32.mrf.mxu0
        %v2504 = vadd.f32 %v2208, %v2503
        %v2505 = vpop.f32.mrf.mxu0
        %v2506 = vadd.f32 %v2212, %v2505
        %2507 = vmatprep.mubr.bf16.mxu0 %v2166
        %2508 = vmatmul.mubr.bf16.gmra.mxu0 %v2165
        %v2509 = vpop.f32.mrf.mxu0
        %v2510 = vadd.f32 %v2208, %v2509
        %v2511 = vpop.f32.mrf.mxu0
        %v2512 = vadd.f32 %v2212, %v2511
        %v2513 = vpop.f32.mrf.mxu0
        %v2514 = vadd.f32 %v2208, %v2513
        %v2515 = vpop.f32.mrf.mxu0
        %v2516 = vadd.f32 %v2212, %v2515
        %2517 = vmatprep.mubr.bf16.mxu0 %v2168
        %2518 = vmatmul.mubr.bf16.gmra.mxu0 %v2167
        %v2519 = vpop.f32.mrf.mxu0
        %v2520 = vadd.f32 %v2208, %v2519
        %v2521 = vpop.f32.mrf.mxu0
        %v2522 = vadd.f32 %v2212, %v2521
        %v2523 = vpop.f32.mrf.mxu0
        %v2524 = vadd.f32 %v2208, %v2523
        %v2525 = vpop.f32.mrf.mxu0
        %v2526 = vadd.f32 %v2212, %v2525
        %2527 = vmatprep.mubr.bf16.mxu0 %v2170
        %2528 = vmatmul.mubr.bf16.gmra.mxu0 %v2169
        %v2529 = vpop.f32.mrf.mxu0
        %v2530 = vadd.f32 %v2208, %v2529
        %v2531 = vpop.f32.mrf.mxu0
        %v2532 = vadd.f32 %v2212, %v2531
        %v2533 = vpop.f32.mrf.mxu0
        %v2534 = vadd.f32 %v2208, %v2533
        %v2535 = vpop.f32.mrf.mxu0
        %v2536 = vadd.f32 %v2212, %v2535
        %2537 = vdwg.mxu0
        %2538 = vst [vmem:[%s1360] sm:$0xff] %v2474
        %2539 = vst [vmem:[%s1360 + $0x8] sm:$0xff] %v2476
        %2540 = vst [vmem:[%s1360 + $0x10] sm:$0xff] %v2480
        %2541 = vst [vmem:[%s1360 + $0x18] sm:$0xff] %v2482
        %2542 = vst [vmem:[%s1360 + $0x20] sm:$0xff] %v2484
        %2543 = vst [vmem:[%s1360 + $0x28] sm:$0xff] %v2486
        %2544 = vst [vmem:[%s1360 + $0x30] sm:$0xff] %v2490
        %2545 = vst [vmem:[%s1360 + $0x38] sm:$0xff] %v2492
        %2546 = vst [vmem:[%s1360 + $0x40] sm:$0xff] %v2494
        %2547 = vst [vmem:[%s1360 + $0x48] sm:$0xff] %v2496
        %2548 = vst [vmem:[%s1360 + $0x50] sm:$0xff] %v2500
        %2549 = vst [vmem:[%s1360 + $0x58] sm:$0xff] %v2502
        %2550 = vst [vmem:[%s1360 + $0x60] sm:$0xff] %v2504
        %2551 = vst [vmem:[%s1360 + $0x68] sm:$0xff] %v2506
        %2552 = vst [vmem:[%s1360 + $0x70] sm:$0xff] %v2510
        %2553 = vst [vmem:[%s1360 + $0x78] sm:$0xff] %v2512
        %2554 = vst [vmem:[%s1360 + $0x80] sm:$0xff] %v2514
        %2555 = vst [vmem:[%s1360 + $0x88] sm:$0xff] %v2516
        %2556 = vst [vmem:[%s1360 + $0x90] sm:$0xff] %v2520
        %2557 = vst [vmem:[%s1360 + $0x98] sm:$0xff] %v2522
        %2558 = vst [vmem:[%s1360 + $0xa0] sm:$0xff] %v2524
        %2559 = vst [vmem:[%s1360 + $0xa8] sm:$0xff] %v2526
        %2560 = vst [vmem:[%s1360 + $0xb0] sm:$0xff] %v2530
        %2561 = vst [vmem:[%s1360 + $0xb8] sm:$0xff] %v2532
        %2562 = vst [vmem:[%s1360 + $0xc0] sm:$0xff] %v2534
        %2563 = vst [vmem:[%s1360 + $0xc8] sm:$0xff] %v2536
        %v2564 = vpack.c.bf16 %v2414, %v2410
        %v2565 = vpack.c.bf16 %v2416, %v2412
        %v2566 = vpack.c.bf16 %v2424, %v2420
        %v2567 = vpack.c.bf16 %v2426, %v2422
        %v2568 = vpack.c.bf16 %v2434, %v2430
        %v2569 = vpack.c.bf16 %v2436, %v2432
        %v2570 = vpack.c.bf16 %v2444, %v2440
        %v2571 = vpack.c.bf16 %v2446, %v2442
        %v2572 = vpack.c.bf16 %v2454, %v2450
        %v2573 = vpack.c.bf16 %v2456, %v2452
        %v2574 = vpack.c.bf16 %v2464, %v2460
        %v2575 = vpack.c.bf16 %v2466, %v2462
        %v2576 = vpack.c.bf16 %v2470, %v2470
        %v2577 = vpack.c.bf16 %v2472, %v2472
        %v2578 = vld [vmem:[%s21] sm:$0xff]
        %v2579 = vld [vmem:[%s21 + $0x8] sm:$0xff]
        %v2580 = vld [vmem:[%s21 + $0x10] sm:$0xff]
        %v2581 = vld [vmem:[%s21 + $0x18] sm:$0xff]
        %v2582 = vld [vmem:[%s21 + $0x20] sm:$0xff]
        %v2583 = vld [vmem:[%s21 + $0x28] sm:$0xff]
        %v2584 = vld [vmem:[%s21 + $0x30] sm:$0xff]
        %v2585 = vld [vmem:[%s21 + $0x38] sm:$0xff]
        %v2586 = vld [vmem:[%s21 + $0x40] sm:$0xff]
        %v2587 = vld [vmem:[%s21 + $0x48] sm:$0xff]
        %v2588 = vld [vmem:[%s21 + $0x50] sm:$0xff]
        %v2589 = vld [vmem:[%s21 + $0x58] sm:$0xff]
        %v2590 = vld [vmem:[%s21 + $0x60] sm:$0xff]
        %v2591 = vld [vmem:[%s21 + $0x68] sm:$0xff]
        %v2592 = vld [vmem:[%s21 + $0x70] sm:$0xff]
        %v2593 = vld [vmem:[%s21 + $0x78] sm:$0xff]
        %v2594 = vld [vmem:[%s21 + $0x80] sm:$0xff]
        %v2595 = vld [vmem:[%s21 + $0x88] sm:$0xff]
        %v2596 = vld [vmem:[%s21 + $0x90] sm:$0xff]
        %v2597 = vld [vmem:[%s21 + $0x98] sm:$0xff]
        %v2598 = vld [vmem:[%s21 + $0xa0] sm:$0xff]
        %v2599 = vld [vmem:[%s21 + $0xa8] sm:$0xff]
        %v2600 = vld [vmem:[%s21 + $0xb0] sm:$0xff]
        %v2601 = vld [vmem:[%s21 + $0xb8] sm:$0xff]
        %v2602 = vld [vmem:[%s21 + $0xc0] sm:$0xff]
        %v2603 = vld [vmem:[%s21 + $0xc8] sm:$0xff]
        %v2604 = vld [vmem:[%s21 + $0xd0] sm:$0xff]
        %v2605 = vld [vmem:[%s21 + $0xd8] sm:$0xff]
        %v2606 = vld [vmem:[%s21 + $0xe0] sm:$0xff]
        %v2607 = vld [vmem:[%s21 + $0xe8] sm:$0xff]
        %v2608 = vld [vmem:[%s21 + $0xf0] sm:$0xff]
        %v2609 = vld [vmem:[%s21 + $0xf8] sm:$0xff]
        %v2610 = vpack.c.bf16 %v2480, %v2474
        %v2611 = vpack.c.bf16 %v2482, %v2476
        %v2612 = vpack.c.bf16 %v2490, %v2484
        %v2613 = vpack.c.bf16 %v2492, %v2486
        %v2614 = vpack.c.bf16 %v2500, %v2494
        %v2615 = vpack.c.bf16 %v2502, %v2496
        %v2616 = vpack.c.bf16 %v2510, %v2504
        %v2617 = vpack.c.bf16 %v2512, %v2506
        %v2618 = vpack.c.bf16 %v2520, %v2514
        %v2619 = vpack.c.bf16 %v2522, %v2516
        %v2620 = vpack.c.bf16 %v2530, %v2524
        %v2621 = vpack.c.bf16 %v2532, %v2526
        %v2622 = vpack.c.bf16 %v2534, %v2534
        %v2623 = vpack.c.bf16 %v2536, %v2536
        %v2624 = vld [vmem:[%s23] sm:$0xff]
        %v2625 = vld [vmem:[%s23 + $0x8] sm:$0xff]
        %v2626 = vld [vmem:[%s23 + $0x10] sm:$0xff]
        %v2627 = vld [vmem:[%s23 + $0x18] sm:$0xff]
        %v2628 = vld [vmem:[%s23 + $0x20] sm:$0xff]
        %v2629 = vld [vmem:[%s23 + $0x28] sm:$0xff]
        %v2630 = vld [vmem:[%s23 + $0x30] sm:$0xff]
        %v2631 = vld [vmem:[%s23 + $0x38] sm:$0xff]
        %v2632 = vld [vmem:[%s23 + $0x40] sm:$0xff]
        %v2633 = vld [vmem:[%s23 + $0x48] sm:$0xff]
        %v2634 = vld [vmem:[%s23 + $0x50] sm:$0xff]
        %v2635 = vld [vmem:[%s23 + $0x58] sm:$0xff]
        %v2636 = vld [vmem:[%s23 + $0x60] sm:$0xff]
        %v2637 = vld [vmem:[%s23 + $0x68] sm:$0xff]
        %v2638 = vld [vmem:[%s23 + $0x70] sm:$0xff]
        %v2639 = vld [vmem:[%s23 + $0x78] sm:$0xff]
        %v2640 = vld [vmem:[%s23 + $0x80] sm:$0xff]
        %v2641 = vld [vmem:[%s23 + $0x88] sm:$0xff]
        %v2642 = vld [vmem:[%s23 + $0x90] sm:$0xff]
        %v2643 = vld [vmem:[%s23 + $0x98] sm:$0xff]
        %v2644 = vld [vmem:[%s23 + $0xa0] sm:$0xff]
        %v2645 = vld [vmem:[%s23 + $0xa8] sm:$0xff]
        %v2646 = vld [vmem:[%s23 + $0xb0] sm:$0xff]
        %v2647 = vld [vmem:[%s23 + $0xb8] sm:$0xff]
        %v2648 = vld [vmem:[%s23 + $0xc0] sm:$0xff]
        %v2649 = vld [vmem:[%s23 + $0xc8] sm:$0xff]
        %v2650 = vld [vmem:[%s23 + $0xd0] sm:$0xff]
        %v2651 = vld [vmem:[%s23 + $0xd8] sm:$0xff]
        %v2652 = vld [vmem:[%s23 + $0xe0] sm:$0xff]
        %v2653 = vld [vmem:[%s23 + $0xe8] sm:$0xff]
        %v2654 = vld [vmem:[%s23 + $0xf0] sm:$0xff]
        %v2655 = vld [vmem:[%s23 + $0xf8] sm:$0xff]
        %v2688 = vunpack.c.l.b16 %v2624
        %v2689 = vunpack.c.h.b16 %v2624
        %v2690 = vunpack.c.l.b16 %v2625
        %v2691 = vunpack.c.h.b16 %v2625
        %v2692 = vunpack.c.l.b16 %v2626
        %v2693 = vunpack.c.h.b16 %v2626
        %v2694 = vunpack.c.l.b16 %v2627
        %v2695 = vunpack.c.h.b16 %v2627
        %v2696 = vunpack.c.l.b16 %v2628
        %v2697 = vunpack.c.h.b16 %v2628
        %v2698 = vunpack.c.l.b16 %v2629
        %v2699 = vunpack.c.h.b16 %v2629
        %v2700 = vunpack.c.l.b16 %v2630
        %v2701 = vunpack.c.h.b16 %v2630
        %v2702 = vunpack.c.l.b16 %v2631
        %v2703 = vunpack.c.h.b16 %v2631
        %v2704 = vunpack.c.l.b16 %v2632
        %v2705 = vunpack.c.h.b16 %v2632
        %v2706 = vunpack.c.l.b16 %v2633
        %v2707 = vunpack.c.h.b16 %v2633
        %v2708 = vunpack.c.l.b16 %v2634
        %v2709 = vunpack.c.h.b16 %v2634
        %v2710 = vunpack.c.l.b16 %v2635
        %v2711 = vunpack.c.h.b16 %v2635
        %v2712 = vunpack.c.l.b16 %v2636
        %v2713 = vunpack.c.h.b16 %v2636
        %v2714 = vunpack.c.l.b16 %v2637
        %v2715 = vunpack.c.h.b16 %v2637
        %v2716 = vunpack.c.l.b16 %v2638
        %v2717 = vunpack.c.h.b16 %v2638
        %v2718 = vunpack.c.l.b16 %v2639
        %v2719 = vunpack.c.h.b16 %v2639
        %v2720 = vunpack.c.l.b16 %v2640
        %v2721 = vunpack.c.h.b16 %v2640
        %v2722 = vunpack.c.l.b16 %v2641
        %v2723 = vunpack.c.h.b16 %v2641
        %v2724 = vunpack.c.l.b16 %v2642
        %v2725 = vunpack.c.h.b16 %v2642
        %v2726 = vunpack.c.l.b16 %v2643
        %v2727 = vunpack.c.h.b16 %v2643
        %v2728 = vunpack.c.l.b16 %v2644
        %v2729 = vunpack.c.h.b16 %v2644
        %v2730 = vunpack.c.l.b16 %v2645
        %v2731 = vunpack.c.h.b16 %v2645
        %v2732 = vunpack.c.l.b16 %v2646
        %v2733 = vunpack.c.h.b16 %v2646
        %v2734 = vunpack.c.l.b16 %v2647
        %v2735 = vunpack.c.h.b16 %v2647
        %v2736 = vunpack.c.l.b16 %v2648
        %v2737 = vunpack.c.h.b16 %v2648
        %v2738 = vunpack.c.l.b16 %v2649
        %v2739 = vunpack.c.h.b16 %v2649
        %v2740 = vunpack.c.l.b16 %v2650
        %v2741 = vunpack.c.h.b16 %v2650
        %v2742 = vunpack.c.l.b16 %v2651
        %v2743 = vunpack.c.h.b16 %v2651
        %v2744 = vunpack.c.l.b16 %v2652
        %v2745 = vunpack.c.h.b16 %v2652
        %v2746 = vunpack.c.l.b16 %v2653
        %v2747 = vunpack.c.h.b16 %v2653
        %v2748 = vunpack.c.l.b16 %v2654
        %v2749 = vunpack.c.h.b16 %v2654
        %v2750 = vunpack.c.l.b16 %v2655
        %v2751 = vunpack.c.h.b16 %v2655
        %v2752 = vpack.c.b16 %v2690, %v2688
        %v2753 = vpack.c.b16 %v2691, %v2689
        %v2754 = vpack.c.b16 %v2694, %v2692
        %v2755 = vpack.c.b16 %v2695, %v2693
        %v2756 = vpack.c.b16 %v2698, %v2696
        %v2757 = vpack.c.b16 %v2699, %v2697
        %v2758 = vpack.c.b16 %v2702, %v2700
        %v2759 = vpack.c.b16 %v2703, %v2701
        %v2760 = vpack.c.b16 %v2706, %v2704
        %v2761 = vpack.c.b16 %v2707, %v2705
        %v2762 = vpack.c.b16 %v2710, %v2708
        %v2763 = vpack.c.b16 %v2711, %v2709
        %v2764 = vpack.c.b16 %v2714, %v2712
        %v2765 = vpack.c.b16 %v2715, %v2713
        %v2766 = vpack.c.b16 %v2718, %v2716
        %v2767 = vpack.c.b16 %v2719, %v2717
        %v2768 = vpack.c.b16 %v2722, %v2720
        %v2769 = vpack.c.b16 %v2723, %v2721
        %v2770 = vpack.c.b16 %v2726, %v2724
        %v2771 = vpack.c.b16 %v2727, %v2725
        %v2772 = vpack.c.b16 %v2730, %v2728
        %v2773 = vpack.c.b16 %v2731, %v2729
        %v2774 = vpack.c.b16 %v2734, %v2732
        %v2775 = vpack.c.b16 %v2735, %v2733
        %v2776 = vpack.c.b16 %v2738, %v2736
        %v2777 = vpack.c.b16 %v2739, %v2737
        %v2778 = vpack.c.b16 %v2742, %v2740
        %v2779 = vpack.c.b16 %v2743, %v2741
        %v2780 = vpack.c.b16 %v2746, %v2744
        %v2781 = vpack.c.b16 %v2747, %v2745
        %v2782 = vpack.c.b16 %v2750, %v2748
        %v2783 = vpack.c.b16 %v2751, %v2749
        %2816 = vmatprep.subr.bf16.mxu0 %v2767
        %2817 = vmatpush1.bf16.msra.mxu0 %v2766
        %2818 = vmatprep.subr.bf16.mxu0 %v2765
        %2819 = vmatpush1.bf16.msra.mxu0 %v2764
        %2820 = vmatprep.subr.bf16.mxu0 %v2763
        %2821 = vmatpush1.bf16.msra.mxu0 %v2762
        %2822 = vmatprep.subr.bf16.mxu0 %v2761
        %2823 = vmatpush1.bf16.msra.mxu0 %v2760
        %2824 = vmatprep.subr.bf16.mxu0 %v2759
        %2825 = vmatpush1.bf16.msra.mxu0 %v2758
        %2826 = vmatprep.subr.bf16.mxu0 %v2757
        %2827 = vmatpush1.bf16.msra.mxu0 %v2756
        %2828 = vmatprep.subr.bf16.mxu0 %v2755
        %2829 = vmatpush1.bf16.msra.mxu0 %v2754
        %2830 = vmatprep.subr.bf16.mxu0 %v2753
        %2831 = vmatpush1.bf16.msra.mxu0 %v2752
        %2832 = vmatprep.subr.bf16.mxu0 %v2783
        %2833 = vmatpush2.bf16.msra.mxu0 %v2782
        %2834 = vmatprep.subr.bf16.mxu0 %v2781
        %2835 = vmatpush2.bf16.msra.mxu0 %v2780
        %2836 = vmatprep.subr.bf16.mxu0 %v2779
        %2837 = vmatpush2.bf16.msra.mxu0 %v2778
        %2838 = vmatprep.subr.bf16.mxu0 %v2777
        %2839 = vmatpush2.bf16.msra.mxu0 %v2776
        %2840 = vmatprep.subr.bf16.mxu0 %v2775
        %2841 = vmatpush2.bf16.msra.mxu0 %v2774
        %2842 = vmatprep.subr.bf16.mxu0 %v2773
        %2843 = vmatpush2.bf16.msra.mxu0 %v2772
        %2844 = vmatprep.subr.bf16.mxu0 %v2771
        %2845 = vmatpush2.bf16.msra.mxu0 %v2770
        %2846 = vmatprep.subr.bf16.mxu0 %v2769
        %2847 = vmatpush2.bf16.msra.mxu0 %v2768
        %2848 = vmatprep.mubr.bf16.mxu0 %v2611
        %2849 = vmatmul.mubr.bf16.gmra.mxu0 %v2610
        %v2850 = vpop.f32.mrf.mxu0
        %v2851 = vadd.f32 0.0, %v2850
        %v2852 = vpop.f32.mrf.mxu0
        %v2853 = vadd.f32 0.0, %v2852
        %v2854 = vpop.f32.mrf.mxu0
        %v2855 = vadd.f32 0.0, %v2854
        %v2856 = vpop.f32.mrf.mxu0
        %v2857 = vadd.f32 0.0, %v2856
        %2858 = vmatprep.mubr.bf16.mxu0 %v2613
        %2859 = vmatmul.mubr.bf16.gmra.mxu0 %v2612
        %v2860 = vpop.f32.mrf.mxu0
        %v2861 = vadd.f32 0.0, %v2860
        %v2862 = vpop.f32.mrf.mxu0
        %v2863 = vadd.f32 0.0, %v2862
        %v2864 = vpop.f32.mrf.mxu0
        %v2865 = vadd.f32 0.0, %v2864
        %v2866 = vpop.f32.mrf.mxu0
        %v2867 = vadd.f32 0.0, %v2866
        %2868 = vmatprep.mubr.bf16.mxu0 %v2615
        %2869 = vmatmul.mubr.bf16.gmra.mxu0 %v2614
        %v2870 = vpop.f32.mrf.mxu0
        %v2871 = vadd.f32 0.0, %v2870
        %v2872 = vpop.f32.mrf.mxu0
        %v2873 = vadd.f32 0.0, %v2872
        %v2874 = vpop.f32.mrf.mxu0
        %v2875 = vadd.f32 0.0, %v2874
        %v2876 = vpop.f32.mrf.mxu0
        %v2877 = vadd.f32 0.0, %v2876
        %2878 = vmatprep.mubr.bf16.mxu0 %v2617
        %2879 = vmatmul.mubr.bf16.gmra.mxu0 %v2616
        %v2880 = vpop.f32.mrf.mxu0
        %v2881 = vadd.f32 0.0, %v2880
        %v2882 = vpop.f32.mrf.mxu0
        %v2883 = vadd.f32 0.0, %v2882
        %v2884 = vpop.f32.mrf.mxu0
        %v2885 = vadd.f32 0.0, %v2884
        %v2886 = vpop.f32.mrf.mxu0
        %v2887 = vadd.f32 0.0, %v2886
        %2888 = vmatprep.mubr.bf16.mxu0 %v2619
        %2889 = vmatmul.mubr.bf16.gmra.mxu0 %v2618
        %v2890 = vpop.f32.mrf.mxu0
        %v2891 = vadd.f32 0.0, %v2890
        %v2892 = vpop.f32.mrf.mxu0
        %v2893 = vadd.f32 0.0, %v2892
        %v2894 = vpop.f32.mrf.mxu0
        %v2895 = vadd.f32 0.0, %v2894
        %v2896 = vpop.f32.mrf.mxu0
        %v2897 = vadd.f32 0.0, %v2896
        %2898 = vmatprep.mubr.bf16.mxu0 %v2621
        %2899 = vmatmul.mubr.bf16.gmra.mxu0 %v2620
        %v2900 = vpop.f32.mrf.mxu0
        %v2901 = vadd.f32 0.0, %v2900
        %v2902 = vpop.f32.mrf.mxu0
        %v2903 = vadd.f32 0.0, %v2902
        %v2904 = vpop.f32.mrf.mxu0
        %v2905 = vadd.f32 0.0, %v2904
        %v2906 = vpop.f32.mrf.mxu0
        %v2907 = vadd.f32 0.0, %v2906
        %2908 = vmatprep.mubr.bf16.mxu0 %v2623
        %2909 = vmatmul.mubr.bf16.gmra.mxu0 %v2622
        %v2910 = vpop.f32.mrf.mxu0
        %v2911 = vadd.f32 0.0, %v2910
        %v2912 = vpop.f32.mrf.mxu0
        %v2913 = vadd.f32 0.0, %v2912
        %v2914 = vpop.f32.mrf.mxu0
        %v2915 = vpop.f32.mrf.mxu0
        %2916 = vdwg.mxu0
        %v2949 = vunpack.c.l.b16 %v2578
        %v2950 = vunpack.c.h.b16 %v2578
        %v2951 = vunpack.c.l.b16 %v2579
        %v2952 = vunpack.c.h.b16 %v2579
        %v2953 = vunpack.c.l.b16 %v2580
        %v2954 = vunpack.c.h.b16 %v2580
        %v2955 = vunpack.c.l.b16 %v2581
        %v2956 = vunpack.c.h.b16 %v2581
        %v2957 = vunpack.c.l.b16 %v2582
        %v2958 = vunpack.c.h.b16 %v2582
        %v2959 = vunpack.c.l.b16 %v2583
        %v2960 = vunpack.c.h.b16 %v2583
        %v2961 = vunpack.c.l.b16 %v2584
        %v2962 = vunpack.c.h.b16 %v2584
        %v2963 = vunpack.c.l.b16 %v2585
        %v2964 = vunpack.c.h.b16 %v2585
        %v2965 = vunpack.c.l.b16 %v2586
        %v2966 = vunpack.c.h.b16 %v2586
        %v2967 = vunpack.c.l.b16 %v2587
        %v2968 = vunpack.c.h.b16 %v2587
        %v2969 = vunpack.c.l.b16 %v2588
        %v2970 = vunpack.c.h.b16 %v2588
        %v2971 = vunpack.c.l.b16 %v2589
        %v2972 = vunpack.c.h.b16 %v2589
        %v2973 = vunpack.c.l.b16 %v2590
        %v2974 = vunpack.c.h.b16 %v2590
        %v2975 = vunpack.c.l.b16 %v2591
        %v2976 = vunpack.c.h.b16 %v2591
        %v2977 = vunpack.c.l.b16 %v2592
        %v2978 = vunpack.c.h.b16 %v2592
        %v2979 = vunpack.c.l.b16 %v2593
        %v2980 = vunpack.c.h.b16 %v2593
        %v2981 = vunpack.c.l.b16 %v2594
        %v2982 = vunpack.c.h.b16 %v2594
        %v2983 = vunpack.c.l.b16 %v2595
        %v2984 = vunpack.c.h.b16 %v2595
        %v2985 = vunpack.c.l.b16 %v2596
        %v2986 = vunpack.c.h.b16 %v2596
        %v2987 = vunpack.c.l.b16 %v2597
        %v2988 = vunpack.c.h.b16 %v2597
        %v2989 = vunpack.c.l.b16 %v2598
        %v2990 = vunpack.c.h.b16 %v2598
        %v2991 = vunpack.c.l.b16 %v2599
        %v2992 = vunpack.c.h.b16 %v2599
        %v2993 = vunpack.c.l.b16 %v2600
        %v2994 = vunpack.c.h.b16 %v2600
        %v2995 = vunpack.c.l.b16 %v2601
        %v2996 = vunpack.c.h.b16 %v2601
        %v2997 = vunpack.c.l.b16 %v2602
        %v2998 = vunpack.c.h.b16 %v2602
        %v2999 = vunpack.c.l.b16 %v2603
        %v3000 = vunpack.c.h.b16 %v2603
        %v3001 = vunpack.c.l.b16 %v2604
        %v3002 = vunpack.c.h.b16 %v2604
        %v3003 = vunpack.c.l.b16 %v2605
        %v3004 = vunpack.c.h.b16 %v2605
        %v3005 = vunpack.c.l.b16 %v2606
        %v3006 = vunpack.c.h.b16 %v2606
        %v3007 = vunpack.c.l.b16 %v2607
        %v3008 = vunpack.c.h.b16 %v2607
        %v3009 = vunpack.c.l.b16 %v2608
        %v3010 = vunpack.c.h.b16 %v2608
        %v3011 = vunpack.c.l.b16 %v2609
        %v3012 = vunpack.c.h.b16 %v2609
        %v3013 = vpack.c.b16 %v2951, %v2949
        %v3014 = vpack.c.b16 %v2952, %v2950
        %v3015 = vpack.c.b16 %v2955, %v2953
        %v3016 = vpack.c.b16 %v2956, %v2954
        %v3017 = vpack.c.b16 %v2959, %v2957
        %v3018 = vpack.c.b16 %v2960, %v2958
        %v3019 = vpack.c.b16 %v2963, %v2961
        %v3020 = vpack.c.b16 %v2964, %v2962
        %v3021 = vpack.c.b16 %v2967, %v2965
        %v3022 = vpack.c.b16 %v2968, %v2966
        %v3023 = vpack.c.b16 %v2971, %v2969
        %v3024 = vpack.c.b16 %v2972, %v2970
        %v3025 = vpack.c.b16 %v2975, %v2973
        %v3026 = vpack.c.b16 %v2976, %v2974
        %v3027 = vpack.c.b16 %v2979, %v2977
        %v3028 = vpack.c.b16 %v2980, %v2978
        %v3029 = vpack.c.b16 %v2983, %v2981
        %v3030 = vpack.c.b16 %v2984, %v2982
        %v3031 = vpack.c.b16 %v2987, %v2985
        %v3032 = vpack.c.b16 %v2988, %v2986
        %v3033 = vpack.c.b16 %v2991, %v2989
        %v3034 = vpack.c.b16 %v2992, %v2990
        %v3035 = vpack.c.b16 %v2995, %v2993
        %v3036 = vpack.c.b16 %v2996, %v2994
        %v3037 = vpack.c.b16 %v2999, %v2997
        %v3038 = vpack.c.b16 %v3000, %v2998
        %v3039 = vpack.c.b16 %v3003, %v3001
        %v3040 = vpack.c.b16 %v3004, %v3002
        %v3041 = vpack.c.b16 %v3007, %v3005
        %v3042 = vpack.c.b16 %v3008, %v3006
        %v3043 = vpack.c.b16 %v3011, %v3009
        %v3044 = vpack.c.b16 %v3012, %v3010
        %3077 = vmatprep.subr.bf16.mxu0 %v3028
        %3078 = vmatpush1.bf16.msra.mxu0 %v3027
        %3079 = vmatprep.subr.bf16.mxu0 %v3026
        %3080 = vmatpush1.bf16.msra.mxu0 %v3025
        %3081 = vmatprep.subr.bf16.mxu0 %v3024
        %3082 = vmatpush1.bf16.msra.mxu0 %v3023
        %3083 = vmatprep.subr.bf16.mxu0 %v3022
        %3084 = vmatpush1.bf16.msra.mxu0 %v3021
        %3085 = vmatprep.subr.bf16.mxu0 %v3020
        %3086 = vmatpush1.bf16.msra.mxu0 %v3019
        %3087 = vmatprep.subr.bf16.mxu0 %v3018
        %3088 = vmatpush1.bf16.msra.mxu0 %v3017
        %3089 = vmatprep.subr.bf16.mxu0 %v3016
        %3090 = vmatpush1.bf16.msra.mxu0 %v3015
        %3091 = vmatprep.subr.bf16.mxu0 %v3014
        %3092 = vmatpush1.bf16.msra.mxu0 %v3013
        %3093 = vmatprep.subr.bf16.mxu0 %v3044
        %3094 = vmatpush2.bf16.msra.mxu0 %v3043
        %3095 = vmatprep.subr.bf16.mxu0 %v3042
        %3096 = vmatpush2.bf16.msra.mxu0 %v3041
        %3097 = vmatprep.subr.bf16.mxu0 %v3040
        %3098 = vmatpush2.bf16.msra.mxu0 %v3039
        %3099 = vmatprep.subr.bf16.mxu0 %v3038
        %3100 = vmatpush2.bf16.msra.mxu0 %v3037
        %3101 = vmatprep.subr.bf16.mxu0 %v3036
        %3102 = vmatpush2.bf16.msra.mxu0 %v3035
        %3103 = vmatprep.subr.bf16.mxu0 %v3034
        %3104 = vmatpush2.bf16.msra.mxu0 %v3033
        %3105 = vmatprep.subr.bf16.mxu0 %v3032
        %3106 = vmatpush2.bf16.msra.mxu0 %v3031
        %3107 = vmatprep.subr.bf16.mxu0 %v3030
        %3108 = vmatpush2.bf16.msra.mxu0 %v3029
        %3109 = vmatprep.mubr.bf16.mxu0 %v2565
        %3110 = vmatmul.mubr.bf16.gmra.mxu0 %v2564
        %v3111 = vpop.f32.mrf.mxu0
        %v3112 = vadd.f32 %v2851, %v3111
        %v3113 = vpop.f32.mrf.mxu0
        %v3114 = vadd.f32 %v2853, %v3113
        %v3115 = vpop.f32.mrf.mxu0
        %v3116 = vadd.f32 %v2855, %v3115
        %v3117 = vpop.f32.mrf.mxu0
        %v3118 = vadd.f32 %v2857, %v3117
        %3119 = vmatprep.mubr.bf16.mxu0 %v2567
        %3120 = vmatmul.mubr.bf16.gmra.mxu0 %v2566
        %v3121 = vpop.f32.mrf.mxu0
        %v3122 = vadd.f32 %v2861, %v3121
        %v3123 = vpop.f32.mrf.mxu0
        %v3124 = vadd.f32 %v2863, %v3123
        %v3125 = vpop.f32.mrf.mxu0
        %v3126 = vadd.f32 %v2865, %v3125
        %v3127 = vpop.f32.mrf.mxu0
        %v3128 = vadd.f32 %v2867, %v3127
        %3129 = vmatprep.mubr.bf16.mxu0 %v2569
        %3130 = vmatmul.mubr.bf16.gmra.mxu0 %v2568
        %v3131 = vpop.f32.mrf.mxu0
        %v3132 = vadd.f32 %v2871, %v3131
        %v3133 = vpop.f32.mrf.mxu0
        %v3134 = vadd.f32 %v2873, %v3133
        %v3135 = vpop.f32.mrf.mxu0
        %v3136 = vadd.f32 %v2875, %v3135
        %v3137 = vpop.f32.mrf.mxu0
        %v3138 = vadd.f32 %v2877, %v3137
        %3139 = vmatprep.mubr.bf16.mxu0 %v2571
        %3140 = vmatmul.mubr.bf16.gmra.mxu0 %v2570
        %v3141 = vpop.f32.mrf.mxu0
        %v3142 = vadd.f32 %v2881, %v3141
        %v3143 = vpop.f32.mrf.mxu0
        %v3144 = vadd.f32 %v2883, %v3143
        %v3145 = vpop.f32.mrf.mxu0
        %v3146 = vadd.f32 %v2885, %v3145
        %v3147 = vpop.f32.mrf.mxu0
        %v3148 = vadd.f32 %v2887, %v3147
        %3149 = vmatprep.mubr.bf16.mxu0 %v2573
        %3150 = vmatmul.mubr.bf16.gmra.mxu0 %v2572
        %v3151 = vpop.f32.mrf.mxu0
        %v3152 = vadd.f32 %v2891, %v3151
        %v3153 = vpop.f32.mrf.mxu0
        %v3154 = vadd.f32 %v2893, %v3153
        %v3155 = vpop.f32.mrf.mxu0
        %v3156 = vadd.f32 %v2895, %v3155
        %v3157 = vpop.f32.mrf.mxu0
        %v3158 = vadd.f32 %v2897, %v3157
        %3159 = vmatprep.mubr.bf16.mxu0 %v2575
        %3160 = vmatmul.mubr.bf16.gmra.mxu0 %v2574
        %v3161 = vpop.f32.mrf.mxu0
        %v3162 = vadd.f32 %v2901, %v3161
        %v3163 = vpop.f32.mrf.mxu0
        %v3164 = vadd.f32 %v2903, %v3163
        %v3165 = vpop.f32.mrf.mxu0
        %v3166 = vadd.f32 %v2905, %v3165
        %v3167 = vpop.f32.mrf.mxu0
        %v3168 = vadd.f32 %v2907, %v3167
        %3169 = vmatprep.mubr.bf16.mxu0 %v2577
        %3170 = vmatmul.mubr.bf16.gmra.mxu0 %v2576
        %v3171 = vpop.f32.mrf.mxu0
        %v3172 = vadd.f32 %v2911, %v3171
        %v3173 = vpop.f32.mrf.mxu0
        %v3174 = vadd.f32 %v2913, %v3173
        %v3175 = vpop.f32.mrf.mxu0
        %v3176 = vpop.f32.mrf.mxu0
        %3177 = vdwg.mxu0
        %v3178 = vld [vmem:[%s25] sm:$0x3]
        %v3180 = vlaneseq
        %v3181 = vshrl.u32 %v3180, 7
        %v3182 = vsub.s32 0, %v3181
        %v3183 = vrot.slane %v3178, %v3182
        %v3184 = vlaneseq
        %v3185 = vshrl.u32 %v3184, 7
        %v3186 = vsub.s32 1, %v3185
        %v3187 = vrot.slane %v3178, %v3186
        %v3190 = vadd.f32 %v3112, %v3183
        %v3191 = vadd.f32 %v3114, %v3187
        %v3192 = vadd.f32 %v3116, %v3183
        %v3193 = vadd.f32 %v3118, %v3187
        %v3194 = vadd.f32 %v3122, %v3183
        %v3195 = vadd.f32 %v3124, %v3187
        %v3196 = vadd.f32 %v3126, %v3183
        %v3197 = vadd.f32 %v3128, %v3187
        %v3198 = vadd.f32 %v3132, %v3183
        %v3199 = vadd.f32 %v3134, %v3187
        %v3200 = vadd.f32 %v3136, %v3183
        %v3201 = vadd.f32 %v3138, %v3187
        %v3202 = vadd.f32 %v3142, %v3183
        %v3203 = vadd.f32 %v3144, %v3187
        %v3204 = vadd.f32 %v3146, %v3183
        %v3205 = vadd.f32 %v3148, %v3187
        %v3206 = vadd.f32 %v3152, %v3183
        %v3207 = vadd.f32 %v3154, %v3187
        %v3208 = vadd.f32 %v3156, %v3183
        %v3209 = vadd.f32 %v3158, %v3187
        %v3210 = vadd.f32 %v3162, %v3183
        %v3211 = vadd.f32 %v3164, %v3187
        %v3212 = vadd.f32 %v3166, %v3183
        %v3213 = vadd.f32 %v3168, %v3187
        %v3214 = vadd.f32 %v3172, %v3183
        %v3215 = vadd.f32 %v3174, %v3187
        %3216 = vst [vmem:[%s1374] sm:$0xff] %v3190
        %3217 = vst [vmem:[%s1374 + $0x8] sm:$0xff] %v3191
        %3218 = vst [vmem:[%s1374 + $0x10] sm:$0xff] %v3192
        %3219 = vst [vmem:[%s1374 + $0x18] sm:$0xff] %v3193
        %3220 = vst [vmem:[%s1374 + $0x20] sm:$0xff] %v3194
        %3221 = vst [vmem:[%s1374 + $0x28] sm:$0xff] %v3195
        %3222 = vst [vmem:[%s1374 + $0x30] sm:$0xff] %v3196
        %3223 = vst [vmem:[%s1374 + $0x38] sm:$0xff] %v3197
        %3224 = vst [vmem:[%s1374 + $0x40] sm:$0xff] %v3198
        %3225 = vst [vmem:[%s1374 + $0x48] sm:$0xff] %v3199
        %3226 = vst [vmem:[%s1374 + $0x50] sm:$0xff] %v3200
        %3227 = vst [vmem:[%s1374 + $0x58] sm:$0xff] %v3201
        %3228 = vst [vmem:[%s1374 + $0x60] sm:$0xff] %v3202
        %3229 = vst [vmem:[%s1374 + $0x68] sm:$0xff] %v3203
        %3230 = vst [vmem:[%s1374 + $0x70] sm:$0xff] %v3204
        %3231 = vst [vmem:[%s1374 + $0x78] sm:$0xff] %v3205
        %3232 = vst [vmem:[%s1374 + $0x80] sm:$0xff] %v3206
        %3233 = vst [vmem:[%s1374 + $0x88] sm:$0xff] %v3207
        %3234 = vst [vmem:[%s1374 + $0x90] sm:$0xff] %v3208
        %3235 = vst [vmem:[%s1374 + $0x98] sm:$0xff] %v3209
        %3236 = vst [vmem:[%s1374 + $0xa0] sm:$0xff] %v3210
        %3237 = vst [vmem:[%s1374 + $0xa8] sm:$0xff] %v3211
        %3238 = vst [vmem:[%s1374 + $0xb0] sm:$0xff] %v3212
        %3239 = vst [vmem:[%s1374 + $0xb8] sm:$0xff] %v3213
        %3240 = vst [vmem:[%s1374 + $0xc0] sm:$0xff] %v3214
        %3241 = vst [vmem:[%s1374 + $0xc8] sm:$0xff] %v3215
        %s3242 = sld [smem:[#allocation3]]
        %s3243 = smul.u32 %s97, 104
        %v3244 = vlaneseq
        %v3245 = vshrl.u32 %v3244, 7
        %v3246 = vadd.s32 %v3245, 8
        %v3247 = vadd.s32 %v3245, 16
        %v3248 = vadd.s32 %v3245, 24
        %v3249 = vadd.s32 %v3245, 32
        %v3250 = vadd.s32 %v3245, 40
        %v3251 = vadd.s32 %v3245, 48
        %v3252 = vadd.s32 %v3245, 56
        %v3253 = vadd.s32 %v3245, 64
        %v3254 = vadd.s32 %v3245, 72
        %v3255 = vadd.s32 %v3245, 80
        %v3256 = vadd.s32 %v3245, 88
        %v3257 = vadd.s32 %v3245, 96
        %v3258 = vstv %s3243
        %v3259 = vadd.s32 %v3258, %v3245
        %v3260 = vadd.s32 %v3258, %v3246
        %v3261 = vadd.s32 %v3258, %v3247
        %v3262 = vadd.s32 %v3258, %v3248
        %v3263 = vadd.s32 %v3258, %v3249
        %v3264 = vadd.s32 %v3258, %v3250
        %v3265 = vadd.s32 %v3258, %v3251
        %v3266 = vadd.s32 %v3258, %v3252
        %v3267 = vadd.s32 %v3258, %v3253
        %v3268 = vadd.s32 %v3258, %v3254
        %v3269 = vadd.s32 %v3258, %v3255
        %v3270 = vadd.s32 %v3258, %v3256
        %v3271 = vadd.s32 %v3258, %v3257
        %v3272 = vstv %s3242
        %vm3273 = vcmp.lt.s32.totalorder %v3259, %v3272
        %vm3274 = vcmp.lt.s32.totalorder %v3260, %v3272
        %vm3275 = vcmp.lt.s32.totalorder %v3261, %v3272
        %vm3276 = vcmp.lt.s32.totalorder %v3262, %v3272
        %vm3277 = vcmp.lt.s32.totalorder %v3263, %v3272
        %vm3278 = vcmp.lt.s32.totalorder %v3264, %v3272
        %vm3279 = vcmp.lt.s32.totalorder %v3265, %v3272
        %vm3280 = vcmp.lt.s32.totalorder %v3266, %v3272
        %vm3281 = vcmp.lt.s32.totalorder %v3267, %v3272
        %vm3282 = vcmp.lt.s32.totalorder %v3268, %v3272
        %vm3283 = vcmp.lt.s32.totalorder %v3269, %v3272
        %vm3284 = vcmp.lt.s32.totalorder %v3270, %v3272
        %vm3285 = vcmp.lt.s32.totalorder %v3271, %v3272
        %v3286 = vsel %vm3273, 1, 0
        %v3287 = vsel %vm3274, 1, 0
        %v3288 = vsel %vm3275, 1, 0
        %v3289 = vsel %vm3276, 1, 0
        %v3290 = vsel %vm3277, 1, 0
        %v3291 = vsel %vm3278, 1, 0
        %v3292 = vsel %vm3279, 1, 0
        %v3293 = vsel %vm3280, 1, 0
        %v3294 = vsel %vm3281, 1, 0
        %v3295 = vsel %vm3282, 1, 0
        %v3296 = vsel %vm3283, 1, 0
        %v3297 = vsel %vm3284, 1, 0
        %v3298 = vsel %vm3285, 1, 0
        %v3299 = vcvt.s32.f32 %v3286
        %v3300 = vcvt.s32.f32 %v3287
        %v3301 = vcvt.s32.f32 %v3288
        %v3302 = vcvt.s32.f32 %v3289
        %v3303 = vcvt.s32.f32 %v3290
        %v3304 = vcvt.s32.f32 %v3291
        %v3305 = vcvt.s32.f32 %v3292
        %v3306 = vcvt.s32.f32 %v3293
        %v3307 = vcvt.s32.f32 %v3294
        %v3308 = vcvt.s32.f32 %v3295
        %v3309 = vcvt.s32.f32 %v3296
        %v3310 = vcvt.s32.f32 %v3297
        %v3311 = vcvt.s32.f32 %v3298
        %v3312 = vmul.f32 %v3190, %v3299
        %v3313 = vmul.f32 %v3191, %v3299
        %v3314 = vmul.f32 %v3192, %v3300
        %v3315 = vmul.f32 %v3193, %v3300
        %v3316 = vmul.f32 %v3194, %v3301
        %v3317 = vmul.f32 %v3195, %v3301
        %v3318 = vmul.f32 %v3196, %v3302
        %v3319 = vmul.f32 %v3197, %v3302
        %v3320 = vmul.f32 %v3198, %v3303
        %v3321 = vmul.f32 %v3199, %v3303
        %v3322 = vmul.f32 %v3200, %v3304
        %v3323 = vmul.f32 %v3201, %v3304
        %v3324 = vmul.f32 %v3202, %v3305
        %v3325 = vmul.f32 %v3203, %v3305
        %v3326 = vmul.f32 %v3204, %v3306
        %v3327 = vmul.f32 %v3205, %v3306
        %v3328 = vmul.f32 %v3206, %v3307
        %v3329 = vmul.f32 %v3207, %v3307
        %v3330 = vmul.f32 %v3208, %v3308
        %v3331 = vmul.f32 %v3209, %v3308
        %v3332 = vmul.f32 %v3210, %v3309
        %v3333 = vmul.f32 %v3211, %v3309
        %v3334 = vmul.f32 %v3212, %v3310
        %v3335 = vmul.f32 %v3213, %v3310
        %v3336 = vmul.f32 %v3214, %v3311
        %v3337 = vmul.f32 %v3215, %v3311
        %v3338 = vadd.f32 %v3312, %v3314
        %v3339 = vadd.f32 %v3338, %v3316
        %v3340 = vadd.f32 %v3339, %v3318
        %v3341 = vadd.f32 %v3340, %v3320
        %v3342 = vadd.f32 %v3341, %v3322
        %v3343 = vadd.f32 %v3342, %v3324
        %v3344 = vadd.f32 %v3343, %v3326
        %v3345 = vadd.f32 %v3344, %v3328
        %v3346 = vadd.f32 %v3345, %v3330
        %v3347 = vadd.f32 %v3346, %v3332
        %v3348 = vadd.f32 %v3347, %v3334
        %v3349 = vadd.f32 %v3348, %v3336
        %v3350 = vrot.slane %v3349, 4
        %v3351 = vadd.f32 %v3349, %v3350
        %v3352 = vrot.slane %v3351, 2
        %v3353 = vadd.f32 %v3351, %v3352
        %v3354 = vrot.slane %v3353, 1
        %v3355 = vadd.f32 %v3353, %v3354
        %v3356 = vadd.f32 %v3313, %v3315
        %v3357 = vadd.f32 %v3356, %v3317
        %v3358 = vadd.f32 %v3357, %v3319
        %v3359 = vadd.f32 %v3358, %v3321
        %v3360 = vadd.f32 %v3359, %v3323
        %v3361 = vadd.f32 %v3360, %v3325
        %v3362 = vadd.f32 %v3361, %v3327
        %v3363 = vadd.f32 %v3362, %v3329
        %v3364 = vadd.f32 %v3363, %v3331
        %v3365 = vadd.f32 %v3364, %v3333
        %v3366 = vadd.f32 %v3365, %v3335
        %v3367 = vadd.f32 %v3366, %v3337
        %v3368 = vrot.slane %v3367, 4
        %v3369 = vadd.f32 %v3367, %v3368
        %v3370 = vrot.slane %v3369, 2
        %v3371 = vadd.f32 %v3369, %v3370
        %v3372 = vrot.slane %v3371, 1
        %v3373 = vadd.f32 %v3371, %v3372
        %v3374 = vmul.f32 %v3312, %v3190
        %v3375 = vmul.f32 %v3313, %v3191
        %v3376 = vmul.f32 %v3314, %v3192
        %v3377 = vmul.f32 %v3315, %v3193
        %v3378 = vmul.f32 %v3316, %v3194
        %v3379 = vmul.f32 %v3317, %v3195
        %v3380 = vmul.f32 %v3318, %v3196
        %v3381 = vmul.f32 %v3319, %v3197
        %v3382 = vmul.f32 %v3320, %v3198
        %v3383 = vmul.f32 %v3321, %v3199
        %v3384 = vmul.f32 %v3322, %v3200
        %v3385 = vmul.f32 %v3323, %v3201
        %v3386 = vmul.f32 %v3324, %v3202
        %v3387 = vmul.f32 %v3325, %v3203
        %v3388 = vmul.f32 %v3326, %v3204
        %v3389 = vmul.f32 %v3327, %v3205
        %v3390 = vmul.f32 %v3328, %v3206
        %v3391 = vmul.f32 %v3329, %v3207
        %v3392 = vmul.f32 %v3330, %v3208
        %v3393 = vmul.f32 %v3331, %v3209
        %v3394 = vmul.f32 %v3332, %v3210
        %v3395 = vmul.f32 %v3333, %v3211
        %v3396 = vmul.f32 %v3334, %v3212
        %v3397 = vmul.f32 %v3335, %v3213
        %v3398 = vmul.f32 %v3336, %v3214
        %v3399 = vmul.f32 %v3337, %v3215
        %v3400 = vadd.f32 %v3374, %v3376
        %v3401 = vadd.f32 %v3400, %v3378
        %v3402 = vadd.f32 %v3401, %v3380
        %v3403 = vadd.f32 %v3402, %v3382
        %v3404 = vadd.f32 %v3403, %v3384
        %v3405 = vadd.f32 %v3404, %v3386
        %v3406 = vadd.f32 %v3405, %v3388
        %v3407 = vadd.f32 %v3406, %v3390
        %v3408 = vadd.f32 %v3407, %v3392
        %v3409 = vadd.f32 %v3408, %v3394
        %v3410 = vadd.f32 %v3409, %v3396
        %v3411 = vadd.f32 %v3410, %v3398
        %v3412 = vrot.slane %v3411, 4
        %v3413 = vadd.f32 %v3411, %v3412
        %v3414 = vrot.slane %v3413, 2
        %v3415 = vadd.f32 %v3413, %v3414
        %v3416 = vrot.slane %v3415, 1
        %v3417 = vadd.f32 %v3415, %v3416
        %v3418 = vadd.f32 %v3375, %v3377
        %v3419 = vadd.f32 %v3418, %v3379
        %v3420 = vadd.f32 %v3419, %v3381
        %v3421 = vadd.f32 %v3420, %v3383
        %v3422 = vadd.f32 %v3421, %v3385
        %v3423 = vadd.f32 %v3422, %v3387
        %v3424 = vadd.f32 %v3423, %v3389
        %v3425 = vadd.f32 %v3424, %v3391
        %v3426 = vadd.f32 %v3425, %v3393
        %v3427 = vadd.f32 %v3426, %v3395
        %v3428 = vadd.f32 %v3427, %v3397
        %v3429 = vadd.f32 %v3428, %v3399
        %v3430 = vrot.slane %v3429, 4
        %v3431 = vadd.f32 %v3429, %v3430
        %v3432 = vrot.slane %v3431, 2
        %v3433 = vadd.f32 %v3431, %v3432
        %v3434 = vrot.slane %v3433, 1
        %v3435 = vadd.f32 %v3433, %v3434
        %vm3436 = vcmp.eq.s32.totalorder %v3245, 0
        %vm3437 = vcmp.eq.s32.totalorder %v3245, 1
        %v3438 = vsel %vm3437, %v3417, 0.0
        %v3439 = vsel %vm3437, %v3435, 0.0
        %v3440 = vsel %vm3436, %v3355, %v3438
        %v3441 = vsel %vm3436, %v3373, %v3439
        %3442 = vst [vmem:[%s1380] sm:$0xff] %v3440
        %3443 = vst [vmem:[%s1380 + $0x8] sm:$0xff] %v3441
        %v3444 = vld [vmem:[%s1353] sm:$0xff]
        %v3445 = vld [vmem:[%s1353 + $0x8] sm:$0xff]
        %v3446 = vld [vmem:[%s1353 + $0x10] sm:$0xff]
        %v3447 = vld [vmem:[%s1353 + $0x18] sm:$0xff]
        %v3448 = vld [vmem:[%s1353 + $0x20] sm:$0xff]
        %v3449 = vld [vmem:[%s1353 + $0x28] sm:$0xff]
        %v3450 = vld [vmem:[%s1353 + $0x30] sm:$0xff]
        %v3451 = vld [vmem:[%s1353 + $0x38] sm:$0xff]
        %v3452 = vld [vmem:[%s1353 + $0x40] sm:$0xff]
        %v3453 = vld [vmem:[%s1353 + $0x48] sm:$0xff]
        %v3454 = vld [vmem:[%s1353 + $0x50] sm:$0xff]
        %v3455 = vld [vmem:[%s1353 + $0x58] sm:$0xff]
        %v3456 = vld [vmem:[%s1353 + $0x60] sm:$0xff]
        %v3457 = vpack.c.bf16 %v3445, %v3444
        %v3458 = vpack.c.bf16 %v3447, %v3446
        %v3459 = vpack.c.bf16 %v3449, %v3448
        %v3460 = vpack.c.bf16 %v3451, %v3450
        %v3461 = vpack.c.bf16 %v3453, %v3452
        %v3462 = vpack.c.bf16 %v3455, %v3454
        %v3463 = vpack.c.bf16 %v3456, %v3456
        %v3464 = vld [vmem:[%s27] sm:$0xff]
        %v3465 = vld [vmem:[%s27 + $0x8] sm:$0xf]
        %v3466 = vld [vmem:[%s29] sm:$0x3f]
        %v3468 = vlaneseq
        %v3469 = vshrl.u32 %v3468, 7
        %v3470 = vsub.s32 0, %v3469
        %v3471 = vrot.slane %v3466, %v3470
        %v3472 = vlaneseq
        %v3473 = vshrl.u32 %v3472, 7
        %v3474 = vsub.s32 1, %v3473
        %v3475 = vrot.slane %v3466, %v3474
        %v3476 = vlaneseq
        %v3477 = vshrl.u32 %v3476, 7
        %v3478 = vsub.s32 2, %v3477
        %v3479 = vrot.slane %v3466, %v3478
        %v3480 = vlaneseq
        %v3481 = vshrl.u32 %v3480, 7
        %v3482 = vsub.s32 3, %v3481
        %v3483 = vrot.slane %v3466, %v3482
        %v3484 = vlaneseq
        %v3485 = vshrl.u32 %v3484, 7
        %v3486 = vsub.s32 4, %v3485
        %v3487 = vrot.slane %v3466, %v3486
        %v3488 = vlaneseq
        %v3489 = vshrl.u32 %v3488, 7
        %v3490 = vsub.s32 5, %v3489
        %v3491 = vrot.slane %v3466, %v3490
        %v3500 = vcombine.high %v3464, %v3464
        %v3502 = vunpack.c.l.s4 1983009808
        %v3503 = vunpack.c.0.s8 %v3502
        %v3504 = vlaneseq
        %v3505 = vshrl.u32 %v3504, 7
        %v3506 = vsub.s32 %v3503, %v3505
        %v3507 = vrot.slane %v3464, %v3506
        %v3509 = vunpack.c.l.s4 1983009808
        %v3510 = vunpack.c.0.s8 %v3509
        %v3511 = vlaneseq
        %v3512 = vshrl.u32 %v3511, 7
        %v3513 = vsub.s32 %v3510, %v3512
        %v3514 = vrot.slane %v3500, %v3513
        %v3515 = vcombine.high %v3507, %v3507
        %v3516 = vcombine.high %v3514, %v3514
        %v3518 = vunpack.c.l.s4 1983009808
        %v3519 = vunpack.c.0.s8 %v3518
        %v3520 = vlaneseq
        %v3521 = vshrl.u32 %v3520, 7
        %v3522 = vsub.s32 %v3519, %v3521
        %v3523 = vrot.slane %v3465, %v3522
        %v3524 = vcombine.high %v3523, %v3523
        %vm3525 = vcmask 31744
        %v3527 = vsel %vm3525, %v3457, 0
        %v3530 = vsel %vm3525, %v3458, 0
        %v3533 = vsel %vm3525, %v3459, 0
        %v3536 = vsel %vm3525, %v3460, 0
        %v3539 = vsel %vm3525, %v3461, 0
        %v3542 = vsel %vm3525, %v3462, 0
        %v3545 = vsel %vm3525, %v3463, 0
        %vm3547 = vcmask 1041408
        %v3549 = vsel %vm3547, %v3507, 0
        %v3552 = vsel %vm3547, %v3515, 0
        %v3555 = vsel %vm3547, %v3514, 0
        %v3558 = vsel %vm3547, %v3516, 0
        %v3561 = vsel %vm3547, %v3523, 0
        %v3564 = vsel %vm3547, %v3524, 0
        %3566 = vmatprep.subr.bf16.mxu0 0
        %3567 = vmatpush1.bf16.msra.mxu0 0
        %3568 = vmatprep.subr.bf16.mxu0 0
        %3569 = vmatpush1.bf16.msra.mxu0 0
        %3570 = vmatprep.subr.bf16.mxu0 0
        %3571 = vmatpush1.bf16.msra.mxu0 0
        %3572 = vmatprep.subr.bf16.mxu0 0
        %3573 = vmatpush1.bf16.msra.mxu0 0
        %3574 = vmatprep.subr.bf16.mxu0 0
        %3575 = vmatpush1.bf16.msra.mxu0 0
        %3576 = vmatprep.subr.bf16.mxu0 0
        %3577 = vmatpush1.bf16.msra.mxu0 0
        %3578 = vmatprep.subr.bf16.mxu0 0
        %3579 = vmatpush1.bf16.msra.mxu0 0
        %3580 = vmatprep.subr.bf16.mxu0 %v3552
        %3581 = vmatpush1.bf16.msra.mxu0 %v3549
        %3582 = vmatprep.subr.bf16.mxu0 0
        %3583 = vmatpush2.bf16.msra.mxu0 0
        %3584 = vmatprep.subr.bf16.mxu0 0
        %3585 = vmatpush2.bf16.msra.mxu0 0
        %3586 = vmatprep.subr.bf16.mxu0 0
        %3587 = vmatpush2.bf16.msra.mxu0 0
        %3588 = vmatprep.subr.bf16.mxu0 0
        %3589 = vmatpush2.bf16.msra.mxu0 0
        %3590 = vmatprep.subr.bf16.mxu0 0
        %3591 = vmatpush2.bf16.msra.mxu0 0
        %3592 = vmatprep.subr.bf16.mxu0 0
        %3593 = vmatpush2.bf16.msra.mxu0 0
        %3594 = vmatprep.subr.bf16.mxu0 0
        %3595 = vmatpush2.bf16.msra.mxu0 0
        %3596 = vmatprep.subr.bf16.mxu0 0
        %3597 = vmatpush2.bf16.msra.mxu0 0
        %3598 = vmatprep.mubr.bf16.mxu0 0
        %3599 = vmatmul.mubr.bf16.gmra.mxu0 %v3527
        %v3600 = vpop.f32.mrf.mxu0
        %v3601 = vadd.f32 %v3471, %v3600
        %v3602 = vpop.f32.mrf.mxu0
        %v3603 = vadd.f32 %v3475, %v3602
        %v3604 = vpop.f32.mrf.mxu0
        %v3605 = vadd.f32 %v3471, %v3604
        %v3606 = vpop.f32.mrf.mxu0
        %v3607 = vadd.f32 %v3475, %v3606
        %3608 = vmatprep.mubr.bf16.mxu0 0
        %3609 = vmatmul.mubr.bf16.gmra.mxu0 %v3530
        %v3610 = vpop.f32.mrf.mxu0
        %v3611 = vadd.f32 %v3471, %v3610
        %v3612 = vpop.f32.mrf.mxu0
        %v3613 = vadd.f32 %v3475, %v3612
        %v3614 = vpop.f32.mrf.mxu0
        %v3615 = vadd.f32 %v3471, %v3614
        %v3616 = vpop.f32.mrf.mxu0
        %v3617 = vadd.f32 %v3475, %v3616
        %3618 = vmatprep.mubr.bf16.mxu0 0
        %3619 = vmatmul.mubr.bf16.gmra.mxu0 %v3533
        %v3620 = vpop.f32.mrf.mxu0
        %v3621 = vadd.f32 %v3471, %v3620
        %v3622 = vpop.f32.mrf.mxu0
        %v3623 = vadd.f32 %v3475, %v3622
        %v3624 = vpop.f32.mrf.mxu0
        %v3625 = vadd.f32 %v3471, %v3624
        %v3626 = vpop.f32.mrf.mxu0
        %v3627 = vadd.f32 %v3475, %v3626
        %3628 = vmatprep.mubr.bf16.mxu0 0
        %3629 = vmatmul.mubr.bf16.gmra.mxu0 %v3536
        %v3630 = vpop.f32.mrf.mxu0
        %v3631 = vadd.f32 %v3471, %v3630
        %v3632 = vpop.f32.mrf.mxu0
        %v3633 = vadd.f32 %v3475, %v3632
        %v3634 = vpop.f32.mrf.mxu0
        %v3635 = vadd.f32 %v3471, %v3634
        %v3636 = vpop.f32.mrf.mxu0
        %v3637 = vadd.f32 %v3475, %v3636
        %3638 = vmatprep.mubr.bf16.mxu0 0
        %3639 = vmatmul.mubr.bf16.gmra.mxu0 %v3539
        %v3640 = vpop.f32.mrf.mxu0
        %v3641 = vadd.f32 %v3471, %v3640
        %v3642 = vpop.f32.mrf.mxu0
        %v3643 = vadd.f32 %v3475, %v3642
        %v3644 = vpop.f32.mrf.mxu0
        %v3645 = vadd.f32 %v3471, %v3644
        %v3646 = vpop.f32.mrf.mxu0
        %v3647 = vadd.f32 %v3475, %v3646
        %3648 = vmatprep.mubr.bf16.mxu0 0
        %3649 = vmatmul.mubr.bf16.gmra.mxu0 %v3542
        %v3650 = vpop.f32.mrf.mxu0
        %v3651 = vadd.f32 %v3471, %v3650
        %v3652 = vpop.f32.mrf.mxu0
        %v3653 = vadd.f32 %v3475, %v3652
        %v3654 = vpop.f32.mrf.mxu0
        %v3655 = vadd.f32 %v3471, %v3654
        %v3656 = vpop.f32.mrf.mxu0
        %v3657 = vadd.f32 %v3475, %v3656
        %3658 = vmatprep.mubr.bf16.mxu0 0
        %3659 = vmatmul.mubr.bf16.gmra.mxu0 %v3545
        %v3660 = vpop.f32.mrf.mxu0
        %v3661 = vadd.f32 %v3471, %v3660
        %v3662 = vpop.f32.mrf.mxu0
        %v3663 = vadd.f32 %v3475, %v3662
        %v3664 = vpop.f32.mrf.mxu0
        %v3665 = vpop.f32.mrf.mxu0
        %3666 = vdwg.mxu0
        %3667 = vmatprep.subr.bf16.mxu0 0
        %3668 = vmatpush1.bf16.msra.mxu0 0
        %3669 = vmatprep.subr.bf16.mxu0 0
        %3670 = vmatpush1.bf16.msra.mxu0 0
        %3671 = vmatprep.subr.bf16.mxu0 0
        %3672 = vmatpush1.bf16.msra.mxu0 0
        %3673 = vmatprep.subr.bf16.mxu0 0
        %3674 = vmatpush1.bf16.msra.mxu0 0
        %3675 = vmatprep.subr.bf16.mxu0 0
        %3676 = vmatpush1.bf16.msra.mxu0 0
        %3677 = vmatprep.subr.bf16.mxu0 0
        %3678 = vmatpush1.bf16.msra.mxu0 0
        %3679 = vmatprep.subr.bf16.mxu0 0
        %3680 = vmatpush1.bf16.msra.mxu0 0
        %3681 = vmatprep.subr.bf16.mxu0 %v3558
        %3682 = vmatpush1.bf16.msra.mxu0 %v3555
        %3683 = vmatprep.subr.bf16.mxu0 0
        %3684 = vmatpush2.bf16.msra.mxu0 0
        %3685 = vmatprep.subr.bf16.mxu0 0
        %3686 = vmatpush2.bf16.msra.mxu0 0
        %3687 = vmatprep.subr.bf16.mxu0 0
        %3688 = vmatpush2.bf16.msra.mxu0 0
        %3689 = vmatprep.subr.bf16.mxu0 0
        %3690 = vmatpush2.bf16.msra.mxu0 0
        %3691 = vmatprep.subr.bf16.mxu0 0
        %3692 = vmatpush2.bf16.msra.mxu0 0
        %3693 = vmatprep.subr.bf16.mxu0 0
        %3694 = vmatpush2.bf16.msra.mxu0 0
        %3695 = vmatprep.subr.bf16.mxu0 0
        %3696 = vmatpush2.bf16.msra.mxu0 0
        %3697 = vmatprep.subr.bf16.mxu0 0
        %3698 = vmatpush2.bf16.msra.mxu0 0
        %3699 = vmatprep.mubr.bf16.mxu0 0
        %3700 = vmatmul.mubr.bf16.gmra.mxu0 %v3527
        %v3701 = vpop.f32.mrf.mxu0
        %v3702 = vadd.f32 %v3479, %v3701
        %v3703 = vpop.f32.mrf.mxu0
        %v3704 = vadd.f32 %v3483, %v3703
        %v3705 = vpop.f32.mrf.mxu0
        %v3706 = vadd.f32 %v3479, %v3705
        %v3707 = vpop.f32.mrf.mxu0
        %v3708 = vadd.f32 %v3483, %v3707
        %3709 = vmatprep.mubr.bf16.mxu0 0
        %3710 = vmatmul.mubr.bf16.gmra.mxu0 %v3530
        %v3711 = vpop.f32.mrf.mxu0
        %v3712 = vadd.f32 %v3479, %v3711
        %v3713 = vpop.f32.mrf.mxu0
        %v3714 = vadd.f32 %v3483, %v3713
        %v3715 = vpop.f32.mrf.mxu0
        %v3716 = vadd.f32 %v3479, %v3715
        %v3717 = vpop.f32.mrf.mxu0
        %v3718 = vadd.f32 %v3483, %v3717
        %3719 = vmatprep.mubr.bf16.mxu0 0
        %3720 = vmatmul.mubr.bf16.gmra.mxu0 %v3533
        %v3721 = vpop.f32.mrf.mxu0
        %v3722 = vadd.f32 %v3479, %v3721
        %v3723 = vpop.f32.mrf.mxu0
        %v3724 = vadd.f32 %v3483, %v3723
        %v3725 = vpop.f32.mrf.mxu0
        %v3726 = vadd.f32 %v3479, %v3725
        %v3727 = vpop.f32.mrf.mxu0
        %v3728 = vadd.f32 %v3483, %v3727
        %3729 = vmatprep.mubr.bf16.mxu0 0
        %3730 = vmatmul.mubr.bf16.gmra.mxu0 %v3536
        %v3731 = vpop.f32.mrf.mxu0
        %v3732 = vadd.f32 %v3479, %v3731
        %v3733 = vpop.f32.mrf.mxu0
        %v3734 = vadd.f32 %v3483, %v3733
        %v3735 = vpop.f32.mrf.mxu0
        %v3736 = vadd.f32 %v3479, %v3735
        %v3737 = vpop.f32.mrf.mxu0
        %v3738 = vadd.f32 %v3483, %v3737
        %3739 = vmatprep.mubr.bf16.mxu0 0
        %3740 = vmatmul.mubr.bf16.gmra.mxu0 %v3539
        %v3741 = vpop.f32.mrf.mxu0
        %v3742 = vadd.f32 %v3479, %v3741
        %v3743 = vpop.f32.mrf.mxu0
        %v3744 = vadd.f32 %v3483, %v3743
        %v3745 = vpop.f32.mrf.mxu0
        %v3746 = vadd.f32 %v3479, %v3745
        %v3747 = vpop.f32.mrf.mxu0
        %v3748 = vadd.f32 %v3483, %v3747
        %3749 = vmatprep.mubr.bf16.mxu0 0
        %3750 = vmatmul.mubr.bf16.gmra.mxu0 %v3542
        %v3751 = vpop.f32.mrf.mxu0
        %v3752 = vadd.f32 %v3479, %v3751
        %v3753 = vpop.f32.mrf.mxu0
        %v3754 = vadd.f32 %v3483, %v3753
        %v3755 = vpop.f32.mrf.mxu0
        %v3756 = vadd.f32 %v3479, %v3755
        %v3757 = vpop.f32.mrf.mxu0
        %v3758 = vadd.f32 %v3483, %v3757
        %3759 = vmatprep.mubr.bf16.mxu0 0
        %3760 = vmatmul.mubr.bf16.gmra.mxu0 %v3545
        %v3761 = vpop.f32.mrf.mxu0
        %v3762 = vadd.f32 %v3479, %v3761
        %v3763 = vpop.f32.mrf.mxu0
        %v3764 = vadd.f32 %v3483, %v3763
        %v3765 = vpop.f32.mrf.mxu0
        %v3766 = vpop.f32.mrf.mxu0
        %3767 = vdwg.mxu0
        %3768 = vmatprep.subr.bf16.mxu0 0
        %3769 = vmatpush1.bf16.msra.mxu0 0
        %3770 = vmatprep.subr.bf16.mxu0 0
        %3771 = vmatpush1.bf16.msra.mxu0 0
        %3772 = vmatprep.subr.bf16.mxu0 0
        %3773 = vmatpush1.bf16.msra.mxu0 0
        %3774 = vmatprep.subr.bf16.mxu0 0
        %3775 = vmatpush1.bf16.msra.mxu0 0
        %3776 = vmatprep.subr.bf16.mxu0 0
        %3777 = vmatpush1.bf16.msra.mxu0 0
        %3778 = vmatprep.subr.bf16.mxu0 0
        %3779 = vmatpush1.bf16.msra.mxu0 0
        %3780 = vmatprep.subr.bf16.mxu0 0
        %3781 = vmatpush1.bf16.msra.mxu0 0
        %3782 = vmatprep.subr.bf16.mxu0 %v3564
        %3783 = vmatpush1.bf16.msra.mxu0 %v3561
        %3784 = vmatprep.subr.bf16.mxu0 0
        %3785 = vmatpush2.bf16.msra.mxu0 0
        %3786 = vmatprep.subr.bf16.mxu0 0
        %3787 = vmatpush2.bf16.msra.mxu0 0
        %3788 = vmatprep.subr.bf16.mxu0 0
        %3789 = vmatpush2.bf16.msra.mxu0 0
        %3790 = vmatprep.subr.bf16.mxu0 0
        %3791 = vmatpush2.bf16.msra.mxu0 0
        %3792 = vmatprep.subr.bf16.mxu0 0
        %3793 = vmatpush2.bf16.msra.mxu0 0
        %3794 = vmatprep.subr.bf16.mxu0 0
        %3795 = vmatpush2.bf16.msra.mxu0 0
        %3796 = vmatprep.subr.bf16.mxu0 0
        %3797 = vmatpush2.bf16.msra.mxu0 0
        %3798 = vmatprep.subr.bf16.mxu0 0
        %3799 = vmatpush2.bf16.msra.mxu0 0
        %3800 = vmatprep.mubr.bf16.mxu0 0
        %3801 = vmatmul.mubr.bf16.gmra.mxu0 %v3527
        %v3802 = vpop.f32.mrf.mxu0
        %v3803 = vadd.f32 %v3487, %v3802
        %v3804 = vpop.f32.mrf.mxu0
        %v3805 = vadd.f32 %v3491, %v3804
        %v3806 = vpop.f32.mrf.mxu0
        %v3807 = vadd.f32 %v3487, %v3806
        %v3808 = vpop.f32.mrf.mxu0
        %v3809 = vadd.f32 %v3491, %v3808
        %3810 = vmatprep.mubr.bf16.mxu0 0
        %3811 = vmatmul.mubr.bf16.gmra.mxu0 %v3530
        %v3812 = vpop.f32.mrf.mxu0
        %v3813 = vadd.f32 %v3487, %v3812
        %v3814 = vpop.f32.mrf.mxu0
        %v3815 = vadd.f32 %v3491, %v3814
        %v3816 = vpop.f32.mrf.mxu0
        %v3817 = vadd.f32 %v3487, %v3816
        %v3818 = vpop.f32.mrf.mxu0
        %v3819 = vadd.f32 %v3491, %v3818
        %3820 = vmatprep.mubr.bf16.mxu0 0
        %3821 = vmatmul.mubr.bf16.gmra.mxu0 %v3533
        %v3822 = vpop.f32.mrf.mxu0
        %v3823 = vadd.f32 %v3487, %v3822
        %v3824 = vpop.f32.mrf.mxu0
        %v3825 = vadd.f32 %v3491, %v3824
        %v3826 = vpop.f32.mrf.mxu0
        %v3827 = vadd.f32 %v3487, %v3826
        %v3828 = vpop.f32.mrf.mxu0
        %v3829 = vadd.f32 %v3491, %v3828
        %3830 = vmatprep.mubr.bf16.mxu0 0
        %3831 = vmatmul.mubr.bf16.gmra.mxu0 %v3536
        %v3832 = vpop.f32.mrf.mxu0
        %v3833 = vadd.f32 %v3487, %v3832
        %v3834 = vpop.f32.mrf.mxu0
        %v3835 = vadd.f32 %v3491, %v3834
        %v3836 = vpop.f32.mrf.mxu0
        %v3837 = vadd.f32 %v3487, %v3836
        %v3838 = vpop.f32.mrf.mxu0
        %v3839 = vadd.f32 %v3491, %v3838
        %3840 = vmatprep.mubr.bf16.mxu0 0
        %3841 = vmatmul.mubr.bf16.gmra.mxu0 %v3539
        %v3842 = vpop.f32.mrf.mxu0
        %v3843 = vadd.f32 %v3487, %v3842
        %v3844 = vpop.f32.mrf.mxu0
        %v3845 = vadd.f32 %v3491, %v3844
        %v3846 = vpop.f32.mrf.mxu0
        %v3847 = vadd.f32 %v3487, %v3846
        %v3848 = vpop.f32.mrf.mxu0
        %v3849 = vadd.f32 %v3491, %v3848
        %3850 = vmatprep.mubr.bf16.mxu0 0
        %3851 = vmatmul.mubr.bf16.gmra.mxu0 %v3542
        %v3852 = vpop.f32.mrf.mxu0
        %v3853 = vadd.f32 %v3487, %v3852
        %v3854 = vpop.f32.mrf.mxu0
        %v3855 = vadd.f32 %v3491, %v3854
        %v3856 = vpop.f32.mrf.mxu0
        %v3857 = vadd.f32 %v3487, %v3856
        %v3858 = vpop.f32.mrf.mxu0
        %v3859 = vadd.f32 %v3491, %v3858
        %3860 = vmatprep.mubr.bf16.mxu0 0
        %3861 = vmatmul.mubr.bf16.gmra.mxu0 %v3545
        %v3862 = vpop.f32.mrf.mxu0
        %v3863 = vadd.f32 %v3487, %v3862
        %v3864 = vpop.f32.mrf.mxu0
        %v3865 = vadd.f32 %v3491, %v3864
        %v3866 = vpop.f32.mrf.mxu0
        %v3867 = vpop.f32.mrf.mxu0
        %3868 = vdwg.mxu0
        %v3869 = vld [vmem:[%s31] sm:$0xff]
        %v3870 = vld [vmem:[%s31 + $0x8] sm:$0xff]
        %v3871 = vld [vmem:[%s31 + $0x10] sm:$0xff]
        %v3872 = vld [vmem:[%s31 + $0x18] sm:$0xff]
        %v3873 = vld [vmem:[%s31 + $0x20] sm:$0xff]
        %v3874 = vld [vmem:[%s31 + $0x28] sm:$0xff]
        %v3875 = vld [vmem:[%s31 + $0x30] sm:$0xff]
        %v3876 = vld [vmem:[%s31 + $0x38] sm:$0xff]
        %v3877 = vld [vmem:[%s31 + $0x40] sm:$0xff]
        %v3878 = vld [vmem:[%s31 + $0x48] sm:$0xff]
        %v3879 = vld [vmem:[%s31 + $0x50] sm:$0xff]
        %v3880 = vld [vmem:[%s31 + $0x58] sm:$0xff]
        %v3881 = vld [vmem:[%s31 + $0x60] sm:$0xff]
        %v3882 = vld [vmem:[%s31 + $0x68] sm:$0xff]
        %v3883 = vld [vmem:[%s31 + $0x70] sm:$0xff]
        %v3884 = vld [vmem:[%s31 + $0x78] sm:$0xff]
        %v3885 = vld [vmem:[%s31 + $0x80] sm:$0xff]
        %v3886 = vld [vmem:[%s31 + $0x88] sm:$0xff]
        %v3887 = vld [vmem:[%s31 + $0x90] sm:$0xff]
        %v3888 = vld [vmem:[%s31 + $0x98] sm:$0xff]
        %v3889 = vld [vmem:[%s31 + $0xa0] sm:$0xff]
        %v3890 = vld [vmem:[%s31 + $0xa8] sm:$0xff]
        %v3891 = vld [vmem:[%s31 + $0xb0] sm:$0xff]
        %v3892 = vld [vmem:[%s31 + $0xb8] sm:$0xff]
        %v3893 = vld [vmem:[%s31 + $0xc0] sm:$0xff]
        %v3894 = vld [vmem:[%s31 + $0xc8] sm:$0xff]
        %v3895 = vld [vmem:[%s31 + $0xd0] sm:$0xff]
        %v3896 = vld [vmem:[%s31 + $0xd8] sm:$0xff]
        %v3897 = vld [vmem:[%s31 + $0xe0] sm:$0xff]
        %v3898 = vld [vmem:[%s31 + $0xe8] sm:$0xff]
        %v3899 = vld [vmem:[%s31 + $0xf0] sm:$0xff]
        %v3900 = vld [vmem:[%s31 + $0xf8] sm:$0xff]
        %v3933 = vunpack.c.l.b16 %v3869
        %v3934 = vunpack.c.h.b16 %v3869
        %v3935 = vunpack.c.l.b16 %v3870
        %v3936 = vunpack.c.h.b16 %v3870
        %v3937 = vunpack.c.l.b16 %v3871
        %v3938 = vunpack.c.h.b16 %v3871
        %v3939 = vunpack.c.l.b16 %v3872
        %v3940 = vunpack.c.h.b16 %v3872
        %v3941 = vunpack.c.l.b16 %v3873
        %v3942 = vunpack.c.h.b16 %v3873
        %v3943 = vunpack.c.l.b16 %v3874
        %v3944 = vunpack.c.h.b16 %v3874
        %v3945 = vunpack.c.l.b16 %v3875
        %v3946 = vunpack.c.h.b16 %v3875
        %v3947 = vunpack.c.l.b16 %v3876
        %v3948 = vunpack.c.h.b16 %v3876
        %v3949 = vunpack.c.l.b16 %v3877
        %v3950 = vunpack.c.h.b16 %v3877
        %v3951 = vunpack.c.l.b16 %v3878
        %v3952 = vunpack.c.h.b16 %v3878
        %v3953 = vunpack.c.l.b16 %v3879
        %v3954 = vunpack.c.h.b16 %v3879
        %v3955 = vunpack.c.l.b16 %v3880
        %v3956 = vunpack.c.h.b16 %v3880
        %v3957 = vunpack.c.l.b16 %v3881
        %v3958 = vunpack.c.h.b16 %v3881
        %v3959 = vunpack.c.l.b16 %v3882
        %v3960 = vunpack.c.h.b16 %v3882
        %v3961 = vunpack.c.l.b16 %v3883
        %v3962 = vunpack.c.h.b16 %v3883
        %v3963 = vunpack.c.l.b16 %v3884
        %v3964 = vunpack.c.h.b16 %v3884
        %v3965 = vunpack.c.l.b16 %v3885
        %v3966 = vunpack.c.h.b16 %v3885
        %v3967 = vunpack.c.l.b16 %v3886
        %v3968 = vunpack.c.h.b16 %v3886
        %v3969 = vunpack.c.l.b16 %v3887
        %v3970 = vunpack.c.h.b16 %v3887
        %v3971 = vunpack.c.l.b16 %v3888
        %v3972 = vunpack.c.h.b16 %v3888
        %v3973 = vunpack.c.l.b16 %v3889
        %v3974 = vunpack.c.h.b16 %v3889
        %v3975 = vunpack.c.l.b16 %v3890
        %v3976 = vunpack.c.h.b16 %v3890
        %v3977 = vunpack.c.l.b16 %v3891
        %v3978 = vunpack.c.h.b16 %v3891
        %v3979 = vunpack.c.l.b16 %v3892
        %v3980 = vunpack.c.h.b16 %v3892
        %v3981 = vunpack.c.l.b16 %v3893
        %v3982 = vunpack.c.h.b16 %v3893
        %v3983 = vunpack.c.l.b16 %v3894
        %v3984 = vunpack.c.h.b16 %v3894
        %v3985 = vunpack.c.l.b16 %v3895
        %v3986 = vunpack.c.h.b16 %v3895
        %v3987 = vunpack.c.l.b16 %v3896
        %v3988 = vunpack.c.h.b16 %v3896
        %v3989 = vunpack.c.l.b16 %v3897
        %v3990 = vunpack.c.h.b16 %v3897
        %v3991 = vunpack.c.l.b16 %v3898
        %v3992 = vunpack.c.h.b16 %v3898
        %v3993 = vunpack.c.l.b16 %v3899
        %v3994 = vunpack.c.h.b16 %v3899
        %v3995 = vunpack.c.l.b16 %v3900
        %v3996 = vunpack.c.h.b16 %v3900
        %v3997 = vpack.c.b16 %v3935, %v3933
        %v3998 = vpack.c.b16 %v3936, %v3934
        %v3999 = vpack.c.b16 %v3939, %v3937
        %v4000 = vpack.c.b16 %v3940, %v3938
        %v4001 = vpack.c.b16 %v3943, %v3941
        %v4002 = vpack.c.b16 %v3944, %v3942
        %v4003 = vpack.c.b16 %v3947, %v3945
        %v4004 = vpack.c.b16 %v3948, %v3946
        %v4005 = vpack.c.b16 %v3951, %v3949
        %v4006 = vpack.c.b16 %v3952, %v3950
        %v4007 = vpack.c.b16 %v3955, %v3953
        %v4008 = vpack.c.b16 %v3956, %v3954
        %v4009 = vpack.c.b16 %v3959, %v3957
        %v4010 = vpack.c.b16 %v3960, %v3958
        %v4011 = vpack.c.b16 %v3963, %v3961
        %v4012 = vpack.c.b16 %v3964, %v3962
        %v4013 = vpack.c.b16 %v3967, %v3965
        %v4014 = vpack.c.b16 %v3968, %v3966
        %v4015 = vpack.c.b16 %v3971, %v3969
        %v4016 = vpack.c.b16 %v3972, %v3970
        %v4017 = vpack.c.b16 %v3975, %v3973
        %v4018 = vpack.c.b16 %v3976, %v3974
        %v4019 = vpack.c.b16 %v3979, %v3977
        %v4020 = vpack.c.b16 %v3980, %v3978
        %v4021 = vpack.c.b16 %v3983, %v3981
        %v4022 = vpack.c.b16 %v3984, %v3982
        %v4023 = vpack.c.b16 %v3987, %v3985
        %v4024 = vpack.c.b16 %v3988, %v3986
        %v4025 = vpack.c.b16 %v3991, %v3989
        %v4026 = vpack.c.b16 %v3992, %v3990
        %v4027 = vpack.c.b16 %v3995, %v3993
        %v4028 = vpack.c.b16 %v3996, %v3994
        %4061 = vmatprep.subr.bf16.mxu0 %v4012
        %4062 = vmatpush1.bf16.msra.mxu0 %v4011
        %4063 = vmatprep.subr.bf16.mxu0 %v4010
        %4064 = vmatpush1.bf16.msra.mxu0 %v4009
        %4065 = vmatprep.subr.bf16.mxu0 %v4008
        %4066 = vmatpush1.bf16.msra.mxu0 %v4007
        %4067 = vmatprep.subr.bf16.mxu0 %v4006
        %4068 = vmatpush1.bf16.msra.mxu0 %v4005
        %4069 = vmatprep.subr.bf16.mxu0 %v4004
        %4070 = vmatpush1.bf16.msra.mxu0 %v4003
        %4071 = vmatprep.subr.bf16.mxu0 %v4002
        %4072 = vmatpush1.bf16.msra.mxu0 %v4001
        %4073 = vmatprep.subr.bf16.mxu0 %v4000
        %4074 = vmatpush1.bf16.msra.mxu0 %v3999
        %4075 = vmatprep.subr.bf16.mxu0 %v3998
        %4076 = vmatpush1.bf16.msra.mxu0 %v3997
        %4077 = vmatprep.subr.bf16.mxu0 %v4028
        %4078 = vmatpush2.bf16.msra.mxu0 %v4027
        %4079 = vmatprep.subr.bf16.mxu0 %v4026
        %4080 = vmatpush2.bf16.msra.mxu0 %v4025
        %4081 = vmatprep.subr.bf16.mxu0 %v4024
        %4082 = vmatpush2.bf16.msra.mxu0 %v4023
        %4083 = vmatprep.subr.bf16.mxu0 %v4022
        %4084 = vmatpush2.bf16.msra.mxu0 %v4021
        %4085 = vmatprep.subr.bf16.mxu0 %v4020
        %4086 = vmatpush2.bf16.msra.mxu0 %v4019
        %4087 = vmatprep.subr.bf16.mxu0 %v4018
        %4088 = vmatpush2.bf16.msra.mxu0 %v4017
        %4089 = vmatprep.subr.bf16.mxu0 %v4016
        %4090 = vmatpush2.bf16.msra.mxu0 %v4015
        %4091 = vmatprep.subr.bf16.mxu0 %v4014
        %4092 = vmatpush2.bf16.msra.mxu0 %v4013
        %4093 = vmatprep.mubr.bf16.mxu0 %v2565
        %4094 = vmatmul.mubr.bf16.gmra.mxu0 %v2564
        %v4095 = vpop.f32.mrf.mxu0
        %v4096 = vadd.f32 %v3601, %v4095
        %v4097 = vpop.f32.mrf.mxu0
        %v4098 = vadd.f32 %v3603, %v4097
        %v4099 = vpop.f32.mrf.mxu0
        %v4100 = vadd.f32 %v3605, %v4099
        %v4101 = vpop.f32.mrf.mxu0
        %v4102 = vadd.f32 %v3607, %v4101
        %4103 = vmatprep.mubr.bf16.mxu0 %v2567
        %4104 = vmatmul.mubr.bf16.gmra.mxu0 %v2566
        %v4105 = vpop.f32.mrf.mxu0
        %v4106 = vadd.f32 %v3611, %v4105
        %v4107 = vpop.f32.mrf.mxu0
        %v4108 = vadd.f32 %v3613, %v4107
        %v4109 = vpop.f32.mrf.mxu0
        %v4110 = vadd.f32 %v3615, %v4109
        %v4111 = vpop.f32.mrf.mxu0
        %v4112 = vadd.f32 %v3617, %v4111
        %4113 = vmatprep.mubr.bf16.mxu0 %v2569
        %4114 = vmatmul.mubr.bf16.gmra.mxu0 %v2568
        %v4115 = vpop.f32.mrf.mxu0
        %v4116 = vadd.f32 %v3621, %v4115
        %v4117 = vpop.f32.mrf.mxu0
        %v4118 = vadd.f32 %v3623, %v4117
        %v4119 = vpop.f32.mrf.mxu0
        %v4120 = vadd.f32 %v3625, %v4119
        %v4121 = vpop.f32.mrf.mxu0
        %v4122 = vadd.f32 %v3627, %v4121
        %4123 = vmatprep.mubr.bf16.mxu0 %v2571
        %4124 = vmatmul.mubr.bf16.gmra.mxu0 %v2570
        %v4125 = vpop.f32.mrf.mxu0
        %v4126 = vadd.f32 %v3631, %v4125
        %v4127 = vpop.f32.mrf.mxu0
        %v4128 = vadd.f32 %v3633, %v4127
        %v4129 = vpop.f32.mrf.mxu0
        %v4130 = vadd.f32 %v3635, %v4129
        %v4131 = vpop.f32.mrf.mxu0
        %v4132 = vadd.f32 %v3637, %v4131
        %4133 = vmatprep.mubr.bf16.mxu0 %v2573
        %4134 = vmatmul.mubr.bf16.gmra.mxu0 %v2572
        %v4135 = vpop.f32.mrf.mxu0
        %v4136 = vadd.f32 %v3641, %v4135
        %v4137 = vpop.f32.mrf.mxu0
        %v4138 = vadd.f32 %v3643, %v4137
        %v4139 = vpop.f32.mrf.mxu0
        %v4140 = vadd.f32 %v3645, %v4139
        %v4141 = vpop.f32.mrf.mxu0
        %v4142 = vadd.f32 %v3647, %v4141
        %4143 = vmatprep.mubr.bf16.mxu0 %v2575
        %4144 = vmatmul.mubr.bf16.gmra.mxu0 %v2574
        %v4145 = vpop.f32.mrf.mxu0
        %v4146 = vadd.f32 %v3651, %v4145
        %v4147 = vpop.f32.mrf.mxu0
        %v4148 = vadd.f32 %v3653, %v4147
        %v4149 = vpop.f32.mrf.mxu0
        %v4150 = vadd.f32 %v3655, %v4149
        %v4151 = vpop.f32.mrf.mxu0
        %v4152 = vadd.f32 %v3657, %v4151
        %4153 = vmatprep.mubr.bf16.mxu0 %v2577
        %4154 = vmatmul.mubr.bf16.gmra.mxu0 %v2576
        %v4155 = vpop.f32.mrf.mxu0
        %v4156 = vadd.f32 %v3661, %v4155
        %v4157 = vpop.f32.mrf.mxu0
        %v4158 = vadd.f32 %v3663, %v4157
        %v4159 = vpop.f32.mrf.mxu0
        %v4160 = vpop.f32.mrf.mxu0
        %4161 = vdwg.mxu0
        %v4162 = vmax.f32 %v4096, 0.0
        %v4163 = vmax.f32 %v4098, 0.0
        %v4164 = vmax.f32 %v4100, 0.0
        %v4165 = vmax.f32 %v4102, 0.0
        %v4166 = vmax.f32 %v4106, 0.0
        %v4167 = vmax.f32 %v4108, 0.0
        %v4168 = vmax.f32 %v4110, 0.0
        %v4169 = vmax.f32 %v4112, 0.0
        %v4170 = vmax.f32 %v4116, 0.0
        %v4171 = vmax.f32 %v4118, 0.0
        %v4172 = vmax.f32 %v4120, 0.0
        %v4173 = vmax.f32 %v4122, 0.0
        %v4174 = vmax.f32 %v4126, 0.0
        %v4175 = vmax.f32 %v4128, 0.0
        %v4176 = vmax.f32 %v4130, 0.0
        %v4177 = vmax.f32 %v4132, 0.0
        %v4178 = vmax.f32 %v4136, 0.0
        %v4179 = vmax.f32 %v4138, 0.0
        %v4180 = vmax.f32 %v4140, 0.0
        %v4181 = vmax.f32 %v4142, 0.0
        %v4182 = vmax.f32 %v4146, 0.0
        %v4183 = vmax.f32 %v4148, 0.0
        %v4184 = vmax.f32 %v4150, 0.0
        %v4185 = vmax.f32 %v4152, 0.0
        %v4186 = vmax.f32 %v4156, 0.0
        %v4187 = vmax.f32 %v4158, 0.0
        %v4188 = vpack.c.bf16 %v4164, %v4162
        %v4189 = vpack.c.bf16 %v4165, %v4163
        %v4190 = vpack.c.bf16 %v4168, %v4166
        %v4191 = vpack.c.bf16 %v4169, %v4167
        %v4192 = vpack.c.bf16 %v4172, %v4170
        %v4193 = vpack.c.bf16 %v4173, %v4171
        %v4194 = vpack.c.bf16 %v4176, %v4174
        %v4195 = vpack.c.bf16 %v4177, %v4175
        %v4196 = vpack.c.bf16 %v4180, %v4178
        %v4197 = vpack.c.bf16 %v4181, %v4179
        %v4198 = vpack.c.bf16 %v4184, %v4182
        %v4199 = vpack.c.bf16 %v4185, %v4183
        %v4200 = vpack.c.bf16 %v4186, %v4186
        %v4201 = vpack.c.bf16 %v4187, %v4187
        %v4202 = vld [vmem:[%s33] sm:$0xff]
        %v4203 = vld [vmem:[%s33 + $0x8] sm:$0xff]
        %v4204 = vld [vmem:[%s33 + $0x10] sm:$0xff]
        %v4205 = vld [vmem:[%s33 + $0x18] sm:$0xff]
        %v4206 = vld [vmem:[%s33 + $0x20] sm:$0xff]
        %v4207 = vld [vmem:[%s33 + $0x28] sm:$0xff]
        %v4208 = vld [vmem:[%s33 + $0x30] sm:$0xff]
        %v4209 = vld [vmem:[%s33 + $0x38] sm:$0xff]
        %v4210 = vld [vmem:[%s33 + $0x40] sm:$0xff]
        %v4211 = vld [vmem:[%s33 + $0x48] sm:$0xff]
        %v4212 = vld [vmem:[%s33 + $0x50] sm:$0xff]
        %v4213 = vld [vmem:[%s33 + $0x58] sm:$0xff]
        %v4214 = vld [vmem:[%s33 + $0x60] sm:$0xff]
        %v4215 = vld [vmem:[%s33 + $0x68] sm:$0xff]
        %v4216 = vld [vmem:[%s33 + $0x70] sm:$0xff]
        %v4217 = vld [vmem:[%s33 + $0x78] sm:$0xff]
        %v4218 = vld [vmem:[%s33 + $0x80] sm:$0xff]
        %v4219 = vld [vmem:[%s33 + $0x88] sm:$0xff]
        %v4220 = vld [vmem:[%s33 + $0x90] sm:$0xff]
        %v4221 = vld [vmem:[%s33 + $0x98] sm:$0xff]
        %v4222 = vld [vmem:[%s33 + $0xa0] sm:$0xff]
        %v4223 = vld [vmem:[%s33 + $0xa8] sm:$0xff]
        %v4224 = vld [vmem:[%s33 + $0xb0] sm:$0xff]
        %v4225 = vld [vmem:[%s33 + $0xb8] sm:$0xff]
        %v4226 = vld [vmem:[%s33 + $0xc0] sm:$0xff]
        %v4227 = vld [vmem:[%s33 + $0xc8] sm:$0xff]
        %v4228 = vld [vmem:[%s33 + $0xd0] sm:$0xff]
        %v4229 = vld [vmem:[%s33 + $0xd8] sm:$0xff]
        %v4230 = vld [vmem:[%s33 + $0xe0] sm:$0xff]
        %v4231 = vld [vmem:[%s33 + $0xe8] sm:$0xff]
        %v4232 = vld [vmem:[%s33 + $0xf0] sm:$0xff]
        %v4233 = vld [vmem:[%s33 + $0xf8] sm:$0xff]
        %v4234 = vld [vmem:[%s35] sm:$0x3]
        %v4236 = vlaneseq
        %v4237 = vshrl.u32 %v4236, 7
        %v4238 = vsub.s32 0, %v4237
        %v4239 = vrot.slane %v4234, %v4238
        %v4240 = vlaneseq
        %v4241 = vshrl.u32 %v4240, 7
        %v4242 = vsub.s32 1, %v4241
        %v4243 = vrot.slane %v4234, %v4242
        %v4278 = vunpack.c.l.b16 %v4202
        %v4279 = vunpack.c.h.b16 %v4202
        %v4280 = vunpack.c.l.b16 %v4203
        %v4281 = vunpack.c.h.b16 %v4203
        %v4282 = vunpack.c.l.b16 %v4204
        %v4283 = vunpack.c.h.b16 %v4204
        %v4284 = vunpack.c.l.b16 %v4205
        %v4285 = vunpack.c.h.b16 %v4205
        %v4286 = vunpack.c.l.b16 %v4206
        %v4287 = vunpack.c.h.b16 %v4206
        %v4288 = vunpack.c.l.b16 %v4207
        %v4289 = vunpack.c.h.b16 %v4207
        %v4290 = vunpack.c.l.b16 %v4208
        %v4291 = vunpack.c.h.b16 %v4208
        %v4292 = vunpack.c.l.b16 %v4209
        %v4293 = vunpack.c.h.b16 %v4209
        %v4294 = vunpack.c.l.b16 %v4210
        %v4295 = vunpack.c.h.b16 %v4210
        %v4296 = vunpack.c.l.b16 %v4211
        %v4297 = vunpack.c.h.b16 %v4211
        %v4298 = vunpack.c.l.b16 %v4212
        %v4299 = vunpack.c.h.b16 %v4212
        %v4300 = vunpack.c.l.b16 %v4213
        %v4301 = vunpack.c.h.b16 %v4213
        %v4302 = vunpack.c.l.b16 %v4214
        %v4303 = vunpack.c.h.b16 %v4214
        %v4304 = vunpack.c.l.b16 %v4215
        %v4305 = vunpack.c.h.b16 %v4215
        %v4306 = vunpack.c.l.b16 %v4216
        %v4307 = vunpack.c.h.b16 %v4216
        %v4308 = vunpack.c.l.b16 %v4217
        %v4309 = vunpack.c.h.b16 %v4217
        %v4310 = vunpack.c.l.b16 %v4218
        %v4311 = vunpack.c.h.b16 %v4218
        %v4312 = vunpack.c.l.b16 %v4219
        %v4313 = vunpack.c.h.b16 %v4219
        %v4314 = vunpack.c.l.b16 %v4220
        %v4315 = vunpack.c.h.b16 %v4220
        %v4316 = vunpack.c.l.b16 %v4221
        %v4317 = vunpack.c.h.b16 %v4221
        %v4318 = vunpack.c.l.b16 %v4222
        %v4319 = vunpack.c.h.b16 %v4222
        %v4320 = vunpack.c.l.b16 %v4223
        %v4321 = vunpack.c.h.b16 %v4223
        %v4322 = vunpack.c.l.b16 %v4224
        %v4323 = vunpack.c.h.b16 %v4224
        %v4324 = vunpack.c.l.b16 %v4225
        %v4325 = vunpack.c.h.b16 %v4225
        %v4326 = vunpack.c.l.b16 %v4226
        %v4327 = vunpack.c.h.b16 %v4226
        %v4328 = vunpack.c.l.b16 %v4227
        %v4329 = vunpack.c.h.b16 %v4227
        %v4330 = vunpack.c.l.b16 %v4228
        %v4331 = vunpack.c.h.b16 %v4228
        %v4332 = vunpack.c.l.b16 %v4229
        %v4333 = vunpack.c.h.b16 %v4229
        %v4334 = vunpack.c.l.b16 %v4230
        %v4335 = vunpack.c.h.b16 %v4230
        %v4336 = vunpack.c.l.b16 %v4231
        %v4337 = vunpack.c.h.b16 %v4231
        %v4338 = vunpack.c.l.b16 %v4232
        %v4339 = vunpack.c.h.b16 %v4232
        %v4340 = vunpack.c.l.b16 %v4233
        %v4341 = vunpack.c.h.b16 %v4233
        %v4342 = vpack.c.b16 %v4280, %v4278
        %v4343 = vpack.c.b16 %v4281, %v4279
        %v4344 = vpack.c.b16 %v4284, %v4282
        %v4345 = vpack.c.b16 %v4285, %v4283
        %v4346 = vpack.c.b16 %v4288, %v4286
        %v4347 = vpack.c.b16 %v4289, %v4287
        %v4348 = vpack.c.b16 %v4292, %v4290
        %v4349 = vpack.c.b16 %v4293, %v4291
        %v4350 = vpack.c.b16 %v4296, %v4294
        %v4351 = vpack.c.b16 %v4297, %v4295
        %v4352 = vpack.c.b16 %v4300, %v4298
        %v4353 = vpack.c.b16 %v4301, %v4299
        %v4354 = vpack.c.b16 %v4304, %v4302
        %v4355 = vpack.c.b16 %v4305, %v4303
        %v4356 = vpack.c.b16 %v4308, %v4306
        %v4357 = vpack.c.b16 %v4309, %v4307
        %v4358 = vpack.c.b16 %v4312, %v4310
        %v4359 = vpack.c.b16 %v4313, %v4311
        %v4360 = vpack.c.b16 %v4316, %v4314
        %v4361 = vpack.c.b16 %v4317, %v4315
        %v4362 = vpack.c.b16 %v4320, %v4318
        %v4363 = vpack.c.b16 %v4321, %v4319
        %v4364 = vpack.c.b16 %v4324, %v4322
        %v4365 = vpack.c.b16 %v4325, %v4323
        %v4366 = vpack.c.b16 %v4328, %v4326
        %v4367 = vpack.c.b16 %v4329, %v4327
        %v4368 = vpack.c.b16 %v4332, %v4330
        %v4369 = vpack.c.b16 %v4333, %v4331
        %v4370 = vpack.c.b16 %v4336, %v4334
        %v4371 = vpack.c.b16 %v4337, %v4335
        %v4372 = vpack.c.b16 %v4340, %v4338
        %v4373 = vpack.c.b16 %v4341, %v4339
        %4406 = vmatprep.subr.bf16.mxu0 %v4357
        %4407 = vmatpush1.bf16.msra.mxu0 %v4356
        %4408 = vmatprep.subr.bf16.mxu0 %v4355
        %4409 = vmatpush1.bf16.msra.mxu0 %v4354
        %4410 = vmatprep.subr.bf16.mxu0 %v4353
        %4411 = vmatpush1.bf16.msra.mxu0 %v4352
        %4412 = vmatprep.subr.bf16.mxu0 %v4351
        %4413 = vmatpush1.bf16.msra.mxu0 %v4350
        %4414 = vmatprep.subr.bf16.mxu0 %v4349
        %4415 = vmatpush1.bf16.msra.mxu0 %v4348
        %4416 = vmatprep.subr.bf16.mxu0 %v4347
        %4417 = vmatpush1.bf16.msra.mxu0 %v4346
        %4418 = vmatprep.subr.bf16.mxu0 %v4345
        %4419 = vmatpush1.bf16.msra.mxu0 %v4344
        %4420 = vmatprep.subr.bf16.mxu0 %v4343
        %4421 = vmatpush1.bf16.msra.mxu0 %v4342
        %4422 = vmatprep.subr.bf16.mxu0 %v4373
        %4423 = vmatpush2.bf16.msra.mxu0 %v4372
        %4424 = vmatprep.subr.bf16.mxu0 %v4371
        %4425 = vmatpush2.bf16.msra.mxu0 %v4370
        %4426 = vmatprep.subr.bf16.mxu0 %v4369
        %4427 = vmatpush2.bf16.msra.mxu0 %v4368
        %4428 = vmatprep.subr.bf16.mxu0 %v4367
        %4429 = vmatpush2.bf16.msra.mxu0 %v4366
        %4430 = vmatprep.subr.bf16.mxu0 %v4365
        %4431 = vmatpush2.bf16.msra.mxu0 %v4364
        %4432 = vmatprep.subr.bf16.mxu0 %v4363
        %4433 = vmatpush2.bf16.msra.mxu0 %v4362
        %4434 = vmatprep.subr.bf16.mxu0 %v4361
        %4435 = vmatpush2.bf16.msra.mxu0 %v4360
        %4436 = vmatprep.subr.bf16.mxu0 %v4359
        %4437 = vmatpush2.bf16.msra.mxu0 %v4358
        %4438 = vmatprep.mubr.bf16.mxu0 %v4189
        %4439 = vmatmul.mubr.bf16.gmra.mxu0 %v4188
        %v4440 = vpop.f32.mrf.mxu0
        %v4441 = vadd.f32 %v4239, %v4440
        %v4442 = vpop.f32.mrf.mxu0
        %v4443 = vadd.f32 %v4243, %v4442
        %v4444 = vpop.f32.mrf.mxu0
        %v4445 = vadd.f32 %v4239, %v4444
        %v4446 = vpop.f32.mrf.mxu0
        %v4447 = vadd.f32 %v4243, %v4446
        %4448 = vmatprep.mubr.bf16.mxu0 %v4191
        %4449 = vmatmul.mubr.bf16.gmra.mxu0 %v4190
        %v4450 = vpop.f32.mrf.mxu0
        %v4451 = vadd.f32 %v4239, %v4450
        %v4452 = vpop.f32.mrf.mxu0
        %v4453 = vadd.f32 %v4243, %v4452
        %v4454 = vpop.f32.mrf.mxu0
        %v4455 = vadd.f32 %v4239, %v4454
        %v4456 = vpop.f32.mrf.mxu0
        %v4457 = vadd.f32 %v4243, %v4456
        %4458 = vmatprep.mubr.bf16.mxu0 %v4193
        %4459 = vmatmul.mubr.bf16.gmra.mxu0 %v4192
        %v4460 = vpop.f32.mrf.mxu0
        %v4461 = vadd.f32 %v4239, %v4460
        %v4462 = vpop.f32.mrf.mxu0
        %v4463 = vadd.f32 %v4243, %v4462
        %v4464 = vpop.f32.mrf.mxu0
        %v4465 = vadd.f32 %v4239, %v4464
        %v4466 = vpop.f32.mrf.mxu0
        %v4467 = vadd.f32 %v4243, %v4466
        %4468 = vmatprep.mubr.bf16.mxu0 %v4195
        %4469 = vmatmul.mubr.bf16.gmra.mxu0 %v4194
        %v4470 = vpop.f32.mrf.mxu0
        %v4471 = vadd.f32 %v4239, %v4470
        %v4472 = vpop.f32.mrf.mxu0
        %v4473 = vadd.f32 %v4243, %v4472
        %v4474 = vpop.f32.mrf.mxu0
        %v4475 = vadd.f32 %v4239, %v4474
        %v4476 = vpop.f32.mrf.mxu0
        %v4477 = vadd.f32 %v4243, %v4476
        %4478 = vmatprep.mubr.bf16.mxu0 %v4197
        %4479 = vmatmul.mubr.bf16.gmra.mxu0 %v4196
        %v4480 = vpop.f32.mrf.mxu0
        %v4481 = vadd.f32 %v4239, %v4480
        %v4482 = vpop.f32.mrf.mxu0
        %v4483 = vadd.f32 %v4243, %v4482
        %v4484 = vpop.f32.mrf.mxu0
        %v4485 = vadd.f32 %v4239, %v4484
        %v4486 = vpop.f32.mrf.mxu0
        %v4487 = vadd.f32 %v4243, %v4486
        %4488 = vmatprep.mubr.bf16.mxu0 %v4199
        %4489 = vmatmul.mubr.bf16.gmra.mxu0 %v4198
        %v4490 = vpop.f32.mrf.mxu0
        %v4491 = vadd.f32 %v4239, %v4490
        %v4492 = vpop.f32.mrf.mxu0
        %v4493 = vadd.f32 %v4243, %v4492
        %v4494 = vpop.f32.mrf.mxu0
        %v4495 = vadd.f32 %v4239, %v4494
        %v4496 = vpop.f32.mrf.mxu0
        %v4497 = vadd.f32 %v4243, %v4496
        %4498 = vmatprep.mubr.bf16.mxu0 %v4201
        %4499 = vmatmul.mubr.bf16.gmra.mxu0 %v4200
        %v4500 = vpop.f32.mrf.mxu0
        %v4501 = vadd.f32 %v4239, %v4500
        %v4502 = vpop.f32.mrf.mxu0
        %v4503 = vadd.f32 %v4243, %v4502
        %v4504 = vpop.f32.mrf.mxu0
        %v4505 = vpop.f32.mrf.mxu0
        %4506 = vdwg.mxu0
        %v4507 = vmax.f32 %v4441, 0.0
        %v4508 = vmax.f32 %v4443, 0.0
        %v4509 = vmax.f32 %v4445, 0.0
        %v4510 = vmax.f32 %v4447, 0.0
        %v4511 = vmax.f32 %v4451, 0.0
        %v4512 = vmax.f32 %v4453, 0.0
        %v4513 = vmax.f32 %v4455, 0.0
        %v4514 = vmax.f32 %v4457, 0.0
        %v4515 = vmax.f32 %v4461, 0.0
        %v4516 = vmax.f32 %v4463, 0.0
        %v4517 = vmax.f32 %v4465, 0.0
        %v4518 = vmax.f32 %v4467, 0.0
        %v4519 = vmax.f32 %v4471, 0.0
        %v4520 = vmax.f32 %v4473, 0.0
        %v4521 = vmax.f32 %v4475, 0.0
        %v4522 = vmax.f32 %v4477, 0.0
        %v4523 = vmax.f32 %v4481, 0.0
        %v4524 = vmax.f32 %v4483, 0.0
        %v4525 = vmax.f32 %v4485, 0.0
        %v4526 = vmax.f32 %v4487, 0.0
        %v4527 = vmax.f32 %v4491, 0.0
        %v4528 = vmax.f32 %v4493, 0.0
        %v4529 = vmax.f32 %v4495, 0.0
        %v4530 = vmax.f32 %v4497, 0.0
        %v4531 = vmax.f32 %v4501, 0.0
        %v4532 = vmax.f32 %v4503, 0.0
        %v4533 = vpack.c.bf16 %v4509, %v4507
        %v4534 = vpack.c.bf16 %v4510, %v4508
        %v4535 = vpack.c.bf16 %v4513, %v4511
        %v4536 = vpack.c.bf16 %v4514, %v4512
        %v4537 = vpack.c.bf16 %v4517, %v4515
        %v4538 = vpack.c.bf16 %v4518, %v4516
        %v4539 = vpack.c.bf16 %v4521, %v4519
        %v4540 = vpack.c.bf16 %v4522, %v4520
        %v4541 = vpack.c.bf16 %v4525, %v4523
        %v4542 = vpack.c.bf16 %v4526, %v4524
        %v4543 = vpack.c.bf16 %v4529, %v4527
        %v4544 = vpack.c.bf16 %v4530, %v4528
        %v4545 = vpack.c.bf16 %v4531, %v4531
        %v4546 = vpack.c.bf16 %v4532, %v4532
        %v4547 = vld [vmem:[%s37] sm:$0xff]
        %v4548 = vld [vmem:[%s37 + $0x8] sm:$0xff]
        %v4549 = vld [vmem:[%s37 + $0x10] sm:$0xff]
        %v4550 = vld [vmem:[%s37 + $0x18] sm:$0xff]
        %v4551 = vld [vmem:[%s37 + $0x20] sm:$0xff]
        %v4552 = vld [vmem:[%s37 + $0x28] sm:$0xff]
        %v4553 = vld [vmem:[%s37 + $0x30] sm:$0xff]
        %v4554 = vld [vmem:[%s37 + $0x38] sm:$0xff]
        %v4555 = vld [vmem:[%s37 + $0x40] sm:$0xff]
        %v4556 = vld [vmem:[%s37 + $0x48] sm:$0xff]
        %v4557 = vld [vmem:[%s37 + $0x50] sm:$0xff]
        %v4558 = vld [vmem:[%s37 + $0x58] sm:$0xff]
        %v4559 = vld [vmem:[%s37 + $0x60] sm:$0xff]
        %v4560 = vld [vmem:[%s37 + $0x68] sm:$0xff]
        %v4561 = vld [vmem:[%s37 + $0x70] sm:$0xff]
        %v4562 = vld [vmem:[%s37 + $0x78] sm:$0xff]
        %v4563 = vld [vmem:[%s37 + $0x80] sm:$0xff]
        %v4564 = vld [vmem:[%s37 + $0x88] sm:$0xff]
        %v4565 = vld [vmem:[%s37 + $0x90] sm:$0xff]
        %v4566 = vld [vmem:[%s37 + $0x98] sm:$0xff]
        %v4567 = vld [vmem:[%s37 + $0xa0] sm:$0xff]
        %v4568 = vld [vmem:[%s37 + $0xa8] sm:$0xff]
        %v4569 = vld [vmem:[%s37 + $0xb0] sm:$0xff]
        %v4570 = vld [vmem:[%s37 + $0xb8] sm:$0xff]
        %v4571 = vld [vmem:[%s37 + $0xc0] sm:$0xff]
        %v4572 = vld [vmem:[%s37 + $0xc8] sm:$0xff]
        %v4573 = vld [vmem:[%s37 + $0xd0] sm:$0xff]
        %v4574 = vld [vmem:[%s37 + $0xd8] sm:$0xff]
        %v4575 = vld [vmem:[%s37 + $0xe0] sm:$0xff]
        %v4576 = vld [vmem:[%s37 + $0xe8] sm:$0xff]
        %v4577 = vld [vmem:[%s37 + $0xf0] sm:$0xff]
        %v4578 = vld [vmem:[%s37 + $0xf8] sm:$0xff]
        %v4579 = vld [vmem:[%s39] sm:$0x3]
        %v4581 = vlaneseq
        %v4582 = vshrl.u32 %v4581, 7
        %v4583 = vsub.s32 0, %v4582
        %v4584 = vrot.slane %v4579, %v4583
        %v4585 = vlaneseq
        %v4586 = vshrl.u32 %v4585, 7
        %v4587 = vsub.s32 1, %v4586
        %v4588 = vrot.slane %v4579, %v4587
        %v4623 = vunpack.c.l.b16 %v4547
        %v4624 = vunpack.c.h.b16 %v4547
        %v4625 = vunpack.c.l.b16 %v4548
        %v4626 = vunpack.c.h.b16 %v4548
        %v4627 = vunpack.c.l.b16 %v4549
        %v4628 = vunpack.c.h.b16 %v4549
        %v4629 = vunpack.c.l.b16 %v4550
        %v4630 = vunpack.c.h.b16 %v4550
        %v4631 = vunpack.c.l.b16 %v4551
        %v4632 = vunpack.c.h.b16 %v4551
        %v4633 = vunpack.c.l.b16 %v4552
        %v4634 = vunpack.c.h.b16 %v4552
        %v4635 = vunpack.c.l.b16 %v4553
        %v4636 = vunpack.c.h.b16 %v4553
        %v4637 = vunpack.c.l.b16 %v4554
        %v4638 = vunpack.c.h.b16 %v4554
        %v4639 = vunpack.c.l.b16 %v4555
        %v4640 = vunpack.c.h.b16 %v4555
        %v4641 = vunpack.c.l.b16 %v4556
        %v4642 = vunpack.c.h.b16 %v4556
        %v4643 = vunpack.c.l.b16 %v4557
        %v4644 = vunpack.c.h.b16 %v4557
        %v4645 = vunpack.c.l.b16 %v4558
        %v4646 = vunpack.c.h.b16 %v4558
        %v4647 = vunpack.c.l.b16 %v4559
        %v4648 = vunpack.c.h.b16 %v4559
        %v4649 = vunpack.c.l.b16 %v4560
        %v4650 = vunpack.c.h.b16 %v4560
        %v4651 = vunpack.c.l.b16 %v4561
        %v4652 = vunpack.c.h.b16 %v4561
        %v4653 = vunpack.c.l.b16 %v4562
        %v4654 = vunpack.c.h.b16 %v4562
        %v4655 = vunpack.c.l.b16 %v4563
        %v4656 = vunpack.c.h.b16 %v4563
        %v4657 = vunpack.c.l.b16 %v4564
        %v4658 = vunpack.c.h.b16 %v4564
        %v4659 = vunpack.c.l.b16 %v4565
        %v4660 = vunpack.c.h.b16 %v4565
        %v4661 = vunpack.c.l.b16 %v4566
        %v4662 = vunpack.c.h.b16 %v4566
        %v4663 = vunpack.c.l.b16 %v4567
        %v4664 = vunpack.c.h.b16 %v4567
        %v4665 = vunpack.c.l.b16 %v4568
        %v4666 = vunpack.c.h.b16 %v4568
        %v4667 = vunpack.c.l.b16 %v4569
        %v4668 = vunpack.c.h.b16 %v4569
        %v4669 = vunpack.c.l.b16 %v4570
        %v4670 = vunpack.c.h.b16 %v4570
        %v4671 = vunpack.c.l.b16 %v4571
        %v4672 = vunpack.c.h.b16 %v4571
        %v4673 = vunpack.c.l.b16 %v4572
        %v4674 = vunpack.c.h.b16 %v4572
        %v4675 = vunpack.c.l.b16 %v4573
        %v4676 = vunpack.c.h.b16 %v4573
        %v4677 = vunpack.c.l.b16 %v4574
        %v4678 = vunpack.c.h.b16 %v4574
        %v4679 = vunpack.c.l.b16 %v4575
        %v4680 = vunpack.c.h.b16 %v4575
        %v4681 = vunpack.c.l.b16 %v4576
        %v4682 = vunpack.c.h.b16 %v4576
        %v4683 = vunpack.c.l.b16 %v4577
        %v4684 = vunpack.c.h.b16 %v4577
        %v4685 = vunpack.c.l.b16 %v4578
        %v4686 = vunpack.c.h.b16 %v4578
        %v4687 = vpack.c.b16 %v4625, %v4623
        %v4688 = vpack.c.b16 %v4626, %v4624
        %v4689 = vpack.c.b16 %v4629, %v4627
        %v4690 = vpack.c.b16 %v4630, %v4628
        %v4691 = vpack.c.b16 %v4633, %v4631
        %v4692 = vpack.c.b16 %v4634, %v4632
        %v4693 = vpack.c.b16 %v4637, %v4635
        %v4694 = vpack.c.b16 %v4638, %v4636
        %v4695 = vpack.c.b16 %v4641, %v4639
        %v4696 = vpack.c.b16 %v4642, %v4640
        %v4697 = vpack.c.b16 %v4645, %v4643
        %v4698 = vpack.c.b16 %v4646, %v4644
        %v4699 = vpack.c.b16 %v4649, %v4647
        %v4700 = vpack.c.b16 %v4650, %v4648
        %v4701 = vpack.c.b16 %v4653, %v4651
        %v4702 = vpack.c.b16 %v4654, %v4652
        %v4703 = vpack.c.b16 %v4657, %v4655
        %v4704 = vpack.c.b16 %v4658, %v4656
        %v4705 = vpack.c.b16 %v4661, %v4659
        %v4706 = vpack.c.b16 %v4662, %v4660
        %v4707 = vpack.c.b16 %v4665, %v4663
        %v4708 = vpack.c.b16 %v4666, %v4664
        %v4709 = vpack.c.b16 %v4669, %v4667
        %v4710 = vpack.c.b16 %v4670, %v4668
        %v4711 = vpack.c.b16 %v4673, %v4671
        %v4712 = vpack.c.b16 %v4674, %v4672
        %v4713 = vpack.c.b16 %v4677, %v4675
        %v4714 = vpack.c.b16 %v4678, %v4676
        %v4715 = vpack.c.b16 %v4681, %v4679
        %v4716 = vpack.c.b16 %v4682, %v4680
        %v4717 = vpack.c.b16 %v4685, %v4683
        %v4718 = vpack.c.b16 %v4686, %v4684
        %4751 = vmatprep.subr.bf16.mxu0 %v4702
        %4752 = vmatpush1.bf16.msra.mxu0 %v4701
        %4753 = vmatprep.subr.bf16.mxu0 %v4700
        %4754 = vmatpush1.bf16.msra.mxu0 %v4699
        %4755 = vmatprep.subr.bf16.mxu0 %v4698
        %4756 = vmatpush1.bf16.msra.mxu0 %v4697
        %4757 = vmatprep.subr.bf16.mxu0 %v4696
        %4758 = vmatpush1.bf16.msra.mxu0 %v4695
        %4759 = vmatprep.subr.bf16.mxu0 %v4694
        %4760 = vmatpush1.bf16.msra.mxu0 %v4693
        %4761 = vmatprep.subr.bf16.mxu0 %v4692
        %4762 = vmatpush1.bf16.msra.mxu0 %v4691
        %4763 = vmatprep.subr.bf16.mxu0 %v4690
        %4764 = vmatpush1.bf16.msra.mxu0 %v4689
        %4765 = vmatprep.subr.bf16.mxu0 %v4688
        %4766 = vmatpush1.bf16.msra.mxu0 %v4687
        %4767 = vmatprep.subr.bf16.mxu0 %v4718
        %4768 = vmatpush2.bf16.msra.mxu0 %v4717
        %4769 = vmatprep.subr.bf16.mxu0 %v4716
        %4770 = vmatpush2.bf16.msra.mxu0 %v4715
        %4771 = vmatprep.subr.bf16.mxu0 %v4714
        %4772 = vmatpush2.bf16.msra.mxu0 %v4713
        %4773 = vmatprep.subr.bf16.mxu0 %v4712
        %4774 = vmatpush2.bf16.msra.mxu0 %v4711
        %4775 = vmatprep.subr.bf16.mxu0 %v4710
        %4776 = vmatpush2.bf16.msra.mxu0 %v4709
        %4777 = vmatprep.subr.bf16.mxu0 %v4708
        %4778 = vmatpush2.bf16.msra.mxu0 %v4707
        %4779 = vmatprep.subr.bf16.mxu0 %v4706
        %4780 = vmatpush2.bf16.msra.mxu0 %v4705
        %4781 = vmatprep.subr.bf16.mxu0 %v4704
        %4782 = vmatpush2.bf16.msra.mxu0 %v4703
        %4783 = vmatprep.mubr.bf16.mxu0 %v4534
        %4784 = vmatmul.mubr.bf16.gmra.mxu0 %v4533
        %v4785 = vpop.f32.mrf.mxu0
        %v4786 = vadd.f32 %v4584, %v4785
        %v4787 = vpop.f32.mrf.mxu0
        %v4788 = vadd.f32 %v4588, %v4787
        %v4789 = vpop.f32.mrf.mxu0
        %v4790 = vadd.f32 %v4584, %v4789
        %v4791 = vpop.f32.mrf.mxu0
        %v4792 = vadd.f32 %v4588, %v4791
        %4793 = vmatprep.mubr.bf16.mxu0 %v4536
        %4794 = vmatmul.mubr.bf16.gmra.mxu0 %v4535
        %v4795 = vpop.f32.mrf.mxu0
        %v4796 = vadd.f32 %v4584, %v4795
        %v4797 = vpop.f32.mrf.mxu0
        %v4798 = vadd.f32 %v4588, %v4797
        %v4799 = vpop.f32.mrf.mxu0
        %v4800 = vadd.f32 %v4584, %v4799
        %v4801 = vpop.f32.mrf.mxu0
        %v4802 = vadd.f32 %v4588, %v4801
        %4803 = vmatprep.mubr.bf16.mxu0 %v4538
        %4804 = vmatmul.mubr.bf16.gmra.mxu0 %v4537
        %v4805 = vpop.f32.mrf.mxu0
        %v4806 = vadd.f32 %v4584, %v4805
        %v4807 = vpop.f32.mrf.mxu0
        %v4808 = vadd.f32 %v4588, %v4807
        %v4809 = vpop.f32.mrf.mxu0
        %v4810 = vadd.f32 %v4584, %v4809
        %v4811 = vpop.f32.mrf.mxu0
        %v4812 = vadd.f32 %v4588, %v4811
        %4813 = vmatprep.mubr.bf16.mxu0 %v4540
        %4814 = vmatmul.mubr.bf16.gmra.mxu0 %v4539
        %v4815 = vpop.f32.mrf.mxu0
        %v4816 = vadd.f32 %v4584, %v4815
        %v4817 = vpop.f32.mrf.mxu0
        %v4818 = vadd.f32 %v4588, %v4817
        %v4819 = vpop.f32.mrf.mxu0
        %v4820 = vadd.f32 %v4584, %v4819
        %v4821 = vpop.f32.mrf.mxu0
        %v4822 = vadd.f32 %v4588, %v4821
        %4823 = vmatprep.mubr.bf16.mxu0 %v4542
        %4824 = vmatmul.mubr.bf16.gmra.mxu0 %v4541
        %v4825 = vpop.f32.mrf.mxu0
        %v4826 = vadd.f32 %v4584, %v4825
        %v4827 = vpop.f32.mrf.mxu0
        %v4828 = vadd.f32 %v4588, %v4827
        %v4829 = vpop.f32.mrf.mxu0
        %v4830 = vadd.f32 %v4584, %v4829
        %v4831 = vpop.f32.mrf.mxu0
        %v4832 = vadd.f32 %v4588, %v4831
        %4833 = vmatprep.mubr.bf16.mxu0 %v4544
        %4834 = vmatmul.mubr.bf16.gmra.mxu0 %v4543
        %v4835 = vpop.f32.mrf.mxu0
        %v4836 = vadd.f32 %v4584, %v4835
        %v4837 = vpop.f32.mrf.mxu0
        %v4838 = vadd.f32 %v4588, %v4837
        %v4839 = vpop.f32.mrf.mxu0
        %v4840 = vadd.f32 %v4584, %v4839
        %v4841 = vpop.f32.mrf.mxu0
        %v4842 = vadd.f32 %v4588, %v4841
        %4843 = vmatprep.mubr.bf16.mxu0 %v4546
        %4844 = vmatmul.mubr.bf16.gmra.mxu0 %v4545
        %v4845 = vpop.f32.mrf.mxu0
        %v4846 = vadd.f32 %v4584, %v4845
        %v4847 = vpop.f32.mrf.mxu0
        %v4848 = vadd.f32 %v4588, %v4847
        %v4849 = vpop.f32.mrf.mxu0
        %v4850 = vpop.f32.mrf.mxu0
        %4851 = vdwg.mxu0
        %v4852 = vmax.f32 %v4786, 0.0
        %v4853 = vmax.f32 %v4788, 0.0
        %v4854 = vmax.f32 %v4790, 0.0
        %v4855 = vmax.f32 %v4792, 0.0
        %v4856 = vmax.f32 %v4796, 0.0
        %v4857 = vmax.f32 %v4798, 0.0
        %v4858 = vmax.f32 %v4800, 0.0
        %v4859 = vmax.f32 %v4802, 0.0
        %v4860 = vmax.f32 %v4806, 0.0
        %v4861 = vmax.f32 %v4808, 0.0
        %v4862 = vmax.f32 %v4810, 0.0
        %v4863 = vmax.f32 %v4812, 0.0
        %v4864 = vmax.f32 %v4816, 0.0
        %v4865 = vmax.f32 %v4818, 0.0
        %v4866 = vmax.f32 %v4820, 0.0
        %v4867 = vmax.f32 %v4822, 0.0
        %v4868 = vmax.f32 %v4826, 0.0
        %v4869 = vmax.f32 %v4828, 0.0
        %v4870 = vmax.f32 %v4830, 0.0
        %v4871 = vmax.f32 %v4832, 0.0
        %v4872 = vmax.f32 %v4836, 0.0
        %v4873 = vmax.f32 %v4838, 0.0
        %v4874 = vmax.f32 %v4840, 0.0
        %v4875 = vmax.f32 %v4842, 0.0
        %v4876 = vmax.f32 %v4846, 0.0
        %v4877 = vmax.f32 %v4848, 0.0
        %v4878 = vpack.c.bf16 %v4854, %v4852
        %v4879 = vpack.c.bf16 %v4855, %v4853
        %v4880 = vpack.c.bf16 %v4858, %v4856
        %v4881 = vpack.c.bf16 %v4859, %v4857
        %v4882 = vpack.c.bf16 %v4862, %v4860
        %v4883 = vpack.c.bf16 %v4863, %v4861
        %v4884 = vpack.c.bf16 %v4866, %v4864
        %v4885 = vpack.c.bf16 %v4867, %v4865
        %v4886 = vpack.c.bf16 %v4870, %v4868
        %v4887 = vpack.c.bf16 %v4871, %v4869
        %v4888 = vpack.c.bf16 %v4874, %v4872
        %v4889 = vpack.c.bf16 %v4875, %v4873
        %v4890 = vpack.c.bf16 %v4876, %v4876
        %v4891 = vpack.c.bf16 %v4877, %v4877
        %v4892 = vld [vmem:[#allocation4] sm:$0xff]
        %v4893 = vld [vmem:[#allocation4 + $0x8] sm:$0xff]
        %v4894 = vld [vmem:[#allocation4 + $0x10] sm:$0xff]
        %v4895 = vld [vmem:[#allocation4 + $0x18] sm:$0xff]
        %v4896 = vld [vmem:[#allocation4 + $0x20] sm:$0xff]
        %v4897 = vld [vmem:[#allocation4 + $0x28] sm:$0xff]
        %v4898 = vld [vmem:[#allocation4 + $0x30] sm:$0xff]
        %v4899 = vld [vmem:[#allocation4 + $0x38] sm:$0xff]
        %v4900 = vld [vmem:[#allocation4 + $0x40] sm:$0xff]
        %v4901 = vld [vmem:[#allocation4 + $0x48] sm:$0xff]
        %v4902 = vld [vmem:[#allocation4 + $0x50] sm:$0xff]
        %v4903 = vld [vmem:[#allocation4 + $0x58] sm:$0xff]
        %v4904 = vld [vmem:[#allocation4 + $0x60] sm:$0xff]
        %v4905 = vld [vmem:[#allocation4 + $0x68] sm:$0xff]
        %v4906 = vld [vmem:[#allocation4 + $0x70] sm:$0xff]
        %v4907 = vld [vmem:[#allocation4 + $0x78] sm:$0xff]
        %v4908 = vld [vmem:[#allocation4 + $0x80] sm:$0xff]
        %v4909 = vld [vmem:[#allocation4 + $0x88] sm:$0xff]
        %v4910 = vld [vmem:[#allocation4 + $0x90] sm:$0xff]
        %v4911 = vld [vmem:[#allocation4 + $0x98] sm:$0xff]
        %v4912 = vld [vmem:[#allocation4 + $0xa0] sm:$0xff]
        %v4913 = vld [vmem:[#allocation4 + $0xa8] sm:$0xff]
        %v4914 = vld [vmem:[#allocation4 + $0xb0] sm:$0xff]
        %v4915 = vld [vmem:[#allocation4 + $0xb8] sm:$0xff]
        %v4916 = vld [vmem:[#allocation4 + $0xc0] sm:$0xff]
        %v4917 = vld [vmem:[#allocation4 + $0xc8] sm:$0xff]
        %v4918 = vld [vmem:[#allocation4 + $0xd0] sm:$0xff]
        %v4919 = vld [vmem:[#allocation4 + $0xd8] sm:$0xff]
        %v4920 = vld [vmem:[#allocation4 + $0xe0] sm:$0xff]
        %v4921 = vld [vmem:[#allocation4 + $0xe8] sm:$0xff]
        %v4922 = vld [vmem:[#allocation4 + $0xf0] sm:$0xff]
        %v4923 = vld [vmem:[#allocation4 + $0xf8] sm:$0xff]
        %v4924 = vld [vmem:[%s43] sm:$0x3]
        %v4926 = vlaneseq
        %v4927 = vshrl.u32 %v4926, 7
        %v4928 = vsub.s32 0, %v4927
        %v4929 = vrot.slane %v4924, %v4928
        %v4930 = vlaneseq
        %v4931 = vshrl.u32 %v4930, 7
        %v4932 = vsub.s32 1, %v4931
        %v4933 = vrot.slane %v4924, %v4932
        %v4968 = vunpack.c.l.b16 %v4892
        %v4969 = vunpack.c.h.b16 %v4892
        %v4970 = vunpack.c.l.b16 %v4893
        %v4971 = vunpack.c.h.b16 %v4893
        %v4972 = vunpack.c.l.b16 %v4894
        %v4973 = vunpack.c.h.b16 %v4894
        %v4974 = vunpack.c.l.b16 %v4895
        %v4975 = vunpack.c.h.b16 %v4895
        %v4976 = vunpack.c.l.b16 %v4896
        %v4977 = vunpack.c.h.b16 %v4896
        %v4978 = vunpack.c.l.b16 %v4897
        %v4979 = vunpack.c.h.b16 %v4897
        %v4980 = vunpack.c.l.b16 %v4898
        %v4981 = vunpack.c.h.b16 %v4898
        %v4982 = vunpack.c.l.b16 %v4899
        %v4983 = vunpack.c.h.b16 %v4899
        %v4984 = vunpack.c.l.b16 %v4900
        %v4985 = vunpack.c.h.b16 %v4900
        %v4986 = vunpack.c.l.b16 %v4901
        %v4987 = vunpack.c.h.b16 %v4901
        %v4988 = vunpack.c.l.b16 %v4902
        %v4989 = vunpack.c.h.b16 %v4902
        %v4990 = vunpack.c.l.b16 %v4903
        %v4991 = vunpack.c.h.b16 %v4903
        %v4992 = vunpack.c.l.b16 %v4904
        %v4993 = vunpack.c.h.b16 %v4904
        %v4994 = vunpack.c.l.b16 %v4905
        %v4995 = vunpack.c.h.b16 %v4905
        %v4996 = vunpack.c.l.b16 %v4906
        %v4997 = vunpack.c.h.b16 %v4906
        %v4998 = vunpack.c.l.b16 %v4907
        %v4999 = vunpack.c.h.b16 %v4907
        %v5000 = vunpack.c.l.b16 %v4908
        %v5001 = vunpack.c.h.b16 %v4908
        %v5002 = vunpack.c.l.b16 %v4909
        %v5003 = vunpack.c.h.b16 %v4909
        %v5004 = vunpack.c.l.b16 %v4910
        %v5005 = vunpack.c.h.b16 %v4910
        %v5006 = vunpack.c.l.b16 %v4911
        %v5007 = vunpack.c.h.b16 %v4911
        %v5008 = vunpack.c.l.b16 %v4912
        %v5009 = vunpack.c.h.b16 %v4912
        %v5010 = vunpack.c.l.b16 %v4913
        %v5011 = vunpack.c.h.b16 %v4913
        %v5012 = vunpack.c.l.b16 %v4914
        %v5013 = vunpack.c.h.b16 %v4914
        %v5014 = vunpack.c.l.b16 %v4915
        %v5015 = vunpack.c.h.b16 %v4915
        %v5016 = vunpack.c.l.b16 %v4916
        %v5017 = vunpack.c.h.b16 %v4916
        %v5018 = vunpack.c.l.b16 %v4917
        %v5019 = vunpack.c.h.b16 %v4917
        %v5020 = vunpack.c.l.b16 %v4918
        %v5021 = vunpack.c.h.b16 %v4918
        %v5022 = vunpack.c.l.b16 %v4919
        %v5023 = vunpack.c.h.b16 %v4919
        %v5024 = vunpack.c.l.b16 %v4920
        %v5025 = vunpack.c.h.b16 %v4920
        %v5026 = vunpack.c.l.b16 %v4921
        %v5027 = vunpack.c.h.b16 %v4921
        %v5028 = vunpack.c.l.b16 %v4922
        %v5029 = vunpack.c.h.b16 %v4922
        %v5030 = vunpack.c.l.b16 %v4923
        %v5031 = vunpack.c.h.b16 %v4923
        %v5032 = vpack.c.b16 %v4970, %v4968
        %v5033 = vpack.c.b16 %v4971, %v4969
        %v5034 = vpack.c.b16 %v4974, %v4972
        %v5035 = vpack.c.b16 %v4975, %v4973
        %v5036 = vpack.c.b16 %v4978, %v4976
        %v5037 = vpack.c.b16 %v4979, %v4977
        %v5038 = vpack.c.b16 %v4982, %v4980
        %v5039 = vpack.c.b16 %v4983, %v4981
        %v5040 = vpack.c.b16 %v4986, %v4984
        %v5041 = vpack.c.b16 %v4987, %v4985
        %v5042 = vpack.c.b16 %v4990, %v4988
        %v5043 = vpack.c.b16 %v4991, %v4989
        %v5044 = vpack.c.b16 %v4994, %v4992
        %v5045 = vpack.c.b16 %v4995, %v4993
        %v5046 = vpack.c.b16 %v4998, %v4996
        %v5047 = vpack.c.b16 %v4999, %v4997
        %v5048 = vpack.c.b16 %v5002, %v5000
        %v5049 = vpack.c.b16 %v5003, %v5001
        %v5050 = vpack.c.b16 %v5006, %v5004
        %v5051 = vpack.c.b16 %v5007, %v5005
        %v5052 = vpack.c.b16 %v5010, %v5008
        %v5053 = vpack.c.b16 %v5011, %v5009
        %v5054 = vpack.c.b16 %v5014, %v5012
        %v5055 = vpack.c.b16 %v5015, %v5013
        %v5056 = vpack.c.b16 %v5018, %v5016
        %v5057 = vpack.c.b16 %v5019, %v5017
        %v5058 = vpack.c.b16 %v5022, %v5020
        %v5059 = vpack.c.b16 %v5023, %v5021
        %v5060 = vpack.c.b16 %v5026, %v5024
        %v5061 = vpack.c.b16 %v5027, %v5025
        %v5062 = vpack.c.b16 %v5030, %v5028
        %v5063 = vpack.c.b16 %v5031, %v5029
        %5096 = vmatprep.subr.bf16.mxu0 %v5047
        %5097 = vmatpush1.bf16.msra.mxu0 %v5046
        %5098 = vmatprep.subr.bf16.mxu0 %v5045
        %5099 = vmatpush1.bf16.msra.mxu0 %v5044
        %5100 = vmatprep.subr.bf16.mxu0 %v5043
        %5101 = vmatpush1.bf16.msra.mxu0 %v5042
        %5102 = vmatprep.subr.bf16.mxu0 %v5041
        %5103 = vmatpush1.bf16.msra.mxu0 %v5040
        %5104 = vmatprep.subr.bf16.mxu0 %v5039
        %5105 = vmatpush1.bf16.msra.mxu0 %v5038
        %5106 = vmatprep.subr.bf16.mxu0 %v5037
        %5107 = vmatpush1.bf16.msra.mxu0 %v5036
        %5108 = vmatprep.subr.bf16.mxu0 %v5035
        %5109 = vmatpush1.bf16.msra.mxu0 %v5034
        %5110 = vmatprep.subr.bf16.mxu0 %v5033
        %5111 = vmatpush1.bf16.msra.mxu0 %v5032
        %5112 = vmatprep.subr.bf16.mxu0 %v5063
        %5113 = vmatpush2.bf16.msra.mxu0 %v5062
        %5114 = vmatprep.subr.bf16.mxu0 %v5061
        %5115 = vmatpush2.bf16.msra.mxu0 %v5060
        %5116 = vmatprep.subr.bf16.mxu0 %v5059
        %5117 = vmatpush2.bf16.msra.mxu0 %v5058
        %5118 = vmatprep.subr.bf16.mxu0 %v5057
        %5119 = vmatpush2.bf16.msra.mxu0 %v5056
        %5120 = vmatprep.subr.bf16.mxu0 %v5055
        %5121 = vmatpush2.bf16.msra.mxu0 %v5054
        %5122 = vmatprep.subr.bf16.mxu0 %v5053
        %5123 = vmatpush2.bf16.msra.mxu0 %v5052
        %5124 = vmatprep.subr.bf16.mxu0 %v5051
        %5125 = vmatpush2.bf16.msra.mxu0 %v5050
        %5126 = vmatprep.subr.bf16.mxu0 %v5049
        %5127 = vmatpush2.bf16.msra.mxu0 %v5048
        %5128 = vmatprep.mubr.bf16.mxu0 %v4879
        %5129 = vmatmul.mubr.bf16.gmra.mxu0 %v4878
        %v5130 = vpop.f32.mrf.mxu0
        %v5131 = vadd.f32 %v4929, %v5130
        %v5132 = vpop.f32.mrf.mxu0
        %v5133 = vadd.f32 %v4933, %v5132
        %v5134 = vpop.f32.mrf.mxu0
        %v5135 = vadd.f32 %v4929, %v5134
        %v5136 = vpop.f32.mrf.mxu0
        %v5137 = vadd.f32 %v4933, %v5136
        %5138 = vmatprep.mubr.bf16.mxu0 %v4881
        %5139 = vmatmul.mubr.bf16.gmra.mxu0 %v4880
        %v5140 = vpop.f32.mrf.mxu0
        %v5141 = vadd.f32 %v4929, %v5140
        %v5142 = vpop.f32.mrf.mxu0
        %v5143 = vadd.f32 %v4933, %v5142
        %v5144 = vpop.f32.mrf.mxu0
        %v5145 = vadd.f32 %v4929, %v5144
        %v5146 = vpop.f32.mrf.mxu0
        %v5147 = vadd.f32 %v4933, %v5146
        %5148 = vmatprep.mubr.bf16.mxu0 %v4883
        %5149 = vmatmul.mubr.bf16.gmra.mxu0 %v4882
        %v5150 = vpop.f32.mrf.mxu0
        %v5151 = vadd.f32 %v4929, %v5150
        %v5152 = vpop.f32.mrf.mxu0
        %v5153 = vadd.f32 %v4933, %v5152
        %v5154 = vpop.f32.mrf.mxu0
        %v5155 = vadd.f32 %v4929, %v5154
        %v5156 = vpop.f32.mrf.mxu0
        %v5157 = vadd.f32 %v4933, %v5156
        %5158 = vmatprep.mubr.bf16.mxu0 %v4885
        %5159 = vmatmul.mubr.bf16.gmra.mxu0 %v4884
        %v5160 = vpop.f32.mrf.mxu0
        %v5161 = vadd.f32 %v4929, %v5160
        %v5162 = vpop.f32.mrf.mxu0
        %v5163 = vadd.f32 %v4933, %v5162
        %v5164 = vpop.f32.mrf.mxu0
        %v5165 = vadd.f32 %v4929, %v5164
        %v5166 = vpop.f32.mrf.mxu0
        %v5167 = vadd.f32 %v4933, %v5166
        %5168 = vmatprep.mubr.bf16.mxu0 %v4887
        %5169 = vmatmul.mubr.bf16.gmra.mxu0 %v4886
        %v5170 = vpop.f32.mrf.mxu0
        %v5171 = vadd.f32 %v4929, %v5170
        %v5172 = vpop.f32.mrf.mxu0
        %v5173 = vadd.f32 %v4933, %v5172
        %v5174 = vpop.f32.mrf.mxu0
        %v5175 = vadd.f32 %v4929, %v5174
        %v5176 = vpop.f32.mrf.mxu0
        %v5177 = vadd.f32 %v4933, %v5176
        %5178 = vmatprep.mubr.bf16.mxu0 %v4889
        %5179 = vmatmul.mubr.bf16.gmra.mxu0 %v4888
        %v5180 = vpop.f32.mrf.mxu0
        %v5181 = vadd.f32 %v4929, %v5180
        %v5182 = vpop.f32.mrf.mxu0
        %v5183 = vadd.f32 %v4933, %v5182
        %v5184 = vpop.f32.mrf.mxu0
        %v5185 = vadd.f32 %v4929, %v5184
        %v5186 = vpop.f32.mrf.mxu0
        %v5187 = vadd.f32 %v4933, %v5186
        %5188 = vmatprep.mubr.bf16.mxu0 %v4891
        %5189 = vmatmul.mubr.bf16.gmra.mxu0 %v4890
        %v5190 = vpop.f32.mrf.mxu0
        %v5191 = vadd.f32 %v4929, %v5190
        %v5192 = vpop.f32.mrf.mxu0
        %v5193 = vadd.f32 %v4933, %v5192
        %v5194 = vpop.f32.mrf.mxu0
        %v5195 = vpop.f32.mrf.mxu0
        %5196 = vdwg.mxu0
        %v5197 = vmax.f32 %v5131, 0.0
        %v5198 = vmax.f32 %v5133, 0.0
        %v5199 = vmax.f32 %v5135, 0.0
        %v5200 = vmax.f32 %v5137, 0.0
        %v5201 = vmax.f32 %v5141, 0.0
        %v5202 = vmax.f32 %v5143, 0.0
        %v5203 = vmax.f32 %v5145, 0.0
        %v5204 = vmax.f32 %v5147, 0.0
        %v5205 = vmax.f32 %v5151, 0.0
        %v5206 = vmax.f32 %v5153, 0.0
        %v5207 = vmax.f32 %v5155, 0.0
        %v5208 = vmax.f32 %v5157, 0.0
        %v5209 = vmax.f32 %v5161, 0.0
        %v5210 = vmax.f32 %v5163, 0.0
        %v5211 = vmax.f32 %v5165, 0.0
        %v5212 = vmax.f32 %v5167, 0.0
        %v5213 = vmax.f32 %v5171, 0.0
        %v5214 = vmax.f32 %v5173, 0.0
        %v5215 = vmax.f32 %v5175, 0.0
        %v5216 = vmax.f32 %v5177, 0.0
        %v5217 = vmax.f32 %v5181, 0.0
        %v5218 = vmax.f32 %v5183, 0.0
        %v5219 = vmax.f32 %v5185, 0.0
        %v5220 = vmax.f32 %v5187, 0.0
        %v5221 = vmax.f32 %v5191, 0.0
        %v5222 = vmax.f32 %v5193, 0.0
        %v5223 = vpack.c.bf16 %v5199, %v5197
        %v5224 = vpack.c.bf16 %v5200, %v5198
        %v5225 = vpack.c.bf16 %v5203, %v5201
        %v5226 = vpack.c.bf16 %v5204, %v5202
        %v5227 = vpack.c.bf16 %v5207, %v5205
        %v5228 = vpack.c.bf16 %v5208, %v5206
        %v5229 = vpack.c.bf16 %v5211, %v5209
        %v5230 = vpack.c.bf16 %v5212, %v5210
        %v5231 = vpack.c.bf16 %v5215, %v5213
        %v5232 = vpack.c.bf16 %v5216, %v5214
        %v5233 = vpack.c.bf16 %v5219, %v5217
        %v5234 = vpack.c.bf16 %v5220, %v5218
        %v5235 = vpack.c.bf16 %v5221, %v5221
        %v5236 = vpack.c.bf16 %v5222, %v5222
        %v5237 = vld [vmem:[#allocation6] sm:$0xff]
        %v5238 = vld [vmem:[#allocation6 + $0x8] sm:$0xff]
        %v5239 = vld [vmem:[#allocation6 + $0x10] sm:$0xff]
        %v5240 = vld [vmem:[#allocation6 + $0x18] sm:$0xff]
        %v5241 = vld [vmem:[#allocation6 + $0x20] sm:$0xff]
        %v5242 = vld [vmem:[#allocation6 + $0x28] sm:$0xff]
        %v5243 = vld [vmem:[#allocation6 + $0x30] sm:$0xff]
        %v5244 = vld [vmem:[#allocation6 + $0x38] sm:$0xff]
        %v5245 = vld [vmem:[#allocation6 + $0x40] sm:$0xff]
        %v5246 = vld [vmem:[#allocation6 + $0x48] sm:$0xff]
        %v5247 = vld [vmem:[#allocation6 + $0x50] sm:$0xff]
        %v5248 = vld [vmem:[#allocation6 + $0x58] sm:$0xff]
        %v5249 = vld [vmem:[#allocation6 + $0x60] sm:$0xff]
        %v5250 = vld [vmem:[#allocation6 + $0x68] sm:$0xff]
        %v5251 = vld [vmem:[#allocation6 + $0x70] sm:$0xff]
        %v5252 = vld [vmem:[#allocation6 + $0x78] sm:$0xff]
        %v5253 = vld [vmem:[#allocation6 + $0x80] sm:$0xff]
        %v5254 = vld [vmem:[#allocation6 + $0x88] sm:$0xff]
        %v5255 = vld [vmem:[#allocation6 + $0x90] sm:$0xff]
        %v5256 = vld [vmem:[#allocation6 + $0x98] sm:$0xff]
        %v5257 = vld [vmem:[#allocation6 + $0xa0] sm:$0xff]
        %v5258 = vld [vmem:[#allocation6 + $0xa8] sm:$0xff]
        %v5259 = vld [vmem:[#allocation6 + $0xb0] sm:$0xff]
        %v5260 = vld [vmem:[#allocation6 + $0xb8] sm:$0xff]
        %v5261 = vld [vmem:[#allocation6 + $0xc0] sm:$0xff]
        %v5262 = vld [vmem:[#allocation6 + $0xc8] sm:$0xff]
        %v5263 = vld [vmem:[#allocation6 + $0xd0] sm:$0xff]
        %v5264 = vld [vmem:[#allocation6 + $0xd8] sm:$0xff]
        %v5265 = vld [vmem:[#allocation6 + $0xe0] sm:$0xff]
        %v5266 = vld [vmem:[#allocation6 + $0xe8] sm:$0xff]
        %v5267 = vld [vmem:[#allocation6 + $0xf0] sm:$0xff]
        %v5268 = vld [vmem:[#allocation6 + $0xf8] sm:$0xff]
        %v5269 = vld [vmem:[%s47] sm:$0x3]
        %v5271 = vlaneseq
        %v5272 = vshrl.u32 %v5271, 7
        %v5273 = vsub.s32 0, %v5272
        %v5274 = vrot.slane %v5269, %v5273
        %v5275 = vlaneseq
        %v5276 = vshrl.u32 %v5275, 7
        %v5277 = vsub.s32 1, %v5276
        %v5278 = vrot.slane %v5269, %v5277
        %v5313 = vunpack.c.l.b16 %v5237
        %v5314 = vunpack.c.h.b16 %v5237
        %v5315 = vunpack.c.l.b16 %v5238
        %v5316 = vunpack.c.h.b16 %v5238
        %v5317 = vunpack.c.l.b16 %v5239
        %v5318 = vunpack.c.h.b16 %v5239
        %v5319 = vunpack.c.l.b16 %v5240
        %v5320 = vunpack.c.h.b16 %v5240
        %v5321 = vunpack.c.l.b16 %v5241
        %v5322 = vunpack.c.h.b16 %v5241
        %v5323 = vunpack.c.l.b16 %v5242
        %v5324 = vunpack.c.h.b16 %v5242
        %v5325 = vunpack.c.l.b16 %v5243
        %v5326 = vunpack.c.h.b16 %v5243
        %v5327 = vunpack.c.l.b16 %v5244
        %v5328 = vunpack.c.h.b16 %v5244
        %v5329 = vunpack.c.l.b16 %v5245
        %v5330 = vunpack.c.h.b16 %v5245
        %v5331 = vunpack.c.l.b16 %v5246
        %v5332 = vunpack.c.h.b16 %v5246
        %v5333 = vunpack.c.l.b16 %v5247
        %v5334 = vunpack.c.h.b16 %v5247
        %v5335 = vunpack.c.l.b16 %v5248
        %v5336 = vunpack.c.h.b16 %v5248
        %v5337 = vunpack.c.l.b16 %v5249
        %v5338 = vunpack.c.h.b16 %v5249
        %v5339 = vunpack.c.l.b16 %v5250
        %v5340 = vunpack.c.h.b16 %v5250
        %v5341 = vunpack.c.l.b16 %v5251
        %v5342 = vunpack.c.h.b16 %v5251
        %v5343 = vunpack.c.l.b16 %v5252
        %v5344 = vunpack.c.h.b16 %v5252
        %v5345 = vunpack.c.l.b16 %v5253
        %v5346 = vunpack.c.h.b16 %v5253
        %v5347 = vunpack.c.l.b16 %v5254
        %v5348 = vunpack.c.h.b16 %v5254
        %v5349 = vunpack.c.l.b16 %v5255
        %v5350 = vunpack.c.h.b16 %v5255
        %v5351 = vunpack.c.l.b16 %v5256
        %v5352 = vunpack.c.h.b16 %v5256
        %v5353 = vunpack.c.l.b16 %v5257
        %v5354 = vunpack.c.h.b16 %v5257
        %v5355 = vunpack.c.l.b16 %v5258
        %v5356 = vunpack.c.h.b16 %v5258
        %v5357 = vunpack.c.l.b16 %v5259
        %v5358 = vunpack.c.h.b16 %v5259
        %v5359 = vunpack.c.l.b16 %v5260
        %v5360 = vunpack.c.h.b16 %v5260
        %v5361 = vunpack.c.l.b16 %v5261
        %v5362 = vunpack.c.h.b16 %v5261
        %v5363 = vunpack.c.l.b16 %v5262
        %v5364 = vunpack.c.h.b16 %v5262
        %v5365 = vunpack.c.l.b16 %v5263
        %v5366 = vunpack.c.h.b16 %v5263
        %v5367 = vunpack.c.l.b16 %v5264
        %v5368 = vunpack.c.h.b16 %v5264
        %v5369 = vunpack.c.l.b16 %v5265
        %v5370 = vunpack.c.h.b16 %v5265
        %v5371 = vunpack.c.l.b16 %v5266
        %v5372 = vunpack.c.h.b16 %v5266
        %v5373 = vunpack.c.l.b16 %v5267
        %v5374 = vunpack.c.h.b16 %v5267
        %v5375 = vunpack.c.l.b16 %v5268
        %v5376 = vunpack.c.h.b16 %v5268
        %v5377 = vpack.c.b16 %v5315, %v5313
        %v5378 = vpack.c.b16 %v5316, %v5314
        %v5379 = vpack.c.b16 %v5319, %v5317
        %v5380 = vpack.c.b16 %v5320, %v5318
        %v5381 = vpack.c.b16 %v5323, %v5321
        %v5382 = vpack.c.b16 %v5324, %v5322
        %v5383 = vpack.c.b16 %v5327, %v5325
        %v5384 = vpack.c.b16 %v5328, %v5326
        %v5385 = vpack.c.b16 %v5331, %v5329
        %v5386 = vpack.c.b16 %v5332, %v5330
        %v5387 = vpack.c.b16 %v5335, %v5333
        %v5388 = vpack.c.b16 %v5336, %v5334
        %v5389 = vpack.c.b16 %v5339, %v5337
        %v5390 = vpack.c.b16 %v5340, %v5338
        %v5391 = vpack.c.b16 %v5343, %v5341
        %v5392 = vpack.c.b16 %v5344, %v5342
        %v5393 = vpack.c.b16 %v5347, %v5345
        %v5394 = vpack.c.b16 %v5348, %v5346
        %v5395 = vpack.c.b16 %v5351, %v5349
        %v5396 = vpack.c.b16 %v5352, %v5350
        %v5397 = vpack.c.b16 %v5355, %v5353
        %v5398 = vpack.c.b16 %v5356, %v5354
        %v5399 = vpack.c.b16 %v5359, %v5357
        %v5400 = vpack.c.b16 %v5360, %v5358
        %v5401 = vpack.c.b16 %v5363, %v5361
        %v5402 = vpack.c.b16 %v5364, %v5362
        %v5403 = vpack.c.b16 %v5367, %v5365
        %v5404 = vpack.c.b16 %v5368, %v5366
        %v5405 = vpack.c.b16 %v5371, %v5369
        %v5406 = vpack.c.b16 %v5372, %v5370
        %v5407 = vpack.c.b16 %v5375, %v5373
        %v5408 = vpack.c.b16 %v5376, %v5374
        %5441 = vmatprep.subr.bf16.mxu0 %v5392
        %5442 = vmatpush1.bf16.msra.mxu0 %v5391
        %5443 = vmatprep.subr.bf16.mxu0 %v5390
        %5444 = vmatpush1.bf16.msra.mxu0 %v5389
        %5445 = vmatprep.subr.bf16.mxu0 %v5388
        %5446 = vmatpush1.bf16.msra.mxu0 %v5387
        %5447 = vmatprep.subr.bf16.mxu0 %v5386
        %5448 = vmatpush1.bf16.msra.mxu0 %v5385
        %5449 = vmatprep.subr.bf16.mxu0 %v5384
        %5450 = vmatpush1.bf16.msra.mxu0 %v5383
        %5451 = vmatprep.subr.bf16.mxu0 %v5382
        %5452 = vmatpush1.bf16.msra.mxu0 %v5381
        %5453 = vmatprep.subr.bf16.mxu0 %v5380
        %5454 = vmatpush1.bf16.msra.mxu0 %v5379
        %5455 = vmatprep.subr.bf16.mxu0 %v5378
        %5456 = vmatpush1.bf16.msra.mxu0 %v5377
        %5457 = vmatprep.subr.bf16.mxu0 %v5408
        %5458 = vmatpush2.bf16.msra.mxu0 %v5407
        %5459 = vmatprep.subr.bf16.mxu0 %v5406
        %5460 = vmatpush2.bf16.msra.mxu0 %v5405
        %5461 = vmatprep.subr.bf16.mxu0 %v5404
        %5462 = vmatpush2.bf16.msra.mxu0 %v5403
        %5463 = vmatprep.subr.bf16.mxu0 %v5402
        %5464 = vmatpush2.bf16.msra.mxu0 %v5401
        %5465 = vmatprep.subr.bf16.mxu0 %v5400
        %5466 = vmatpush2.bf16.msra.mxu0 %v5399
        %5467 = vmatprep.subr.bf16.mxu0 %v5398
        %5468 = vmatpush2.bf16.msra.mxu0 %v5397
        %5469 = vmatprep.subr.bf16.mxu0 %v5396
        %5470 = vmatpush2.bf16.msra.mxu0 %v5395
        %5471 = vmatprep.subr.bf16.mxu0 %v5394
        %5472 = vmatpush2.bf16.msra.mxu0 %v5393
        %5473 = vmatprep.mubr.bf16.mxu0 %v5224
        %5474 = vmatmul.mubr.bf16.gmra.mxu0 %v5223
        %v5475 = vpop.f32.mrf.mxu0
        %v5476 = vadd.f32 %v5274, %v5475
        %v5477 = vpop.f32.mrf.mxu0
        %v5478 = vadd.f32 %v5278, %v5477
        %v5479 = vpop.f32.mrf.mxu0
        %v5480 = vadd.f32 %v5274, %v5479
        %v5481 = vpop.f32.mrf.mxu0
        %v5482 = vadd.f32 %v5278, %v5481
        %5483 = vmatprep.mubr.bf16.mxu0 %v5226
        %5484 = vmatmul.mubr.bf16.gmra.mxu0 %v5225
        %v5485 = vpop.f32.mrf.mxu0
        %v5486 = vadd.f32 %v5274, %v5485
        %v5487 = vpop.f32.mrf.mxu0
        %v5488 = vadd.f32 %v5278, %v5487
        %v5489 = vpop.f32.mrf.mxu0
        %v5490 = vadd.f32 %v5274, %v5489
        %v5491 = vpop.f32.mrf.mxu0
        %v5492 = vadd.f32 %v5278, %v5491
        %5493 = vmatprep.mubr.bf16.mxu0 %v5228
        %5494 = vmatmul.mubr.bf16.gmra.mxu0 %v5227
        %v5495 = vpop.f32.mrf.mxu0
        %v5496 = vadd.f32 %v5274, %v5495
        %v5497 = vpop.f32.mrf.mxu0
        %v5498 = vadd.f32 %v5278, %v5497
        %v5499 = vpop.f32.mrf.mxu0
        %v5500 = vadd.f32 %v5274, %v5499
        %v5501 = vpop.f32.mrf.mxu0
        %v5502 = vadd.f32 %v5278, %v5501
        %5503 = vmatprep.mubr.bf16.mxu0 %v5230
        %5504 = vmatmul.mubr.bf16.gmra.mxu0 %v5229
        %v5505 = vpop.f32.mrf.mxu0
        %v5506 = vadd.f32 %v5274, %v5505
        %v5507 = vpop.f32.mrf.mxu0
        %v5508 = vadd.f32 %v5278, %v5507
        %v5509 = vpop.f32.mrf.mxu0
        %v5510 = vadd.f32 %v5274, %v5509
        %v5511 = vpop.f32.mrf.mxu0
        %v5512 = vadd.f32 %v5278, %v5511
        %5513 = vmatprep.mubr.bf16.mxu0 %v5232
        %5514 = vmatmul.mubr.bf16.gmra.mxu0 %v5231
        %v5515 = vpop.f32.mrf.mxu0
        %v5516 = vadd.f32 %v5274, %v5515
        %v5517 = vpop.f32.mrf.mxu0
        %v5518 = vadd.f32 %v5278, %v5517
        %v5519 = vpop.f32.mrf.mxu0
        %v5520 = vadd.f32 %v5274, %v5519
        %v5521 = vpop.f32.mrf.mxu0
        %v5522 = vadd.f32 %v5278, %v5521
        %5523 = vmatprep.mubr.bf16.mxu0 %v5234
        %5524 = vmatmul.mubr.bf16.gmra.mxu0 %v5233
        %v5525 = vpop.f32.mrf.mxu0
        %v5526 = vadd.f32 %v5274, %v5525
        %v5527 = vpop.f32.mrf.mxu0
        %v5528 = vadd.f32 %v5278, %v5527
        %v5529 = vpop.f32.mrf.mxu0
        %v5530 = vadd.f32 %v5274, %v5529
        %v5531 = vpop.f32.mrf.mxu0
        %v5532 = vadd.f32 %v5278, %v5531
        %5533 = vmatprep.mubr.bf16.mxu0 %v5236
        %5534 = vmatmul.mubr.bf16.gmra.mxu0 %v5235
        %v5535 = vpop.f32.mrf.mxu0
        %v5536 = vadd.f32 %v5274, %v5535
        %v5537 = vpop.f32.mrf.mxu0
        %v5538 = vadd.f32 %v5278, %v5537
        %v5539 = vpop.f32.mrf.mxu0
        %v5540 = vpop.f32.mrf.mxu0
        %5541 = vdwg.mxu0
        loop: start=0, step=1, limit=4
        $region197: #{_lambda_.3} parent=159 // loop_pre_header
          _
        $region198: #{_lambda_.3} parent=159 // loop_header
          %s5543 = sphi 0, %s5547
          %p5544 = scmp.ge.s32.totalorder %s5543, 4
          %v5548 = vphi %v5476, %v6482
          %v5549 = vphi %v5478, %v6483
          %v5550 = vphi %v5480, %v6484
          %v5551 = vphi %v5482, %v6485
          %v5552 = vphi %v5486, %v6486
          %v5553 = vphi %v5488, %v6487
          %v5554 = vphi %v5490, %v6488
          %v5555 = vphi %v5492, %v6489
          %v5556 = vphi %v5496, %v6490
          %v5557 = vphi %v5498, %v6491
          %v5558 = vphi %v5500, %v6492
          %v5559 = vphi %v5502, %v6493
          %v5560 = vphi %v5506, %v6494
          %v5561 = vphi %v5508, %v6495
          %v5562 = vphi %v5510, %v6496
          %v5563 = vphi %v5512, %v6497
          %v5564 = vphi %v5516, %v6498
          %v5565 = vphi %v5518, %v6499
          %v5566 = vphi %v5520, %v6500
          %v5567 = vphi %v5522, %v6501
          %v5568 = vphi %v5526, %v6502
          %v5569 = vphi %v5528, %v6503
          %v5570 = vphi %v5530, %v6504
          %v5571 = vphi %v5532, %v6505
          %v5572 = vphi %v5536, %v6506
          %v5573 = vphi %v5538, %v6507
        $region199: #{_lambda_.3} parent=159 // loop_header_branch
          %5546 = sbr.rel (%p5544) target = $region203
        $region200: #{_lambda_.3} parent=159 // loop_body
          %v5574 = vpack.c.bf16 %v5550, %v5548
          %v5575 = vpack.c.bf16 %v5551, %v5549
          %v5576 = vpack.c.bf16 %v5554, %v5552
          %v5577 = vpack.c.bf16 %v5555, %v5553
          %v5578 = vpack.c.bf16 %v5558, %v5556
          %v5579 = vpack.c.bf16 %v5559, %v5557
          %v5580 = vpack.c.bf16 %v5562, %v5560
          %v5581 = vpack.c.bf16 %v5563, %v5561
          %v5582 = vpack.c.bf16 %v5566, %v5564
          %v5583 = vpack.c.bf16 %v5567, %v5565
          %v5584 = vpack.c.bf16 %v5570, %v5568
          %v5585 = vpack.c.bf16 %v5571, %v5569
          %v5586 = vpack.c.bf16 %v5572, %v5572
          %v5587 = vpack.c.bf16 %v5573, %v5573
          %v5588 = vld [vmem:[#allocation8] sm:$0xff]
          %v5589 = vld [vmem:[#allocation8 + $0x8] sm:$0xff]
          %v5590 = vld [vmem:[#allocation8 + $0x10] sm:$0xff]
          %v5591 = vld [vmem:[#allocation8 + $0x18] sm:$0xff]
          %v5592 = vld [vmem:[#allocation8 + $0x20] sm:$0xff]
          %v5593 = vld [vmem:[#allocation8 + $0x28] sm:$0xff]
          %v5594 = vld [vmem:[#allocation8 + $0x30] sm:$0xff]
          %v5595 = vld [vmem:[#allocation8 + $0x38] sm:$0xff]
          %v5596 = vld [vmem:[#allocation8 + $0x40] sm:$0xff]
          %v5597 = vld [vmem:[#allocation8 + $0x48] sm:$0xff]
          %v5598 = vld [vmem:[#allocation8 + $0x50] sm:$0xff]
          %v5599 = vld [vmem:[#allocation8 + $0x58] sm:$0xff]
          %v5600 = vld [vmem:[#allocation8 + $0x60] sm:$0xff]
          %v5601 = vld [vmem:[#allocation8 + $0x68] sm:$0xff]
          %v5602 = vld [vmem:[#allocation8 + $0x70] sm:$0xff]
          %v5603 = vld [vmem:[#allocation8 + $0x78] sm:$0xff]
          %v5604 = vld [vmem:[#allocation8 + $0x80] sm:$0xff]
          %v5605 = vld [vmem:[#allocation8 + $0x88] sm:$0xff]
          %v5606 = vld [vmem:[#allocation8 + $0x90] sm:$0xff]
          %v5607 = vld [vmem:[#allocation8 + $0x98] sm:$0xff]
          %v5608 = vld [vmem:[#allocation8 + $0xa0] sm:$0xff]
          %v5609 = vld [vmem:[#allocation8 + $0xa8] sm:$0xff]
          %v5610 = vld [vmem:[#allocation8 + $0xb0] sm:$0xff]
          %v5611 = vld [vmem:[#allocation8 + $0xb8] sm:$0xff]
          %v5612 = vld [vmem:[#allocation8 + $0xc0] sm:$0xff]
          %v5613 = vld [vmem:[#allocation8 + $0xc8] sm:$0xff]
          %v5614 = vld [vmem:[#allocation8 + $0xd0] sm:$0xff]
          %v5615 = vld [vmem:[#allocation8 + $0xd8] sm:$0xff]
          %v5616 = vld [vmem:[#allocation8 + $0xe0] sm:$0xff]
          %v5617 = vld [vmem:[#allocation8 + $0xe8] sm:$0xff]
          %v5618 = vld [vmem:[#allocation8 + $0xf0] sm:$0xff]
          %v5619 = vld [vmem:[#allocation8 + $0xf8] sm:$0xff]
          %v5652 = vunpack.c.l.b16 %v5588
          %v5653 = vunpack.c.h.b16 %v5588
          %v5654 = vunpack.c.l.b16 %v5589
          %v5655 = vunpack.c.h.b16 %v5589
          %v5656 = vunpack.c.l.b16 %v5590
          %v5657 = vunpack.c.h.b16 %v5590
          %v5658 = vunpack.c.l.b16 %v5591
          %v5659 = vunpack.c.h.b16 %v5591
          %v5660 = vunpack.c.l.b16 %v5592
          %v5661 = vunpack.c.h.b16 %v5592
          %v5662 = vunpack.c.l.b16 %v5593
          %v5663 = vunpack.c.h.b16 %v5593
          %v5664 = vunpack.c.l.b16 %v5594
          %v5665 = vunpack.c.h.b16 %v5594
          %v5666 = vunpack.c.l.b16 %v5595
          %v5667 = vunpack.c.h.b16 %v5595
          %v5668 = vunpack.c.l.b16 %v5596
          %v5669 = vunpack.c.h.b16 %v5596
          %v5670 = vunpack.c.l.b16 %v5597
          %v5671 = vunpack.c.h.b16 %v5597
          %v5672 = vunpack.c.l.b16 %v5598
          %v5673 = vunpack.c.h.b16 %v5598
          %v5674 = vunpack.c.l.b16 %v5599
          %v5675 = vunpack.c.h.b16 %v5599
          %v5676 = vunpack.c.l.b16 %v5600
          %v5677 = vunpack.c.h.b16 %v5600
          %v5678 = vunpack.c.l.b16 %v5601
          %v5679 = vunpack.c.h.b16 %v5601
          %v5680 = vunpack.c.l.b16 %v5602
          %v5681 = vunpack.c.h.b16 %v5602
          %v5682 = vunpack.c.l.b16 %v5603
          %v5683 = vunpack.c.h.b16 %v5603
          %v5684 = vunpack.c.l.b16 %v5604
          %v5685 = vunpack.c.h.b16 %v5604
          %v5686 = vunpack.c.l.b16 %v5605
          %v5687 = vunpack.c.h.b16 %v5605
          %v5688 = vunpack.c.l.b16 %v5606
          %v5689 = vunpack.c.h.b16 %v5606
          %v5690 = vunpack.c.l.b16 %v5607
          %v5691 = vunpack.c.h.b16 %v5607
          %v5692 = vunpack.c.l.b16 %v5608
          %v5693 = vunpack.c.h.b16 %v5608
          %v5694 = vunpack.c.l.b16 %v5609
          %v5695 = vunpack.c.h.b16 %v5609
          %v5696 = vunpack.c.l.b16 %v5610
          %v5697 = vunpack.c.h.b16 %v5610
          %v5698 = vunpack.c.l.b16 %v5611
          %v5699 = vunpack.c.h.b16 %v5611
          %v5700 = vunpack.c.l.b16 %v5612
          %v5701 = vunpack.c.h.b16 %v5612
          %v5702 = vunpack.c.l.b16 %v5613
          %v5703 = vunpack.c.h.b16 %v5613
          %v5704 = vunpack.c.l.b16 %v5614
          %v5705 = vunpack.c.h.b16 %v5614
          %v5706 = vunpack.c.l.b16 %v5615
          %v5707 = vunpack.c.h.b16 %v5615
          %v5708 = vunpack.c.l.b16 %v5616
          %v5709 = vunpack.c.h.b16 %v5616
          %v5710 = vunpack.c.l.b16 %v5617
          %v5711 = vunpack.c.h.b16 %v5617
          %v5712 = vunpack.c.l.b16 %v5618
          %v5713 = vunpack.c.h.b16 %v5618
          %v5714 = vunpack.c.l.b16 %v5619
          %v5715 = vunpack.c.h.b16 %v5619
          %v5716 = vpack.c.b16 %v5654, %v5652
          %v5717 = vpack.c.b16 %v5655, %v5653
          %v5718 = vpack.c.b16 %v5658, %v5656
          %v5719 = vpack.c.b16 %v5659, %v5657
          %v5720 = vpack.c.b16 %v5662, %v5660
          %v5721 = vpack.c.b16 %v5663, %v5661
          %v5722 = vpack.c.b16 %v5666, %v5664
          %v5723 = vpack.c.b16 %v5667, %v5665
          %v5724 = vpack.c.b16 %v5670, %v5668
          %v5725 = vpack.c.b16 %v5671, %v5669
          %v5726 = vpack.c.b16 %v5674, %v5672
          %v5727 = vpack.c.b16 %v5675, %v5673
          %v5728 = vpack.c.b16 %v5678, %v5676
          %v5729 = vpack.c.b16 %v5679, %v5677
          %v5730 = vpack.c.b16 %v5682, %v5680
          %v5731 = vpack.c.b16 %v5683, %v5681
          %v5732 = vpack.c.b16 %v5686, %v5684
          %v5733 = vpack.c.b16 %v5687, %v5685
          %v5734 = vpack.c.b16 %v5690, %v5688
          %v5735 = vpack.c.b16 %v5691, %v5689
          %v5736 = vpack.c.b16 %v5694, %v5692
          %v5737 = vpack.c.b16 %v5695, %v5693
          %v5738 = vpack.c.b16 %v5698, %v5696
          %v5739 = vpack.c.b16 %v5699, %v5697
          %v5740 = vpack.c.b16 %v5702, %v5700
          %v5741 = vpack.c.b16 %v5703, %v5701
          %v5742 = vpack.c.b16 %v5706, %v5704
          %v5743 = vpack.c.b16 %v5707, %v5705
          %v5744 = vpack.c.b16 %v5710, %v5708
          %v5745 = vpack.c.b16 %v5711, %v5709
          %v5746 = vpack.c.b16 %v5714, %v5712
          %v5747 = vpack.c.b16 %v5715, %v5713
          %5780 = vmatprep.subr.bf16.mxu0 %v5731
          %5781 = vmatpush1.bf16.msra.mxu0 %v5730
          %5782 = vmatprep.subr.bf16.mxu0 %v5729
          %5783 = vmatpush1.bf16.msra.mxu0 %v5728
          %5784 = vmatprep.subr.bf16.mxu0 %v5727
          %5785 = vmatpush1.bf16.msra.mxu0 %v5726
          %5786 = vmatprep.subr.bf16.mxu0 %v5725
          %5787 = vmatpush1.bf16.msra.mxu0 %v5724
          %5788 = vmatprep.subr.bf16.mxu0 %v5723
          %5789 = vmatpush1.bf16.msra.mxu0 %v5722
          %5790 = vmatprep.subr.bf16.mxu0 %v5721
          %5791 = vmatpush1.bf16.msra.mxu0 %v5720
          %5792 = vmatprep.subr.bf16.mxu0 %v5719
          %5793 = vmatpush1.bf16.msra.mxu0 %v5718
          %5794 = vmatprep.subr.bf16.mxu0 %v5717
          %5795 = vmatpush1.bf16.msra.mxu0 %v5716
          %5796 = vmatprep.subr.bf16.mxu0 %v5747
          %5797 = vmatpush2.bf16.msra.mxu0 %v5746
          %5798 = vmatprep.subr.bf16.mxu0 %v5745
          %5799 = vmatpush2.bf16.msra.mxu0 %v5744
          %5800 = vmatprep.subr.bf16.mxu0 %v5743
          %5801 = vmatpush2.bf16.msra.mxu0 %v5742
          %5802 = vmatprep.subr.bf16.mxu0 %v5741
          %5803 = vmatpush2.bf16.msra.mxu0 %v5740
          %5804 = vmatprep.subr.bf16.mxu0 %v5739
          %5805 = vmatpush2.bf16.msra.mxu0 %v5738
          %5806 = vmatprep.subr.bf16.mxu0 %v5737
          %5807 = vmatpush2.bf16.msra.mxu0 %v5736
          %5808 = vmatprep.subr.bf16.mxu0 %v5735
          %5809 = vmatpush2.bf16.msra.mxu0 %v5734
          %5810 = vmatprep.subr.bf16.mxu0 %v5733
          %5811 = vmatpush2.bf16.msra.mxu0 %v5732
          %5812 = vmatprep.mubr.bf16.mxu0 %v5575
          %5813 = vmatmul.mubr.bf16.gmra.mxu0 %v5574
          %v5814 = vpop.f32.mrf.mxu0
          %v5815 = vadd.f32 %v3702, %v5814
          %v5816 = vpop.f32.mrf.mxu0
          %v5817 = vadd.f32 %v3704, %v5816
          %v5818 = vpop.f32.mrf.mxu0
          %v5819 = vadd.f32 %v3706, %v5818
          %v5820 = vpop.f32.mrf.mxu0
          %v5821 = vadd.f32 %v3708, %v5820
          %5822 = vmatprep.mubr.bf16.mxu0 %v5577
          %5823 = vmatmul.mubr.bf16.gmra.mxu0 %v5576
          %v5824 = vpop.f32.mrf.mxu0
          %v5825 = vadd.f32 %v3712, %v5824
          %v5826 = vpop.f32.mrf.mxu0
          %v5827 = vadd.f32 %v3714, %v5826
          %v5828 = vpop.f32.mrf.mxu0
          %v5829 = vadd.f32 %v3716, %v5828
          %v5830 = vpop.f32.mrf.mxu0
          %v5831 = vadd.f32 %v3718, %v5830
          %5832 = vmatprep.mubr.bf16.mxu0 %v5579
          %5833 = vmatmul.mubr.bf16.gmra.mxu0 %v5578
          %v5834 = vpop.f32.mrf.mxu0
          %v5835 = vadd.f32 %v3722, %v5834
          %v5836 = vpop.f32.mrf.mxu0
          %v5837 = vadd.f32 %v3724, %v5836
          %v5838 = vpop.f32.mrf.mxu0
          %v5839 = vadd.f32 %v3726, %v5838
          %v5840 = vpop.f32.mrf.mxu0
          %v5841 = vadd.f32 %v3728, %v5840
          %5842 = vmatprep.mubr.bf16.mxu0 %v5581
          %5843 = vmatmul.mubr.bf16.gmra.mxu0 %v5580
          %v5844 = vpop.f32.mrf.mxu0
          %v5845 = vadd.f32 %v3732, %v5844
          %v5846 = vpop.f32.mrf.mxu0
          %v5847 = vadd.f32 %v3734, %v5846
          %v5848 = vpop.f32.mrf.mxu0
          %v5849 = vadd.f32 %v3736, %v5848
          %v5850 = vpop.f32.mrf.mxu0
          %v5851 = vadd.f32 %v3738, %v5850
          %5852 = vmatprep.mubr.bf16.mxu0 %v5583
          %5853 = vmatmul.mubr.bf16.gmra.mxu0 %v5582
          %v5854 = vpop.f32.mrf.mxu0
          %v5855 = vadd.f32 %v3742, %v5854
          %v5856 = vpop.f32.mrf.mxu0
          %v5857 = vadd.f32 %v3744, %v5856
          %v5858 = vpop.f32.mrf.mxu0
          %v5859 = vadd.f32 %v3746, %v5858
          %v5860 = vpop.f32.mrf.mxu0
          %v5861 = vadd.f32 %v3748, %v5860
          %5862 = vmatprep.mubr.bf16.mxu0 %v5585
          %5863 = vmatmul.mubr.bf16.gmra.mxu0 %v5584
          %v5864 = vpop.f32.mrf.mxu0
          %v5865 = vadd.f32 %v3752, %v5864
          %v5866 = vpop.f32.mrf.mxu0
          %v5867 = vadd.f32 %v3754, %v5866
          %v5868 = vpop.f32.mrf.mxu0
          %v5869 = vadd.f32 %v3756, %v5868
          %v5870 = vpop.f32.mrf.mxu0
          %v5871 = vadd.f32 %v3758, %v5870
          %5872 = vmatprep.mubr.bf16.mxu0 %v5587
          %5873 = vmatmul.mubr.bf16.gmra.mxu0 %v5586
          %v5874 = vpop.f32.mrf.mxu0
          %v5875 = vadd.f32 %v3762, %v5874
          %v5876 = vpop.f32.mrf.mxu0
          %v5877 = vadd.f32 %v3764, %v5876
          %v5878 = vpop.f32.mrf.mxu0
          %v5879 = vpop.f32.mrf.mxu0
          %5880 = vdwg.mxu0
          %v5881 = vmax.f32 %v5815, 0.0
          %v5882 = vmax.f32 %v5817, 0.0
          %v5883 = vmax.f32 %v5819, 0.0
          %v5884 = vmax.f32 %v5821, 0.0
          %v5885 = vmax.f32 %v5825, 0.0
          %v5886 = vmax.f32 %v5827, 0.0
          %v5887 = vmax.f32 %v5829, 0.0
          %v5888 = vmax.f32 %v5831, 0.0
          %v5889 = vmax.f32 %v5835, 0.0
          %v5890 = vmax.f32 %v5837, 0.0
          %v5891 = vmax.f32 %v5839, 0.0
          %v5892 = vmax.f32 %v5841, 0.0
          %v5893 = vmax.f32 %v5845, 0.0
          %v5894 = vmax.f32 %v5847, 0.0
          %v5895 = vmax.f32 %v5849, 0.0
          %v5896 = vmax.f32 %v5851, 0.0
          %v5897 = vmax.f32 %v5855, 0.0
          %v5898 = vmax.f32 %v5857, 0.0
          %v5899 = vmax.f32 %v5859, 0.0
          %v5900 = vmax.f32 %v5861, 0.0
          %v5901 = vmax.f32 %v5865, 0.0
          %v5902 = vmax.f32 %v5867, 0.0
          %v5903 = vmax.f32 %v5869, 0.0
          %v5904 = vmax.f32 %v5871, 0.0
          %v5905 = vmax.f32 %v5875, 0.0
          %v5906 = vmax.f32 %v5877, 0.0
          %v5907 = vpack.c.bf16 %v5883, %v5881
          %v5908 = vpack.c.bf16 %v5884, %v5882
          %v5909 = vpack.c.bf16 %v5887, %v5885
          %v5910 = vpack.c.bf16 %v5888, %v5886
          %v5911 = vpack.c.bf16 %v5891, %v5889
          %v5912 = vpack.c.bf16 %v5892, %v5890
          %v5913 = vpack.c.bf16 %v5895, %v5893
          %v5914 = vpack.c.bf16 %v5896, %v5894
          %v5915 = vpack.c.bf16 %v5899, %v5897
          %v5916 = vpack.c.bf16 %v5900, %v5898
          %v5917 = vpack.c.bf16 %v5903, %v5901
          %v5918 = vpack.c.bf16 %v5904, %v5902
          %v5919 = vpack.c.bf16 %v5905, %v5905
          %v5920 = vpack.c.bf16 %v5906, %v5906
          %v5921 = vld [vmem:[#allocation9] sm:$0xff]
          %v5922 = vld [vmem:[#allocation9 + $0x8] sm:$0xff]
          %v5923 = vld [vmem:[#allocation9 + $0x10] sm:$0xff]
          %v5924 = vld [vmem:[#allocation9 + $0x18] sm:$0xff]
          %v5925 = vld [vmem:[#allocation9 + $0x20] sm:$0xff]
          %v5926 = vld [vmem:[#allocation9 + $0x28] sm:$0xff]
          %v5927 = vld [vmem:[#allocation9 + $0x30] sm:$0xff]
          %v5928 = vld [vmem:[#allocation9 + $0x38] sm:$0xff]
          %v5929 = vld [vmem:[#allocation9 + $0x40] sm:$0xff]
          %v5930 = vld [vmem:[#allocation9 + $0x48] sm:$0xff]
          %v5931 = vld [vmem:[#allocation9 + $0x50] sm:$0xff]
          %v5932 = vld [vmem:[#allocation9 + $0x58] sm:$0xff]
          %v5933 = vld [vmem:[#allocation9 + $0x60] sm:$0xff]
          %v5934 = vld [vmem:[#allocation9 + $0x68] sm:$0xff]
          %v5935 = vld [vmem:[#allocation9 + $0x70] sm:$0xff]
          %v5936 = vld [vmem:[#allocation9 + $0x78] sm:$0xff]
          %v5937 = vld [vmem:[#allocation9 + $0x80] sm:$0xff]
          %v5938 = vld [vmem:[#allocation9 + $0x88] sm:$0xff]
          %v5939 = vld [vmem:[#allocation9 + $0x90] sm:$0xff]
          %v5940 = vld [vmem:[#allocation9 + $0x98] sm:$0xff]
          %v5941 = vld [vmem:[#allocation9 + $0xa0] sm:$0xff]
          %v5942 = vld [vmem:[#allocation9 + $0xa8] sm:$0xff]
          %v5943 = vld [vmem:[#allocation9 + $0xb0] sm:$0xff]
          %v5944 = vld [vmem:[#allocation9 + $0xb8] sm:$0xff]
          %v5945 = vld [vmem:[#allocation9 + $0xc0] sm:$0xff]
          %v5946 = vld [vmem:[#allocation9 + $0xc8] sm:$0xff]
          %v5947 = vld [vmem:[#allocation9 + $0xd0] sm:$0xff]
          %v5948 = vld [vmem:[#allocation9 + $0xd8] sm:$0xff]
          %v5949 = vld [vmem:[#allocation9 + $0xe0] sm:$0xff]
          %v5950 = vld [vmem:[#allocation9 + $0xe8] sm:$0xff]
          %v5951 = vld [vmem:[#allocation9 + $0xf0] sm:$0xff]
          %v5952 = vld [vmem:[#allocation9 + $0xf8] sm:$0xff]
          %v5953 = vld [vmem:[%s53] sm:$0x3]
          %v5955 = vlaneseq
          %v5956 = vshrl.u32 %v5955, 7
          %v5957 = vsub.s32 0, %v5956
          %v5958 = vrot.slane %v5953, %v5957
          %v5959 = vlaneseq
          %v5960 = vshrl.u32 %v5959, 7
          %v5961 = vsub.s32 1, %v5960
          %v5962 = vrot.slane %v5953, %v5961
          %v5997 = vunpack.c.l.b16 %v5921
          %v5998 = vunpack.c.h.b16 %v5921
          %v5999 = vunpack.c.l.b16 %v5922
          %v6000 = vunpack.c.h.b16 %v5922
          %v6001 = vunpack.c.l.b16 %v5923
          %v6002 = vunpack.c.h.b16 %v5923
          %v6003 = vunpack.c.l.b16 %v5924
          %v6004 = vunpack.c.h.b16 %v5924
          %v6005 = vunpack.c.l.b16 %v5925
          %v6006 = vunpack.c.h.b16 %v5925
          %v6007 = vunpack.c.l.b16 %v5926
          %v6008 = vunpack.c.h.b16 %v5926
          %v6009 = vunpack.c.l.b16 %v5927
          %v6010 = vunpack.c.h.b16 %v5927
          %v6011 = vunpack.c.l.b16 %v5928
          %v6012 = vunpack.c.h.b16 %v5928
          %v6013 = vunpack.c.l.b16 %v5929
          %v6014 = vunpack.c.h.b16 %v5929
          %v6015 = vunpack.c.l.b16 %v5930
          %v6016 = vunpack.c.h.b16 %v5930
          %v6017 = vunpack.c.l.b16 %v5931
          %v6018 = vunpack.c.h.b16 %v5931
          %v6019 = vunpack.c.l.b16 %v5932
          %v6020 = vunpack.c.h.b16 %v5932
          %v6021 = vunpack.c.l.b16 %v5933
          %v6022 = vunpack.c.h.b16 %v5933
          %v6023 = vunpack.c.l.b16 %v5934
          %v6024 = vunpack.c.h.b16 %v5934
          %v6025 = vunpack.c.l.b16 %v5935
          %v6026 = vunpack.c.h.b16 %v5935
          %v6027 = vunpack.c.l.b16 %v5936
          %v6028 = vunpack.c.h.b16 %v5936
          %v6029 = vunpack.c.l.b16 %v5937
          %v6030 = vunpack.c.h.b16 %v5937
          %v6031 = vunpack.c.l.b16 %v5938
          %v6032 = vunpack.c.h.b16 %v5938
          %v6033 = vunpack.c.l.b16 %v5939
          %v6034 = vunpack.c.h.b16 %v5939
          %v6035 = vunpack.c.l.b16 %v5940
          %v6036 = vunpack.c.h.b16 %v5940
          %v6037 = vunpack.c.l.b16 %v5941
          %v6038 = vunpack.c.h.b16 %v5941
          %v6039 = vunpack.c.l.b16 %v5942
          %v6040 = vunpack.c.h.b16 %v5942
          %v6041 = vunpack.c.l.b16 %v5943
          %v6042 = vunpack.c.h.b16 %v5943
          %v6043 = vunpack.c.l.b16 %v5944
          %v6044 = vunpack.c.h.b16 %v5944
          %v6045 = vunpack.c.l.b16 %v5945
          %v6046 = vunpack.c.h.b16 %v5945
          %v6047 = vunpack.c.l.b16 %v5946
          %v6048 = vunpack.c.h.b16 %v5946
          %v6049 = vunpack.c.l.b16 %v5947
          %v6050 = vunpack.c.h.b16 %v5947
          %v6051 = vunpack.c.l.b16 %v5948
          %v6052 = vunpack.c.h.b16 %v5948
          %v6053 = vunpack.c.l.b16 %v5949
          %v6054 = vunpack.c.h.b16 %v5949
          %v6055 = vunpack.c.l.b16 %v5950
          %v6056 = vunpack.c.h.b16 %v5950
          %v6057 = vunpack.c.l.b16 %v5951
          %v6058 = vunpack.c.h.b16 %v5951
          %v6059 = vunpack.c.l.b16 %v5952
          %v6060 = vunpack.c.h.b16 %v5952
          %v6061 = vpack.c.b16 %v5999, %v5997
          %v6062 = vpack.c.b16 %v6000, %v5998
          %v6063 = vpack.c.b16 %v6003, %v6001
          %v6064 = vpack.c.b16 %v6004, %v6002
          %v6065 = vpack.c.b16 %v6007, %v6005
          %v6066 = vpack.c.b16 %v6008, %v6006
          %v6067 = vpack.c.b16 %v6011, %v6009
          %v6068 = vpack.c.b16 %v6012, %v6010
          %v6069 = vpack.c.b16 %v6015, %v6013
          %v6070 = vpack.c.b16 %v6016, %v6014
          %v6071 = vpack.c.b16 %v6019, %v6017
          %v6072 = vpack.c.b16 %v6020, %v6018
          %v6073 = vpack.c.b16 %v6023, %v6021
          %v6074 = vpack.c.b16 %v6024, %v6022
          %v6075 = vpack.c.b16 %v6027, %v6025
          %v6076 = vpack.c.b16 %v6028, %v6026
          %v6077 = vpack.c.b16 %v6031, %v6029
          %v6078 = vpack.c.b16 %v6032, %v6030
          %v6079 = vpack.c.b16 %v6035, %v6033
          %v6080 = vpack.c.b16 %v6036, %v6034
          %v6081 = vpack.c.b16 %v6039, %v6037
          %v6082 = vpack.c.b16 %v6040, %v6038
          %v6083 = vpack.c.b16 %v6043, %v6041
          %v6084 = vpack.c.b16 %v6044, %v6042
          %v6085 = vpack.c.b16 %v6047, %v6045
          %v6086 = vpack.c.b16 %v6048, %v6046
          %v6087 = vpack.c.b16 %v6051, %v6049
          %v6088 = vpack.c.b16 %v6052, %v6050
          %v6089 = vpack.c.b16 %v6055, %v6053
          %v6090 = vpack.c.b16 %v6056, %v6054
          %v6091 = vpack.c.b16 %v6059, %v6057
          %v6092 = vpack.c.b16 %v6060, %v6058
          %6125 = vmatprep.subr.bf16.mxu0 %v6076
          %6126 = vmatpush1.bf16.msra.mxu0 %v6075
          %6127 = vmatprep.subr.bf16.mxu0 %v6074
          %6128 = vmatpush1.bf16.msra.mxu0 %v6073
          %6129 = vmatprep.subr.bf16.mxu0 %v6072
          %6130 = vmatpush1.bf16.msra.mxu0 %v6071
          %6131 = vmatprep.subr.bf16.mxu0 %v6070
          %6132 = vmatpush1.bf16.msra.mxu0 %v6069
          %6133 = vmatprep.subr.bf16.mxu0 %v6068
          %6134 = vmatpush1.bf16.msra.mxu0 %v6067
          %6135 = vmatprep.subr.bf16.mxu0 %v6066
          %6136 = vmatpush1.bf16.msra.mxu0 %v6065
          %6137 = vmatprep.subr.bf16.mxu0 %v6064
          %6138 = vmatpush1.bf16.msra.mxu0 %v6063
          %6139 = vmatprep.subr.bf16.mxu0 %v6062
          %6140 = vmatpush1.bf16.msra.mxu0 %v6061
          %6141 = vmatprep.subr.bf16.mxu0 %v6092
          %6142 = vmatpush2.bf16.msra.mxu0 %v6091
          %6143 = vmatprep.subr.bf16.mxu0 %v6090
          %6144 = vmatpush2.bf16.msra.mxu0 %v6089
          %6145 = vmatprep.subr.bf16.mxu0 %v6088
          %6146 = vmatpush2.bf16.msra.mxu0 %v6087
          %6147 = vmatprep.subr.bf16.mxu0 %v6086
          %6148 = vmatpush2.bf16.msra.mxu0 %v6085
          %6149 = vmatprep.subr.bf16.mxu0 %v6084
          %6150 = vmatpush2.bf16.msra.mxu0 %v6083
          %6151 = vmatprep.subr.bf16.mxu0 %v6082
          %6152 = vmatpush2.bf16.msra.mxu0 %v6081
          %6153 = vmatprep.subr.bf16.mxu0 %v6080
          %6154 = vmatpush2.bf16.msra.mxu0 %v6079
          %6155 = vmatprep.subr.bf16.mxu0 %v6078
          %6156 = vmatpush2.bf16.msra.mxu0 %v6077
          %6157 = vmatprep.mubr.bf16.mxu0 %v5908
          %6158 = vmatmul.mubr.bf16.gmra.mxu0 %v5907
          %v6159 = vpop.f32.mrf.mxu0
          %v6160 = vadd.f32 %v5958, %v6159
          %v6161 = vpop.f32.mrf.mxu0
          %v6162 = vadd.f32 %v5962, %v6161
          %v6163 = vpop.f32.mrf.mxu0
          %v6164 = vadd.f32 %v5958, %v6163
          %v6165 = vpop.f32.mrf.mxu0
          %v6166 = vadd.f32 %v5962, %v6165
          %6167 = vmatprep.mubr.bf16.mxu0 %v5910
          %6168 = vmatmul.mubr.bf16.gmra.mxu0 %v5909
          %v6169 = vpop.f32.mrf.mxu0
          %v6170 = vadd.f32 %v5958, %v6169
          %v6171 = vpop.f32.mrf.mxu0
          %v6172 = vadd.f32 %v5962, %v6171
          %v6173 = vpop.f32.mrf.mxu0
          %v6174 = vadd.f32 %v5958, %v6173
          %v6175 = vpop.f32.mrf.mxu0
          %v6176 = vadd.f32 %v5962, %v6175
          %6177 = vmatprep.mubr.bf16.mxu0 %v5912
          %6178 = vmatmul.mubr.bf16.gmra.mxu0 %v5911
          %v6179 = vpop.f32.mrf.mxu0
          %v6180 = vadd.f32 %v5958, %v6179
          %v6181 = vpop.f32.mrf.mxu0
          %v6182 = vadd.f32 %v5962, %v6181
          %v6183 = vpop.f32.mrf.mxu0
          %v6184 = vadd.f32 %v5958, %v6183
          %v6185 = vpop.f32.mrf.mxu0
          %v6186 = vadd.f32 %v5962, %v6185
          %6187 = vmatprep.mubr.bf16.mxu0 %v5914
          %6188 = vmatmul.mubr.bf16.gmra.mxu0 %v5913
          %v6189 = vpop.f32.mrf.mxu0
          %v6190 = vadd.f32 %v5958, %v6189
          %v6191 = vpop.f32.mrf.mxu0
          %v6192 = vadd.f32 %v5962, %v6191
          %v6193 = vpop.f32.mrf.mxu0
          %v6194 = vadd.f32 %v5958, %v6193
          %v6195 = vpop.f32.mrf.mxu0
          %v6196 = vadd.f32 %v5962, %v6195
          %6197 = vmatprep.mubr.bf16.mxu0 %v5916
          %6198 = vmatmul.mubr.bf16.gmra.mxu0 %v5915
          %v6199 = vpop.f32.mrf.mxu0
          %v6200 = vadd.f32 %v5958, %v6199
          %v6201 = vpop.f32.mrf.mxu0
          %v6202 = vadd.f32 %v5962, %v6201
          %v6203 = vpop.f32.mrf.mxu0
          %v6204 = vadd.f32 %v5958, %v6203
          %v6205 = vpop.f32.mrf.mxu0
          %v6206 = vadd.f32 %v5962, %v6205
          %6207 = vmatprep.mubr.bf16.mxu0 %v5918
          %6208 = vmatmul.mubr.bf16.gmra.mxu0 %v5917
          %v6209 = vpop.f32.mrf.mxu0
          %v6210 = vadd.f32 %v5958, %v6209
          %v6211 = vpop.f32.mrf.mxu0
          %v6212 = vadd.f32 %v5962, %v6211
          %v6213 = vpop.f32.mrf.mxu0
          %v6214 = vadd.f32 %v5958, %v6213
          %v6215 = vpop.f32.mrf.mxu0
          %v6216 = vadd.f32 %v5962, %v6215
          %6217 = vmatprep.mubr.bf16.mxu0 %v5920
          %6218 = vmatmul.mubr.bf16.gmra.mxu0 %v5919
          %v6219 = vpop.f32.mrf.mxu0
          %v6220 = vadd.f32 %v5958, %v6219
          %v6221 = vpop.f32.mrf.mxu0
          %v6222 = vadd.f32 %v5962, %v6221
          %v6223 = vpop.f32.mrf.mxu0
          %v6224 = vpop.f32.mrf.mxu0
          %6225 = vdwg.mxu0
          %v6226 = vpack.c.bf16 %v6164, %v6160
          %v6227 = vpack.c.bf16 %v6166, %v6162
          %v6228 = vpack.c.bf16 %v6174, %v6170
          %v6229 = vpack.c.bf16 %v6176, %v6172
          %v6230 = vpack.c.bf16 %v6184, %v6180
          %v6231 = vpack.c.bf16 %v6186, %v6182
          %v6232 = vpack.c.bf16 %v6194, %v6190
          %v6233 = vpack.c.bf16 %v6196, %v6192
          %v6234 = vpack.c.bf16 %v6204, %v6200
          %v6235 = vpack.c.bf16 %v6206, %v6202
          %v6236 = vpack.c.bf16 %v6214, %v6210
          %v6237 = vpack.c.bf16 %v6216, %v6212
          %v6238 = vpack.c.bf16 %v6220, %v6220
          %v6239 = vpack.c.bf16 %v6222, %v6222
          %6240 = vmatprep.subr.bf16.mxu0 %v5731
          %6241 = vmatpush1.bf16.msra.mxu0 %v5730
          %6242 = vmatprep.subr.bf16.mxu0 %v5729
          %6243 = vmatpush1.bf16.msra.mxu0 %v5728
          %6244 = vmatprep.subr.bf16.mxu0 %v5727
          %6245 = vmatpush1.bf16.msra.mxu0 %v5726
          %6246 = vmatprep.subr.bf16.mxu0 %v5725
          %6247 = vmatpush1.bf16.msra.mxu0 %v5724
          %6248 = vmatprep.subr.bf16.mxu0 %v5723
          %6249 = vmatpush1.bf16.msra.mxu0 %v5722
          %6250 = vmatprep.subr.bf16.mxu0 %v5721
          %6251 = vmatpush1.bf16.msra.mxu0 %v5720
          %6252 = vmatprep.subr.bf16.mxu0 %v5719
          %6253 = vmatpush1.bf16.msra.mxu0 %v5718
          %6254 = vmatprep.subr.bf16.mxu0 %v5717
          %6255 = vmatpush1.bf16.msra.mxu0 %v5716
          %6256 = vmatprep.subr.bf16.mxu0 %v5747
          %6257 = vmatpush2.bf16.msra.mxu0 %v5746
          %6258 = vmatprep.subr.bf16.mxu0 %v5745
          %6259 = vmatpush2.bf16.msra.mxu0 %v5744
          %6260 = vmatprep.subr.bf16.mxu0 %v5743
          %6261 = vmatpush2.bf16.msra.mxu0 %v5742
          %6262 = vmatprep.subr.bf16.mxu0 %v5741
          %6263 = vmatpush2.bf16.msra.mxu0 %v5740
          %6264 = vmatprep.subr.bf16.mxu0 %v5739
          %6265 = vmatpush2.bf16.msra.mxu0 %v5738
          %6266 = vmatprep.subr.bf16.mxu0 %v5737
          %6267 = vmatpush2.bf16.msra.mxu0 %v5736
          %6268 = vmatprep.subr.bf16.mxu0 %v5735
          %6269 = vmatpush2.bf16.msra.mxu0 %v5734
          %6270 = vmatprep.subr.bf16.mxu0 %v5733
          %6271 = vmatpush2.bf16.msra.mxu0 %v5732
          %6272 = vmatprep.mubr.bf16.mxu0 %v6227
          %6273 = vmatmul.mubr.bf16.gmra.mxu0 %v6226
          %v6274 = vpop.f32.mrf.mxu0
          %v6275 = vadd.f32 %v3702, %v6274
          %v6276 = vpop.f32.mrf.mxu0
          %v6277 = vadd.f32 %v3704, %v6276
          %v6278 = vpop.f32.mrf.mxu0
          %v6279 = vadd.f32 %v3706, %v6278
          %v6280 = vpop.f32.mrf.mxu0
          %v6281 = vadd.f32 %v3708, %v6280
          %6282 = vmatprep.mubr.bf16.mxu0 %v6229
          %6283 = vmatmul.mubr.bf16.gmra.mxu0 %v6228
          %v6284 = vpop.f32.mrf.mxu0
          %v6285 = vadd.f32 %v3712, %v6284
          %v6286 = vpop.f32.mrf.mxu0
          %v6287 = vadd.f32 %v3714, %v6286
          %v6288 = vpop.f32.mrf.mxu0
          %v6289 = vadd.f32 %v3716, %v6288
          %v6290 = vpop.f32.mrf.mxu0
          %v6291 = vadd.f32 %v3718, %v6290
          %6292 = vmatprep.mubr.bf16.mxu0 %v6231
          %6293 = vmatmul.mubr.bf16.gmra.mxu0 %v6230
          %v6294 = vpop.f32.mrf.mxu0
          %v6295 = vadd.f32 %v3722, %v6294
          %v6296 = vpop.f32.mrf.mxu0
          %v6297 = vadd.f32 %v3724, %v6296
          %v6298 = vpop.f32.mrf.mxu0
          %v6299 = vadd.f32 %v3726, %v6298
          %v6300 = vpop.f32.mrf.mxu0
          %v6301 = vadd.f32 %v3728, %v6300
          %6302 = vmatprep.mubr.bf16.mxu0 %v6233
          %6303 = vmatmul.mubr.bf16.gmra.mxu0 %v6232
          %v6304 = vpop.f32.mrf.mxu0
          %v6305 = vadd.f32 %v3732, %v6304
          %v6306 = vpop.f32.mrf.mxu0
          %v6307 = vadd.f32 %v3734, %v6306
          %v6308 = vpop.f32.mrf.mxu0
          %v6309 = vadd.f32 %v3736, %v6308
          %v6310 = vpop.f32.mrf.mxu0
          %v6311 = vadd.f32 %v3738, %v6310
          %6312 = vmatprep.mubr.bf16.mxu0 %v6235
          %6313 = vmatmul.mubr.bf16.gmra.mxu0 %v6234
          %v6314 = vpop.f32.mrf.mxu0
          %v6315 = vadd.f32 %v3742, %v6314
          %v6316 = vpop.f32.mrf.mxu0
          %v6317 = vadd.f32 %v3744, %v6316
          %v6318 = vpop.f32.mrf.mxu0
          %v6319 = vadd.f32 %v3746, %v6318
          %v6320 = vpop.f32.mrf.mxu0
          %v6321 = vadd.f32 %v3748, %v6320
          %6322 = vmatprep.mubr.bf16.mxu0 %v6237
          %6323 = vmatmul.mubr.bf16.gmra.mxu0 %v6236
          %v6324 = vpop.f32.mrf.mxu0
          %v6325 = vadd.f32 %v3752, %v6324
          %v6326 = vpop.f32.mrf.mxu0
          %v6327 = vadd.f32 %v3754, %v6326
          %v6328 = vpop.f32.mrf.mxu0
          %v6329 = vadd.f32 %v3756, %v6328
          %v6330 = vpop.f32.mrf.mxu0
          %v6331 = vadd.f32 %v3758, %v6330
          %6332 = vmatprep.mubr.bf16.mxu0 %v6239
          %6333 = vmatmul.mubr.bf16.gmra.mxu0 %v6238
          %v6334 = vpop.f32.mrf.mxu0
          %v6335 = vadd.f32 %v3762, %v6334
          %v6336 = vpop.f32.mrf.mxu0
          %v6337 = vadd.f32 %v3764, %v6336
          %v6338 = vpop.f32.mrf.mxu0
          %v6339 = vpop.f32.mrf.mxu0
          %6340 = vdwg.mxu0
          %v6341 = vmax.f32 %v6275, 0.0
          %v6342 = vmax.f32 %v6277, 0.0
          %v6343 = vmax.f32 %v6279, 0.0
          %v6344 = vmax.f32 %v6281, 0.0
          %v6345 = vmax.f32 %v6285, 0.0
          %v6346 = vmax.f32 %v6287, 0.0
          %v6347 = vmax.f32 %v6289, 0.0
          %v6348 = vmax.f32 %v6291, 0.0
          %v6349 = vmax.f32 %v6295, 0.0
          %v6350 = vmax.f32 %v6297, 0.0
          %v6351 = vmax.f32 %v6299, 0.0
          %v6352 = vmax.f32 %v6301, 0.0
          %v6353 = vmax.f32 %v6305, 0.0
          %v6354 = vmax.f32 %v6307, 0.0
          %v6355 = vmax.f32 %v6309, 0.0
          %v6356 = vmax.f32 %v6311, 0.0
          %v6357 = vmax.f32 %v6315, 0.0
          %v6358 = vmax.f32 %v6317, 0.0
          %v6359 = vmax.f32 %v6319, 0.0
          %v6360 = vmax.f32 %v6321, 0.0
          %v6361 = vmax.f32 %v6325, 0.0
          %v6362 = vmax.f32 %v6327, 0.0
          %v6363 = vmax.f32 %v6329, 0.0
          %v6364 = vmax.f32 %v6331, 0.0
          %v6365 = vmax.f32 %v6335, 0.0
          %v6366 = vmax.f32 %v6337, 0.0
          %v6367 = vpack.c.bf16 %v6343, %v6341
          %v6368 = vpack.c.bf16 %v6344, %v6342
          %v6369 = vpack.c.bf16 %v6347, %v6345
          %v6370 = vpack.c.bf16 %v6348, %v6346
          %v6371 = vpack.c.bf16 %v6351, %v6349
          %v6372 = vpack.c.bf16 %v6352, %v6350
          %v6373 = vpack.c.bf16 %v6355, %v6353
          %v6374 = vpack.c.bf16 %v6356, %v6354
          %v6375 = vpack.c.bf16 %v6359, %v6357
          %v6376 = vpack.c.bf16 %v6360, %v6358
          %v6377 = vpack.c.bf16 %v6363, %v6361
          %v6378 = vpack.c.bf16 %v6364, %v6362
          %v6379 = vpack.c.bf16 %v6365, %v6365
          %v6380 = vpack.c.bf16 %v6366, %v6366
          %6381 = vmatprep.subr.bf16.mxu0 %v6076
          %6382 = vmatpush1.bf16.msra.mxu0 %v6075
          %6383 = vmatprep.subr.bf16.mxu0 %v6074
          %6384 = vmatpush1.bf16.msra.mxu0 %v6073
          %6385 = vmatprep.subr.bf16.mxu0 %v6072
          %6386 = vmatpush1.bf16.msra.mxu0 %v6071
          %6387 = vmatprep.subr.bf16.mxu0 %v6070
          %6388 = vmatpush1.bf16.msra.mxu0 %v6069
          %6389 = vmatprep.subr.bf16.mxu0 %v6068
          %6390 = vmatpush1.bf16.msra.mxu0 %v6067
          %6391 = vmatprep.subr.bf16.mxu0 %v6066
          %6392 = vmatpush1.bf16.msra.mxu0 %v6065
          %6393 = vmatprep.subr.bf16.mxu0 %v6064
          %6394 = vmatpush1.bf16.msra.mxu0 %v6063
          %6395 = vmatprep.subr.bf16.mxu0 %v6062
          %6396 = vmatpush1.bf16.msra.mxu0 %v6061
          %6397 = vmatprep.subr.bf16.mxu0 %v6092
          %6398 = vmatpush2.bf16.msra.mxu0 %v6091
          %6399 = vmatprep.subr.bf16.mxu0 %v6090
          %6400 = vmatpush2.bf16.msra.mxu0 %v6089
          %6401 = vmatprep.subr.bf16.mxu0 %v6088
          %6402 = vmatpush2.bf16.msra.mxu0 %v6087
          %6403 = vmatprep.subr.bf16.mxu0 %v6086
          %6404 = vmatpush2.bf16.msra.mxu0 %v6085
          %6405 = vmatprep.subr.bf16.mxu0 %v6084
          %6406 = vmatpush2.bf16.msra.mxu0 %v6083
          %6407 = vmatprep.subr.bf16.mxu0 %v6082
          %6408 = vmatpush2.bf16.msra.mxu0 %v6081
          %6409 = vmatprep.subr.bf16.mxu0 %v6080
          %6410 = vmatpush2.bf16.msra.mxu0 %v6079
          %6411 = vmatprep.subr.bf16.mxu0 %v6078
          %6412 = vmatpush2.bf16.msra.mxu0 %v6077
          %6413 = vmatprep.mubr.bf16.mxu0 %v6368
          %6414 = vmatmul.mubr.bf16.gmra.mxu0 %v6367
          %v6415 = vpop.f32.mrf.mxu0
          %v6416 = vadd.f32 %v5958, %v6415
          %v6417 = vpop.f32.mrf.mxu0
          %v6418 = vadd.f32 %v5962, %v6417
          %v6419 = vpop.f32.mrf.mxu0
          %v6420 = vadd.f32 %v5958, %v6419
          %v6421 = vpop.f32.mrf.mxu0
          %v6422 = vadd.f32 %v5962, %v6421
          %6423 = vmatprep.mubr.bf16.mxu0 %v6370
          %6424 = vmatmul.mubr.bf16.gmra.mxu0 %v6369
          %v6425 = vpop.f32.mrf.mxu0
          %v6426 = vadd.f32 %v5958, %v6425
          %v6427 = vpop.f32.mrf.mxu0
          %v6428 = vadd.f32 %v5962, %v6427
          %v6429 = vpop.f32.mrf.mxu0
          %v6430 = vadd.f32 %v5958, %v6429
          %v6431 = vpop.f32.mrf.mxu0
          %v6432 = vadd.f32 %v5962, %v6431
          %6433 = vmatprep.mubr.bf16.mxu0 %v6372
          %6434 = vmatmul.mubr.bf16.gmra.mxu0 %v6371
          %v6435 = vpop.f32.mrf.mxu0
          %v6436 = vadd.f32 %v5958, %v6435
          %v6437 = vpop.f32.mrf.mxu0
          %v6438 = vadd.f32 %v5962, %v6437
          %v6439 = vpop.f32.mrf.mxu0
          %v6440 = vadd.f32 %v5958, %v6439
          %v6441 = vpop.f32.mrf.mxu0
          %v6442 = vadd.f32 %v5962, %v6441
          %6443 = vmatprep.mubr.bf16.mxu0 %v6374
          %6444 = vmatmul.mubr.bf16.gmra.mxu0 %v6373
          %v6445 = vpop.f32.mrf.mxu0
          %v6446 = vadd.f32 %v5958, %v6445
          %v6447 = vpop.f32.mrf.mxu0
          %v6448 = vadd.f32 %v5962, %v6447
          %v6449 = vpop.f32.mrf.mxu0
          %v6450 = vadd.f32 %v5958, %v6449
          %v6451 = vpop.f32.mrf.mxu0
          %v6452 = vadd.f32 %v5962, %v6451
          %6453 = vmatprep.mubr.bf16.mxu0 %v6376
          %6454 = vmatmul.mubr.bf16.gmra.mxu0 %v6375
          %v6455 = vpop.f32.mrf.mxu0
          %v6456 = vadd.f32 %v5958, %v6455
          %v6457 = vpop.f32.mrf.mxu0
          %v6458 = vadd.f32 %v5962, %v6457
          %v6459 = vpop.f32.mrf.mxu0
          %v6460 = vadd.f32 %v5958, %v6459
          %v6461 = vpop.f32.mrf.mxu0
          %v6462 = vadd.f32 %v5962, %v6461
          %6463 = vmatprep.mubr.bf16.mxu0 %v6378
          %6464 = vmatmul.mubr.bf16.gmra.mxu0 %v6377
          %v6465 = vpop.f32.mrf.mxu0
          %v6466 = vadd.f32 %v5958, %v6465
          %v6467 = vpop.f32.mrf.mxu0
          %v6468 = vadd.f32 %v5962, %v6467
          %v6469 = vpop.f32.mrf.mxu0
          %v6470 = vadd.f32 %v5958, %v6469
          %v6471 = vpop.f32.mrf.mxu0
          %v6472 = vadd.f32 %v5962, %v6471
          %6473 = vmatprep.mubr.bf16.mxu0 %v6380
          %6474 = vmatmul.mubr.bf16.gmra.mxu0 %v6379
          %v6475 = vpop.f32.mrf.mxu0
          %v6476 = vadd.f32 %v5958, %v6475
          %v6477 = vpop.f32.mrf.mxu0
          %v6478 = vadd.f32 %v5962, %v6477
          %v6479 = vpop.f32.mrf.mxu0
          %v6480 = vpop.f32.mrf.mxu0
          %6481 = vdwg.mxu0
          %v6482 = vadd.f32 %v6416, %v5548
          %v6483 = vadd.f32 %v6418, %v5549
          %v6484 = vadd.f32 %v6420, %v5550
          %v6485 = vadd.f32 %v6422, %v5551
          %v6486 = vadd.f32 %v6426, %v5552
          %v6487 = vadd.f32 %v6428, %v5553
          %v6488 = vadd.f32 %v6430, %v5554
          %v6489 = vadd.f32 %v6432, %v5555
          %v6490 = vadd.f32 %v6436, %v5556
          %v6491 = vadd.f32 %v6438, %v5557
          %v6492 = vadd.f32 %v6440, %v5558
          %v6493 = vadd.f32 %v6442, %v5559
          %v6494 = vadd.f32 %v6446, %v5560
          %v6495 = vadd.f32 %v6448, %v5561
          %v6496 = vadd.f32 %v6450, %v5562
          %v6497 = vadd.f32 %v6452, %v5563
          %v6498 = vadd.f32 %v6456, %v5564
          %v6499 = vadd.f32 %v6458, %v5565
          %v6500 = vadd.f32 %v6460, %v5566
          %v6501 = vadd.f32 %v6462, %v5567
          %v6502 = vadd.f32 %v6466, %v5568
          %v6503 = vadd.f32 %v6468, %v5569
          %v6504 = vadd.f32 %v6470, %v5570
          %v6505 = vadd.f32 %v6472, %v5571
          %v6506 = vadd.f32 %v6476, %v5572
          %v6507 = vadd.f32 %v6478, %v5573
        $region201: #{_lambda_.3} parent=159 // loop_footer
          %s5547 = sadd.s32 1, %s5543
        $region202: #{_lambda_.3} parent=159 // loop_footer_branch
          %5542 = sbr.rel target = $region198
        $region203: #{_lambda_.3} parent=159 // loop_exit
          _
        %v6508 = vpack.c.bf16 %v5550, %v5548
        %v6509 = vpack.c.bf16 %v5551, %v5549
        %v6510 = vpack.c.bf16 %v5554, %v5552
        %v6511 = vpack.c.bf16 %v5555, %v5553
        %v6512 = vpack.c.bf16 %v5558, %v5556
        %v6513 = vpack.c.bf16 %v5559, %v5557
        %v6514 = vpack.c.bf16 %v5562, %v5560
        %v6515 = vpack.c.bf16 %v5563, %v5561
        %v6516 = vpack.c.bf16 %v5566, %v5564
        %v6517 = vpack.c.bf16 %v5567, %v5565
        %v6518 = vpack.c.bf16 %v5570, %v5568
        %v6519 = vpack.c.bf16 %v5571, %v5569
        %v6520 = vpack.c.bf16 %v5572, %v5572
        %v6521 = vpack.c.bf16 %v5573, %v5573
        %v6522 = vld [vmem:[#allocation11] sm:$0xff]
        %v6523 = vld [vmem:[#allocation11 + $0x8] sm:$0xff]
        %v6524 = vld [vmem:[#allocation11 + $0x10] sm:$0xff]
        %v6525 = vld [vmem:[#allocation11 + $0x18] sm:$0xff]
        %v6526 = vld [vmem:[#allocation11 + $0x20] sm:$0xff]
        %v6527 = vld [vmem:[#allocation11 + $0x28] sm:$0xff]
        %v6528 = vld [vmem:[#allocation11 + $0x30] sm:$0xff]
        %v6529 = vld [vmem:[#allocation11 + $0x38] sm:$0xff]
        %v6530 = vld [vmem:[#allocation11 + $0x40] sm:$0xff]
        %v6531 = vld [vmem:[#allocation11 + $0x48] sm:$0xff]
        %v6532 = vld [vmem:[#allocation11 + $0x50] sm:$0xff]
        %v6533 = vld [vmem:[#allocation11 + $0x58] sm:$0xff]
        %v6534 = vld [vmem:[#allocation11 + $0x60] sm:$0xff]
        %v6535 = vld [vmem:[#allocation11 + $0x68] sm:$0xff]
        %v6536 = vld [vmem:[#allocation11 + $0x70] sm:$0xff]
        %v6537 = vld [vmem:[#allocation11 + $0x78] sm:$0xff]
        %v6538 = vld [vmem:[#allocation11 + $0x80] sm:$0xff]
        %v6539 = vld [vmem:[#allocation11 + $0x88] sm:$0xff]
        %v6540 = vld [vmem:[#allocation11 + $0x90] sm:$0xff]
        %v6541 = vld [vmem:[#allocation11 + $0x98] sm:$0xff]
        %v6542 = vld [vmem:[#allocation11 + $0xa0] sm:$0xff]
        %v6543 = vld [vmem:[#allocation11 + $0xa8] sm:$0xff]
        %v6544 = vld [vmem:[#allocation11 + $0xb0] sm:$0xff]
        %v6545 = vld [vmem:[#allocation11 + $0xb8] sm:$0xff]
        %v6546 = vld [vmem:[#allocation11 + $0xc0] sm:$0xff]
        %v6547 = vld [vmem:[#allocation11 + $0xc8] sm:$0xff]
        %v6548 = vld [vmem:[#allocation11 + $0xd0] sm:$0xff]
        %v6549 = vld [vmem:[#allocation11 + $0xd8] sm:$0xff]
        %v6550 = vld [vmem:[#allocation11 + $0xe0] sm:$0xff]
        %v6551 = vld [vmem:[#allocation11 + $0xe8] sm:$0xff]
        %v6552 = vld [vmem:[#allocation11 + $0xf0] sm:$0xff]
        %v6553 = vld [vmem:[#allocation11 + $0xf8] sm:$0xff]
        %v6586 = vunpack.c.l.b16 %v6522
        %v6587 = vunpack.c.h.b16 %v6522
        %v6588 = vunpack.c.l.b16 %v6523
        %v6589 = vunpack.c.h.b16 %v6523
        %v6590 = vunpack.c.l.b16 %v6524
        %v6591 = vunpack.c.h.b16 %v6524
        %v6592 = vunpack.c.l.b16 %v6525
        %v6593 = vunpack.c.h.b16 %v6525
        %v6594 = vunpack.c.l.b16 %v6526
        %v6595 = vunpack.c.h.b16 %v6526
        %v6596 = vunpack.c.l.b16 %v6527
        %v6597 = vunpack.c.h.b16 %v6527
        %v6598 = vunpack.c.l.b16 %v6528
        %v6599 = vunpack.c.h.b16 %v6528
        %v6600 = vunpack.c.l.b16 %v6529
        %v6601 = vunpack.c.h.b16 %v6529
        %v6602 = vunpack.c.l.b16 %v6530
        %v6603 = vunpack.c.h.b16 %v6530
        %v6604 = vunpack.c.l.b16 %v6531
        %v6605 = vunpack.c.h.b16 %v6531
        %v6606 = vunpack.c.l.b16 %v6532
        %v6607 = vunpack.c.h.b16 %v6532
        %v6608 = vunpack.c.l.b16 %v6533
        %v6609 = vunpack.c.h.b16 %v6533
        %v6610 = vunpack.c.l.b16 %v6534
        %v6611 = vunpack.c.h.b16 %v6534
        %v6612 = vunpack.c.l.b16 %v6535
        %v6613 = vunpack.c.h.b16 %v6535
        %v6614 = vunpack.c.l.b16 %v6536
        %v6615 = vunpack.c.h.b16 %v6536
        %v6616 = vunpack.c.l.b16 %v6537
        %v6617 = vunpack.c.h.b16 %v6537
        %v6618 = vunpack.c.l.b16 %v6538
        %v6619 = vunpack.c.h.b16 %v6538
        %v6620 = vunpack.c.l.b16 %v6539
        %v6621 = vunpack.c.h.b16 %v6539
        %v6622 = vunpack.c.l.b16 %v6540
        %v6623 = vunpack.c.h.b16 %v6540
        %v6624 = vunpack.c.l.b16 %v6541
        %v6625 = vunpack.c.h.b16 %v6541
        %v6626 = vunpack.c.l.b16 %v6542
        %v6627 = vunpack.c.h.b16 %v6542
        %v6628 = vunpack.c.l.b16 %v6543
        %v6629 = vunpack.c.h.b16 %v6543
        %v6630 = vunpack.c.l.b16 %v6544
        %v6631 = vunpack.c.h.b16 %v6544
        %v6632 = vunpack.c.l.b16 %v6545
        %v6633 = vunpack.c.h.b16 %v6545
        %v6634 = vunpack.c.l.b16 %v6546
        %v6635 = vunpack.c.h.b16 %v6546
        %v6636 = vunpack.c.l.b16 %v6547
        %v6637 = vunpack.c.h.b16 %v6547
        %v6638 = vunpack.c.l.b16 %v6548
        %v6639 = vunpack.c.h.b16 %v6548
        %v6640 = vunpack.c.l.b16 %v6549
        %v6641 = vunpack.c.h.b16 %v6549
        %v6642 = vunpack.c.l.b16 %v6550
        %v6643 = vunpack.c.h.b16 %v6550
        %v6644 = vunpack.c.l.b16 %v6551
        %v6645 = vunpack.c.h.b16 %v6551
        %v6646 = vunpack.c.l.b16 %v6552
        %v6647 = vunpack.c.h.b16 %v6552
        %v6648 = vunpack.c.l.b16 %v6553
        %v6649 = vunpack.c.h.b16 %v6553
        %v6650 = vpack.c.b16 %v6588, %v6586
        %v6651 = vpack.c.b16 %v6589, %v6587
        %v6652 = vpack.c.b16 %v6592, %v6590
        %v6653 = vpack.c.b16 %v6593, %v6591
        %v6654 = vpack.c.b16 %v6596, %v6594
        %v6655 = vpack.c.b16 %v6597, %v6595
        %v6656 = vpack.c.b16 %v6600, %v6598
        %v6657 = vpack.c.b16 %v6601, %v6599
        %v6658 = vpack.c.b16 %v6604, %v6602
        %v6659 = vpack.c.b16 %v6605, %v6603
        %v6660 = vpack.c.b16 %v6608, %v6606
        %v6661 = vpack.c.b16 %v6609, %v6607
        %v6662 = vpack.c.b16 %v6612, %v6610
        %v6663 = vpack.c.b16 %v6613, %v6611
        %v6664 = vpack.c.b16 %v6616, %v6614
        %v6665 = vpack.c.b16 %v6617, %v6615
        %v6666 = vpack.c.b16 %v6620, %v6618
        %v6667 = vpack.c.b16 %v6621, %v6619
        %v6668 = vpack.c.b16 %v6624, %v6622
        %v6669 = vpack.c.b16 %v6625, %v6623
        %v6670 = vpack.c.b16 %v6628, %v6626
        %v6671 = vpack.c.b16 %v6629, %v6627
        %v6672 = vpack.c.b16 %v6632, %v6630
        %v6673 = vpack.c.b16 %v6633, %v6631
        %v6674 = vpack.c.b16 %v6636, %v6634
        %v6675 = vpack.c.b16 %v6637, %v6635
        %v6676 = vpack.c.b16 %v6640, %v6638
        %v6677 = vpack.c.b16 %v6641, %v6639
        %v6678 = vpack.c.b16 %v6644, %v6642
        %v6679 = vpack.c.b16 %v6645, %v6643
        %v6680 = vpack.c.b16 %v6648, %v6646
        %v6681 = vpack.c.b16 %v6649, %v6647
        %6714 = vmatprep.subr.bf16.mxu0 %v6665
        %6715 = vmatpush1.bf16.msra.mxu0 %v6664
        %6716 = vmatprep.subr.bf16.mxu0 %v6663
        %6717 = vmatpush1.bf16.msra.mxu0 %v6662
        %6718 = vmatprep.subr.bf16.mxu0 %v6661
        %6719 = vmatpush1.bf16.msra.mxu0 %v6660
        %6720 = vmatprep.subr.bf16.mxu0 %v6659
        %6721 = vmatpush1.bf16.msra.mxu0 %v6658
        %6722 = vmatprep.subr.bf16.mxu0 %v6657
        %6723 = vmatpush1.bf16.msra.mxu0 %v6656
        %6724 = vmatprep.subr.bf16.mxu0 %v6655
        %6725 = vmatpush1.bf16.msra.mxu0 %v6654
        %6726 = vmatprep.subr.bf16.mxu0 %v6653
        %6727 = vmatpush1.bf16.msra.mxu0 %v6652
        %6728 = vmatprep.subr.bf16.mxu0 %v6651
        %6729 = vmatpush1.bf16.msra.mxu0 %v6650
        %6730 = vmatprep.subr.bf16.mxu0 %v6681
        %6731 = vmatpush2.bf16.msra.mxu0 %v6680
        %6732 = vmatprep.subr.bf16.mxu0 %v6679
        %6733 = vmatpush2.bf16.msra.mxu0 %v6678
        %6734 = vmatprep.subr.bf16.mxu0 %v6677
        %6735 = vmatpush2.bf16.msra.mxu0 %v6676
        %6736 = vmatprep.subr.bf16.mxu0 %v6675
        %6737 = vmatpush2.bf16.msra.mxu0 %v6674
        %6738 = vmatprep.subr.bf16.mxu0 %v6673
        %6739 = vmatpush2.bf16.msra.mxu0 %v6672
        %6740 = vmatprep.subr.bf16.mxu0 %v6671
        %6741 = vmatpush2.bf16.msra.mxu0 %v6670
        %6742 = vmatprep.subr.bf16.mxu0 %v6669
        %6743 = vmatpush2.bf16.msra.mxu0 %v6668
        %6744 = vmatprep.subr.bf16.mxu0 %v6667
        %6745 = vmatpush2.bf16.msra.mxu0 %v6666
        %6746 = vmatprep.mubr.bf16.mxu0 %v6509
        %6747 = vmatmul.mubr.bf16.gmra.mxu0 %v6508
        %v6748 = vpop.f32.mrf.mxu0
        %v6749 = vadd.f32 %v3803, %v6748
        %v6750 = vpop.f32.mrf.mxu0
        %v6751 = vadd.f32 %v3805, %v6750
        %v6752 = vpop.f32.mrf.mxu0
        %v6753 = vadd.f32 %v3807, %v6752
        %v6754 = vpop.f32.mrf.mxu0
        %v6755 = vadd.f32 %v3809, %v6754
        %6756 = vmatprep.mubr.bf16.mxu0 %v6511
        %6757 = vmatmul.mubr.bf16.gmra.mxu0 %v6510
        %v6758 = vpop.f32.mrf.mxu0
        %v6759 = vadd.f32 %v3813, %v6758
        %v6760 = vpop.f32.mrf.mxu0
        %v6761 = vadd.f32 %v3815, %v6760
        %v6762 = vpop.f32.mrf.mxu0
        %v6763 = vadd.f32 %v3817, %v6762
        %v6764 = vpop.f32.mrf.mxu0
        %v6765 = vadd.f32 %v3819, %v6764
        %6766 = vmatprep.mubr.bf16.mxu0 %v6513
        %6767 = vmatmul.mubr.bf16.gmra.mxu0 %v6512
        %v6768 = vpop.f32.mrf.mxu0
        %v6769 = vadd.f32 %v3823, %v6768
        %v6770 = vpop.f32.mrf.mxu0
        %v6771 = vadd.f32 %v3825, %v6770
        %v6772 = vpop.f32.mrf.mxu0
        %v6773 = vadd.f32 %v3827, %v6772
        %v6774 = vpop.f32.mrf.mxu0
        %v6775 = vadd.f32 %v3829, %v6774
        %6776 = vmatprep.mubr.bf16.mxu0 %v6515
        %6777 = vmatmul.mubr.bf16.gmra.mxu0 %v6514
        %v6778 = vpop.f32.mrf.mxu0
        %v6779 = vadd.f32 %v3833, %v6778
        %v6780 = vpop.f32.mrf.mxu0
        %v6781 = vadd.f32 %v3835, %v6780
        %v6782 = vpop.f32.mrf.mxu0
        %v6783 = vadd.f32 %v3837, %v6782
        %v6784 = vpop.f32.mrf.mxu0
        %v6785 = vadd.f32 %v3839, %v6784
        %6786 = vmatprep.mubr.bf16.mxu0 %v6517
        %6787 = vmatmul.mubr.bf16.gmra.mxu0 %v6516
        %v6788 = vpop.f32.mrf.mxu0
        %v6789 = vadd.f32 %v3843, %v6788
        %v6790 = vpop.f32.mrf.mxu0
        %v6791 = vadd.f32 %v3845, %v6790
        %v6792 = vpop.f32.mrf.mxu0
        %v6793 = vadd.f32 %v3847, %v6792
        %v6794 = vpop.f32.mrf.mxu0
        %v6795 = vadd.f32 %v3849, %v6794
        %6796 = vmatprep.mubr.bf16.mxu0 %v6519
        %6797 = vmatmul.mubr.bf16.gmra.mxu0 %v6518
        %v6798 = vpop.f32.mrf.mxu0
        %v6799 = vadd.f32 %v3853, %v6798
        %v6800 = vpop.f32.mrf.mxu0
        %v6801 = vadd.f32 %v3855, %v6800
        %v6802 = vpop.f32.mrf.mxu0
        %v6803 = vadd.f32 %v3857, %v6802
        %v6804 = vpop.f32.mrf.mxu0
        %v6805 = vadd.f32 %v3859, %v6804
        %6806 = vmatprep.mubr.bf16.mxu0 %v6521
        %6807 = vmatmul.mubr.bf16.gmra.mxu0 %v6520
        %v6808 = vpop.f32.mrf.mxu0
        %v6809 = vadd.f32 %v3863, %v6808
        %v6810 = vpop.f32.mrf.mxu0
        %v6811 = vadd.f32 %v3865, %v6810
        %v6812 = vpop.f32.mrf.mxu0
        %v6813 = vpop.f32.mrf.mxu0
        %6814 = vdwg.mxu0
        %v6815 = vmax.f32 %v6749, 0.0
        %v6816 = vmax.f32 %v6751, 0.0
        %v6817 = vmax.f32 %v6753, 0.0
        %v6818 = vmax.f32 %v6755, 0.0
        %v6819 = vmax.f32 %v6759, 0.0
        %v6820 = vmax.f32 %v6761, 0.0
        %v6821 = vmax.f32 %v6763, 0.0
        %v6822 = vmax.f32 %v6765, 0.0
        %v6823 = vmax.f32 %v6769, 0.0
        %v6824 = vmax.f32 %v6771, 0.0
        %v6825 = vmax.f32 %v6773, 0.0
        %v6826 = vmax.f32 %v6775, 0.0
        %v6827 = vmax.f32 %v6779, 0.0
        %v6828 = vmax.f32 %v6781, 0.0
        %v6829 = vmax.f32 %v6783, 0.0
        %v6830 = vmax.f32 %v6785, 0.0
        %v6831 = vmax.f32 %v6789, 0.0
        %v6832 = vmax.f32 %v6791, 0.0
        %v6833 = vmax.f32 %v6793, 0.0
        %v6834 = vmax.f32 %v6795, 0.0
        %v6835 = vmax.f32 %v6799, 0.0
        %v6836 = vmax.f32 %v6801, 0.0
        %v6837 = vmax.f32 %v6803, 0.0
        %v6838 = vmax.f32 %v6805, 0.0
        %v6839 = vmax.f32 %v6809, 0.0
        %v6840 = vmax.f32 %v6811, 0.0
        %v6841 = vpack.c.bf16 %v6817, %v6815
        %v6842 = vpack.c.bf16 %v6818, %v6816
        %v6843 = vpack.c.bf16 %v6821, %v6819
        %v6844 = vpack.c.bf16 %v6822, %v6820
        %v6845 = vpack.c.bf16 %v6825, %v6823
        %v6846 = vpack.c.bf16 %v6826, %v6824
        %v6847 = vpack.c.bf16 %v6829, %v6827
        %v6848 = vpack.c.bf16 %v6830, %v6828
        %v6849 = vpack.c.bf16 %v6833, %v6831
        %v6850 = vpack.c.bf16 %v6834, %v6832
        %v6851 = vpack.c.bf16 %v6837, %v6835
        %v6852 = vpack.c.bf16 %v6838, %v6836
        %v6853 = vpack.c.bf16 %v6839, %v6839
        %v6854 = vpack.c.bf16 %v6840, %v6840
        %v6855 = vld [vmem:[#allocation12] sm:$0xff]
        %v6856 = vld [vmem:[#allocation12 + $0x8] sm:$0xff]
        %v6857 = vld [vmem:[#allocation12 + $0x10] sm:$0xff]
        %v6858 = vld [vmem:[#allocation12 + $0x18] sm:$0xff]
        %v6859 = vld [vmem:[#allocation12 + $0x20] sm:$0xff]
        %v6860 = vld [vmem:[#allocation12 + $0x28] sm:$0xff]
        %v6861 = vld [vmem:[#allocation12 + $0x30] sm:$0xff]
        %v6862 = vld [vmem:[#allocation12 + $0x38] sm:$0xff]
        %v6863 = vld [vmem:[#allocation12 + $0x40] sm:$0xff]
        %v6864 = vld [vmem:[#allocation12 + $0x48] sm:$0xff]
        %v6865 = vld [vmem:[#allocation12 + $0x50] sm:$0xff]
        %v6866 = vld [vmem:[#allocation12 + $0x58] sm:$0xff]
        %v6867 = vld [vmem:[#allocation12 + $0x60] sm:$0xff]
        %v6868 = vld [vmem:[#allocation12 + $0x68] sm:$0xff]
        %v6869 = vld [vmem:[#allocation12 + $0x70] sm:$0xff]
        %v6870 = vld [vmem:[#allocation12 + $0x78] sm:$0xff]
        %v6871 = vld [vmem:[#allocation12 + $0x80] sm:$0xff]
        %v6872 = vld [vmem:[#allocation12 + $0x88] sm:$0xff]
        %v6873 = vld [vmem:[#allocation12 + $0x90] sm:$0xff]
        %v6874 = vld [vmem:[#allocation12 + $0x98] sm:$0xff]
        %v6875 = vld [vmem:[#allocation12 + $0xa0] sm:$0xff]
        %v6876 = vld [vmem:[#allocation12 + $0xa8] sm:$0xff]
        %v6877 = vld [vmem:[#allocation12 + $0xb0] sm:$0xff]
        %v6878 = vld [vmem:[#allocation12 + $0xb8] sm:$0xff]
        %v6879 = vld [vmem:[#allocation12 + $0xc0] sm:$0xff]
        %v6880 = vld [vmem:[#allocation12 + $0xc8] sm:$0xff]
        %v6881 = vld [vmem:[#allocation12 + $0xd0] sm:$0xff]
        %v6882 = vld [vmem:[#allocation12 + $0xd8] sm:$0xff]
        %v6883 = vld [vmem:[#allocation12 + $0xe0] sm:$0xff]
        %v6884 = vld [vmem:[#allocation12 + $0xe8] sm:$0xff]
        %v6885 = vld [vmem:[#allocation12 + $0xf0] sm:$0xff]
        %v6886 = vld [vmem:[#allocation12 + $0xf8] sm:$0xff]
        %v6887 = vld [vmem:[%s59] sm:$0x3]
        %v6889 = vlaneseq
        %v6890 = vshrl.u32 %v6889, 7
        %v6891 = vsub.s32 0, %v6890
        %v6892 = vrot.slane %v6887, %v6891
        %v6893 = vlaneseq
        %v6894 = vshrl.u32 %v6893, 7
        %v6895 = vsub.s32 1, %v6894
        %v6896 = vrot.slane %v6887, %v6895
        %v6931 = vunpack.c.l.b16 %v6855
        %v6932 = vunpack.c.h.b16 %v6855
        %v6933 = vunpack.c.l.b16 %v6856
        %v6934 = vunpack.c.h.b16 %v6856
        %v6935 = vunpack.c.l.b16 %v6857
        %v6936 = vunpack.c.h.b16 %v6857
        %v6937 = vunpack.c.l.b16 %v6858
        %v6938 = vunpack.c.h.b16 %v6858
        %v6939 = vunpack.c.l.b16 %v6859
        %v6940 = vunpack.c.h.b16 %v6859
        %v6941 = vunpack.c.l.b16 %v6860
        %v6942 = vunpack.c.h.b16 %v6860
        %v6943 = vunpack.c.l.b16 %v6861
        %v6944 = vunpack.c.h.b16 %v6861
        %v6945 = vunpack.c.l.b16 %v6862
        %v6946 = vunpack.c.h.b16 %v6862
        %v6947 = vunpack.c.l.b16 %v6863
        %v6948 = vunpack.c.h.b16 %v6863
        %v6949 = vunpack.c.l.b16 %v6864
        %v6950 = vunpack.c.h.b16 %v6864
        %v6951 = vunpack.c.l.b16 %v6865
        %v6952 = vunpack.c.h.b16 %v6865
        %v6953 = vunpack.c.l.b16 %v6866
        %v6954 = vunpack.c.h.b16 %v6866
        %v6955 = vunpack.c.l.b16 %v6867
        %v6956 = vunpack.c.h.b16 %v6867
        %v6957 = vunpack.c.l.b16 %v6868
        %v6958 = vunpack.c.h.b16 %v6868
        %v6959 = vunpack.c.l.b16 %v6869
        %v6960 = vunpack.c.h.b16 %v6869
        %v6961 = vunpack.c.l.b16 %v6870
        %v6962 = vunpack.c.h.b16 %v6870
        %v6963 = vunpack.c.l.b16 %v6871
        %v6964 = vunpack.c.h.b16 %v6871
        %v6965 = vunpack.c.l.b16 %v6872
        %v6966 = vunpack.c.h.b16 %v6872
        %v6967 = vunpack.c.l.b16 %v6873
        %v6968 = vunpack.c.h.b16 %v6873
        %v6969 = vunpack.c.l.b16 %v6874
        %v6970 = vunpack.c.h.b16 %v6874
        %v6971 = vunpack.c.l.b16 %v6875
        %v6972 = vunpack.c.h.b16 %v6875
        %v6973 = vunpack.c.l.b16 %v6876
        %v6974 = vunpack.c.h.b16 %v6876
        %v6975 = vunpack.c.l.b16 %v6877
        %v6976 = vunpack.c.h.b16 %v6877
        %v6977 = vunpack.c.l.b16 %v6878
        %v6978 = vunpack.c.h.b16 %v6878
        %v6979 = vunpack.c.l.b16 %v6879
        %v6980 = vunpack.c.h.b16 %v6879
        %v6981 = vunpack.c.l.b16 %v6880
        %v6982 = vunpack.c.h.b16 %v6880
        %v6983 = vunpack.c.l.b16 %v6881
        %v6984 = vunpack.c.h.b16 %v6881
        %v6985 = vunpack.c.l.b16 %v6882
        %v6986 = vunpack.c.h.b16 %v6882
        %v6987 = vunpack.c.l.b16 %v6883
        %v6988 = vunpack.c.h.b16 %v6883
        %v6989 = vunpack.c.l.b16 %v6884
        %v6990 = vunpack.c.h.b16 %v6884
        %v6991 = vunpack.c.l.b16 %v6885
        %v6992 = vunpack.c.h.b16 %v6885
        %v6993 = vunpack.c.l.b16 %v6886
        %v6994 = vunpack.c.h.b16 %v6886
        %v6995 = vpack.c.b16 %v6933, %v6931
        %v6996 = vpack.c.b16 %v6934, %v6932
        %v6997 = vpack.c.b16 %v6937, %v6935
        %v6998 = vpack.c.b16 %v6938, %v6936
        %v6999 = vpack.c.b16 %v6941, %v6939
        %v7000 = vpack.c.b16 %v6942, %v6940
        %v7001 = vpack.c.b16 %v6945, %v6943
        %v7002 = vpack.c.b16 %v6946, %v6944
        %v7003 = vpack.c.b16 %v6949, %v6947
        %v7004 = vpack.c.b16 %v6950, %v6948
        %v7005 = vpack.c.b16 %v6953, %v6951
        %v7006 = vpack.c.b16 %v6954, %v6952
        %v7007 = vpack.c.b16 %v6957, %v6955
        %v7008 = vpack.c.b16 %v6958, %v6956
        %v7009 = vpack.c.b16 %v6961, %v6959
        %v7010 = vpack.c.b16 %v6962, %v6960
        %v7011 = vpack.c.b16 %v6965, %v6963
        %v7012 = vpack.c.b16 %v6966, %v6964
        %v7013 = vpack.c.b16 %v6969, %v6967
        %v7014 = vpack.c.b16 %v6970, %v6968
        %v7015 = vpack.c.b16 %v6973, %v6971
        %v7016 = vpack.c.b16 %v6974, %v6972
        %v7017 = vpack.c.b16 %v6977, %v6975
        %v7018 = vpack.c.b16 %v6978, %v6976
        %v7019 = vpack.c.b16 %v6981, %v6979
        %v7020 = vpack.c.b16 %v6982, %v6980
        %v7021 = vpack.c.b16 %v6985, %v6983
        %v7022 = vpack.c.b16 %v6986, %v6984
        %v7023 = vpack.c.b16 %v6989, %v6987
        %v7024 = vpack.c.b16 %v6990, %v6988
        %v7025 = vpack.c.b16 %v6993, %v6991
        %v7026 = vpack.c.b16 %v6994, %v6992
        %7059 = vmatprep.subr.bf16.mxu0 %v7010
        %7060 = vmatpush1.bf16.msra.mxu0 %v7009
        %7061 = vmatprep.subr.bf16.mxu0 %v7008
        %7062 = vmatpush1.bf16.msra.mxu0 %v7007
        %7063 = vmatprep.subr.bf16.mxu0 %v7006
        %7064 = vmatpush1.bf16.msra.mxu0 %v7005
        %7065 = vmatprep.subr.bf16.mxu0 %v7004
        %7066 = vmatpush1.bf16.msra.mxu0 %v7003
        %7067 = vmatprep.subr.bf16.mxu0 %v7002
        %7068 = vmatpush1.bf16.msra.mxu0 %v7001
        %7069 = vmatprep.subr.bf16.mxu0 %v7000
        %7070 = vmatpush1.bf16.msra.mxu0 %v6999
        %7071 = vmatprep.subr.bf16.mxu0 %v6998
        %7072 = vmatpush1.bf16.msra.mxu0 %v6997
        %7073 = vmatprep.subr.bf16.mxu0 %v6996
        %7074 = vmatpush1.bf16.msra.mxu0 %v6995
        %7075 = vmatprep.subr.bf16.mxu0 %v7026
        %7076 = vmatpush2.bf16.msra.mxu0 %v7025
        %7077 = vmatprep.subr.bf16.mxu0 %v7024
        %7078 = vmatpush2.bf16.msra.mxu0 %v7023
        %7079 = vmatprep.subr.bf16.mxu0 %v7022
        %7080 = vmatpush2.bf16.msra.mxu0 %v7021
        %7081 = vmatprep.subr.bf16.mxu0 %v7020
        %7082 = vmatpush2.bf16.msra.mxu0 %v7019
        %7083 = vmatprep.subr.bf16.mxu0 %v7018
        %7084 = vmatpush2.bf16.msra.mxu0 %v7017
        %7085 = vmatprep.subr.bf16.mxu0 %v7016
        %7086 = vmatpush2.bf16.msra.mxu0 %v7015
        %7087 = vmatprep.subr.bf16.mxu0 %v7014
        %7088 = vmatpush2.bf16.msra.mxu0 %v7013
        %7089 = vmatprep.subr.bf16.mxu0 %v7012
        %7090 = vmatpush2.bf16.msra.mxu0 %v7011
        %7091 = vmatprep.mubr.bf16.mxu0 %v6842
        %7092 = vmatmul.mubr.bf16.gmra.mxu0 %v6841
        %v7093 = vpop.f32.mrf.mxu0
        %v7094 = vadd.f32 %v6892, %v7093
        %v7095 = vpop.f32.mrf.mxu0
        %v7096 = vadd.f32 %v6896, %v7095
        %v7097 = vpop.f32.mrf.mxu0
        %v7098 = vadd.f32 %v6892, %v7097
        %v7099 = vpop.f32.mrf.mxu0
        %v7100 = vadd.f32 %v6896, %v7099
        %7101 = vmatprep.mubr.bf16.mxu0 %v6844
        %7102 = vmatmul.mubr.bf16.gmra.mxu0 %v6843
        %v7103 = vpop.f32.mrf.mxu0
        %v7104 = vadd.f32 %v6892, %v7103
        %v7105 = vpop.f32.mrf.mxu0
        %v7106 = vadd.f32 %v6896, %v7105
        %v7107 = vpop.f32.mrf.mxu0
        %v7108 = vadd.f32 %v6892, %v7107
        %v7109 = vpop.f32.mrf.mxu0
        %v7110 = vadd.f32 %v6896, %v7109
        %7111 = vmatprep.mubr.bf16.mxu0 %v6846
        %7112 = vmatmul.mubr.bf16.gmra.mxu0 %v6845
        %v7113 = vpop.f32.mrf.mxu0
        %v7114 = vadd.f32 %v6892, %v7113
        %v7115 = vpop.f32.mrf.mxu0
        %v7116 = vadd.f32 %v6896, %v7115
        %v7117 = vpop.f32.mrf.mxu0
        %v7118 = vadd.f32 %v6892, %v7117
        %v7119 = vpop.f32.mrf.mxu0
        %v7120 = vadd.f32 %v6896, %v7119
        %7121 = vmatprep.mubr.bf16.mxu0 %v6848
        %7122 = vmatmul.mubr.bf16.gmra.mxu0 %v6847
        %v7123 = vpop.f32.mrf.mxu0
        %v7124 = vadd.f32 %v6892, %v7123
        %v7125 = vpop.f32.mrf.mxu0
        %v7126 = vadd.f32 %v6896, %v7125
        %v7127 = vpop.f32.mrf.mxu0
        %v7128 = vadd.f32 %v6892, %v7127
        %v7129 = vpop.f32.mrf.mxu0
        %v7130 = vadd.f32 %v6896, %v7129
        %7131 = vmatprep.mubr.bf16.mxu0 %v6850
        %7132 = vmatmul.mubr.bf16.gmra.mxu0 %v6849
        %v7133 = vpop.f32.mrf.mxu0
        %v7134 = vadd.f32 %v6892, %v7133
        %v7135 = vpop.f32.mrf.mxu0
        %v7136 = vadd.f32 %v6896, %v7135
        %v7137 = vpop.f32.mrf.mxu0
        %v7138 = vadd.f32 %v6892, %v7137
        %v7139 = vpop.f32.mrf.mxu0
        %v7140 = vadd.f32 %v6896, %v7139
        %7141 = vmatprep.mubr.bf16.mxu0 %v6852
        %7142 = vmatmul.mubr.bf16.gmra.mxu0 %v6851
        %v7143 = vpop.f32.mrf.mxu0
        %v7144 = vadd.f32 %v6892, %v7143
        %v7145 = vpop.f32.mrf.mxu0
        %v7146 = vadd.f32 %v6896, %v7145
        %v7147 = vpop.f32.mrf.mxu0
        %v7148 = vadd.f32 %v6892, %v7147
        %v7149 = vpop.f32.mrf.mxu0
        %v7150 = vadd.f32 %v6896, %v7149
        %7151 = vmatprep.mubr.bf16.mxu0 %v6854
        %7152 = vmatmul.mubr.bf16.gmra.mxu0 %v6853
        %v7153 = vpop.f32.mrf.mxu0
        %v7154 = vadd.f32 %v6892, %v7153
        %v7155 = vpop.f32.mrf.mxu0
        %v7156 = vadd.f32 %v6896, %v7155
        %v7157 = vpop.f32.mrf.mxu0
        %v7158 = vpop.f32.mrf.mxu0
        %7159 = vdwg.mxu0
        %v7160 = vmax.f32 %v7094, 0.0
        %v7161 = vmax.f32 %v7096, 0.0
        %v7162 = vmax.f32 %v7098, 0.0
        %v7163 = vmax.f32 %v7100, 0.0
        %v7164 = vmax.f32 %v7104, 0.0
        %v7165 = vmax.f32 %v7106, 0.0
        %v7166 = vmax.f32 %v7108, 0.0
        %v7167 = vmax.f32 %v7110, 0.0
        %v7168 = vmax.f32 %v7114, 0.0
        %v7169 = vmax.f32 %v7116, 0.0
        %v7170 = vmax.f32 %v7118, 0.0
        %v7171 = vmax.f32 %v7120, 0.0
        %v7172 = vmax.f32 %v7124, 0.0
        %v7173 = vmax.f32 %v7126, 0.0
        %v7174 = vmax.f32 %v7128, 0.0
        %v7175 = vmax.f32 %v7130, 0.0
        %v7176 = vmax.f32 %v7134, 0.0
        %v7177 = vmax.f32 %v7136, 0.0
        %v7178 = vmax.f32 %v7138, 0.0
        %v7179 = vmax.f32 %v7140, 0.0
        %v7180 = vmax.f32 %v7144, 0.0
        %v7181 = vmax.f32 %v7146, 0.0
        %v7182 = vmax.f32 %v7148, 0.0
        %v7183 = vmax.f32 %v7150, 0.0
        %v7184 = vmax.f32 %v7154, 0.0
        %v7185 = vmax.f32 %v7156, 0.0
        %v7186 = vpack.c.bf16 %v7162, %v7160
        %v7187 = vpack.c.bf16 %v7163, %v7161
        %v7188 = vpack.c.bf16 %v7166, %v7164
        %v7189 = vpack.c.bf16 %v7167, %v7165
        %v7190 = vpack.c.bf16 %v7170, %v7168
        %v7191 = vpack.c.bf16 %v7171, %v7169
        %v7192 = vpack.c.bf16 %v7174, %v7172
        %v7193 = vpack.c.bf16 %v7175, %v7173
        %v7194 = vpack.c.bf16 %v7178, %v7176
        %v7195 = vpack.c.bf16 %v7179, %v7177
        %v7196 = vpack.c.bf16 %v7182, %v7180
        %v7197 = vpack.c.bf16 %v7183, %v7181
        %v7198 = vpack.c.bf16 %v7184, %v7184
        %v7199 = vpack.c.bf16 %v7185, %v7185
        %v7200 = vld [vmem:[#allocation14] sm:$0xff]
        %v7201 = vld [vmem:[#allocation14 + $0x8] sm:$0xff]
        %v7202 = vld [vmem:[#allocation14 + $0x10] sm:$0xff]
        %v7203 = vld [vmem:[#allocation14 + $0x18] sm:$0xff]
        %v7204 = vld [vmem:[#allocation14 + $0x20] sm:$0xff]
        %v7205 = vld [vmem:[#allocation14 + $0x28] sm:$0xff]
        %v7206 = vld [vmem:[#allocation14 + $0x30] sm:$0xff]
        %v7207 = vld [vmem:[#allocation14 + $0x38] sm:$0xff]
        %v7208 = vld [vmem:[#allocation14 + $0x40] sm:$0xff]
        %v7209 = vld [vmem:[#allocation14 + $0x48] sm:$0xff]
        %v7210 = vld [vmem:[#allocation14 + $0x50] sm:$0xff]
        %v7211 = vld [vmem:[#allocation14 + $0x58] sm:$0xff]
        %v7212 = vld [vmem:[#allocation14 + $0x60] sm:$0xff]
        %v7213 = vld [vmem:[#allocation14 + $0x68] sm:$0xff]
        %v7214 = vld [vmem:[#allocation14 + $0x70] sm:$0xff]
        %v7215 = vld [vmem:[#allocation14 + $0x78] sm:$0xff]
        %v7216 = vld [vmem:[#allocation14 + $0x80] sm:$0xff]
        %v7217 = vld [vmem:[#allocation14 + $0x88] sm:$0xff]
        %v7218 = vld [vmem:[#allocation14 + $0x90] sm:$0xff]
        %v7219 = vld [vmem:[#allocation14 + $0x98] sm:$0xff]
        %v7220 = vld [vmem:[#allocation14 + $0xa0] sm:$0xff]
        %v7221 = vld [vmem:[#allocation14 + $0xa8] sm:$0xff]
        %v7222 = vld [vmem:[#allocation14 + $0xb0] sm:$0xff]
        %v7223 = vld [vmem:[#allocation14 + $0xb8] sm:$0xff]
        %v7224 = vld [vmem:[#allocation14 + $0xc0] sm:$0xff]
        %v7225 = vld [vmem:[#allocation14 + $0xc8] sm:$0xff]
        %v7226 = vld [vmem:[#allocation14 + $0xd0] sm:$0xff]
        %v7227 = vld [vmem:[#allocation14 + $0xd8] sm:$0xff]
        %v7228 = vld [vmem:[#allocation14 + $0xe0] sm:$0xff]
        %v7229 = vld [vmem:[#allocation14 + $0xe8] sm:$0xff]
        %v7230 = vld [vmem:[#allocation14 + $0xf0] sm:$0xff]
        %v7231 = vld [vmem:[#allocation14 + $0xf8] sm:$0xff]
        %v7232 = vld [vmem:[%s63] sm:$0x3]
        %v7234 = vlaneseq
        %v7235 = vshrl.u32 %v7234, 7
        %v7236 = vsub.s32 0, %v7235
        %v7237 = vrot.slane %v7232, %v7236
        %v7238 = vlaneseq
        %v7239 = vshrl.u32 %v7238, 7
        %v7240 = vsub.s32 1, %v7239
        %v7241 = vrot.slane %v7232, %v7240
        %v7276 = vunpack.c.l.b16 %v7200
        %v7277 = vunpack.c.h.b16 %v7200
        %v7278 = vunpack.c.l.b16 %v7201
        %v7279 = vunpack.c.h.b16 %v7201
        %v7280 = vunpack.c.l.b16 %v7202
        %v7281 = vunpack.c.h.b16 %v7202
        %v7282 = vunpack.c.l.b16 %v7203
        %v7283 = vunpack.c.h.b16 %v7203
        %v7284 = vunpack.c.l.b16 %v7204
        %v7285 = vunpack.c.h.b16 %v7204
        %v7286 = vunpack.c.l.b16 %v7205
        %v7287 = vunpack.c.h.b16 %v7205
        %v7288 = vunpack.c.l.b16 %v7206
        %v7289 = vunpack.c.h.b16 %v7206
        %v7290 = vunpack.c.l.b16 %v7207
        %v7291 = vunpack.c.h.b16 %v7207
        %v7292 = vunpack.c.l.b16 %v7208
        %v7293 = vunpack.c.h.b16 %v7208
        %v7294 = vunpack.c.l.b16 %v7209
        %v7295 = vunpack.c.h.b16 %v7209
        %v7296 = vunpack.c.l.b16 %v7210
        %v7297 = vunpack.c.h.b16 %v7210
        %v7298 = vunpack.c.l.b16 %v7211
        %v7299 = vunpack.c.h.b16 %v7211
        %v7300 = vunpack.c.l.b16 %v7212
        %v7301 = vunpack.c.h.b16 %v7212
        %v7302 = vunpack.c.l.b16 %v7213
        %v7303 = vunpack.c.h.b16 %v7213
        %v7304 = vunpack.c.l.b16 %v7214
        %v7305 = vunpack.c.h.b16 %v7214
        %v7306 = vunpack.c.l.b16 %v7215
        %v7307 = vunpack.c.h.b16 %v7215
        %v7308 = vunpack.c.l.b16 %v7216
        %v7309 = vunpack.c.h.b16 %v7216
        %v7310 = vunpack.c.l.b16 %v7217
        %v7311 = vunpack.c.h.b16 %v7217
        %v7312 = vunpack.c.l.b16 %v7218
        %v7313 = vunpack.c.h.b16 %v7218
        %v7314 = vunpack.c.l.b16 %v7219
        %v7315 = vunpack.c.h.b16 %v7219
        %v7316 = vunpack.c.l.b16 %v7220
        %v7317 = vunpack.c.h.b16 %v7220
        %v7318 = vunpack.c.l.b16 %v7221
        %v7319 = vunpack.c.h.b16 %v7221
        %v7320 = vunpack.c.l.b16 %v7222
        %v7321 = vunpack.c.h.b16 %v7222
        %v7322 = vunpack.c.l.b16 %v7223
        %v7323 = vunpack.c.h.b16 %v7223
        %v7324 = vunpack.c.l.b16 %v7224
        %v7325 = vunpack.c.h.b16 %v7224
        %v7326 = vunpack.c.l.b16 %v7225
        %v7327 = vunpack.c.h.b16 %v7225
        %v7328 = vunpack.c.l.b16 %v7226
        %v7329 = vunpack.c.h.b16 %v7226
        %v7330 = vunpack.c.l.b16 %v7227
        %v7331 = vunpack.c.h.b16 %v7227
        %v7332 = vunpack.c.l.b16 %v7228
        %v7333 = vunpack.c.h.b16 %v7228
        %v7334 = vunpack.c.l.b16 %v7229
        %v7335 = vunpack.c.h.b16 %v7229
        %v7336 = vunpack.c.l.b16 %v7230
        %v7337 = vunpack.c.h.b16 %v7230
        %v7338 = vunpack.c.l.b16 %v7231
        %v7339 = vunpack.c.h.b16 %v7231
        %v7340 = vpack.c.b16 %v7278, %v7276
        %v7341 = vpack.c.b16 %v7279, %v7277
        %v7342 = vpack.c.b16 %v7282, %v7280
        %v7343 = vpack.c.b16 %v7283, %v7281
        %v7344 = vpack.c.b16 %v7286, %v7284
        %v7345 = vpack.c.b16 %v7287, %v7285
        %v7346 = vpack.c.b16 %v7290, %v7288
        %v7347 = vpack.c.b16 %v7291, %v7289
        %v7348 = vpack.c.b16 %v7294, %v7292
        %v7349 = vpack.c.b16 %v7295, %v7293
        %v7350 = vpack.c.b16 %v7298, %v7296
        %v7351 = vpack.c.b16 %v7299, %v7297
        %v7352 = vpack.c.b16 %v7302, %v7300
        %v7353 = vpack.c.b16 %v7303, %v7301
        %v7354 = vpack.c.b16 %v7306, %v7304
        %v7355 = vpack.c.b16 %v7307, %v7305
        %v7356 = vpack.c.b16 %v7310, %v7308
        %v7357 = vpack.c.b16 %v7311, %v7309
        %v7358 = vpack.c.b16 %v7314, %v7312
        %v7359 = vpack.c.b16 %v7315, %v7313
        %v7360 = vpack.c.b16 %v7318, %v7316
        %v7361 = vpack.c.b16 %v7319, %v7317
        %v7362 = vpack.c.b16 %v7322, %v7320
        %v7363 = vpack.c.b16 %v7323, %v7321
        %v7364 = vpack.c.b16 %v7326, %v7324
        %v7365 = vpack.c.b16 %v7327, %v7325
        %v7366 = vpack.c.b16 %v7330, %v7328
        %v7367 = vpack.c.b16 %v7331, %v7329
        %v7368 = vpack.c.b16 %v7334, %v7332
        %v7369 = vpack.c.b16 %v7335, %v7333
        %v7370 = vpack.c.b16 %v7338, %v7336
        %v7371 = vpack.c.b16 %v7339, %v7337
        %7404 = vmatprep.subr.bf16.mxu0 %v7355
        %7405 = vmatpush1.bf16.msra.mxu0 %v7354
        %7406 = vmatprep.subr.bf16.mxu0 %v7353
        %7407 = vmatpush1.bf16.msra.mxu0 %v7352
        %7408 = vmatprep.subr.bf16.mxu0 %v7351
        %7409 = vmatpush1.bf16.msra.mxu0 %v7350
        %7410 = vmatprep.subr.bf16.mxu0 %v7349
        %7411 = vmatpush1.bf16.msra.mxu0 %v7348
        %7412 = vmatprep.subr.bf16.mxu0 %v7347
        %7413 = vmatpush1.bf16.msra.mxu0 %v7346
        %7414 = vmatprep.subr.bf16.mxu0 %v7345
        %7415 = vmatpush1.bf16.msra.mxu0 %v7344
        %7416 = vmatprep.subr.bf16.mxu0 %v7343
        %7417 = vmatpush1.bf16.msra.mxu0 %v7342
        %7418 = vmatprep.subr.bf16.mxu0 %v7341
        %7419 = vmatpush1.bf16.msra.mxu0 %v7340
        %7420 = vmatprep.subr.bf16.mxu0 %v7371
        %7421 = vmatpush2.bf16.msra.mxu0 %v7370
        %7422 = vmatprep.subr.bf16.mxu0 %v7369
        %7423 = vmatpush2.bf16.msra.mxu0 %v7368
        %7424 = vmatprep.subr.bf16.mxu0 %v7367
        %7425 = vmatpush2.bf16.msra.mxu0 %v7366
        %7426 = vmatprep.subr.bf16.mxu0 %v7365
        %7427 = vmatpush2.bf16.msra.mxu0 %v7364
        %7428 = vmatprep.subr.bf16.mxu0 %v7363
        %7429 = vmatpush2.bf16.msra.mxu0 %v7362
        %7430 = vmatprep.subr.bf16.mxu0 %v7361
        %7431 = vmatpush2.bf16.msra.mxu0 %v7360
        %7432 = vmatprep.subr.bf16.mxu0 %v7359
        %7433 = vmatpush2.bf16.msra.mxu0 %v7358
        %7434 = vmatprep.subr.bf16.mxu0 %v7357
        %7435 = vmatpush2.bf16.msra.mxu0 %v7356
        %7436 = vmatprep.mubr.bf16.mxu0 %v7187
        %7437 = vmatmul.mubr.bf16.gmra.mxu0 %v7186
        %v7438 = vpop.f32.mrf.mxu0
        %v7439 = vadd.f32 %v7237, %v7438
        %v7440 = vpop.f32.mrf.mxu0
        %v7441 = vadd.f32 %v7241, %v7440
        %v7442 = vpop.f32.mrf.mxu0
        %v7443 = vadd.f32 %v7237, %v7442
        %v7444 = vpop.f32.mrf.mxu0
        %v7445 = vadd.f32 %v7241, %v7444
        %7446 = vmatprep.mubr.bf16.mxu0 %v7189
        %7447 = vmatmul.mubr.bf16.gmra.mxu0 %v7188
        %v7448 = vpop.f32.mrf.mxu0
        %v7449 = vadd.f32 %v7237, %v7448
        %v7450 = vpop.f32.mrf.mxu0
        %v7451 = vadd.f32 %v7241, %v7450
        %v7452 = vpop.f32.mrf.mxu0
        %v7453 = vadd.f32 %v7237, %v7452
        %v7454 = vpop.f32.mrf.mxu0
        %v7455 = vadd.f32 %v7241, %v7454
        %7456 = vmatprep.mubr.bf16.mxu0 %v7191
        %7457 = vmatmul.mubr.bf16.gmra.mxu0 %v7190
        %v7458 = vpop.f32.mrf.mxu0
        %v7459 = vadd.f32 %v7237, %v7458
        %v7460 = vpop.f32.mrf.mxu0
        %v7461 = vadd.f32 %v7241, %v7460
        %v7462 = vpop.f32.mrf.mxu0
        %v7463 = vadd.f32 %v7237, %v7462
        %v7464 = vpop.f32.mrf.mxu0
        %v7465 = vadd.f32 %v7241, %v7464
        %7466 = vmatprep.mubr.bf16.mxu0 %v7193
        %7467 = vmatmul.mubr.bf16.gmra.mxu0 %v7192
        %v7468 = vpop.f32.mrf.mxu0
        %v7469 = vadd.f32 %v7237, %v7468
        %v7470 = vpop.f32.mrf.mxu0
        %v7471 = vadd.f32 %v7241, %v7470
        %v7472 = vpop.f32.mrf.mxu0
        %v7473 = vadd.f32 %v7237, %v7472
        %v7474 = vpop.f32.mrf.mxu0
        %v7475 = vadd.f32 %v7241, %v7474
        %7476 = vmatprep.mubr.bf16.mxu0 %v7195
        %7477 = vmatmul.mubr.bf16.gmra.mxu0 %v7194
        %v7478 = vpop.f32.mrf.mxu0
        %v7479 = vadd.f32 %v7237, %v7478
        %v7480 = vpop.f32.mrf.mxu0
        %v7481 = vadd.f32 %v7241, %v7480
        %v7482 = vpop.f32.mrf.mxu0
        %v7483 = vadd.f32 %v7237, %v7482
        %v7484 = vpop.f32.mrf.mxu0
        %v7485 = vadd.f32 %v7241, %v7484
        %7486 = vmatprep.mubr.bf16.mxu0 %v7197
        %7487 = vmatmul.mubr.bf16.gmra.mxu0 %v7196
        %v7488 = vpop.f32.mrf.mxu0
        %v7489 = vadd.f32 %v7237, %v7488
        %v7490 = vpop.f32.mrf.mxu0
        %v7491 = vadd.f32 %v7241, %v7490
        %v7492 = vpop.f32.mrf.mxu0
        %v7493 = vadd.f32 %v7237, %v7492
        %v7494 = vpop.f32.mrf.mxu0
        %v7495 = vadd.f32 %v7241, %v7494
        %7496 = vmatprep.mubr.bf16.mxu0 %v7199
        %7497 = vmatmul.mubr.bf16.gmra.mxu0 %v7198
        %v7498 = vpop.f32.mrf.mxu0
        %v7499 = vadd.f32 %v7237, %v7498
        %v7500 = vpop.f32.mrf.mxu0
        %v7501 = vadd.f32 %v7241, %v7500
        %v7502 = vpop.f32.mrf.mxu0
        %v7503 = vpop.f32.mrf.mxu0
        %7504 = vdwg.mxu0
        %v7505 = vmax.f32 %v7439, 0.0
        %v7506 = vmax.f32 %v7441, 0.0
        %v7507 = vmax.f32 %v7443, 0.0
        %v7508 = vmax.f32 %v7445, 0.0
        %v7509 = vmax.f32 %v7449, 0.0
        %v7510 = vmax.f32 %v7451, 0.0
        %v7511 = vmax.f32 %v7453, 0.0
        %v7512 = vmax.f32 %v7455, 0.0
        %v7513 = vmax.f32 %v7459, 0.0
        %v7514 = vmax.f32 %v7461, 0.0
        %v7515 = vmax.f32 %v7463, 0.0
        %v7516 = vmax.f32 %v7465, 0.0
        %v7517 = vmax.f32 %v7469, 0.0
        %v7518 = vmax.f32 %v7471, 0.0
        %v7519 = vmax.f32 %v7473, 0.0
        %v7520 = vmax.f32 %v7475, 0.0
        %v7521 = vmax.f32 %v7479, 0.0
        %v7522 = vmax.f32 %v7481, 0.0
        %v7523 = vmax.f32 %v7483, 0.0
        %v7524 = vmax.f32 %v7485, 0.0
        %v7525 = vmax.f32 %v7489, 0.0
        %v7526 = vmax.f32 %v7491, 0.0
        %v7527 = vmax.f32 %v7493, 0.0
        %v7528 = vmax.f32 %v7495, 0.0
        %v7529 = vmax.f32 %v7499, 0.0
        %v7530 = vmax.f32 %v7501, 0.0
        %v7531 = vpack.c.bf16 %v7507, %v7505
        %v7532 = vpack.c.bf16 %v7508, %v7506
        %v7533 = vpack.c.bf16 %v7511, %v7509
        %v7534 = vpack.c.bf16 %v7512, %v7510
        %v7535 = vpack.c.bf16 %v7515, %v7513
        %v7536 = vpack.c.bf16 %v7516, %v7514
        %v7537 = vpack.c.bf16 %v7519, %v7517
        %v7538 = vpack.c.bf16 %v7520, %v7518
        %v7539 = vpack.c.bf16 %v7523, %v7521
        %v7540 = vpack.c.bf16 %v7524, %v7522
        %v7541 = vpack.c.bf16 %v7527, %v7525
        %v7542 = vpack.c.bf16 %v7528, %v7526
        %v7543 = vpack.c.bf16 %v7529, %v7529
        %v7544 = vpack.c.bf16 %v7530, %v7530
        %v7545 = vld [vmem:[#allocation15] sm:$0xff]
        %v7546 = vld [vmem:[#allocation15 + $0x8] sm:$0xff]
        %v7547 = vld [vmem:[#allocation15 + $0x10] sm:$0xff]
        %v7548 = vld [vmem:[#allocation15 + $0x18] sm:$0xff]
        %v7549 = vld [vmem:[#allocation15 + $0x20] sm:$0xff]
        %v7550 = vld [vmem:[#allocation15 + $0x28] sm:$0xff]
        %v7551 = vld [vmem:[#allocation15 + $0x30] sm:$0xff]
        %v7552 = vld [vmem:[#allocation15 + $0x38] sm:$0xff]
        %v7553 = vld [vmem:[#allocation15 + $0x40] sm:$0xff]
        %v7554 = vld [vmem:[#allocation15 + $0x48] sm:$0xff]
        %v7555 = vld [vmem:[#allocation15 + $0x50] sm:$0xff]
        %v7556 = vld [vmem:[#allocation15 + $0x58] sm:$0xff]
        %v7557 = vld [vmem:[#allocation15 + $0x60] sm:$0xff]
        %v7558 = vld [vmem:[#allocation15 + $0x68] sm:$0xff]
        %v7559 = vld [vmem:[#allocation15 + $0x70] sm:$0xff]
        %v7560 = vld [vmem:[#allocation15 + $0x78] sm:$0xff]
        %v7561 = vld [vmem:[#allocation15 + $0x80] sm:$0xff]
        %v7562 = vld [vmem:[#allocation15 + $0x88] sm:$0xff]
        %v7563 = vld [vmem:[#allocation15 + $0x90] sm:$0xff]
        %v7564 = vld [vmem:[#allocation15 + $0x98] sm:$0xff]
        %v7565 = vld [vmem:[#allocation15 + $0xa0] sm:$0xff]
        %v7566 = vld [vmem:[#allocation15 + $0xa8] sm:$0xff]
        %v7567 = vld [vmem:[#allocation15 + $0xb0] sm:$0xff]
        %v7568 = vld [vmem:[#allocation15 + $0xb8] sm:$0xff]
        %v7569 = vld [vmem:[#allocation15 + $0xc0] sm:$0xff]
        %v7570 = vld [vmem:[#allocation15 + $0xc8] sm:$0xff]
        %v7571 = vld [vmem:[#allocation15 + $0xd0] sm:$0xff]
        %v7572 = vld [vmem:[#allocation15 + $0xd8] sm:$0xff]
        %v7573 = vld [vmem:[#allocation15 + $0xe0] sm:$0xff]
        %v7574 = vld [vmem:[#allocation15 + $0xe8] sm:$0xff]
        %v7575 = vld [vmem:[#allocation15 + $0xf0] sm:$0xff]
        %v7576 = vld [vmem:[#allocation15 + $0xf8] sm:$0xff]
        %v7577 = vld [vmem:[%s67] sm:$0x3]
        %v7579 = vlaneseq
        %v7580 = vshrl.u32 %v7579, 7
        %v7581 = vsub.s32 0, %v7580
        %v7582 = vrot.slane %v7577, %v7581
        %v7583 = vlaneseq
        %v7584 = vshrl.u32 %v7583, 7
        %v7585 = vsub.s32 1, %v7584
        %v7586 = vrot.slane %v7577, %v7585
        %v7621 = vunpack.c.l.b16 %v7545
        %v7622 = vunpack.c.h.b16 %v7545
        %v7623 = vunpack.c.l.b16 %v7546
        %v7624 = vunpack.c.h.b16 %v7546
        %v7625 = vunpack.c.l.b16 %v7547
        %v7626 = vunpack.c.h.b16 %v7547
        %v7627 = vunpack.c.l.b16 %v7548
        %v7628 = vunpack.c.h.b16 %v7548
        %v7629 = vunpack.c.l.b16 %v7549
        %v7630 = vunpack.c.h.b16 %v7549
        %v7631 = vunpack.c.l.b16 %v7550
        %v7632 = vunpack.c.h.b16 %v7550
        %v7633 = vunpack.c.l.b16 %v7551
        %v7634 = vunpack.c.h.b16 %v7551
        %v7635 = vunpack.c.l.b16 %v7552
        %v7636 = vunpack.c.h.b16 %v7552
        %v7637 = vunpack.c.l.b16 %v7553
        %v7638 = vunpack.c.h.b16 %v7553
        %v7639 = vunpack.c.l.b16 %v7554
        %v7640 = vunpack.c.h.b16 %v7554
        %v7641 = vunpack.c.l.b16 %v7555
        %v7642 = vunpack.c.h.b16 %v7555
        %v7643 = vunpack.c.l.b16 %v7556
        %v7644 = vunpack.c.h.b16 %v7556
        %v7645 = vunpack.c.l.b16 %v7557
        %v7646 = vunpack.c.h.b16 %v7557
        %v7647 = vunpack.c.l.b16 %v7558
        %v7648 = vunpack.c.h.b16 %v7558
        %v7649 = vunpack.c.l.b16 %v7559
        %v7650 = vunpack.c.h.b16 %v7559
        %v7651 = vunpack.c.l.b16 %v7560
        %v7652 = vunpack.c.h.b16 %v7560
        %v7653 = vunpack.c.l.b16 %v7561
        %v7654 = vunpack.c.h.b16 %v7561
        %v7655 = vunpack.c.l.b16 %v7562
        %v7656 = vunpack.c.h.b16 %v7562
        %v7657 = vunpack.c.l.b16 %v7563
        %v7658 = vunpack.c.h.b16 %v7563
        %v7659 = vunpack.c.l.b16 %v7564
        %v7660 = vunpack.c.h.b16 %v7564
        %v7661 = vunpack.c.l.b16 %v7565
        %v7662 = vunpack.c.h.b16 %v7565
        %v7663 = vunpack.c.l.b16 %v7566
        %v7664 = vunpack.c.h.b16 %v7566
        %v7665 = vunpack.c.l.b16 %v7567
        %v7666 = vunpack.c.h.b16 %v7567
        %v7667 = vunpack.c.l.b16 %v7568
        %v7668 = vunpack.c.h.b16 %v7568
        %v7669 = vunpack.c.l.b16 %v7569
        %v7670 = vunpack.c.h.b16 %v7569
        %v7671 = vunpack.c.l.b16 %v7570
        %v7672 = vunpack.c.h.b16 %v7570
        %v7673 = vunpack.c.l.b16 %v7571
        %v7674 = vunpack.c.h.b16 %v7571
        %v7675 = vunpack.c.l.b16 %v7572
        %v7676 = vunpack.c.h.b16 %v7572
        %v7677 = vunpack.c.l.b16 %v7573
        %v7678 = vunpack.c.h.b16 %v7573
        %v7679 = vunpack.c.l.b16 %v7574
        %v7680 = vunpack.c.h.b16 %v7574
        %v7681 = vunpack.c.l.b16 %v7575
        %v7682 = vunpack.c.h.b16 %v7575
        %v7683 = vunpack.c.l.b16 %v7576
        %v7684 = vunpack.c.h.b16 %v7576
        %v7685 = vpack.c.b16 %v7623, %v7621
        %v7686 = vpack.c.b16 %v7624, %v7622
        %v7687 = vpack.c.b16 %v7627, %v7625
        %v7688 = vpack.c.b16 %v7628, %v7626
        %v7689 = vpack.c.b16 %v7631, %v7629
        %v7690 = vpack.c.b16 %v7632, %v7630
        %v7691 = vpack.c.b16 %v7635, %v7633
        %v7692 = vpack.c.b16 %v7636, %v7634
        %v7693 = vpack.c.b16 %v7639, %v7637
        %v7694 = vpack.c.b16 %v7640, %v7638
        %v7695 = vpack.c.b16 %v7643, %v7641
        %v7696 = vpack.c.b16 %v7644, %v7642
        %v7697 = vpack.c.b16 %v7647, %v7645
        %v7698 = vpack.c.b16 %v7648, %v7646
        %v7699 = vpack.c.b16 %v7651, %v7649
        %v7700 = vpack.c.b16 %v7652, %v7650
        %v7701 = vpack.c.b16 %v7655, %v7653
        %v7702 = vpack.c.b16 %v7656, %v7654
        %v7703 = vpack.c.b16 %v7659, %v7657
        %v7704 = vpack.c.b16 %v7660, %v7658
        %v7705 = vpack.c.b16 %v7663, %v7661
        %v7706 = vpack.c.b16 %v7664, %v7662
        %v7707 = vpack.c.b16 %v7667, %v7665
        %v7708 = vpack.c.b16 %v7668, %v7666
        %v7709 = vpack.c.b16 %v7671, %v7669
        %v7710 = vpack.c.b16 %v7672, %v7670
        %v7711 = vpack.c.b16 %v7675, %v7673
        %v7712 = vpack.c.b16 %v7676, %v7674
        %v7713 = vpack.c.b16 %v7679, %v7677
        %v7714 = vpack.c.b16 %v7680, %v7678
        %v7715 = vpack.c.b16 %v7683, %v7681
        %v7716 = vpack.c.b16 %v7684, %v7682
        %7749 = vmatprep.subr.bf16.mxu0 %v7700
        %7750 = vmatpush1.bf16.msra.mxu0 %v7699
        %7751 = vmatprep.subr.bf16.mxu0 %v7698
        %7752 = vmatpush1.bf16.msra.mxu0 %v7697
        %7753 = vmatprep.subr.bf16.mxu0 %v7696
        %7754 = vmatpush1.bf16.msra.mxu0 %v7695
        %7755 = vmatprep.subr.bf16.mxu0 %v7694
        %7756 = vmatpush1.bf16.msra.mxu0 %v7693
        %7757 = vmatprep.subr.bf16.mxu0 %v7692
        %7758 = vmatpush1.bf16.msra.mxu0 %v7691
        %7759 = vmatprep.subr.bf16.mxu0 %v7690
        %7760 = vmatpush1.bf16.msra.mxu0 %v7689
        %7761 = vmatprep.subr.bf16.mxu0 %v7688
        %7762 = vmatpush1.bf16.msra.mxu0 %v7687
        %7763 = vmatprep.subr.bf16.mxu0 %v7686
        %7764 = vmatpush1.bf16.msra.mxu0 %v7685
        %7765 = vmatprep.subr.bf16.mxu0 %v7716
        %7766 = vmatpush2.bf16.msra.mxu0 %v7715
        %7767 = vmatprep.subr.bf16.mxu0 %v7714
        %7768 = vmatpush2.bf16.msra.mxu0 %v7713
        %7769 = vmatprep.subr.bf16.mxu0 %v7712
        %7770 = vmatpush2.bf16.msra.mxu0 %v7711
        %7771 = vmatprep.subr.bf16.mxu0 %v7710
        %7772 = vmatpush2.bf16.msra.mxu0 %v7709
        %7773 = vmatprep.subr.bf16.mxu0 %v7708
        %7774 = vmatpush2.bf16.msra.mxu0 %v7707
        %7775 = vmatprep.subr.bf16.mxu0 %v7706
        %7776 = vmatpush2.bf16.msra.mxu0 %v7705
        %7777 = vmatprep.subr.bf16.mxu0 %v7704
        %7778 = vmatpush2.bf16.msra.mxu0 %v7703
        %7779 = vmatprep.subr.bf16.mxu0 %v7702
        %7780 = vmatpush2.bf16.msra.mxu0 %v7701
        %7781 = vmatprep.mubr.bf16.mxu0 %v7532
        %7782 = vmatmul.mubr.bf16.gmra.mxu0 %v7531
        %v7783 = vpop.f32.mrf.mxu0
        %v7784 = vadd.f32 %v7582, %v7783
        %v7785 = vpop.f32.mrf.mxu0
        %v7786 = vadd.f32 %v7586, %v7785
        %v7787 = vpop.f32.mrf.mxu0
        %v7788 = vadd.f32 %v7582, %v7787
        %v7789 = vpop.f32.mrf.mxu0
        %v7790 = vadd.f32 %v7586, %v7789
        %7791 = vmatprep.mubr.bf16.mxu0 %v7534
        %7792 = vmatmul.mubr.bf16.gmra.mxu0 %v7533
        %v7793 = vpop.f32.mrf.mxu0
        %v7794 = vadd.f32 %v7582, %v7793
        %v7795 = vpop.f32.mrf.mxu0
        %v7796 = vadd.f32 %v7586, %v7795
        %v7797 = vpop.f32.mrf.mxu0
        %v7798 = vadd.f32 %v7582, %v7797
        %v7799 = vpop.f32.mrf.mxu0
        %v7800 = vadd.f32 %v7586, %v7799
        %7801 = vmatprep.mubr.bf16.mxu0 %v7536
        %7802 = vmatmul.mubr.bf16.gmra.mxu0 %v7535
        %v7803 = vpop.f32.mrf.mxu0
        %v7804 = vadd.f32 %v7582, %v7803
        %v7805 = vpop.f32.mrf.mxu0
        %v7806 = vadd.f32 %v7586, %v7805
        %v7807 = vpop.f32.mrf.mxu0
        %v7808 = vadd.f32 %v7582, %v7807
        %v7809 = vpop.f32.mrf.mxu0
        %v7810 = vadd.f32 %v7586, %v7809
        %7811 = vmatprep.mubr.bf16.mxu0 %v7538
        %7812 = vmatmul.mubr.bf16.gmra.mxu0 %v7537
        %v7813 = vpop.f32.mrf.mxu0
        %v7814 = vadd.f32 %v7582, %v7813
        %v7815 = vpop.f32.mrf.mxu0
        %v7816 = vadd.f32 %v7586, %v7815
        %v7817 = vpop.f32.mrf.mxu0
        %v7818 = vadd.f32 %v7582, %v7817
        %v7819 = vpop.f32.mrf.mxu0
        %v7820 = vadd.f32 %v7586, %v7819
        %7821 = vmatprep.mubr.bf16.mxu0 %v7540
        %7822 = vmatmul.mubr.bf16.gmra.mxu0 %v7539
        %v7823 = vpop.f32.mrf.mxu0
        %v7824 = vadd.f32 %v7582, %v7823
        %v7825 = vpop.f32.mrf.mxu0
        %v7826 = vadd.f32 %v7586, %v7825
        %v7827 = vpop.f32.mrf.mxu0
        %v7828 = vadd.f32 %v7582, %v7827
        %v7829 = vpop.f32.mrf.mxu0
        %v7830 = vadd.f32 %v7586, %v7829
        %7831 = vmatprep.mubr.bf16.mxu0 %v7542
        %7832 = vmatmul.mubr.bf16.gmra.mxu0 %v7541
        %v7833 = vpop.f32.mrf.mxu0
        %v7834 = vadd.f32 %v7582, %v7833
        %v7835 = vpop.f32.mrf.mxu0
        %v7836 = vadd.f32 %v7586, %v7835
        %v7837 = vpop.f32.mrf.mxu0
        %v7838 = vadd.f32 %v7582, %v7837
        %v7839 = vpop.f32.mrf.mxu0
        %v7840 = vadd.f32 %v7586, %v7839
        %7841 = vmatprep.mubr.bf16.mxu0 %v7544
        %7842 = vmatmul.mubr.bf16.gmra.mxu0 %v7543
        %v7843 = vpop.f32.mrf.mxu0
        %v7844 = vadd.f32 %v7582, %v7843
        %v7845 = vpop.f32.mrf.mxu0
        %v7846 = vadd.f32 %v7586, %v7845
        %v7847 = vpop.f32.mrf.mxu0
        %v7848 = vpop.f32.mrf.mxu0
        %7849 = vdwg.mxu0
        %v7850 = vmax.f32 %v7784, 0.0
        %v7851 = vmax.f32 %v7786, 0.0
        %v7852 = vmax.f32 %v7788, 0.0
        %v7853 = vmax.f32 %v7790, 0.0
        %v7854 = vmax.f32 %v7794, 0.0
        %v7855 = vmax.f32 %v7796, 0.0
        %v7856 = vmax.f32 %v7798, 0.0
        %v7857 = vmax.f32 %v7800, 0.0
        %v7858 = vmax.f32 %v7804, 0.0
        %v7859 = vmax.f32 %v7806, 0.0
        %v7860 = vmax.f32 %v7808, 0.0
        %v7861 = vmax.f32 %v7810, 0.0
        %v7862 = vmax.f32 %v7814, 0.0
        %v7863 = vmax.f32 %v7816, 0.0
        %v7864 = vmax.f32 %v7818, 0.0
        %v7865 = vmax.f32 %v7820, 0.0
        %v7866 = vmax.f32 %v7824, 0.0
        %v7867 = vmax.f32 %v7826, 0.0
        %v7868 = vmax.f32 %v7828, 0.0
        %v7869 = vmax.f32 %v7830, 0.0
        %v7870 = vmax.f32 %v7834, 0.0
        %v7871 = vmax.f32 %v7836, 0.0
        %v7872 = vmax.f32 %v7838, 0.0
        %v7873 = vmax.f32 %v7840, 0.0
        %v7874 = vmax.f32 %v7844, 0.0
        %v7875 = vmax.f32 %v7846, 0.0
        %v7876 = vpack.c.bf16 %v7852, %v7850
        %v7877 = vpack.c.bf16 %v7853, %v7851
        %v7878 = vpack.c.bf16 %v7856, %v7854
        %v7879 = vpack.c.bf16 %v7857, %v7855
        %v7880 = vpack.c.bf16 %v7860, %v7858
        %v7881 = vpack.c.bf16 %v7861, %v7859
        %v7882 = vpack.c.bf16 %v7864, %v7862
        %v7883 = vpack.c.bf16 %v7865, %v7863
        %v7884 = vpack.c.bf16 %v7868, %v7866
        %v7885 = vpack.c.bf16 %v7869, %v7867
        %v7886 = vpack.c.bf16 %v7872, %v7870
        %v7887 = vpack.c.bf16 %v7873, %v7871
        %v7888 = vpack.c.bf16 %v7874, %v7874
        %v7889 = vpack.c.bf16 %v7875, %v7875
        %v7890 = vld [vmem:[#allocation17] sm:$0xff]
        %v7891 = vld [vmem:[#allocation17 + $0x8] sm:$0xff]
        %v7892 = vld [vmem:[#allocation17 + $0x10] sm:$0xff]
        %v7893 = vld [vmem:[#allocation17 + $0x18] sm:$0xff]
        %v7894 = vld [vmem:[#allocation17 + $0x20] sm:$0xff]
        %v7895 = vld [vmem:[#allocation17 + $0x28] sm:$0xff]
        %v7896 = vld [vmem:[#allocation17 + $0x30] sm:$0xff]
        %v7897 = vld [vmem:[#allocation17 + $0x38] sm:$0xff]
        %v7898 = vld [vmem:[#allocation17 + $0x40] sm:$0xff]
        %v7899 = vld [vmem:[#allocation17 + $0x48] sm:$0xff]
        %v7900 = vld [vmem:[#allocation17 + $0x50] sm:$0xff]
        %v7901 = vld [vmem:[#allocation17 + $0x58] sm:$0xff]
        %v7902 = vld [vmem:[#allocation17 + $0x60] sm:$0xff]
        %v7903 = vld [vmem:[#allocation17 + $0x68] sm:$0xff]
        %v7904 = vld [vmem:[#allocation17 + $0x70] sm:$0xff]
        %v7905 = vld [vmem:[#allocation17 + $0x78] sm:$0xff]
        %v7906 = vld [vmem:[#allocation17 + $0x80] sm:$0xff]
        %v7907 = vld [vmem:[#allocation17 + $0x88] sm:$0xff]
        %v7908 = vld [vmem:[#allocation17 + $0x90] sm:$0xff]
        %v7909 = vld [vmem:[#allocation17 + $0x98] sm:$0xff]
        %v7910 = vld [vmem:[#allocation17 + $0xa0] sm:$0xff]
        %v7911 = vld [vmem:[#allocation17 + $0xa8] sm:$0xff]
        %v7912 = vld [vmem:[#allocation17 + $0xb0] sm:$0xff]
        %v7913 = vld [vmem:[#allocation17 + $0xb8] sm:$0xff]
        %v7914 = vld [vmem:[#allocation17 + $0xc0] sm:$0xff]
        %v7915 = vld [vmem:[#allocation17 + $0xc8] sm:$0xff]
        %v7916 = vld [vmem:[#allocation17 + $0xd0] sm:$0xff]
        %v7917 = vld [vmem:[#allocation17 + $0xd8] sm:$0xff]
        %v7918 = vld [vmem:[#allocation17 + $0xe0] sm:$0xff]
        %v7919 = vld [vmem:[#allocation17 + $0xe8] sm:$0xff]
        %v7920 = vld [vmem:[#allocation17 + $0xf0] sm:$0xff]
        %v7921 = vld [vmem:[#allocation17 + $0xf8] sm:$0xff]
        %v7922 = vld [vmem:[%s71] sm:$0x3]
        %v7924 = vlaneseq
        %v7925 = vshrl.u32 %v7924, 7
        %v7926 = vsub.s32 0, %v7925
        %v7927 = vrot.slane %v7922, %v7926
        %v7928 = vlaneseq
        %v7929 = vshrl.u32 %v7928, 7
        %v7930 = vsub.s32 1, %v7929
        %v7931 = vrot.slane %v7922, %v7930
        %v7966 = vunpack.c.l.b16 %v7890
        %v7967 = vunpack.c.h.b16 %v7890
        %v7968 = vunpack.c.l.b16 %v7891
        %v7969 = vunpack.c.h.b16 %v7891
        %v7970 = vunpack.c.l.b16 %v7892
        %v7971 = vunpack.c.h.b16 %v7892
        %v7972 = vunpack.c.l.b16 %v7893
        %v7973 = vunpack.c.h.b16 %v7893
        %v7974 = vunpack.c.l.b16 %v7894
        %v7975 = vunpack.c.h.b16 %v7894
        %v7976 = vunpack.c.l.b16 %v7895
        %v7977 = vunpack.c.h.b16 %v7895
        %v7978 = vunpack.c.l.b16 %v7896
        %v7979 = vunpack.c.h.b16 %v7896
        %v7980 = vunpack.c.l.b16 %v7897
        %v7981 = vunpack.c.h.b16 %v7897
        %v7982 = vunpack.c.l.b16 %v7898
        %v7983 = vunpack.c.h.b16 %v7898
        %v7984 = vunpack.c.l.b16 %v7899
        %v7985 = vunpack.c.h.b16 %v7899
        %v7986 = vunpack.c.l.b16 %v7900
        %v7987 = vunpack.c.h.b16 %v7900
        %v7988 = vunpack.c.l.b16 %v7901
        %v7989 = vunpack.c.h.b16 %v7901
        %v7990 = vunpack.c.l.b16 %v7902
        %v7991 = vunpack.c.h.b16 %v7902
        %v7992 = vunpack.c.l.b16 %v7903
        %v7993 = vunpack.c.h.b16 %v7903
        %v7994 = vunpack.c.l.b16 %v7904
        %v7995 = vunpack.c.h.b16 %v7904
        %v7996 = vunpack.c.l.b16 %v7905
        %v7997 = vunpack.c.h.b16 %v7905
        %v7998 = vunpack.c.l.b16 %v7906
        %v7999 = vunpack.c.h.b16 %v7906
        %v8000 = vunpack.c.l.b16 %v7907
        %v8001 = vunpack.c.h.b16 %v7907
        %v8002 = vunpack.c.l.b16 %v7908
        %v8003 = vunpack.c.h.b16 %v7908
        %v8004 = vunpack.c.l.b16 %v7909
        %v8005 = vunpack.c.h.b16 %v7909
        %v8006 = vunpack.c.l.b16 %v7910
        %v8007 = vunpack.c.h.b16 %v7910
        %v8008 = vunpack.c.l.b16 %v7911
        %v8009 = vunpack.c.h.b16 %v7911
        %v8010 = vunpack.c.l.b16 %v7912
        %v8011 = vunpack.c.h.b16 %v7912
        %v8012 = vunpack.c.l.b16 %v7913
        %v8013 = vunpack.c.h.b16 %v7913
        %v8014 = vunpack.c.l.b16 %v7914
        %v8015 = vunpack.c.h.b16 %v7914
        %v8016 = vunpack.c.l.b16 %v7915
        %v8017 = vunpack.c.h.b16 %v7915
        %v8018 = vunpack.c.l.b16 %v7916
        %v8019 = vunpack.c.h.b16 %v7916
        %v8020 = vunpack.c.l.b16 %v7917
        %v8021 = vunpack.c.h.b16 %v7917
        %v8022 = vunpack.c.l.b16 %v7918
        %v8023 = vunpack.c.h.b16 %v7918
        %v8024 = vunpack.c.l.b16 %v7919
        %v8025 = vunpack.c.h.b16 %v7919
        %v8026 = vunpack.c.l.b16 %v7920
        %v8027 = vunpack.c.h.b16 %v7920
        %v8028 = vunpack.c.l.b16 %v7921
        %v8029 = vunpack.c.h.b16 %v7921
        %v8030 = vpack.c.b16 %v7968, %v7966
        %v8031 = vpack.c.b16 %v7969, %v7967
        %v8032 = vpack.c.b16 %v7972, %v7970
        %v8033 = vpack.c.b16 %v7973, %v7971
        %v8034 = vpack.c.b16 %v7976, %v7974
        %v8035 = vpack.c.b16 %v7977, %v7975
        %v8036 = vpack.c.b16 %v7980, %v7978
        %v8037 = vpack.c.b16 %v7981, %v7979
        %v8038 = vpack.c.b16 %v7984, %v7982
        %v8039 = vpack.c.b16 %v7985, %v7983
        %v8040 = vpack.c.b16 %v7988, %v7986
        %v8041 = vpack.c.b16 %v7989, %v7987
        %v8042 = vpack.c.b16 %v7992, %v7990
        %v8043 = vpack.c.b16 %v7993, %v7991
        %v8044 = vpack.c.b16 %v7996, %v7994
        %v8045 = vpack.c.b16 %v7997, %v7995
        %v8046 = vpack.c.b16 %v8000, %v7998
        %v8047 = vpack.c.b16 %v8001, %v7999
        %v8048 = vpack.c.b16 %v8004, %v8002
        %v8049 = vpack.c.b16 %v8005, %v8003
        %v8050 = vpack.c.b16 %v8008, %v8006
        %v8051 = vpack.c.b16 %v8009, %v8007
        %v8052 = vpack.c.b16 %v8012, %v8010
        %v8053 = vpack.c.b16 %v8013, %v8011
        %v8054 = vpack.c.b16 %v8016, %v8014
        %v8055 = vpack.c.b16 %v8017, %v8015
        %v8056 = vpack.c.b16 %v8020, %v8018
        %v8057 = vpack.c.b16 %v8021, %v8019
        %v8058 = vpack.c.b16 %v8024, %v8022
        %v8059 = vpack.c.b16 %v8025, %v8023
        %v8060 = vpack.c.b16 %v8028, %v8026
        %v8061 = vpack.c.b16 %v8029, %v8027
        %8094 = vmatprep.subr.bf16.mxu0 %v8045
        %8095 = vmatpush1.bf16.msra.mxu0 %v8044
        %8096 = vmatprep.subr.bf16.mxu0 %v8043
        %8097 = vmatpush1.bf16.msra.mxu0 %v8042
        %8098 = vmatprep.subr.bf16.mxu0 %v8041
        %8099 = vmatpush1.bf16.msra.mxu0 %v8040
        %8100 = vmatprep.subr.bf16.mxu0 %v8039
        %8101 = vmatpush1.bf16.msra.mxu0 %v8038
        %8102 = vmatprep.subr.bf16.mxu0 %v8037
        %8103 = vmatpush1.bf16.msra.mxu0 %v8036
        %8104 = vmatprep.subr.bf16.mxu0 %v8035
        %8105 = vmatpush1.bf16.msra.mxu0 %v8034
        %8106 = vmatprep.subr.bf16.mxu0 %v8033
        %8107 = vmatpush1.bf16.msra.mxu0 %v8032
        %8108 = vmatprep.subr.bf16.mxu0 %v8031
        %8109 = vmatpush1.bf16.msra.mxu0 %v8030
        %8110 = vmatprep.subr.bf16.mxu0 %v8061
        %8111 = vmatpush2.bf16.msra.mxu0 %v8060
        %8112 = vmatprep.subr.bf16.mxu0 %v8059
        %8113 = vmatpush2.bf16.msra.mxu0 %v8058
        %8114 = vmatprep.subr.bf16.mxu0 %v8057
        %8115 = vmatpush2.bf16.msra.mxu0 %v8056
        %8116 = vmatprep.subr.bf16.mxu0 %v8055
        %8117 = vmatpush2.bf16.msra.mxu0 %v8054
        %8118 = vmatprep.subr.bf16.mxu0 %v8053
        %8119 = vmatpush2.bf16.msra.mxu0 %v8052
        %8120 = vmatprep.subr.bf16.mxu0 %v8051
        %8121 = vmatpush2.bf16.msra.mxu0 %v8050
        %8122 = vmatprep.subr.bf16.mxu0 %v8049
        %8123 = vmatpush2.bf16.msra.mxu0 %v8048
        %8124 = vmatprep.subr.bf16.mxu0 %v8047
        %8125 = vmatpush2.bf16.msra.mxu0 %v8046
        %8126 = vmatprep.mubr.bf16.mxu0 %v7877
        %8127 = vmatmul.mubr.bf16.gmra.mxu0 %v7876
        %v8128 = vpop.f32.mrf.mxu0
        %v8129 = vadd.f32 %v7927, %v8128
        %v8130 = vpop.f32.mrf.mxu0
        %v8131 = vadd.f32 %v7931, %v8130
        %v8132 = vpop.f32.mrf.mxu0
        %v8133 = vadd.f32 %v7927, %v8132
        %v8134 = vpop.f32.mrf.mxu0
        %v8135 = vadd.f32 %v7931, %v8134
        %8136 = vmatprep.mubr.bf16.mxu0 %v7879
        %8137 = vmatmul.mubr.bf16.gmra.mxu0 %v7878
        %v8138 = vpop.f32.mrf.mxu0
        %v8139 = vadd.f32 %v7927, %v8138
        %v8140 = vpop.f32.mrf.mxu0
        %v8141 = vadd.f32 %v7931, %v8140
        %v8142 = vpop.f32.mrf.mxu0
        %v8143 = vadd.f32 %v7927, %v8142
        %v8144 = vpop.f32.mrf.mxu0
        %v8145 = vadd.f32 %v7931, %v8144
        %8146 = vmatprep.mubr.bf16.mxu0 %v7881
        %8147 = vmatmul.mubr.bf16.gmra.mxu0 %v7880
        %v8148 = vpop.f32.mrf.mxu0
        %v8149 = vadd.f32 %v7927, %v8148
        %v8150 = vpop.f32.mrf.mxu0
        %v8151 = vadd.f32 %v7931, %v8150
        %v8152 = vpop.f32.mrf.mxu0
        %v8153 = vadd.f32 %v7927, %v8152
        %v8154 = vpop.f32.mrf.mxu0
        %v8155 = vadd.f32 %v7931, %v8154
        %8156 = vmatprep.mubr.bf16.mxu0 %v7883
        %8157 = vmatmul.mubr.bf16.gmra.mxu0 %v7882
        %v8158 = vpop.f32.mrf.mxu0
        %v8159 = vadd.f32 %v7927, %v8158
        %v8160 = vpop.f32.mrf.mxu0
        %v8161 = vadd.f32 %v7931, %v8160
        %v8162 = vpop.f32.mrf.mxu0
        %v8163 = vadd.f32 %v7927, %v8162
        %v8164 = vpop.f32.mrf.mxu0
        %v8165 = vadd.f32 %v7931, %v8164
        %8166 = vmatprep.mubr.bf16.mxu0 %v7885
        %8167 = vmatmul.mubr.bf16.gmra.mxu0 %v7884
        %v8168 = vpop.f32.mrf.mxu0
        %v8169 = vadd.f32 %v7927, %v8168
        %v8170 = vpop.f32.mrf.mxu0
        %v8171 = vadd.f32 %v7931, %v8170
        %v8172 = vpop.f32.mrf.mxu0
        %v8173 = vadd.f32 %v7927, %v8172
        %v8174 = vpop.f32.mrf.mxu0
        %v8175 = vadd.f32 %v7931, %v8174
        %8176 = vmatprep.mubr.bf16.mxu0 %v7887
        %8177 = vmatmul.mubr.bf16.gmra.mxu0 %v7886
        %v8178 = vpop.f32.mrf.mxu0
        %v8179 = vadd.f32 %v7927, %v8178
        %v8180 = vpop.f32.mrf.mxu0
        %v8181 = vadd.f32 %v7931, %v8180
        %v8182 = vpop.f32.mrf.mxu0
        %v8183 = vadd.f32 %v7927, %v8182
        %v8184 = vpop.f32.mrf.mxu0
        %v8185 = vadd.f32 %v7931, %v8184
        %8186 = vmatprep.mubr.bf16.mxu0 %v7889
        %8187 = vmatmul.mubr.bf16.gmra.mxu0 %v7888
        %v8188 = vpop.f32.mrf.mxu0
        %v8189 = vadd.f32 %v7927, %v8188
        %v8190 = vpop.f32.mrf.mxu0
        %v8191 = vadd.f32 %v7931, %v8190
        %v8192 = vpop.f32.mrf.mxu0
        %v8193 = vpop.f32.mrf.mxu0
        %8194 = vdwg.mxu0
        %8195 = vst [vmem:[%s1367] sm:$0xff] %v8129
        %8196 = vst [vmem:[%s1367 + $0x8] sm:$0xff] %v8131
        %8197 = vst [vmem:[%s1367 + $0x10] sm:$0xff] %v8133
        %8198 = vst [vmem:[%s1367 + $0x18] sm:$0xff] %v8135
        %8199 = vst [vmem:[%s1367 + $0x20] sm:$0xff] %v8139
        %8200 = vst [vmem:[%s1367 + $0x28] sm:$0xff] %v8141
        %8201 = vst [vmem:[%s1367 + $0x30] sm:$0xff] %v8143
        %8202 = vst [vmem:[%s1367 + $0x38] sm:$0xff] %v8145
        %8203 = vst [vmem:[%s1367 + $0x40] sm:$0xff] %v8149
        %8204 = vst [vmem:[%s1367 + $0x48] sm:$0xff] %v8151
        %8205 = vst [vmem:[%s1367 + $0x50] sm:$0xff] %v8153
        %8206 = vst [vmem:[%s1367 + $0x58] sm:$0xff] %v8155
        %8207 = vst [vmem:[%s1367 + $0x60] sm:$0xff] %v8159
        %8208 = vst [vmem:[%s1367 + $0x68] sm:$0xff] %v8161
        %8209 = vst [vmem:[%s1367 + $0x70] sm:$0xff] %v8163
        %8210 = vst [vmem:[%s1367 + $0x78] sm:$0xff] %v8165
        %8211 = vst [vmem:[%s1367 + $0x80] sm:$0xff] %v8169
        %8212 = vst [vmem:[%s1367 + $0x88] sm:$0xff] %v8171
        %8213 = vst [vmem:[%s1367 + $0x90] sm:$0xff] %v8173
        %8214 = vst [vmem:[%s1367 + $0x98] sm:$0xff] %v8175
        %8215 = vst [vmem:[%s1367 + $0xa0] sm:$0xff] %v8179
        %8216 = vst [vmem:[%s1367 + $0xa8] sm:$0xff] %v8181
        %8217 = vst [vmem:[%s1367 + $0xb0] sm:$0xff] %v8183
        %8218 = vst [vmem:[%s1367 + $0xb8] sm:$0xff] %v8185
        %8219 = vst [vmem:[%s1367 + $0xc0] sm:$0xff] %v8189
        %8220 = vst [vmem:[%s1367 + $0xc8] sm:$0xff] %v8191
        %s8221 = smul.u32 13, %s97
        %p8222 = scmp.lt.s32.totalorder %s8221, 25
        %s8223 = scalar_select %p8222, %s8221, 25
        %s8224 = smul.addr %s8223, 2
        %s8225 = smul.addr %s8224, 8
        %s8226 = scalar_lea.vmem %s73, %s8225
        %s8227 = smul.u32 13, %s97
        %p8228 = scmp.lt.s32.totalorder %s8227, 25
        %s8229 = scalar_select %p8228, %s8227, 25
        %s8230 = smul.addr %s8229, 2
        %s8231 = smul.addr %s8230, 8
        %s8232 = scalar_lea.vmem %s75, %s8231
        %s8233 = smul.u32 13, %s97
        %p8234 = scmp.lt.s32.totalorder %s8233, 25
        %s8235 = scalar_select %p8234, %s8233, 25
        %s8236 = smul.addr %s8235, 2
        %s8237 = smul.addr %s8236, 8
        %s8238 = scalar_lea.vmem %s77, %s8237
        %p8239 = scmp.lt.s32.totalorder %s97, 1
        %s8240 = scalar_select %p8239, %s97, 1
        %s8241 = smul.addr %s8240, 2
        %s8242 = smul.addr %s8241, 8
        %s8243 = scalar_lea.vmem %s79, %s8242
        // Predicated region
        $region204: #{_lambda_.3} parent=159 // pred_check
          %p8244 = pneg %p865
        $region205: #{_lambda_.3} parent=159 // pred_check_branch
          %8246 = sbr.rel (%p8244) target = $region207
        $region206: #{_lambda_.3} parent=159 // pred_region
          %s8247 = smul.u32 13, %s97
        $region207: #{_lambda_.3} parent=159 // pred_fallthru
          _
        // Predicated region
        $region208: #{_lambda_.3} parent=159 // pred_check
          %p8248 = pneg %p891
        $region209: #{_lambda_.3} parent=159 // pred_check_branch
          %8250 = sbr.rel (%p8248) target = $region211
        $region210: #{_lambda_.3} parent=159 // pred_region
          %s8251 = smul.u32 13, %s97
        $region211: #{_lambda_.3} parent=159 // pred_fallthru
          _
        // Predicated region
        $region212: #{_lambda_.3} parent=159 // pred_check
          %p8252 = pneg %p917
        $region213: #{_lambda_.3} parent=159 // pred_check_branch
          %8254 = sbr.rel (%p8252) target = $region215
        $region214: #{_lambda_.3} parent=159 // pred_region
          %s8255 = smul.u32 13, %s97
        $region215: #{_lambda_.3} parent=159 // pred_fallthru
          _
        // Predicated region
        $region216: #{_lambda_.3} parent=159 // pred_check
          %p8256 = pneg %p943
        $region217: #{_lambda_.3} parent=159 // pred_check_branch
          %8258 = sbr.rel (%p8256) target = $region219
        $region218: #{_lambda_.3} parent=159 // pred_region
          _
        $region219: #{_lambda_.3} parent=159 // pred_fallthru
          _
      $region160: #{_lambda_.3} parent=5 // pred_fallthru
        _
      %p8259 = scmp.le.s32.totalorder 2, %s92
      // Predicated region
      $region220: #{_lambda_.3} parent=5 // pred_check
        %p8260 = pneg %p8259
      $region221: #{_lambda_.3} parent=5 // pred_check_branch
        %8262 = sbr.rel (%p8260) target = $region223
      $region222: #{_lambda_.3} parent=5 // pred_region
        %s8263 = ssub.s32 %s92, 2
        // Predicated region
        $region224: #{_lambda_.3} parent=222 // pred_check
          %p8264 = pneg %p871
        $region225: #{_lambda_.3} parent=222 // pred_check_branch
          %8266 = sbr.rel (%p8264) target = $region227
        $region226: #{_lambda_.3} parent=222 // pred_region
          %s8267 = smul.u32 13, %s98
          %p8268 = scmp.lt.s32.totalorder %s8267, 25
          %s8269 = scalar_select %p8268, %s8267, 25
          %s8270 = smul.addr %s8269, 2
          %s8271 = smul.addr %s8270, 8
          %s8272 = scalar_lea.vmem %s73, %s8271
        $region227: #{_lambda_.3} parent=222 // pred_fallthru
          _
        // Predicated region
        $region228: #{_lambda_.3} parent=222 // pred_check
          %p8273 = pneg %p897
        $region229: #{_lambda_.3} parent=222 // pred_check_branch
          %8275 = sbr.rel (%p8273) target = $region231
        $region230: #{_lambda_.3} parent=222 // pred_region
          %s8276 = smul.u32 13, %s98
          %p8277 = scmp.lt.s32.totalorder %s8276, 25
          %s8278 = scalar_select %p8277, %s8276, 25
          %s8279 = smul.addr %s8278, 2
          %s8280 = smul.addr %s8279, 8
          %s8281 = scalar_lea.vmem %s75, %s8280
        $region231: #{_lambda_.3} parent=222 // pred_fallthru
          _
        // Predicated region
        $region232: #{_lambda_.3} parent=222 // pred_check
          %p8282 = pneg %p923
        $region233: #{_lambda_.3} parent=222 // pred_check_branch
          %8284 = sbr.rel (%p8282) target = $region235
        $region234: #{_lambda_.3} parent=222 // pred_region
          %s8285 = smul.u32 13, %s98
          %p8286 = scmp.lt.s32.totalorder %s8285, 25
          %s8287 = scalar_select %p8286, %s8285, 25
          %s8288 = smul.addr %s8287, 2
          %s8289 = smul.addr %s8288, 8
          %s8290 = scalar_lea.vmem %s77, %s8289
        $region235: #{_lambda_.3} parent=222 // pred_fallthru
          _
        // Predicated region
        $region236: #{_lambda_.3} parent=222 // pred_check
          %p8291 = pneg %p949
        $region237: #{_lambda_.3} parent=222 // pred_check_branch
          %8293 = sbr.rel (%p8291) target = $region239
        $region238: #{_lambda_.3} parent=222 // pred_region
          %p8294 = scmp.lt.s32.totalorder %s98, 1
          %s8295 = scalar_select %p8294, %s98, 1
          %s8296 = smul.addr %s8295, 2
          %s8297 = smul.addr %s8296, 8
          %s8298 = scalar_lea.vmem %s79, %s8297
        $region239: #{_lambda_.3} parent=222 // pred_fallthru
          _
      $region223: #{_lambda_.3} parent=5 // pred_fallthru
        _
    $region6: #{_lambda_.3} parent=1 // loop_footer
      %s96 = sadd.s32 1, %s92
    $region7: #{_lambda_.3} parent=1 // loop_footer_branch
      %91 = sbr.rel target = $region3
    $region8: #{_lambda_.3} parent=1 // loop_exit
      _
    %8299 = vsyncpa [#allocation5], 1
    %s8300 = scalar_lea.sflag [#allocation5], 1
    %8301 = vsyncpa %s8300, 1
    %8302 = vsyncpa [#allocation7], 1
    %8303 = vsyncpa [#allocation10], 1
    %8304 = vsyncpa [#allocation13], 1
    %8305 = vsyncpa [#allocation16], 1

</llo_original>
